<compile_context>
chip_gen: v5e
topology: v5e:2x2
jax: 0.10.0
libtpu: 0.0.40
codegen_flags: <defaults>
</compile_context>

<pallas_src>
import numpy as np

import jax
import jax.numpy as jnp
from jax import lax
from jax.experimental import pallas as pl
from jax.experimental.pallas import tpu as pltpu


# ----------------------------------------------------------------------------
# One fused kernel for the whole encoder (per batch element).
# ----------------------------------------------------------------------------
def _make_encoder_kernel(cfg):
    taps1, taps2, taps3 = cfg["taps1"], cfg["taps2"], cfg["taps3"]
    L1, L2, L3 = cfg["L1"], cfg["L2"], cfg["L3"]
    n_res = cfg["num_residual_layers"]

    def conv_taps(xp, w_ref, taps, length):
        # xp:    (P, Cin) zero-padded, spatially flattened activation (VMEM value)
        # w_ref: (KH*KW, Cin, Cout) per-tap weights
        # Accumulates KH*KW shifted-slab matmuls (no im2col materialization).
        acc = None
        for i, t in enumerate(taps):
            part = jnp.dot(xp[t:t + length, :], w_ref[i],
                           preferred_element_type=jnp.float32)
            acc = part if acc is None else acc + part
        return acc

    def kernel(x_ref, w1_ref, b1_ref, t1_ref, w2_ref, b2_ref, t2_ref,
               w3_ref, b3_ref, t3_ref, *rest):
        res_refs = rest[:2 * n_res]
        tv_ref, wf_ref, bf_ref, o_ref = rest[2 * n_res:]

        # conv1 (4x4, s2, p1) + ReLU  -- evaluated at stride 1.
        xp1 = x_ref[0]                                           # (Sp1*Sp1, Cin)
        z1 = jnp.maximum(conv_taps(xp1, w1_ref, taps1, L1) + b1_ref[...], 0.0)
        # stride-2 subsample + zero-pad for conv2: one gather matmul.
        xp2 = jnp.dot(t1_ref[...], z1, preferred_element_type=jnp.float32)

        # conv2 (4x4, s2, p1) + ReLU  -- evaluated at stride 1.
        z2 = jnp.maximum(conv_taps(xp2, w2_ref, taps2, L2) + b2_ref[...], 0.0)
        xp3 = jnp.dot(t2_ref[...], z2, preferred_element_type=jnp.float32)

        # conv3 (3x3, s1, p1), no ReLU.
        a3 = conv_taps(xp3, w3_ref, taps3, L3) + b3_ref[...]
        # re-pad conv3 output into the (Sp3*Sp3, num_hiddens) padded layout.
        xc = jnp.dot(t3_ref[...], a3, preferred_element_type=jnp.float32)

        # residual stack: x = x + conv1x1(relu(conv3x3(relu(x))))
        for li in range(n_res):
            w3x3_ref = res_refs[2 * li]
            w1x1_ref = res_refs[2 * li + 1]
            u = jnp.maximum(xc, 0.0)                              # keeps padding 0
            h = jnp.maximum(conv_taps(u, w3x3_ref, taps3, L3), 0.0)
            h = jnp.dot(h, w1x1_ref[...], preferred_element_type=jnp.float32)
            xc = xc + jnp.dot(t3_ref[...], h, preferred_element_type=jnp.float32)

        # trailing ReLU of the residual stack + final 1x1 conv (+bias).
        u = jnp.maximum(xc, 0.0)
        z = jnp.dot(tv_ref[...], u, preferred_element_type=jnp.float32)  # (S2*S2, nh)
        o = jnp.dot(z, wf_ref[...], preferred_element_type=jnp.float32) + bf_ref[...]
        # (emb, S2*S2): row-major flatten == PyTorch NCHW .view(batch, -1).
        o_ref[0] = jnp.transpose(o).astype(o_ref.dtype)

    return kernel


# ----------------------------------------------------------------------------
# One-time parameter / constant preparation (hoisted out of the forward path).
# ----------------------------------------------------------------------------
def _per_tap_weight(w_oihw):
    co, ci, kh, kw = w_oihw.shape
    # OIHW -> (kh, kw, cin, cout) -> (KH*KW, Cin, Cout); tap index = kh*KW + kw.
    return jnp.transpose(w_oihw, (2, 3, 1, 0)).reshape(kh * kw, ci, co).astype(
        jnp.float32)


def _gather_matrix(n_rows, n_cols, pairs):
    m = np.zeros((n_rows, n_cols), dtype=np.float32)
    for r, c in pairs:
        m[r, c] = 1.0
    return jnp.asarray(m)


def prepare_encoder_params(params, spatial):
    assert spatial % 4 == 0 and spatial >= 8, "spatial must be a multiple of 4"
    s0 = spatial
    s1, s2 = s0 // 2, s0 // 4
    sp1, sp2, sp3 = s0 + 2, s1 + 2, s2 + 2          # zero-padded spatial extents
    o1, o2, o3 = sp1 - 3, sp2 - 3, sp3 - 2          # stride-1 output extents
    l1 = (o1 - 1) * sp1 + o1                        # flat slab / acc lengths
    l2 = (o2 - 1) * sp2 + o2
    l3 = (o3 - 1) * sp3 + o3
    taps1 = [kh * sp1 + kw for kh in range(4) for kw in range(4)]
    taps2 = [kh * sp2 + kw for kh in range(4) for kw in range(4)]
    taps3 = [kh * sp3 + kw for kh in range(3) for kw in range(3)]

    # Gather matrices: stride-2 subsample (+ re-zero-pad) done as matmuls.
    t1 = _gather_matrix(
        sp2 * sp2, l1,
        [((h + 1) * sp2 + (w + 1), (2 * h) * sp1 + 2 * w)
         for h in range(s1) for w in range(s1)])
    t2 = _gather_matrix(
        sp3 * sp3, l2,
        [((h + 1) * sp3 + (w + 1), (2 * h) * sp2 + 2 * w)
         for h in range(s2) for w in range(s2)])
    t3 = _gather_matrix(
        sp3 * sp3, l3,
        [((h + 1) * sp3 + (w + 1), h * sp3 + w)
         for h in range(s2) for w in range(s2)])
    tv = _gather_matrix(
        s2 * s2, sp3 * sp3,
        [(h * s2 + w, (h + 1) * sp3 + (w + 1))
         for h in range(s2) for w in range(s2)])

    tensors = [
        _per_tap_weight(params["conv1_w"]),
        params["conv1_b"].reshape(1, -1).astype(jnp.float32),
        t1,
        _per_tap_weight(params["conv2_w"]),
        params["conv2_b"].reshape(1, -1).astype(jnp.float32),
        t2,
        _per_tap_weight(params["conv3_w"]),
        params["conv3_b"].reshape(1, -1).astype(jnp.float32),
        t3,
    ]
    for layer in params["res_layers"]:
        tensors.append(_per_tap_weight(layer["w3"]))
        tensors.append(layer["w1"][:, :, 0, 0].T.astype(jnp.float32))
    tensors.append(tv)
    tensors.append(params["final_w"][:, :, 0, 0].T.astype(jnp.float32))
    tensors.append(params["final_b"].reshape(1, -1).astype(jnp.float32))

    cfg = dict(S0=s0, S1=s1, S2=s2, Sp1=sp1, Sp2=sp2, Sp3=sp3,
               L1=l1, L2=l2, L3=l3,
               taps1=taps1, taps2=taps2, taps3=taps3,
               num_residual_layers=len(params["res_layers"]),
               in_channels=int(params["conv1_w"].shape[1]),
               embedding_dim=int(params["final_w"].shape[0]))
    return {"cfg": cfg, "tensors": tensors}


# ----------------------------------------------------------------------------
# Forward pass (single pallas_call).
# ----------------------------------------------------------------------------
def encoder_forward_pallas(x_nchw, prep):
    cfg = prep["cfg"]
    tensors = prep["tensors"]
    n = x_nchw.shape[0]
    cin, sp1 = cfg["in_channels"], cfg["Sp1"]
    emb, s2 = cfg["embedding_dim"], cfg["S2"]

    # NCHW -> NHWC, zero-pad by 1, flatten spatial. Pure layout, no im2col.
    x = jnp.transpose(x_nchw, (0, 2, 3, 1)).astype(jnp.float32)
    x = jnp.pad(x, ((0, 0), (1, 1), (1, 1), (0, 0)))
    x = x.reshape(n, sp1 * sp1, cin)

    kernel = _make_encoder_kernel(cfg)

    def _const_map(ndim):
        return lambda b, _nd=ndim: (0,) * _nd

    in_specs = [pl.BlockSpec((1, sp1 * sp1, cin), lambda b: (b, 0, 0))]
    in_specs += [pl.BlockSpec(t.shape, _const_map(t.ndim)) for t in tensors]
    out_specs = pl.BlockSpec((1, emb, s2 * s2), lambda b: (b, 0, 0))

    out = pl.pallas_call(
        kernel,
        grid=(n,),
        in_specs=in_specs,
        out_specs=out_specs,
        out_shape=jax.ShapeDtypeStruct((n, emb, s2 * s2), jnp.float32),
        compiler_params=pltpu.CompilerParams(
            dimension_semantics=("parallel",)),
    )(x, *tensors)

    # PyTorch flattens NCHW: (c, h, w) order == row-major flatten of (emb, S2*S2).
    return out.reshape(n, emb * s2 * s2)


# ----------------------------------------------------------------------------
# Pure-JAX NCHW reference (PyTorch semantics) for the parity check.
# ----------------------------------------------------------------------------
def _ref_conv(x, w, b, stride, pad):
    out = lax.conv_general_dilated(
        x, w, (stride, stride), [(pad, pad), (pad, pad)],
        dimension_numbers=("NCHW", "OIHW", "NCHW"))
    if b is not None:
        out = out + b[None, :, None, None]
    return out


def encoder_forward_reference(x, params):
    x = jax.nn.relu(_ref_conv(x, params["conv1_w"], params["conv1_b"], 2, 1))
    x = jax.nn.relu(_ref_conv(x, params["conv2_w"], params["conv2_b"], 2, 1))
    x = _ref_conv(x, params["conv3_w"], params["conv3_b"], 1, 1)
    for layer in params["res_layers"]:
        h = _ref_conv(jax.nn.relu(x), layer["w3"], None, 1, 1)
        h = _ref_conv(jax.nn.relu(h), layer["w1"], None, 1, 0)
        x = x + h
    x = jax.nn.relu(x)
    x = _ref_conv(x, params["final_w"], params["final_b"], 1, 0)
    return x.reshape(x.shape[0], -1)


# ----------------------------------------------------------------------------
# Deterministic parameter initialization (synthetic, not a checkpoint).
# ----------------------------------------------------------------------------
def init_params(key, in_channels, num_hiddens, num_residual_layers,
                num_residual_hiddens, embedding_dim):
    def w(key, shape, scale=0.1):
        return scale * jax.random.normal(key, shape, dtype=jnp.float32)

    keys = jax.random.split(key, 16)
    nh2 = num_hiddens // 2
    params = {
        "conv1_w": w(keys[0], (nh2, in_channels, 4, 4)),
        "conv1_b": w(keys[1], (nh2,)),
        "conv2_w": w(keys[2], (num_hiddens, nh2, 4, 4)),
        "conv2_b": w(keys[3], (num_hiddens,)),
        "conv3_w": w(keys[4], (num_hiddens, num_hiddens, 3, 3)),
        "conv3_b": w(keys[5], (num_hiddens,)),
        "final_w": w(keys[6], (embedding_dim, num_hiddens, 1, 1)),
        "final_b": w(keys[7], (embedding_dim,)),
        "res_layers": [],
    }
    rkeys = jax.random.split(keys[8], 2 * num_residual_layers)
    for i in range(num_residual_layers):
        params["res_layers"].append({
            "w3": w(rkeys[2 * i], (num_residual_hiddens, num_hiddens, 3, 3)),
            "w1": w(rkeys[2 * i + 1], (num_hiddens, num_residual_hiddens, 1, 1)),
        })
    return params


if __name__ == "__main__":
    # Small, module-consistent shapes.
    batch, in_channels, spatial = 2, 4, 16
    num_hiddens, num_residual_layers, num_residual_hiddens = 32, 2, 8
    embedding_dim = 16

    key = jax.random.PRNGKey(0)
    k_in, k_p = jax.random.split(key)
    x = jax.random.normal(k_in, (batch, in_channels, spatial, spatial),
                          dtype=jnp.float32)
    params = init_params(k_p, in_channels, num_hiddens, num_residual_layers,
                         num_residual_hiddens, embedding_dim)

    # One-time prep (weight rearrangement + gather matrices), outside forward.
    prep = prepare_encoder_params(params, spatial)
    fwd = jax.jit(lambda inp: encoder_forward_pallas(inp, prep))

    out = jax.block_until_ready(fwd(x))

    # Cross-check against a pure-JAX NCHW reference (PyTorch semantics).
    ref = jax.block_until_ready(encoder_forward_reference(x, params))
    assert out.shape == (batch, embedding_dim * (spatial // 4) ** 2), out.shape
    max_err = float(jnp.max(jnp.abs(out - ref)))
    assert max_err < 1e-3, f"mismatch vs reference: {max_err}"

    print("KERNEL_OK")
</pallas_src>

<mosaic_0001>
module attributes {stable_mosaic.version = 11 : i64} {
  func.func @kernel(%arg0: i32, %arg1: memref<1x324x4xf32, #tpu.memory_space<vmem>>, %arg2: memref<16x4x16xf32, #tpu.memory_space<vmem>>, %arg3: memref<1x16xf32, #tpu.memory_space<vmem>>, %arg4: memref<100x267xf32, #tpu.memory_space<vmem>>, %arg5: memref<16x16x32xf32, #tpu.memory_space<vmem>>, %arg6: memref<1x32xf32, #tpu.memory_space<vmem>>, %arg7: memref<36x67xf32, #tpu.memory_space<vmem>>, %arg8: memref<9x32x32xf32, #tpu.memory_space<vmem>>, %arg9: memref<1x32xf32, #tpu.memory_space<vmem>>, %arg10: memref<36x22xf32, #tpu.memory_space<vmem>>, %arg11: memref<9x32x8xf32, #tpu.memory_space<vmem>>, %arg12: memref<8x32xf32, #tpu.memory_space<vmem>>, %arg13: memref<9x32x8xf32, #tpu.memory_space<vmem>>, %arg14: memref<8x32xf32, #tpu.memory_space<vmem>>, %arg15: memref<16x36xf32, #tpu.memory_space<vmem>>, %arg16: memref<32x16xf32, #tpu.memory_space<vmem>>, %arg17: memref<1x16xf32, #tpu.memory_space<vmem>>, %arg18: memref<1x16x16xf32, #tpu.memory_space<vmem>>) attributes {dimension_semantics = [#tpu.dimension_semantics<parallel>], iteration_bounds = array<i64: 2>, scalar_prefetch = 0 : i64, scratch_operands = 0 : i64, tpu.core_type = #tpu.core_type<tc>, window_params = [{transform_indices = @transform_0, window_bounds = array<i64: 1, 324, 4>}, {pipeline_mode = #tpu.pipeline_mode<synchronous>, transform_indices = @transform_1, window_bounds = array<i64: 16, 4, 16>}, {pipeline_mode = #tpu.pipeline_mode<synchronous>, transform_indices = @transform_2, window_bounds = array<i64: 1, 16>}, {pipeline_mode = #tpu.pipeline_mode<synchronous>, transform_indices = @transform_3, window_bounds = array<i64: 100, 267>}, {pipeline_mode = #tpu.pipeline_mode<synchronous>, transform_indices = @transform_4, window_bounds = array<i64: 16, 16, 32>}, {pipeline_mode = #tpu.pipeline_mode<synchronous>, transform_indices = @transform_5, window_bounds = array<i64: 1, 32>}, {pipeline_mode = #tpu.pipeline_mode<synchronous>, transform_indices = @transform_6, window_bounds = array<i64: 36, 67>}, {pipeline_mode = #tpu.pipeline_mode<synchronous>, transform_indices = @transform_7, window_bounds = array<i64: 9, 32, 32>}, {pipeline_mode = #tpu.pipeline_mode<synchronous>, transform_indices = @transform_8, window_bounds = array<i64: 1, 32>}, {pipeline_mode = #tpu.pipeline_mode<synchronous>, transform_indices = @transform_9, window_bounds = array<i64: 36, 22>}, {pipeline_mode = #tpu.pipeline_mode<synchronous>, transform_indices = @transform_10, window_bounds = array<i64: 9, 32, 8>}, {pipeline_mode = #tpu.pipeline_mode<synchronous>, transform_indices = @transform_11, window_bounds = array<i64: 8, 32>}, {pipeline_mode = #tpu.pipeline_mode<synchronous>, transform_indices = @transform_12, window_bounds = array<i64: 9, 32, 8>}, {pipeline_mode = #tpu.pipeline_mode<synchronous>, transform_indices = @transform_13, window_bounds = array<i64: 8, 32>}, {pipeline_mode = #tpu.pipeline_mode<synchronous>, transform_indices = @transform_14, window_bounds = array<i64: 16, 36>}, {pipeline_mode = #tpu.pipeline_mode<synchronous>, transform_indices = @transform_15, window_bounds = array<i64: 32, 16>}, {pipeline_mode = #tpu.pipeline_mode<synchronous>, transform_indices = @transform_16, window_bounds = array<i64: 1, 16>}, {transform_indices = @transform_17, window_bounds = array<i64: 1, 16, 16>}]} {
    %c0 = arith.constant 0 : index
    %c0_0 = arith.constant 0 : index
    %c0_1 = arith.constant 0 : index
    %0 = vector.load %arg1[%c0, %c0_0, %c0_1] : memref<1x324x4xf32, #tpu.memory_space<vmem>>, vector<1x324x4xf32>
    %1 = vector.shape_cast %0 : vector<1x324x4xf32> to vector<324x4xf32>
    %2 = vector.extract_strided_slice %1 {offsets = [0, 0], sizes = [267, 4], strides = [1, 1]} : vector<324x4xf32> to vector<267x4xf32>
    %c0_2 = arith.constant 0 : index
    %c0_3 = arith.constant 0 : index
    %c0_4 = arith.constant 0 : index
    %3 = vector.load %arg2[%c0_2, %c0_3, %c0_4] : memref<16x4x16xf32, #tpu.memory_space<vmem>>, vector<1x4x16xf32>
    %4 = vector.shape_cast %3 : vector<1x4x16xf32> to vector<4x16xf32>
    %cst = arith.constant dense<0.000000e+00> : vector<267x16xf32>
    %5 = tpu.matmul %2, %4, %cst {dimension_numbers = #tpu.dot_dimension_numbers<[1], [0], [0], [1], [0, 0, 1, 1], [], []>} : vector<267x4xf32>, vector<4x16xf32>, vector<267x16xf32> -> vector<267x16xf32>
    %6 = vector.extract_strided_slice %1 {offsets = [1, 0], sizes = [267, 4], strides = [1, 1]} : vector<324x4xf32> to vector<267x4xf32>
    %c1 = arith.constant 1 : index
    %c0_5 = arith.constant 0 : index
    %c0_6 = arith.constant 0 : index
    %7 = vector.load %arg2[%c1, %c0_5, %c0_6] : memref<16x4x16xf32, #tpu.memory_space<vmem>>, vector<1x4x16xf32>
    %8 = vector.shape_cast %7 : vector<1x4x16xf32> to vector<4x16xf32>
    %cst_7 = arith.constant dense<0.000000e+00> : vector<267x16xf32>
    %9 = tpu.matmul %6, %8, %cst_7 {dimension_numbers = #tpu.dot_dimension_numbers<[1], [0], [0], [1], [0, 0, 1, 1], [], []>} : vector<267x4xf32>, vector<4x16xf32>, vector<267x16xf32> -> vector<267x16xf32>
    %10 = arith.addf %5, %9 : vector<267x16xf32>
    %11 = vector.extract_strided_slice %1 {offsets = [2, 0], sizes = [267, 4], strides = [1, 1]} : vector<324x4xf32> to vector<267x4xf32>
    %c2 = arith.constant 2 : index
    %c0_8 = arith.constant 0 : index
    %c0_9 = arith.constant 0 : index
    %12 = vector.load %arg2[%c2, %c0_8, %c0_9] : memref<16x4x16xf32, #tpu.memory_space<vmem>>, vector<1x4x16xf32>
    %13 = vector.shape_cast %12 : vector<1x4x16xf32> to vector<4x16xf32>
    %cst_10 = arith.constant dense<0.000000e+00> : vector<267x16xf32>
    %14 = tpu.matmul %11, %13, %cst_10 {dimension_numbers = #tpu.dot_dimension_numbers<[1], [0], [0], [1], [0, 0, 1, 1], [], []>} : vector<267x4xf32>, vector<4x16xf32>, vector<267x16xf32> -> vector<267x16xf32>
    %15 = arith.addf %10, %14 : vector<267x16xf32>
    %16 = vector.extract_strided_slice %1 {offsets = [3, 0], sizes = [267, 4], strides = [1, 1]} : vector<324x4xf32> to vector<267x4xf32>
    %c3 = arith.constant 3 : index
    %c0_11 = arith.constant 0 : index
    %c0_12 = arith.constant 0 : index
    %17 = vector.load %arg2[%c3, %c0_11, %c0_12] : memref<16x4x16xf32, #tpu.memory_space<vmem>>, vector<1x4x16xf32>
    %18 = vector.shape_cast %17 : vector<1x4x16xf32> to vector<4x16xf32>
    %cst_13 = arith.constant dense<0.000000e+00> : vector<267x16xf32>
    %19 = tpu.matmul %16, %18, %cst_13 {dimension_numbers = #tpu.dot_dimension_numbers<[1], [0], [0], [1], [0, 0, 1, 1], [], []>} : vector<267x4xf32>, vector<4x16xf32>, vector<267x16xf32> -> vector<267x16xf32>
    %20 = arith.addf %15, %19 : vector<267x16xf32>
    %21 = vector.extract_strided_slice %1 {offsets = [18, 0], sizes = [267, 4], strides = [1, 1]} : vector<324x4xf32> to vector<267x4xf32>
    %c4 = arith.constant 4 : index
    %c0_14 = arith.constant 0 : index
    %c0_15 = arith.constant 0 : index
    %22 = vector.load %arg2[%c4, %c0_14, %c0_15] : memref<16x4x16xf32, #tpu.memory_space<vmem>>, vector<1x4x16xf32>
    %23 = vector.shape_cast %22 : vector<1x4x16xf32> to vector<4x16xf32>
    %cst_16 = arith.constant dense<0.000000e+00> : vector<267x16xf32>
    %24 = tpu.matmul %21, %23, %cst_16 {dimension_numbers = #tpu.dot_dimension_numbers<[1], [0], [0], [1], [0, 0, 1, 1], [], []>} : vector<267x4xf32>, vector<4x16xf32>, vector<267x16xf32> -> vector<267x16xf32>
    %25 = arith.addf %20, %24 : vector<267x16xf32>
    %26 = vector.extract_strided_slice %1 {offsets = [19, 0], sizes = [267, 4], strides = [1, 1]} : vector<324x4xf32> to vector<267x4xf32>
    %c5 = arith.constant 5 : index
    %c0_17 = arith.constant 0 : index
    %c0_18 = arith.constant 0 : index
    %27 = vector.load %arg2[%c5, %c0_17, %c0_18] : memref<16x4x16xf32, #tpu.memory_space<vmem>>, vector<1x4x16xf32>
    %28 = vector.shape_cast %27 : vector<1x4x16xf32> to vector<4x16xf32>
    %cst_19 = arith.constant dense<0.000000e+00> : vector<267x16xf32>
    %29 = tpu.matmul %26, %28, %cst_19 {dimension_numbers = #tpu.dot_dimension_numbers<[1], [0], [0], [1], [0, 0, 1, 1], [], []>} : vector<267x4xf32>, vector<4x16xf32>, vector<267x16xf32> -> vector<267x16xf32>
    %30 = arith.addf %25, %29 : vector<267x16xf32>
    %31 = vector.extract_strided_slice %1 {offsets = [20, 0], sizes = [267, 4], strides = [1, 1]} : vector<324x4xf32> to vector<267x4xf32>
    %c6 = arith.constant 6 : index
    %c0_20 = arith.constant 0 : index
    %c0_21 = arith.constant 0 : index
    %32 = vector.load %arg2[%c6, %c0_20, %c0_21] : memref<16x4x16xf32, #tpu.memory_space<vmem>>, vector<1x4x16xf32>
    %33 = vector.shape_cast %32 : vector<1x4x16xf32> to vector<4x16xf32>
    %cst_22 = arith.constant dense<0.000000e+00> : vector<267x16xf32>
    %34 = tpu.matmul %31, %33, %cst_22 {dimension_numbers = #tpu.dot_dimension_numbers<[1], [0], [0], [1], [0, 0, 1, 1], [], []>} : vector<267x4xf32>, vector<4x16xf32>, vector<267x16xf32> -> vector<267x16xf32>
    %35 = arith.addf %30, %34 : vector<267x16xf32>
    %36 = vector.extract_strided_slice %1 {offsets = [21, 0], sizes = [267, 4], strides = [1, 1]} : vector<324x4xf32> to vector<267x4xf32>
    %c7 = arith.constant 7 : index
    %c0_23 = arith.constant 0 : index
    %c0_24 = arith.constant 0 : index
    %37 = vector.load %arg2[%c7, %c0_23, %c0_24] : memref<16x4x16xf32, #tpu.memory_space<vmem>>, vector<1x4x16xf32>
    %38 = vector.shape_cast %37 : vector<1x4x16xf32> to vector<4x16xf32>
    %cst_25 = arith.constant dense<0.000000e+00> : vector<267x16xf32>
    %39 = tpu.matmul %36, %38, %cst_25 {dimension_numbers = #tpu.dot_dimension_numbers<[1], [0], [0], [1], [0, 0, 1, 1], [], []>} : vector<267x4xf32>, vector<4x16xf32>, vector<267x16xf32> -> vector<267x16xf32>
    %40 = arith.addf %35, %39 : vector<267x16xf32>
    %41 = vector.extract_strided_slice %1 {offsets = [36, 0], sizes = [267, 4], strides = [1, 1]} : vector<324x4xf32> to vector<267x4xf32>
    %c8 = arith.constant 8 : index
    %c0_26 = arith.constant 0 : index
    %c0_27 = arith.constant 0 : index
    %42 = vector.load %arg2[%c8, %c0_26, %c0_27] : memref<16x4x16xf32, #tpu.memory_space<vmem>>, vector<1x4x16xf32>
    %43 = vector.shape_cast %42 : vector<1x4x16xf32> to vector<4x16xf32>
    %cst_28 = arith.constant dense<0.000000e+00> : vector<267x16xf32>
    %44 = tpu.matmul %41, %43, %cst_28 {dimension_numbers = #tpu.dot_dimension_numbers<[1], [0], [0], [1], [0, 0, 1, 1], [], []>} : vector<267x4xf32>, vector<4x16xf32>, vector<267x16xf32> -> vector<267x16xf32>
    %45 = arith.addf %40, %44 : vector<267x16xf32>
    %46 = vector.extract_strided_slice %1 {offsets = [37, 0], sizes = [267, 4], strides = [1, 1]} : vector<324x4xf32> to vector<267x4xf32>
    %c9 = arith.constant 9 : index
    %c0_29 = arith.constant 0 : index
    %c0_30 = arith.constant 0 : index
    %47 = vector.load %arg2[%c9, %c0_29, %c0_30] : memref<16x4x16xf32, #tpu.memory_space<vmem>>, vector<1x4x16xf32>
    %48 = vector.shape_cast %47 : vector<1x4x16xf32> to vector<4x16xf32>
    %cst_31 = arith.constant dense<0.000000e+00> : vector<267x16xf32>
    %49 = tpu.matmul %46, %48, %cst_31 {dimension_numbers = #tpu.dot_dimension_numbers<[1], [0], [0], [1], [0, 0, 1, 1], [], []>} : vector<267x4xf32>, vector<4x16xf32>, vector<267x16xf32> -> vector<267x16xf32>
    %50 = arith.addf %45, %49 : vector<267x16xf32>
    %51 = vector.extract_strided_slice %1 {offsets = [38, 0], sizes = [267, 4], strides = [1, 1]} : vector<324x4xf32> to vector<267x4xf32>
    %c10 = arith.constant 10 : index
    %c0_32 = arith.constant 0 : index
    %c0_33 = arith.constant 0 : index
    %52 = vector.load %arg2[%c10, %c0_32, %c0_33] : memref<16x4x16xf32, #tpu.memory_space<vmem>>, vector<1x4x16xf32>
    %53 = vector.shape_cast %52 : vector<1x4x16xf32> to vector<4x16xf32>
    %cst_34 = arith.constant dense<0.000000e+00> : vector<267x16xf32>
    %54 = tpu.matmul %51, %53, %cst_34 {dimension_numbers = #tpu.dot_dimension_numbers<[1], [0], [0], [1], [0, 0, 1, 1], [], []>} : vector<267x4xf32>, vector<4x16xf32>, vector<267x16xf32> -> vector<267x16xf32>
    %55 = arith.addf %50, %54 : vector<267x16xf32>
    %56 = vector.extract_strided_slice %1 {offsets = [39, 0], sizes = [267, 4], strides = [1, 1]} : vector<324x4xf32> to vector<267x4xf32>
    %c11 = arith.constant 11 : index
    %c0_35 = arith.constant 0 : index
    %c0_36 = arith.constant 0 : index
    %57 = vector.load %arg2[%c11, %c0_35, %c0_36] : memref<16x4x16xf32, #tpu.memory_space<vmem>>, vector<1x4x16xf32>
    %58 = vector.shape_cast %57 : vector<1x4x16xf32> to vector<4x16xf32>
    %cst_37 = arith.constant dense<0.000000e+00> : vector<267x16xf32>
    %59 = tpu.matmul %56, %58, %cst_37 {dimension_numbers = #tpu.dot_dimension_numbers<[1], [0], [0], [1], [0, 0, 1, 1], [], []>} : vector<267x4xf32>, vector<4x16xf32>, vector<267x16xf32> -> vector<267x16xf32>
    %60 = arith.addf %55, %59 : vector<267x16xf32>
    %61 = vector.extract_strided_slice %1 {offsets = [54, 0], sizes = [267, 4], strides = [1, 1]} : vector<324x4xf32> to vector<267x4xf32>
    %c12 = arith.constant 12 : index
    %c0_38 = arith.constant 0 : index
    %c0_39 = arith.constant 0 : index
    %62 = vector.load %arg2[%c12, %c0_38, %c0_39] : memref<16x4x16xf32, #tpu.memory_space<vmem>>, vector<1x4x16xf32>
    %63 = vector.shape_cast %62 : vector<1x4x16xf32> to vector<4x16xf32>
    %cst_40 = arith.constant dense<0.000000e+00> : vector<267x16xf32>
    %64 = tpu.matmul %61, %63, %cst_40 {dimension_numbers = #tpu.dot_dimension_numbers<[1], [0], [0], [1], [0, 0, 1, 1], [], []>} : vector<267x4xf32>, vector<4x16xf32>, vector<267x16xf32> -> vector<267x16xf32>
    %65 = arith.addf %60, %64 : vector<267x16xf32>
    %66 = vector.extract_strided_slice %1 {offsets = [55, 0], sizes = [267, 4], strides = [1, 1]} : vector<324x4xf32> to vector<267x4xf32>
    %c13 = arith.constant 13 : index
    %c0_41 = arith.constant 0 : index
    %c0_42 = arith.constant 0 : index
    %67 = vector.load %arg2[%c13, %c0_41, %c0_42] : memref<16x4x16xf32, #tpu.memory_space<vmem>>, vector<1x4x16xf32>
    %68 = vector.shape_cast %67 : vector<1x4x16xf32> to vector<4x16xf32>
    %cst_43 = arith.constant dense<0.000000e+00> : vector<267x16xf32>
    %69 = tpu.matmul %66, %68, %cst_43 {dimension_numbers = #tpu.dot_dimension_numbers<[1], [0], [0], [1], [0, 0, 1, 1], [], []>} : vector<267x4xf32>, vector<4x16xf32>, vector<267x16xf32> -> vector<267x16xf32>
    %70 = arith.addf %65, %69 : vector<267x16xf32>
    %71 = vector.extract_strided_slice %1 {offsets = [56, 0], sizes = [267, 4], strides = [1, 1]} : vector<324x4xf32> to vector<267x4xf32>
    %c14 = arith.constant 14 : index
    %c0_44 = arith.constant 0 : index
    %c0_45 = arith.constant 0 : index
    %72 = vector.load %arg2[%c14, %c0_44, %c0_45] : memref<16x4x16xf32, #tpu.memory_space<vmem>>, vector<1x4x16xf32>
    %73 = vector.shape_cast %72 : vector<1x4x16xf32> to vector<4x16xf32>
    %cst_46 = arith.constant dense<0.000000e+00> : vector<267x16xf32>
    %74 = tpu.matmul %71, %73, %cst_46 {dimension_numbers = #tpu.dot_dimension_numbers<[1], [0], [0], [1], [0, 0, 1, 1], [], []>} : vector<267x4xf32>, vector<4x16xf32>, vector<267x16xf32> -> vector<267x16xf32>
    %75 = arith.addf %70, %74 : vector<267x16xf32>
    %76 = vector.extract_strided_slice %1 {offsets = [57, 0], sizes = [267, 4], strides = [1, 1]} : vector<324x4xf32> to vector<267x4xf32>
    %c15 = arith.constant 15 : index
    %c0_47 = arith.constant 0 : index
    %c0_48 = arith.constant 0 : index
    %77 = vector.load %arg2[%c15, %c0_47, %c0_48] : memref<16x4x16xf32, #tpu.memory_space<vmem>>, vector<1x4x16xf32>
    %78 = vector.shape_cast %77 : vector<1x4x16xf32> to vector<4x16xf32>
    %cst_49 = arith.constant dense<0.000000e+00> : vector<267x16xf32>
    %79 = tpu.matmul %76, %78, %cst_49 {dimension_numbers = #tpu.dot_dimension_numbers<[1], [0], [0], [1], [0, 0, 1, 1], [], []>} : vector<267x4xf32>, vector<4x16xf32>, vector<267x16xf32> -> vector<267x16xf32>
    %80 = arith.addf %75, %79 : vector<267x16xf32>
    %c0_50 = arith.constant 0 : index
    %c0_51 = arith.constant 0 : index
    %81 = vector.load %arg3[%c0_50, %c0_51] : memref<1x16xf32, #tpu.memory_space<vmem>>, vector<1x16xf32>
    %82 = vector.broadcast %81 : vector<1x16xf32> to vector<267x16xf32>
    %83 = arith.addf %80, %82 : vector<267x16xf32>
    %cst_52 = arith.constant 0.000000e+00 : f32
    %84 = vector.broadcast %cst_52 : f32 to vector<267x16xf32>
    %85 = arith.maximumf %83, %84 : vector<267x16xf32>
    %c0_53 = arith.constant 0 : index
    %c0_54 = arith.constant 0 : index
    %86 = vector.load %arg4[%c0_53, %c0_54] : memref<100x267xf32, #tpu.memory_space<vmem>>, vector<100x267xf32>
    %cst_55 = arith.constant dense<0.000000e+00> : vector<100x16xf32>
    %87 = tpu.matmul %86, %85, %cst_55 {dimension_numbers = #tpu.dot_dimension_numbers<[1], [0], [0], [1], [0, 0, 1, 1], [], []>} : vector<100x267xf32>, vector<267x16xf32>, vector<100x16xf32> -> vector<100x16xf32>
    %88 = vector.extract_strided_slice %87 {offsets = [0, 0], sizes = [67, 16], strides = [1, 1]} : vector<100x16xf32> to vector<67x16xf32>
    %c0_56 = arith.constant 0 : index
    %c0_57 = arith.constant 0 : index
    %c0_58 = arith.constant 0 : index
    %89 = vector.load %arg5[%c0_56, %c0_57, %c0_58] : memref<16x16x32xf32, #tpu.memory_space<vmem>>, vector<1x16x32xf32>
    %90 = vector.shape_cast %89 : vector<1x16x32xf32> to vector<16x32xf32>
    %cst_59 = arith.constant dense<0.000000e+00> : vector<67x32xf32>
    %91 = tpu.matmul %88, %90, %cst_59 {dimension_numbers = #tpu.dot_dimension_numbers<[1], [0], [0], [1], [0, 0, 1, 1], [], []>} : vector<67x16xf32>, vector<16x32xf32>, vector<67x32xf32> -> vector<67x32xf32>
    %92 = vector.extract_strided_slice %87 {offsets = [1, 0], sizes = [67, 16], strides = [1, 1]} : vector<100x16xf32> to vector<67x16xf32>
    %c1_60 = arith.constant 1 : index
    %c0_61 = arith.constant 0 : index
    %c0_62 = arith.constant 0 : index
    %93 = vector.load %arg5[%c1_60, %c0_61, %c0_62] : memref<16x16x32xf32, #tpu.memory_space<vmem>>, vector<1x16x32xf32>
    %94 = vector.shape_cast %93 : vector<1x16x32xf32> to vector<16x32xf32>
    %cst_63 = arith.constant dense<0.000000e+00> : vector<67x32xf32>
    %95 = tpu.matmul %92, %94, %cst_63 {dimension_numbers = #tpu.dot_dimension_numbers<[1], [0], [0], [1], [0, 0, 1, 1], [], []>} : vector<67x16xf32>, vector<16x32xf32>, vector<67x32xf32> -> vector<67x32xf32>
    %96 = arith.addf %91, %95 : vector<67x32xf32>
    %97 = vector.extract_strided_slice %87 {offsets = [2, 0], sizes = [67, 16], strides = [1, 1]} : vector<100x16xf32> to vector<67x16xf32>
    %c2_64 = arith.constant 2 : index
    %c0_65 = arith.constant 0 : index
    %c0_66 = arith.constant 0 : index
    %98 = vector.load %arg5[%c2_64, %c0_65, %c0_66] : memref<16x16x32xf32, #tpu.memory_space<vmem>>, vector<1x16x32xf32>
    %99 = vector.shape_cast %98 : vector<1x16x32xf32> to vector<16x32xf32>
    %cst_67 = arith.constant dense<0.000000e+00> : vector<67x32xf32>
    %100 = tpu.matmul %97, %99, %cst_67 {dimension_numbers = #tpu.dot_dimension_numbers<[1], [0], [0], [1], [0, 0, 1, 1], [], []>} : vector<67x16xf32>, vector<16x32xf32>, vector<67x32xf32> -> vector<67x32xf32>
    %101 = arith.addf %96, %100 : vector<67x32xf32>
    %102 = vector.extract_strided_slice %87 {offsets = [3, 0], sizes = [67, 16], strides = [1, 1]} : vector<100x16xf32> to vector<67x16xf32>
    %c3_68 = arith.constant 3 : index
    %c0_69 = arith.constant 0 : index
    %c0_70 = arith.constant 0 : index
    %103 = vector.load %arg5[%c3_68, %c0_69, %c0_70] : memref<16x16x32xf32, #tpu.memory_space<vmem>>, vector<1x16x32xf32>
    %104 = vector.shape_cast %103 : vector<1x16x32xf32> to vector<16x32xf32>
    %cst_71 = arith.constant dense<0.000000e+00> : vector<67x32xf32>
    %105 = tpu.matmul %102, %104, %cst_71 {dimension_numbers = #tpu.dot_dimension_numbers<[1], [0], [0], [1], [0, 0, 1, 1], [], []>} : vector<67x16xf32>, vector<16x32xf32>, vector<67x32xf32> -> vector<67x32xf32>
    %106 = arith.addf %101, %105 : vector<67x32xf32>
    %107 = vector.extract_strided_slice %87 {offsets = [10, 0], sizes = [67, 16], strides = [1, 1]} : vector<100x16xf32> to vector<67x16xf32>
    %c4_72 = arith.constant 4 : index
    %c0_73 = arith.constant 0 : index
    %c0_74 = arith.constant 0 : index
    %108 = vector.load %arg5[%c4_72, %c0_73, %c0_74] : memref<16x16x32xf32, #tpu.memory_space<vmem>>, vector<1x16x32xf32>
    %109 = vector.shape_cast %108 : vector<1x16x32xf32> to vector<16x32xf32>
    %cst_75 = arith.constant dense<0.000000e+00> : vector<67x32xf32>
    %110 = tpu.matmul %107, %109, %cst_75 {dimension_numbers = #tpu.dot_dimension_numbers<[1], [0], [0], [1], [0, 0, 1, 1], [], []>} : vector<67x16xf32>, vector<16x32xf32>, vector<67x32xf32> -> vector<67x32xf32>
    %111 = arith.addf %106, %110 : vector<67x32xf32>
    %112 = vector.extract_strided_slice %87 {offsets = [11, 0], sizes = [67, 16], strides = [1, 1]} : vector<100x16xf32> to vector<67x16xf32>
    %c5_76 = arith.constant 5 : index
    %c0_77 = arith.constant 0 : index
    %c0_78 = arith.constant 0 : index
    %113 = vector.load %arg5[%c5_76, %c0_77, %c0_78] : memref<16x16x32xf32, #tpu.memory_space<vmem>>, vector<1x16x32xf32>
    %114 = vector.shape_cast %113 : vector<1x16x32xf32> to vector<16x32xf32>
    %cst_79 = arith.constant dense<0.000000e+00> : vector<67x32xf32>
    %115 = tpu.matmul %112, %114, %cst_79 {dimension_numbers = #tpu.dot_dimension_numbers<[1], [0], [0], [1], [0, 0, 1, 1], [], []>} : vector<67x16xf32>, vector<16x32xf32>, vector<67x32xf32> -> vector<67x32xf32>
    %116 = arith.addf %111, %115 : vector<67x32xf32>
    %117 = vector.extract_strided_slice %87 {offsets = [12, 0], sizes = [67, 16], strides = [1, 1]} : vector<100x16xf32> to vector<67x16xf32>
    %c6_80 = arith.constant 6 : index
    %c0_81 = arith.constant 0 : index
    %c0_82 = arith.constant 0 : index
    %118 = vector.load %arg5[%c6_80, %c0_81, %c0_82] : memref<16x16x32xf32, #tpu.memory_space<vmem>>, vector<1x16x32xf32>
    %119 = vector.shape_cast %118 : vector<1x16x32xf32> to vector<16x32xf32>
    %cst_83 = arith.constant dense<0.000000e+00> : vector<67x32xf32>
    %120 = tpu.matmul %117, %119, %cst_83 {dimension_numbers = #tpu.dot_dimension_numbers<[1], [0], [0], [1], [0, 0, 1, 1], [], []>} : vector<67x16xf32>, vector<16x32xf32>, vector<67x32xf32> -> vector<67x32xf32>
    %121 = arith.addf %116, %120 : vector<67x32xf32>
    %122 = vector.extract_strided_slice %87 {offsets = [13, 0], sizes = [67, 16], strides = [1, 1]} : vector<100x16xf32> to vector<67x16xf32>
    %c7_84 = arith.constant 7 : index
    %c0_85 = arith.constant 0 : index
    %c0_86 = arith.constant 0 : index
    %123 = vector.load %arg5[%c7_84, %c0_85, %c0_86] : memref<16x16x32xf32, #tpu.memory_space<vmem>>, vector<1x16x32xf32>
    %124 = vector.shape_cast %123 : vector<1x16x32xf32> to vector<16x32xf32>
    %cst_87 = arith.constant dense<0.000000e+00> : vector<67x32xf32>
    %125 = tpu.matmul %122, %124, %cst_87 {dimension_numbers = #tpu.dot_dimension_numbers<[1], [0], [0], [1], [0, 0, 1, 1], [], []>} : vector<67x16xf32>, vector<16x32xf32>, vector<67x32xf32> -> vector<67x32xf32>
    %126 = arith.addf %121, %125 : vector<67x32xf32>
    %127 = vector.extract_strided_slice %87 {offsets = [20, 0], sizes = [67, 16], strides = [1, 1]} : vector<100x16xf32> to vector<67x16xf32>
    %c8_88 = arith.constant 8 : index
    %c0_89 = arith.constant 0 : index
    %c0_90 = arith.constant 0 : index
    %128 = vector.load %arg5[%c8_88, %c0_89, %c0_90] : memref<16x16x32xf32, #tpu.memory_space<vmem>>, vector<1x16x32xf32>
    %129 = vector.shape_cast %128 : vector<1x16x32xf32> to vector<16x32xf32>
    %cst_91 = arith.constant dense<0.000000e+00> : vector<67x32xf32>
    %130 = tpu.matmul %127, %129, %cst_91 {dimension_numbers = #tpu.dot_dimension_numbers<[1], [0], [0], [1], [0, 0, 1, 1], [], []>} : vector<67x16xf32>, vector<16x32xf32>, vector<67x32xf32> -> vector<67x32xf32>
    %131 = arith.addf %126, %130 : vector<67x32xf32>
    %132 = vector.extract_strided_slice %87 {offsets = [21, 0], sizes = [67, 16], strides = [1, 1]} : vector<100x16xf32> to vector<67x16xf32>
    %c9_92 = arith.constant 9 : index
    %c0_93 = arith.constant 0 : index
    %c0_94 = arith.constant 0 : index
    %133 = vector.load %arg5[%c9_92, %c0_93, %c0_94] : memref<16x16x32xf32, #tpu.memory_space<vmem>>, vector<1x16x32xf32>
    %134 = vector.shape_cast %133 : vector<1x16x32xf32> to vector<16x32xf32>
    %cst_95 = arith.constant dense<0.000000e+00> : vector<67x32xf32>
    %135 = tpu.matmul %132, %134, %cst_95 {dimension_numbers = #tpu.dot_dimension_numbers<[1], [0], [0], [1], [0, 0, 1, 1], [], []>} : vector<67x16xf32>, vector<16x32xf32>, vector<67x32xf32> -> vector<67x32xf32>
    %136 = arith.addf %131, %135 : vector<67x32xf32>
    %137 = vector.extract_strided_slice %87 {offsets = [22, 0], sizes = [67, 16], strides = [1, 1]} : vector<100x16xf32> to vector<67x16xf32>
    %c10_96 = arith.constant 10 : index
    %c0_97 = arith.constant 0 : index
    %c0_98 = arith.constant 0 : index
    %138 = vector.load %arg5[%c10_96, %c0_97, %c0_98] : memref<16x16x32xf32, #tpu.memory_space<vmem>>, vector<1x16x32xf32>
    %139 = vector.shape_cast %138 : vector<1x16x32xf32> to vector<16x32xf32>
    %cst_99 = arith.constant dense<0.000000e+00> : vector<67x32xf32>
    %140 = tpu.matmul %137, %139, %cst_99 {dimension_numbers = #tpu.dot_dimension_numbers<[1], [0], [0], [1], [0, 0, 1, 1], [], []>} : vector<67x16xf32>, vector<16x32xf32>, vector<67x32xf32> -> vector<67x32xf32>
    %141 = arith.addf %136, %140 : vector<67x32xf32>
    %142 = vector.extract_strided_slice %87 {offsets = [23, 0], sizes = [67, 16], strides = [1, 1]} : vector<100x16xf32> to vector<67x16xf32>
    %c11_100 = arith.constant 11 : index
    %c0_101 = arith.constant 0 : index
    %c0_102 = arith.constant 0 : index
    %143 = vector.load %arg5[%c11_100, %c0_101, %c0_102] : memref<16x16x32xf32, #tpu.memory_space<vmem>>, vector<1x16x32xf32>
    %144 = vector.shape_cast %143 : vector<1x16x32xf32> to vector<16x32xf32>
    %cst_103 = arith.constant dense<0.000000e+00> : vector<67x32xf32>
    %145 = tpu.matmul %142, %144, %cst_103 {dimension_numbers = #tpu.dot_dimension_numbers<[1], [0], [0], [1], [0, 0, 1, 1], [], []>} : vector<67x16xf32>, vector<16x32xf32>, vector<67x32xf32> -> vector<67x32xf32>
    %146 = arith.addf %141, %145 : vector<67x32xf32>
    %147 = vector.extract_strided_slice %87 {offsets = [30, 0], sizes = [67, 16], strides = [1, 1]} : vector<100x16xf32> to vector<67x16xf32>
    %c12_104 = arith.constant 12 : index
    %c0_105 = arith.constant 0 : index
    %c0_106 = arith.constant 0 : index
    %148 = vector.load %arg5[%c12_104, %c0_105, %c0_106] : memref<16x16x32xf32, #tpu.memory_space<vmem>>, vector<1x16x32xf32>
    %149 = vector.shape_cast %148 : vector<1x16x32xf32> to vector<16x32xf32>
    %cst_107 = arith.constant dense<0.000000e+00> : vector<67x32xf32>
    %150 = tpu.matmul %147, %149, %cst_107 {dimension_numbers = #tpu.dot_dimension_numbers<[1], [0], [0], [1], [0, 0, 1, 1], [], []>} : vector<67x16xf32>, vector<16x32xf32>, vector<67x32xf32> -> vector<67x32xf32>
    %151 = arith.addf %146, %150 : vector<67x32xf32>
    %152 = vector.extract_strided_slice %87 {offsets = [31, 0], sizes = [67, 16], strides = [1, 1]} : vector<100x16xf32> to vector<67x16xf32>
    %c13_108 = arith.constant 13 : index
    %c0_109 = arith.constant 0 : index
    %c0_110 = arith.constant 0 : index
    %153 = vector.load %arg5[%c13_108, %c0_109, %c0_110] : memref<16x16x32xf32, #tpu.memory_space<vmem>>, vector<1x16x32xf32>
    %154 = vector.shape_cast %153 : vector<1x16x32xf32> to vector<16x32xf32>
    %cst_111 = arith.constant dense<0.000000e+00> : vector<67x32xf32>
    %155 = tpu.matmul %152, %154, %cst_111 {dimension_numbers = #tpu.dot_dimension_numbers<[1], [0], [0], [1], [0, 0, 1, 1], [], []>} : vector<67x16xf32>, vector<16x32xf32>, vector<67x32xf32> -> vector<67x32xf32>
    %156 = arith.addf %151, %155 : vector<67x32xf32>
    %157 = vector.extract_strided_slice %87 {offsets = [32, 0], sizes = [67, 16], strides = [1, 1]} : vector<100x16xf32> to vector<67x16xf32>
    %c14_112 = arith.constant 14 : index
    %c0_113 = arith.constant 0 : index
    %c0_114 = arith.constant 0 : index
    %158 = vector.load %arg5[%c14_112, %c0_113, %c0_114] : memref<16x16x32xf32, #tpu.memory_space<vmem>>, vector<1x16x32xf32>
    %159 = vector.shape_cast %158 : vector<1x16x32xf32> to vector<16x32xf32>
    %cst_115 = arith.constant dense<0.000000e+00> : vector<67x32xf32>
    %160 = tpu.matmul %157, %159, %cst_115 {dimension_numbers = #tpu.dot_dimension_numbers<[1], [0], [0], [1], [0, 0, 1, 1], [], []>} : vector<67x16xf32>, vector<16x32xf32>, vector<67x32xf32> -> vector<67x32xf32>
    %161 = arith.addf %156, %160 : vector<67x32xf32>
    %162 = vector.extract_strided_slice %87 {offsets = [33, 0], sizes = [67, 16], strides = [1, 1]} : vector<100x16xf32> to vector<67x16xf32>
    %c15_116 = arith.constant 15 : index
    %c0_117 = arith.constant 0 : index
    %c0_118 = arith.constant 0 : index
    %163 = vector.load %arg5[%c15_116, %c0_117, %c0_118] : memref<16x16x32xf32, #tpu.memory_space<vmem>>, vector<1x16x32xf32>
    %164 = vector.shape_cast %163 : vector<1x16x32xf32> to vector<16x32xf32>
    %cst_119 = arith.constant dense<0.000000e+00> : vector<67x32xf32>
    %165 = tpu.matmul %162, %164, %cst_119 {dimension_numbers = #tpu.dot_dimension_numbers<[1], [0], [0], [1], [0, 0, 1, 1], [], []>} : vector<67x16xf32>, vector<16x32xf32>, vector<67x32xf32> -> vector<67x32xf32>
    %166 = arith.addf %161, %165 : vector<67x32xf32>
    %c0_120 = arith.constant 0 : index
    %c0_121 = arith.constant 0 : index
    %167 = vector.load %arg6[%c0_120, %c0_121] : memref<1x32xf32, #tpu.memory_space<vmem>>, vector<1x32xf32>
    %168 = vector.broadcast %167 : vector<1x32xf32> to vector<67x32xf32>
    %169 = arith.addf %166, %168 : vector<67x32xf32>
    %cst_122 = arith.constant 0.000000e+00 : f32
    %170 = vector.broadcast %cst_122 : f32 to vector<67x32xf32>
    %171 = arith.maximumf %169, %170 : vector<67x32xf32>
    %c0_123 = arith.constant 0 : index
    %c0_124 = arith.constant 0 : index
    %172 = vector.load %arg7[%c0_123, %c0_124] : memref<36x67xf32, #tpu.memory_space<vmem>>, vector<36x67xf32>
    %cst_125 = arith.constant dense<0.000000e+00> : vector<36x32xf32>
    %173 = tpu.matmul %172, %171, %cst_125 {dimension_numbers = #tpu.dot_dimension_numbers<[1], [0], [0], [1], [0, 0, 1, 1], [], []>} : vector<36x67xf32>, vector<67x32xf32>, vector<36x32xf32> -> vector<36x32xf32>
    %174 = vector.extract_strided_slice %173 {offsets = [0, 0], sizes = [22, 32], strides = [1, 1]} : vector<36x32xf32> to vector<22x32xf32>
    %c0_126 = arith.constant 0 : index
    %c0_127 = arith.constant 0 : index
    %c0_128 = arith.constant 0 : index
    %175 = vector.load %arg8[%c0_126, %c0_127, %c0_128] : memref<9x32x32xf32, #tpu.memory_space<vmem>>, vector<1x32x32xf32>
    %176 = vector.shape_cast %175 : vector<1x32x32xf32> to vector<32x32xf32>
    %cst_129 = arith.constant dense<0.000000e+00> : vector<22x32xf32>
    %177 = tpu.matmul %174, %176, %cst_129 {dimension_numbers = #tpu.dot_dimension_numbers<[1], [0], [0], [1], [0, 0, 1, 1], [], []>} : vector<22x32xf32>, vector<32x32xf32>, vector<22x32xf32> -> vector<22x32xf32>
    %178 = vector.extract_strided_slice %173 {offsets = [1, 0], sizes = [22, 32], strides = [1, 1]} : vector<36x32xf32> to vector<22x32xf32>
    %c1_130 = arith.constant 1 : index
    %c0_131 = arith.constant 0 : index
    %c0_132 = arith.constant 0 : index
    %179 = vector.load %arg8[%c1_130, %c0_131, %c0_132] : memref<9x32x32xf32, #tpu.memory_space<vmem>>, vector<1x32x32xf32>
    %180 = vector.shape_cast %179 : vector<1x32x32xf32> to vector<32x32xf32>
    %cst_133 = arith.constant dense<0.000000e+00> : vector<22x32xf32>
    %181 = tpu.matmul %178, %180, %cst_133 {dimension_numbers = #tpu.dot_dimension_numbers<[1], [0], [0], [1], [0, 0, 1, 1], [], []>} : vector<22x32xf32>, vector<32x32xf32>, vector<22x32xf32> -> vector<22x32xf32>
    %182 = arith.addf %177, %181 : vector<22x32xf32>
    %183 = vector.extract_strided_slice %173 {offsets = [2, 0], sizes = [22, 32], strides = [1, 1]} : vector<36x32xf32> to vector<22x32xf32>
    %c2_134 = arith.constant 2 : index
    %c0_135 = arith.constant 0 : index
    %c0_136 = arith.constant 0 : index
    %184 = vector.load %arg8[%c2_134, %c0_135, %c0_136] : memref<9x32x32xf32, #tpu.memory_space<vmem>>, vector<1x32x32xf32>
    %185 = vector.shape_cast %184 : vector<1x32x32xf32> to vector<32x32xf32>
    %cst_137 = arith.constant dense<0.000000e+00> : vector<22x32xf32>
    %186 = tpu.matmul %183, %185, %cst_137 {dimension_numbers = #tpu.dot_dimension_numbers<[1], [0], [0], [1], [0, 0, 1, 1], [], []>} : vector<22x32xf32>, vector<32x32xf32>, vector<22x32xf32> -> vector<22x32xf32>
    %187 = arith.addf %182, %186 : vector<22x32xf32>
    %188 = vector.extract_strided_slice %173 {offsets = [6, 0], sizes = [22, 32], strides = [1, 1]} : vector<36x32xf32> to vector<22x32xf32>
    %c3_138 = arith.constant 3 : index
    %c0_139 = arith.constant 0 : index
    %c0_140 = arith.constant 0 : index
    %189 = vector.load %arg8[%c3_138, %c0_139, %c0_140] : memref<9x32x32xf32, #tpu.memory_space<vmem>>, vector<1x32x32xf32>
    %190 = vector.shape_cast %189 : vector<1x32x32xf32> to vector<32x32xf32>
    %cst_141 = arith.constant dense<0.000000e+00> : vector<22x32xf32>
    %191 = tpu.matmul %188, %190, %cst_141 {dimension_numbers = #tpu.dot_dimension_numbers<[1], [0], [0], [1], [0, 0, 1, 1], [], []>} : vector<22x32xf32>, vector<32x32xf32>, vector<22x32xf32> -> vector<22x32xf32>
    %192 = arith.addf %187, %191 : vector<22x32xf32>
    %193 = vector.extract_strided_slice %173 {offsets = [7, 0], sizes = [22, 32], strides = [1, 1]} : vector<36x32xf32> to vector<22x32xf32>
    %c4_142 = arith.constant 4 : index
    %c0_143 = arith.constant 0 : index
    %c0_144 = arith.constant 0 : index
    %194 = vector.load %arg8[%c4_142, %c0_143, %c0_144] : memref<9x32x32xf32, #tpu.memory_space<vmem>>, vector<1x32x32xf32>
    %195 = vector.shape_cast %194 : vector<1x32x32xf32> to vector<32x32xf32>
    %cst_145 = arith.constant dense<0.000000e+00> : vector<22x32xf32>
    %196 = tpu.matmul %193, %195, %cst_145 {dimension_numbers = #tpu.dot_dimension_numbers<[1], [0], [0], [1], [0, 0, 1, 1], [], []>} : vector<22x32xf32>, vector<32x32xf32>, vector<22x32xf32> -> vector<22x32xf32>
    %197 = arith.addf %192, %196 : vector<22x32xf32>
    %198 = vector.extract_strided_slice %173 {offsets = [8, 0], sizes = [22, 32], strides = [1, 1]} : vector<36x32xf32> to vector<22x32xf32>
    %c5_146 = arith.constant 5 : index
    %c0_147 = arith.constant 0 : index
    %c0_148 = arith.constant 0 : index
    %199 = vector.load %arg8[%c5_146, %c0_147, %c0_148] : memref<9x32x32xf32, #tpu.memory_space<vmem>>, vector<1x32x32xf32>
    %200 = vector.shape_cast %199 : vector<1x32x32xf32> to vector<32x32xf32>
    %cst_149 = arith.constant dense<0.000000e+00> : vector<22x32xf32>
    %201 = tpu.matmul %198, %200, %cst_149 {dimension_numbers = #tpu.dot_dimension_numbers<[1], [0], [0], [1], [0, 0, 1, 1], [], []>} : vector<22x32xf32>, vector<32x32xf32>, vector<22x32xf32> -> vector<22x32xf32>
    %202 = arith.addf %197, %201 : vector<22x32xf32>
    %203 = vector.extract_strided_slice %173 {offsets = [12, 0], sizes = [22, 32], strides = [1, 1]} : vector<36x32xf32> to vector<22x32xf32>
    %c6_150 = arith.constant 6 : index
    %c0_151 = arith.constant 0 : index
    %c0_152 = arith.constant 0 : index
    %204 = vector.load %arg8[%c6_150, %c0_151, %c0_152] : memref<9x32x32xf32, #tpu.memory_space<vmem>>, vector<1x32x32xf32>
    %205 = vector.shape_cast %204 : vector<1x32x32xf32> to vector<32x32xf32>
    %cst_153 = arith.constant dense<0.000000e+00> : vector<22x32xf32>
    %206 = tpu.matmul %203, %205, %cst_153 {dimension_numbers = #tpu.dot_dimension_numbers<[1], [0], [0], [1], [0, 0, 1, 1], [], []>} : vector<22x32xf32>, vector<32x32xf32>, vector<22x32xf32> -> vector<22x32xf32>
    %207 = arith.addf %202, %206 : vector<22x32xf32>
    %208 = vector.extract_strided_slice %173 {offsets = [13, 0], sizes = [22, 32], strides = [1, 1]} : vector<36x32xf32> to vector<22x32xf32>
    %c7_154 = arith.constant 7 : index
    %c0_155 = arith.constant 0 : index
    %c0_156 = arith.constant 0 : index
    %209 = vector.load %arg8[%c7_154, %c0_155, %c0_156] : memref<9x32x32xf32, #tpu.memory_space<vmem>>, vector<1x32x32xf32>
    %210 = vector.shape_cast %209 : vector<1x32x32xf32> to vector<32x32xf32>
    %cst_157 = arith.constant dense<0.000000e+00> : vector<22x32xf32>
    %211 = tpu.matmul %208, %210, %cst_157 {dimension_numbers = #tpu.dot_dimension_numbers<[1], [0], [0], [1], [0, 0, 1, 1], [], []>} : vector<22x32xf32>, vector<32x32xf32>, vector<22x32xf32> -> vector<22x32xf32>
    %212 = arith.addf %207, %211 : vector<22x32xf32>
    %213 = vector.extract_strided_slice %173 {offsets = [14, 0], sizes = [22, 32], strides = [1, 1]} : vector<36x32xf32> to vector<22x32xf32>
    %c8_158 = arith.constant 8 : index
    %c0_159 = arith.constant 0 : index
    %c0_160 = arith.constant 0 : index
    %214 = vector.load %arg8[%c8_158, %c0_159, %c0_160] : memref<9x32x32xf32, #tpu.memory_space<vmem>>, vector<1x32x32xf32>
    %215 = vector.shape_cast %214 : vector<1x32x32xf32> to vector<32x32xf32>
    %cst_161 = arith.constant dense<0.000000e+00> : vector<22x32xf32>
    %216 = tpu.matmul %213, %215, %cst_161 {dimension_numbers = #tpu.dot_dimension_numbers<[1], [0], [0], [1], [0, 0, 1, 1], [], []>} : vector<22x32xf32>, vector<32x32xf32>, vector<22x32xf32> -> vector<22x32xf32>
    %217 = arith.addf %212, %216 : vector<22x32xf32>
    %c0_162 = arith.constant 0 : index
    %c0_163 = arith.constant 0 : index
    %218 = vector.load %arg9[%c0_162, %c0_163] : memref<1x32xf32, #tpu.memory_space<vmem>>, vector<1x32xf32>
    %219 = vector.broadcast %218 : vector<1x32xf32> to vector<22x32xf32>
    %220 = arith.addf %217, %219 : vector<22x32xf32>
    %c0_164 = arith.constant 0 : index
    %c0_165 = arith.constant 0 : index
    %221 = vector.load %arg10[%c0_164, %c0_165] : memref<36x22xf32, #tpu.memory_space<vmem>>, vector<36x22xf32>
    %cst_166 = arith.constant dense<0.000000e+00> : vector<36x32xf32>
    %222 = tpu.matmul %221, %220, %cst_166 {dimension_numbers = #tpu.dot_dimension_numbers<[1], [0], [0], [1], [0, 0, 1, 1], [], []>} : vector<36x22xf32>, vector<22x32xf32>, vector<36x32xf32> -> vector<36x32xf32>
    %cst_167 = arith.constant 0.000000e+00 : f32
    %223 = vector.broadcast %cst_167 : f32 to vector<36x32xf32>
    %224 = arith.maximumf %222, %223 : vector<36x32xf32>
    %225 = vector.extract_strided_slice %224 {offsets = [0, 0], sizes = [22, 32], strides = [1, 1]} : vector<36x32xf32> to vector<22x32xf32>
    %c0_168 = arith.constant 0 : index
    %c0_169 = arith.constant 0 : index
    %c0_170 = arith.constant 0 : index
    %226 = vector.load %arg11[%c0_168, %c0_169, %c0_170] : memref<9x32x8xf32, #tpu.memory_space<vmem>>, vector<1x32x8xf32>
    %227 = vector.shape_cast %226 : vector<1x32x8xf32> to vector<32x8xf32>
    %cst_171 = arith.constant dense<0.000000e+00> : vector<22x8xf32>
    %228 = tpu.matmul %225, %227, %cst_171 {dimension_numbers = #tpu.dot_dimension_numbers<[1], [0], [0], [1], [0, 0, 1, 1], [], []>} : vector<22x32xf32>, vector<32x8xf32>, vector<22x8xf32> -> vector<22x8xf32>
    %229 = vector.extract_strided_slice %224 {offsets = [1, 0], sizes = [22, 32], strides = [1, 1]} : vector<36x32xf32> to vector<22x32xf32>
    %c1_172 = arith.constant 1 : index
    %c0_173 = arith.constant 0 : index
    %c0_174 = arith.constant 0 : index
    %230 = vector.load %arg11[%c1_172, %c0_173, %c0_174] : memref<9x32x8xf32, #tpu.memory_space<vmem>>, vector<1x32x8xf32>
    %231 = vector.shape_cast %230 : vector<1x32x8xf32> to vector<32x8xf32>
    %cst_175 = arith.constant dense<0.000000e+00> : vector<22x8xf32>
    %232 = tpu.matmul %229, %231, %cst_175 {dimension_numbers = #tpu.dot_dimension_numbers<[1], [0], [0], [1], [0, 0, 1, 1], [], []>} : vector<22x32xf32>, vector<32x8xf32>, vector<22x8xf32> -> vector<22x8xf32>
    %233 = arith.addf %228, %232 : vector<22x8xf32>
    %234 = vector.extract_strided_slice %224 {offsets = [2, 0], sizes = [22, 32], strides = [1, 1]} : vector<36x32xf32> to vector<22x32xf32>
    %c2_176 = arith.constant 2 : index
    %c0_177 = arith.constant 0 : index
    %c0_178 = arith.constant 0 : index
    %235 = vector.load %arg11[%c2_176, %c0_177, %c0_178] : memref<9x32x8xf32, #tpu.memory_space<vmem>>, vector<1x32x8xf32>
    %236 = vector.shape_cast %235 : vector<1x32x8xf32> to vector<32x8xf32>
    %cst_179 = arith.constant dense<0.000000e+00> : vector<22x8xf32>
    %237 = tpu.matmul %234, %236, %cst_179 {dimension_numbers = #tpu.dot_dimension_numbers<[1], [0], [0], [1], [0, 0, 1, 1], [], []>} : vector<22x32xf32>, vector<32x8xf32>, vector<22x8xf32> -> vector<22x8xf32>
    %238 = arith.addf %233, %237 : vector<22x8xf32>
    %239 = vector.extract_strided_slice %224 {offsets = [6, 0], sizes = [22, 32], strides = [1, 1]} : vector<36x32xf32> to vector<22x32xf32>
    %c3_180 = arith.constant 3 : index
    %c0_181 = arith.constant 0 : index
    %c0_182 = arith.constant 0 : index
    %240 = vector.load %arg11[%c3_180, %c0_181, %c0_182] : memref<9x32x8xf32, #tpu.memory_space<vmem>>, vector<1x32x8xf32>
    %241 = vector.shape_cast %240 : vector<1x32x8xf32> to vector<32x8xf32>
    %cst_183 = arith.constant dense<0.000000e+00> : vector<22x8xf32>
    %242 = tpu.matmul %239, %241, %cst_183 {dimension_numbers = #tpu.dot_dimension_numbers<[1], [0], [0], [1], [0, 0, 1, 1], [], []>} : vector<22x32xf32>, vector<32x8xf32>, vector<22x8xf32> -> vector<22x8xf32>
    %243 = arith.addf %238, %242 : vector<22x8xf32>
    %244 = vector.extract_strided_slice %224 {offsets = [7, 0], sizes = [22, 32], strides = [1, 1]} : vector<36x32xf32> to vector<22x32xf32>
    %c4_184 = arith.constant 4 : index
    %c0_185 = arith.constant 0 : index
    %c0_186 = arith.constant 0 : index
    %245 = vector.load %arg11[%c4_184, %c0_185, %c0_186] : memref<9x32x8xf32, #tpu.memory_space<vmem>>, vector<1x32x8xf32>
    %246 = vector.shape_cast %245 : vector<1x32x8xf32> to vector<32x8xf32>
    %cst_187 = arith.constant dense<0.000000e+00> : vector<22x8xf32>
    %247 = tpu.matmul %244, %246, %cst_187 {dimension_numbers = #tpu.dot_dimension_numbers<[1], [0], [0], [1], [0, 0, 1, 1], [], []>} : vector<22x32xf32>, vector<32x8xf32>, vector<22x8xf32> -> vector<22x8xf32>
    %248 = arith.addf %243, %247 : vector<22x8xf32>
    %249 = vector.extract_strided_slice %224 {offsets = [8, 0], sizes = [22, 32], strides = [1, 1]} : vector<36x32xf32> to vector<22x32xf32>
    %c5_188 = arith.constant 5 : index
    %c0_189 = arith.constant 0 : index
    %c0_190 = arith.constant 0 : index
    %250 = vector.load %arg11[%c5_188, %c0_189, %c0_190] : memref<9x32x8xf32, #tpu.memory_space<vmem>>, vector<1x32x8xf32>
    %251 = vector.shape_cast %250 : vector<1x32x8xf32> to vector<32x8xf32>
    %cst_191 = arith.constant dense<0.000000e+00> : vector<22x8xf32>
    %252 = tpu.matmul %249, %251, %cst_191 {dimension_numbers = #tpu.dot_dimension_numbers<[1], [0], [0], [1], [0, 0, 1, 1], [], []>} : vector<22x32xf32>, vector<32x8xf32>, vector<22x8xf32> -> vector<22x8xf32>
    %253 = arith.addf %248, %252 : vector<22x8xf32>
    %254 = vector.extract_strided_slice %224 {offsets = [12, 0], sizes = [22, 32], strides = [1, 1]} : vector<36x32xf32> to vector<22x32xf32>
    %c6_192 = arith.constant 6 : index
    %c0_193 = arith.constant 0 : index
    %c0_194 = arith.constant 0 : index
    %255 = vector.load %arg11[%c6_192, %c0_193, %c0_194] : memref<9x32x8xf32, #tpu.memory_space<vmem>>, vector<1x32x8xf32>
    %256 = vector.shape_cast %255 : vector<1x32x8xf32> to vector<32x8xf32>
    %cst_195 = arith.constant dense<0.000000e+00> : vector<22x8xf32>
    %257 = tpu.matmul %254, %256, %cst_195 {dimension_numbers = #tpu.dot_dimension_numbers<[1], [0], [0], [1], [0, 0, 1, 1], [], []>} : vector<22x32xf32>, vector<32x8xf32>, vector<22x8xf32> -> vector<22x8xf32>
    %258 = arith.addf %253, %257 : vector<22x8xf32>
    %259 = vector.extract_strided_slice %224 {offsets = [13, 0], sizes = [22, 32], strides = [1, 1]} : vector<36x32xf32> to vector<22x32xf32>
    %c7_196 = arith.constant 7 : index
    %c0_197 = arith.constant 0 : index
    %c0_198 = arith.constant 0 : index
    %260 = vector.load %arg11[%c7_196, %c0_197, %c0_198] : memref<9x32x8xf32, #tpu.memory_space<vmem>>, vector<1x32x8xf32>
    %261 = vector.shape_cast %260 : vector<1x32x8xf32> to vector<32x8xf32>
    %cst_199 = arith.constant dense<0.000000e+00> : vector<22x8xf32>
    %262 = tpu.matmul %259, %261, %cst_199 {dimension_numbers = #tpu.dot_dimension_numbers<[1], [0], [0], [1], [0, 0, 1, 1], [], []>} : vector<22x32xf32>, vector<32x8xf32>, vector<22x8xf32> -> vector<22x8xf32>
    %263 = arith.addf %258, %262 : vector<22x8xf32>
    %264 = vector.extract_strided_slice %224 {offsets = [14, 0], sizes = [22, 32], strides = [1, 1]} : vector<36x32xf32> to vector<22x32xf32>
    %c8_200 = arith.constant 8 : index
    %c0_201 = arith.constant 0 : index
    %c0_202 = arith.constant 0 : index
    %265 = vector.load %arg11[%c8_200, %c0_201, %c0_202] : memref<9x32x8xf32, #tpu.memory_space<vmem>>, vector<1x32x8xf32>
    %266 = vector.shape_cast %265 : vector<1x32x8xf32> to vector<32x8xf32>
    %cst_203 = arith.constant dense<0.000000e+00> : vector<22x8xf32>
    %267 = tpu.matmul %264, %266, %cst_203 {dimension_numbers = #tpu.dot_dimension_numbers<[1], [0], [0], [1], [0, 0, 1, 1], [], []>} : vector<22x32xf32>, vector<32x8xf32>, vector<22x8xf32> -> vector<22x8xf32>
    %268 = arith.addf %263, %267 : vector<22x8xf32>
    %cst_204 = arith.constant 0.000000e+00 : f32
    %269 = vector.broadcast %cst_204 : f32 to vector<22x8xf32>
    %270 = arith.maximumf %268, %269 : vector<22x8xf32>
    %c0_205 = arith.constant 0 : index
    %c0_206 = arith.constant 0 : index
    %271 = vector.load %arg12[%c0_205, %c0_206] : memref<8x32xf32, #tpu.memory_space<vmem>>, vector<8x32xf32>
    %cst_207 = arith.constant dense<0.000000e+00> : vector<22x32xf32>
    %272 = tpu.matmul %270, %271, %cst_207 {dimension_numbers = #tpu.dot_dimension_numbers<[1], [0], [0], [1], [0, 0, 1, 1], [], []>} : vector<22x8xf32>, vector<8x32xf32>, vector<22x32xf32> -> vector<22x32xf32>
    %c0_208 = arith.constant 0 : index
    %c0_209 = arith.constant 0 : index
    %273 = vector.load %arg10[%c0_208, %c0_209] : memref<36x22xf32, #tpu.memory_space<vmem>>, vector<36x22xf32>
    %cst_210 = arith.constant dense<0.000000e+00> : vector<36x32xf32>
    %274 = tpu.matmul %273, %272, %cst_210 {dimension_numbers = #tpu.dot_dimension_numbers<[1], [0], [0], [1], [0, 0, 1, 1], [], []>} : vector<36x22xf32>, vector<22x32xf32>, vector<36x32xf32> -> vector<36x32xf32>
    %275 = arith.addf %222, %274 : vector<36x32xf32>
    %cst_211 = arith.constant 0.000000e+00 : f32
    %276 = vector.broadcast %cst_211 : f32 to vector<36x32xf32>
    %277 = arith.maximumf %275, %276 : vector<36x32xf32>
    %278 = vector.extract_strided_slice %277 {offsets = [0, 0], sizes = [22, 32], strides = [1, 1]} : vector<36x32xf32> to vector<22x32xf32>
    %c0_212 = arith.constant 0 : index
    %c0_213 = arith.constant 0 : index
    %c0_214 = arith.constant 0 : index
    %279 = vector.load %arg13[%c0_212, %c0_213, %c0_214] : memref<9x32x8xf32, #tpu.memory_space<vmem>>, vector<1x32x8xf32>
    %280 = vector.shape_cast %279 : vector<1x32x8xf32> to vector<32x8xf32>
    %cst_215 = arith.constant dense<0.000000e+00> : vector<22x8xf32>
    %281 = tpu.matmul %278, %280, %cst_215 {dimension_numbers = #tpu.dot_dimension_numbers<[1], [0], [0], [1], [0, 0, 1, 1], [], []>} : vector<22x32xf32>, vector<32x8xf32>, vector<22x8xf32> -> vector<22x8xf32>
    %282 = vector.extract_strided_slice %277 {offsets = [1, 0], sizes = [22, 32], strides = [1, 1]} : vector<36x32xf32> to vector<22x32xf32>
    %c1_216 = arith.constant 1 : index
    %c0_217 = arith.constant 0 : index
    %c0_218 = arith.constant 0 : index
    %283 = vector.load %arg13[%c1_216, %c0_217, %c0_218] : memref<9x32x8xf32, #tpu.memory_space<vmem>>, vector<1x32x8xf32>
    %284 = vector.shape_cast %283 : vector<1x32x8xf32> to vector<32x8xf32>
    %cst_219 = arith.constant dense<0.000000e+00> : vector<22x8xf32>
    %285 = tpu.matmul %282, %284, %cst_219 {dimension_numbers = #tpu.dot_dimension_numbers<[1], [0], [0], [1], [0, 0, 1, 1], [], []>} : vector<22x32xf32>, vector<32x8xf32>, vector<22x8xf32> -> vector<22x8xf32>
    %286 = arith.addf %281, %285 : vector<22x8xf32>
    %287 = vector.extract_strided_slice %277 {offsets = [2, 0], sizes = [22, 32], strides = [1, 1]} : vector<36x32xf32> to vector<22x32xf32>
    %c2_220 = arith.constant 2 : index
    %c0_221 = arith.constant 0 : index
    %c0_222 = arith.constant 0 : index
    %288 = vector.load %arg13[%c2_220, %c0_221, %c0_222] : memref<9x32x8xf32, #tpu.memory_space<vmem>>, vector<1x32x8xf32>
    %289 = vector.shape_cast %288 : vector<1x32x8xf32> to vector<32x8xf32>
    %cst_223 = arith.constant dense<0.000000e+00> : vector<22x8xf32>
    %290 = tpu.matmul %287, %289, %cst_223 {dimension_numbers = #tpu.dot_dimension_numbers<[1], [0], [0], [1], [0, 0, 1, 1], [], []>} : vector<22x32xf32>, vector<32x8xf32>, vector<22x8xf32> -> vector<22x8xf32>
    %291 = arith.addf %286, %290 : vector<22x8xf32>
    %292 = vector.extract_strided_slice %277 {offsets = [6, 0], sizes = [22, 32], strides = [1, 1]} : vector<36x32xf32> to vector<22x32xf32>
    %c3_224 = arith.constant 3 : index
    %c0_225 = arith.constant 0 : index
    %c0_226 = arith.constant 0 : index
    %293 = vector.load %arg13[%c3_224, %c0_225, %c0_226] : memref<9x32x8xf32, #tpu.memory_space<vmem>>, vector<1x32x8xf32>
    %294 = vector.shape_cast %293 : vector<1x32x8xf32> to vector<32x8xf32>
    %cst_227 = arith.constant dense<0.000000e+00> : vector<22x8xf32>
    %295 = tpu.matmul %292, %294, %cst_227 {dimension_numbers = #tpu.dot_dimension_numbers<[1], [0], [0], [1], [0, 0, 1, 1], [], []>} : vector<22x32xf32>, vector<32x8xf32>, vector<22x8xf32> -> vector<22x8xf32>
    %296 = arith.addf %291, %295 : vector<22x8xf32>
    %297 = vector.extract_strided_slice %277 {offsets = [7, 0], sizes = [22, 32], strides = [1, 1]} : vector<36x32xf32> to vector<22x32xf32>
    %c4_228 = arith.constant 4 : index
    %c0_229 = arith.constant 0 : index
    %c0_230 = arith.constant 0 : index
    %298 = vector.load %arg13[%c4_228, %c0_229, %c0_230] : memref<9x32x8xf32, #tpu.memory_space<vmem>>, vector<1x32x8xf32>
    %299 = vector.shape_cast %298 : vector<1x32x8xf32> to vector<32x8xf32>
    %cst_231 = arith.constant dense<0.000000e+00> : vector<22x8xf32>
    %300 = tpu.matmul %297, %299, %cst_231 {dimension_numbers = #tpu.dot_dimension_numbers<[1], [0], [0], [1], [0, 0, 1, 1], [], []>} : vector<22x32xf32>, vector<32x8xf32>, vector<22x8xf32> -> vector<22x8xf32>
    %301 = arith.addf %296, %300 : vector<22x8xf32>
    %302 = vector.extract_strided_slice %277 {offsets = [8, 0], sizes = [22, 32], strides = [1, 1]} : vector<36x32xf32> to vector<22x32xf32>
    %c5_232 = arith.constant 5 : index
    %c0_233 = arith.constant 0 : index
    %c0_234 = arith.constant 0 : index
    %303 = vector.load %arg13[%c5_232, %c0_233, %c0_234] : memref<9x32x8xf32, #tpu.memory_space<vmem>>, vector<1x32x8xf32>
    %304 = vector.shape_cast %303 : vector<1x32x8xf32> to vector<32x8xf32>
    %cst_235 = arith.constant dense<0.000000e+00> : vector<22x8xf32>
    %305 = tpu.matmul %302, %304, %cst_235 {dimension_numbers = #tpu.dot_dimension_numbers<[1], [0], [0], [1], [0, 0, 1, 1], [], []>} : vector<22x32xf32>, vector<32x8xf32>, vector<22x8xf32> -> vector<22x8xf32>
    %306 = arith.addf %301, %305 : vector<22x8xf32>
    %307 = vector.extract_strided_slice %277 {offsets = [12, 0], sizes = [22, 32], strides = [1, 1]} : vector<36x32xf32> to vector<22x32xf32>
    %c6_236 = arith.constant 6 : index
    %c0_237 = arith.constant 0 : index
    %c0_238 = arith.constant 0 : index
    %308 = vector.load %arg13[%c6_236, %c0_237, %c0_238] : memref<9x32x8xf32, #tpu.memory_space<vmem>>, vector<1x32x8xf32>
    %309 = vector.shape_cast %308 : vector<1x32x8xf32> to vector<32x8xf32>
    %cst_239 = arith.constant dense<0.000000e+00> : vector<22x8xf32>
    %310 = tpu.matmul %307, %309, %cst_239 {dimension_numbers = #tpu.dot_dimension_numbers<[1], [0], [0], [1], [0, 0, 1, 1], [], []>} : vector<22x32xf32>, vector<32x8xf32>, vector<22x8xf32> -> vector<22x8xf32>
    %311 = arith.addf %306, %310 : vector<22x8xf32>
    %312 = vector.extract_strided_slice %277 {offsets = [13, 0], sizes = [22, 32], strides = [1, 1]} : vector<36x32xf32> to vector<22x32xf32>
    %c7_240 = arith.constant 7 : index
    %c0_241 = arith.constant 0 : index
    %c0_242 = arith.constant 0 : index
    %313 = vector.load %arg13[%c7_240, %c0_241, %c0_242] : memref<9x32x8xf32, #tpu.memory_space<vmem>>, vector<1x32x8xf32>
    %314 = vector.shape_cast %313 : vector<1x32x8xf32> to vector<32x8xf32>
    %cst_243 = arith.constant dense<0.000000e+00> : vector<22x8xf32>
    %315 = tpu.matmul %312, %314, %cst_243 {dimension_numbers = #tpu.dot_dimension_numbers<[1], [0], [0], [1], [0, 0, 1, 1], [], []>} : vector<22x32xf32>, vector<32x8xf32>, vector<22x8xf32> -> vector<22x8xf32>
    %316 = arith.addf %311, %315 : vector<22x8xf32>
    %317 = vector.extract_strided_slice %277 {offsets = [14, 0], sizes = [22, 32], strides = [1, 1]} : vector<36x32xf32> to vector<22x32xf32>
    %c8_244 = arith.constant 8 : index
    %c0_245 = arith.constant 0 : index
    %c0_246 = arith.constant 0 : index
    %318 = vector.load %arg13[%c8_244, %c0_245, %c0_246] : memref<9x32x8xf32, #tpu.memory_space<vmem>>, vector<1x32x8xf32>
    %319 = vector.shape_cast %318 : vector<1x32x8xf32> to vector<32x8xf32>
    %cst_247 = arith.constant dense<0.000000e+00> : vector<22x8xf32>
    %320 = tpu.matmul %317, %319, %cst_247 {dimension_numbers = #tpu.dot_dimension_numbers<[1], [0], [0], [1], [0, 0, 1, 1], [], []>} : vector<22x32xf32>, vector<32x8xf32>, vector<22x8xf32> -> vector<22x8xf32>
    %321 = arith.addf %316, %320 : vector<22x8xf32>
    %cst_248 = arith.constant 0.000000e+00 : f32
    %322 = vector.broadcast %cst_248 : f32 to vector<22x8xf32>
    %323 = arith.maximumf %321, %322 : vector<22x8xf32>
    %c0_249 = arith.constant 0 : index
    %c0_250 = arith.constant 0 : index
    %324 = vector.load %arg14[%c0_249, %c0_250] : memref<8x32xf32, #tpu.memory_space<vmem>>, vector<8x32xf32>
    %cst_251 = arith.constant dense<0.000000e+00> : vector<22x32xf32>
    %325 = tpu.matmul %323, %324, %cst_251 {dimension_numbers = #tpu.dot_dimension_numbers<[1], [0], [0], [1], [0, 0, 1, 1], [], []>} : vector<22x8xf32>, vector<8x32xf32>, vector<22x32xf32> -> vector<22x32xf32>
    %c0_252 = arith.constant 0 : index
    %c0_253 = arith.constant 0 : index
    %326 = vector.load %arg10[%c0_252, %c0_253] : memref<36x22xf32, #tpu.memory_space<vmem>>, vector<36x22xf32>
    %cst_254 = arith.constant dense<0.000000e+00> : vector<36x32xf32>
    %327 = tpu.matmul %326, %325, %cst_254 {dimension_numbers = #tpu.dot_dimension_numbers<[1], [0], [0], [1], [0, 0, 1, 1], [], []>} : vector<36x22xf32>, vector<22x32xf32>, vector<36x32xf32> -> vector<36x32xf32>
    %328 = arith.addf %275, %327 : vector<36x32xf32>
    %cst_255 = arith.constant 0.000000e+00 : f32
    %329 = vector.broadcast %cst_255 : f32 to vector<36x32xf32>
    %330 = arith.maximumf %328, %329 : vector<36x32xf32>
    %c0_256 = arith.constant 0 : index
    %c0_257 = arith.constant 0 : index
    %331 = vector.load %arg15[%c0_256, %c0_257] : memref<16x36xf32, #tpu.memory_space<vmem>>, vector<16x36xf32>
    %cst_258 = arith.constant dense<0.000000e+00> : vector<16x32xf32>
    %332 = tpu.matmul %331, %330, %cst_258 {dimension_numbers = #tpu.dot_dimension_numbers<[1], [0], [0], [1], [0, 0, 1, 1], [], []>} : vector<16x36xf32>, vector<36x32xf32>, vector<16x32xf32> -> vector<16x32xf32>
    %c0_259 = arith.constant 0 : index
    %c0_260 = arith.constant 0 : index
    %333 = vector.load %arg16[%c0_259, %c0_260] : memref<32x16xf32, #tpu.memory_space<vmem>>, vector<32x16xf32>
    %cst_261 = arith.constant dense<0.000000e+00> : vector<16x16xf32>
    %334 = tpu.matmul %332, %333, %cst_261 {dimension_numbers = #tpu.dot_dimension_numbers<[1], [0], [0], [1], [0, 0, 1, 1], [], []>} : vector<16x32xf32>, vector<32x16xf32>, vector<16x16xf32> -> vector<16x16xf32>
    %c0_262 = arith.constant 0 : index
    %c0_263 = arith.constant 0 : index
    %335 = vector.load %arg17[%c0_262, %c0_263] : memref<1x16xf32, #tpu.memory_space<vmem>>, vector<1x16xf32>
    %336 = vector.broadcast %335 : vector<1x16xf32> to vector<16x16xf32>
    %337 = arith.addf %334, %336 : vector<16x16xf32>
    %338 = tpu.transpose %337, [1, 0] : vector<16x16xf32> -> vector<16x16xf32>
    %c0_264 = arith.constant 0 : index
    %c0_265 = arith.constant 0 : index
    %c0_266 = arith.constant 0 : index
    %339 = vector.load %arg18[%c0_264, %c0_265, %c0_266] : memref<1x16x16xf32, #tpu.memory_space<vmem>>, vector<1x16x16xf32>
    %340 = vector.shape_cast %339 : vector<1x16x16xf32> to vector<16x16xf32>
    %341 = vector.shape_cast %338 : vector<16x16xf32> to vector<1x16x16xf32>
    tpu.vector_store %arg18[%c0_264, %c0_265, %c0_266], %341 {strides = array<i32>} : memref<1x16x16xf32, #tpu.memory_space<vmem>>, vector<1x16x16xf32>,
    return
  }
  func.func @transform_0(%arg0: i32) -> (i32, i32, i32) {
    %c0_i32 = arith.constant 0 : i32
    %c0_i32_0 = arith.constant 0 : i32
    %c0_i32_1 = arith.constant 0 : i32
    return %arg0, %c0_i32, %c0_i32_0 : i32, i32, i32
  }
  func.func @transform_1(%arg0: i32) -> (i32, i32, i32) {
    %c0_i32 = arith.constant 0 : i32
    %c0_i32_0 = arith.constant 0 : i32
    %c0_i32_1 = arith.constant 0 : i32
    %c0_i32_2 = arith.constant 0 : i32
    return %c0_i32, %c0_i32_0, %c0_i32_1 : i32, i32, i32
  }
  func.func @transform_2(%arg0: i32) -> (i32, i32) {
    %c0_i32 = arith.constant 0 : i32
    %c0_i32_0 = arith.constant 0 : i32
    %c0_i32_1 = arith.constant 0 : i32
    return %c0_i32, %c0_i32_0 : i32, i32
  }
  func.func @transform_3(%arg0: i32) -> (i32, i32) {
    %c0_i32 = arith.constant 0 : i32
    %c0_i32_0 = arith.constant 0 : i32
    %c0_i32_1 = arith.constant 0 : i32
    return %c0_i32, %c0_i32_0 : i32, i32
  }
  func.func @transform_4(%arg0: i32) -> (i32, i32, i32) {
    %c0_i32 = arith.constant 0 : i32
    %c0_i32_0 = arith.constant 0 : i32
    %c0_i32_1 = arith.constant 0 : i32
    %c0_i32_2 = arith.constant 0 : i32
    return %c0_i32, %c0_i32_0, %c0_i32_1 : i32, i32, i32
  }
  func.func @transform_5(%arg0: i32) -> (i32, i32) {
    %c0_i32 = arith.constant 0 : i32
    %c0_i32_0 = arith.constant 0 : i32
    %c0_i32_1 = arith.constant 0 : i32
    return %c0_i32, %c0_i32_0 : i32, i32
  }
  func.func @transform_6(%arg0: i32) -> (i32, i32) {
    %c0_i32 = arith.constant 0 : i32
    %c0_i32_0 = arith.constant 0 : i32
    %c0_i32_1 = arith.constant 0 : i32
    return %c0_i32, %c0_i32_0 : i32, i32
  }
  func.func @transform_7(%arg0: i32) -> (i32, i32, i32) {
    %c0_i32 = arith.constant 0 : i32
    %c0_i32_0 = arith.constant 0 : i32
    %c0_i32_1 = arith.constant 0 : i32
    %c0_i32_2 = arith.constant 0 : i32
    return %c0_i32, %c0_i32_0, %c0_i32_1 : i32, i32, i32
  }
  func.func @transform_8(%arg0: i32) -> (i32, i32) {
    %c0_i32 = arith.constant 0 : i32
    %c0_i32_0 = arith.constant 0 : i32
    %c0_i32_1 = arith.constant 0 : i32
    return %c0_i32, %c0_i32_0 : i32, i32
  }
  func.func @transform_9(%arg0: i32) -> (i32, i32) {
    %c0_i32 = arith.constant 0 : i32
    %c0_i32_0 = arith.constant 0 : i32
    %c0_i32_1 = arith.constant 0 : i32
    return %c0_i32, %c0_i32_0 : i32, i32
  }
  func.func @transform_10(%arg0: i32) -> (i32, i32, i32) {
    %c0_i32 = arith.constant 0 : i32
    %c0_i32_0 = arith.constant 0 : i32
    %c0_i32_1 = arith.constant 0 : i32
    %c0_i32_2 = arith.constant 0 : i32
    return %c0_i32, %c0_i32_0, %c0_i32_1 : i32, i32, i32
  }
  func.func @transform_11(%arg0: i32) -> (i32, i32) {
    %c0_i32 = arith.constant 0 : i32
    %c0_i32_0 = arith.constant 0 : i32
    %c0_i32_1 = arith.constant 0 : i32
    return %c0_i32, %c0_i32_0 : i32, i32
  }
  func.func @transform_12(%arg0: i32) -> (i32, i32, i32) {
    %c0_i32 = arith.constant 0 : i32
    %c0_i32_0 = arith.constant 0 : i32
    %c0_i32_1 = arith.constant 0 : i32
    %c0_i32_2 = arith.constant 0 : i32
    return %c0_i32, %c0_i32_0, %c0_i32_1 : i32, i32, i32
  }
  func.func @transform_13(%arg0: i32) -> (i32, i32) {
    %c0_i32 = arith.constant 0 : i32
    %c0_i32_0 = arith.constant 0 : i32
    %c0_i32_1 = arith.constant 0 : i32
    return %c0_i32, %c0_i32_0 : i32, i32
  }
  func.func @transform_14(%arg0: i32) -> (i32, i32) {
    %c0_i32 = arith.constant 0 : i32
    %c0_i32_0 = arith.constant 0 : i32
    %c0_i32_1 = arith.constant 0 : i32
    return %c0_i32, %c0_i32_0 : i32, i32
  }
  func.func @transform_15(%arg0: i32) -> (i32, i32) {
    %c0_i32 = arith.constant 0 : i32
    %c0_i32_0 = arith.constant 0 : i32
    %c0_i32_1 = arith.constant 0 : i32
    return %c0_i32, %c0_i32_0 : i32, i32
  }
  func.func @transform_16(%arg0: i32) -> (i32, i32) {
    %c0_i32 = arith.constant 0 : i32
    %c0_i32_0 = arith.constant 0 : i32
    %c0_i32_1 = arith.constant 0 : i32
    return %c0_i32, %c0_i32_0 : i32, i32
  }
  func.func @transform_17(%arg0: i32) -> (i32, i32, i32) {
    %c0_i32 = arith.constant 0 : i32
    %c0_i32_0 = arith.constant 0 : i32
    %c0_i32_1 = arith.constant 0 : i32
    return %arg0, %c0_i32, %c0_i32_0 : i32, i32, i32
  }
}

</mosaic_0001>

<llo_original>
// kernel: _lambda_.1
$region0: #{_lambda_.1}
  #allocation0 [shape = 'u32[]', space=smem, size = 0x4, offset = 0x4, fixed_abs, tag = 'smem constant byte address 0x4 - core index']
  #allocation1 [shape = 'u32[72,128]{1,0:T(1,128)}', space=vmem, size = 0x9000, scoped, tag = 'internal scratch']
  %s0 = inlined_call_operand.vmem [shape: f32[2,324,4], index: 0, kind: input, shape index: {}]
  %s1 = inlined_call_operand.hbm [shape: f32[16,4,16], index: 1, kind: input, shape index: {}]
  %s2 = inlined_call_operand.hbm [shape: f32[1,16], index: 2, kind: input, shape index: {}]
  %s3 = inlined_call_operand.vmem [shape: f32[100,267], index: 3, kind: input, shape index: {}]
  %s4 = inlined_call_operand.hbm [shape: f32[16,16,32], index: 4, kind: input, shape index: {}]
  %s5 = inlined_call_operand.hbm [shape: f32[1,32], index: 5, kind: input, shape index: {}]
  %s6 = inlined_call_operand.hbm [shape: f32[36,67], index: 6, kind: input, shape index: {}]
  %s7 = inlined_call_operand.vmem [shape: f32[9,32,32], index: 7, kind: input, shape index: {}]
  %s8 = inlined_call_operand.hbm [shape: f32[1,32], index: 8, kind: input, shape index: {}]
  %s9 = inlined_call_operand.vmem [shape: f32[36,22], index: 9, kind: input, shape index: {}]
  %s10 = inlined_call_operand.vmem [shape: f32[9,32,8], index: 10, kind: input, shape index: {}]
  %s11 = inlined_call_operand.hbm [shape: f32[8,32], index: 11, kind: input, shape index: {}]
  %s12 = inlined_call_operand.vmem [shape: f32[9,32,8], index: 12, kind: input, shape index: {}]
  %s13 = inlined_call_operand.vmem [shape: f32[8,32], index: 13, kind: input, shape index: {}]
  %s14 = inlined_call_operand.hbm [shape: f32[16,36], index: 14, kind: input, shape index: {}]
  %s15 = inlined_call_operand.hbm [shape: f32[32,16], index: 15, kind: input, shape index: {}]
  %s16 = inlined_call_operand.vmem [shape: f32[1,16], index: 16, kind: input, shape index: {}]
  %s17 = inlined_call_operand.vmem [shape: f32[2,16,16], index: 17, kind: output, shape index: {}]
  %s18 = sld [smem:[#allocation0]]
  $region137: #{_lambda_.1} parent=0
    _
  %s20 = ssub.s32 1, %s18
  %s21 = scalar_select 0, %s20, %s18
  $region1: #{_lambda_.1} parent=0
    #allocation2 [shape = 'u8[32768]{0}', space=vmem, size = 0x8000, scoped, tag = 'input window, operand 1, single buffered']
    #allocation3 [shape = 's32[2]{0}', space=sflag, size = 0x8, scoped, tag = 'scoped memory for _lambda_.1']
    #allocation4 [shape = 'u8[512]{0}', space=vmem, size = 0x400, scoped, tag = 'input window, operand 2, single buffered']
    #allocation5 [shape = 's32[1]{0}', space=sflag, size = 0x4, scoped, tag = 'scoped memory for _lambda_.1']
    #allocation6 [shape = 'u8[131072]{0}', space=vmem, size = 0x20000, scoped, tag = 'input window, operand 4, single buffered']
    #allocation7 [shape = 'u8[512]{0}', space=vmem, size = 0x400, scoped, tag = 'input window, operand 5, single buffered']
    #allocation8 [shape = 's32[1]{0}', space=sflag, size = 0x4, scoped, tag = 'scoped memory for _lambda_.1']
    #allocation9 [shape = 'u8[20480]{0}', space=vmem, size = 0x5000, scoped, tag = 'input window, operand 6, single buffered']
    #allocation10 [shape = 'u8[512]{0}', space=vmem, size = 0x400, scoped, tag = 'input window, operand 8, single buffered']
    #allocation11 [shape = 's32[1]{0}', space=sflag, size = 0x4, scoped, tag = 'scoped memory for _lambda_.1']
    #allocation12 [shape = 'u8[4096]{0}', space=vmem, size = 0x1000, scoped, tag = 'input window, operand 11, single buffered']
    #allocation13 [shape = 'u8[8192]{0}', space=vmem, size = 0x2000, scoped, tag = 'input window, operand 14, single buffered']
    #allocation14 [shape = 's32[1]{0}', space=sflag, size = 0x4, scoped, tag = 'scoped memory for _lambda_.1']
    #allocation15 [shape = 'u8[16384]{0}', space=vmem, size = 0x4000, scoped, tag = 'input window, operand 15, single buffered']
    %22 = vsyncpa [#allocation3], 0
    %23 = vsyncpa [#allocation5], 0
    %24 = vsyncpa [#allocation8], 0
    %25 = vsyncpa [#allocation11], 0
    %26 = vsyncpa [#allocation14], 0
    loop: start=0, step=1, limit=4
    $region2: #{_lambda_.1} parent=1 // loop_pre_header
      _
    $region3: #{_lambda_.1} parent=1 // loop_header
      %s28 = sphi 0, %s32
      %p29 = scmp.ge.s32.totalorder %s28, 4
      %s38 = sphi 0, %s40
      %s41 = sphi 0, %s38
      %s42 = sphi 0, %s41
      %s58 = sphi 0, %s42
      %s62 = sphi 0, %s62
      %s64 = sphi 0, %s62
      %s65 = sphi 0, %s64
      %s79 = sphi 0, %s65
      %s83 = sphi 0, %s83
      %s85 = sphi 0, %s83
      %s86 = sphi 0, %s85
      %s100 = sphi 0, %s86
      %s104 = sphi 0, %s104
      %s106 = sphi 0, %s104
      %s107 = sphi 0, %s106
      %s121 = sphi 0, %s107
      %s125 = sphi 0, %s125
      %s127 = sphi 0, %s125
      %s128 = sphi 0, %s127
      %s142 = sphi 0, %s128
      %s146 = sphi 0, %s146
      %s148 = sphi 0, %s146
      %s149 = sphi 0, %s148
      %s163 = sphi 0, %s149
      %s167 = sphi 0, %s167
      %s169 = sphi 0, %s167
      %s170 = sphi 0, %s169
      %s184 = sphi 0, %s170
      %s188 = sphi 0, %s188
      %s190 = sphi 0, %s188
      %s191 = sphi 0, %s190
      %s205 = sphi 0, %s191
      %s209 = sphi 0, %s209
      %s211 = sphi 0, %s209
      %s212 = sphi 0, %s211
      %s226 = sphi 0, %s212
      %s230 = sphi 0, %s230
      %s232 = sphi 0, %s230
      %s233 = sphi 0, %s232
      %s247 = sphi 0, %s233
      %s251 = sphi 0, %s251
      %s253 = sphi 0, %s251
      %s254 = sphi 0, %s253
      %s268 = sphi 0, %s254
      %s272 = sphi 0, %s272
      %s274 = sphi 0, %s272
      %s275 = sphi 0, %s274
      %s289 = sphi 0, %s275
      %s293 = sphi 0, %s293
      %s295 = sphi 0, %s293
      %s296 = sphi 0, %s295
      %s310 = sphi 0, %s296
      %s314 = sphi 0, %s314
      %s316 = sphi 0, %s314
      %s317 = sphi 0, %s316
      %s331 = sphi 0, %s317
      %s335 = sphi 0, %s335
      %s337 = sphi 0, %s335
      %s338 = sphi 0, %s337
      %s352 = sphi 0, %s338
      %s356 = sphi 0, %s356
      %s358 = sphi 0, %s356
      %s359 = sphi 0, %s358
      %s373 = sphi 0, %s359
      %s377 = sphi 0, %s377
      %s379 = sphi 0, %s377
      %s380 = sphi 0, %s379
      %s394 = sphi 0, %s380
      %s400 = sphi 0, %s402
      %s403 = sphi 0, %s400
      %s404 = sphi 0, %s403
      %s420 = sphi 0, %s404
    $region4: #{_lambda_.1} parent=1 // loop_header_branch
      %31 = sbr.rel (%p29) target = $region8
    $region5: #{_lambda_.1} parent=1 // loop_body
      %s33 = ssub.s32 %s28, 1
      %s34 = ssub.s32 %s28, 2
      %s35 = sadd.s32 %s28, 1
      %s36 = ssub.s32 %s28, %s35
      %p37 = scmp.eq.s32.totalorder %s36, 0
      %s39 = sadd.s32 %s38, 1
      %s40 = scalar_select %p37, %s38, %s39
      %p43 = pneg %p37
      %p44 = scmp.eq.s32.totalorder %s28, 1
      %p45 = por %p43, %p44
      %p46 = scmp.ne.s32.totalorder %s38, %s41
      %p47 = scmp.eq.s32.totalorder %s28, 0
      %p48 = por %p46, %p47
      %p49 = scmp.ne.s32.totalorder %s38, %s41
      %p50 = scmp.eq.s32.totalorder %s33, 1
      %p51 = por %p49, %p50
      %p52 = scmp.ne.s32.totalorder %s41, %s42
      %p53 = scmp.eq.s32.totalorder %s33, 0
      %p54 = por %p52, %p53
      %p55 = scmp.ne.s32.totalorder %s41, %s42
      %p56 = scmp.eq.s32.totalorder %s34, 1
      %p57 = por %p55, %p56
      %p59 = scmp.ne.s32.totalorder %s42, %s58
      %p60 = scmp.eq.s32.totalorder %s34, 0
      %p61 = por %p59, %p60
      %s63 = sadd.s32 %s62, 1
      %p66 = scmp.eq.s32.totalorder %s28, 1
      %p67 = scmp.ne.s32.totalorder %s62, %s64
      %p68 = scmp.eq.s32.totalorder %s28, 0
      %p69 = por %p67, %p68
      %p70 = scmp.ne.s32.totalorder %s62, %s64
      %p71 = scmp.eq.s32.totalorder %s33, 1
      %p72 = por %p70, %p71
      %p73 = scmp.ne.s32.totalorder %s64, %s65
      %p74 = scmp.eq.s32.totalorder %s33, 0
      %p75 = por %p73, %p74
      %p76 = scmp.ne.s32.totalorder %s64, %s65
      %p77 = scmp.eq.s32.totalorder %s34, 1
      %p78 = por %p76, %p77
      %p80 = scmp.ne.s32.totalorder %s65, %s79
      %p81 = scmp.eq.s32.totalorder %s34, 0
      %p82 = por %p80, %p81
      %s84 = sadd.s32 %s83, 1
      %p87 = scmp.eq.s32.totalorder %s28, 1
      %p88 = scmp.ne.s32.totalorder %s83, %s85
      %p89 = scmp.eq.s32.totalorder %s28, 0
      %p90 = por %p88, %p89
      %p91 = scmp.ne.s32.totalorder %s83, %s85
      %p92 = scmp.eq.s32.totalorder %s33, 1
      %p93 = por %p91, %p92
      %p94 = scmp.ne.s32.totalorder %s85, %s86
      %p95 = scmp.eq.s32.totalorder %s33, 0
      %p96 = por %p94, %p95
      %p97 = scmp.ne.s32.totalorder %s85, %s86
      %p98 = scmp.eq.s32.totalorder %s34, 1
      %p99 = por %p97, %p98
      %p101 = scmp.ne.s32.totalorder %s86, %s100
      %p102 = scmp.eq.s32.totalorder %s34, 0
      %p103 = por %p101, %p102
      %s105 = sadd.s32 %s104, 1
      %p108 = scmp.eq.s32.totalorder %s28, 1
      %p109 = scmp.ne.s32.totalorder %s104, %s106
      %p110 = scmp.eq.s32.totalorder %s28, 0
      %p111 = por %p109, %p110
      %p112 = scmp.ne.s32.totalorder %s104, %s106
      %p113 = scmp.eq.s32.totalorder %s33, 1
      %p114 = por %p112, %p113
      %p115 = scmp.ne.s32.totalorder %s106, %s107
      %p116 = scmp.eq.s32.totalorder %s33, 0
      %p117 = por %p115, %p116
      %p118 = scmp.ne.s32.totalorder %s106, %s107
      %p119 = scmp.eq.s32.totalorder %s34, 1
      %p120 = por %p118, %p119
      %p122 = scmp.ne.s32.totalorder %s107, %s121
      %p123 = scmp.eq.s32.totalorder %s34, 0
      %p124 = por %p122, %p123
      %s126 = sadd.s32 %s125, 1
      %p129 = scmp.eq.s32.totalorder %s28, 1
      %p130 = scmp.ne.s32.totalorder %s125, %s127
      %p131 = scmp.eq.s32.totalorder %s28, 0
      %p132 = por %p130, %p131
      %p133 = scmp.ne.s32.totalorder %s125, %s127
      %p134 = scmp.eq.s32.totalorder %s33, 1
      %p135 = por %p133, %p134
      %p136 = scmp.ne.s32.totalorder %s127, %s128
      %p137 = scmp.eq.s32.totalorder %s33, 0
      %p138 = por %p136, %p137
      %p139 = scmp.ne.s32.totalorder %s127, %s128
      %p140 = scmp.eq.s32.totalorder %s34, 1
      %p141 = por %p139, %p140
      %p143 = scmp.ne.s32.totalorder %s128, %s142
      %p144 = scmp.eq.s32.totalorder %s34, 0
      %p145 = por %p143, %p144
      %s147 = sadd.s32 %s146, 1
      %p150 = scmp.eq.s32.totalorder %s28, 1
      %p151 = scmp.ne.s32.totalorder %s146, %s148
      %p152 = scmp.eq.s32.totalorder %s28, 0
      %p153 = por %p151, %p152
      %p154 = scmp.ne.s32.totalorder %s146, %s148
      %p155 = scmp.eq.s32.totalorder %s33, 1
      %p156 = por %p154, %p155
      %p157 = scmp.ne.s32.totalorder %s148, %s149
      %p158 = scmp.eq.s32.totalorder %s33, 0
      %p159 = por %p157, %p158
      %p160 = scmp.ne.s32.totalorder %s148, %s149
      %p161 = scmp.eq.s32.totalorder %s34, 1
      %p162 = por %p160, %p161
      %p164 = scmp.ne.s32.totalorder %s149, %s163
      %p165 = scmp.eq.s32.totalorder %s34, 0
      %p166 = por %p164, %p165
      %s168 = sadd.s32 %s167, 1
      %p171 = scmp.eq.s32.totalorder %s28, 1
      %p172 = scmp.ne.s32.totalorder %s167, %s169
      %p173 = scmp.eq.s32.totalorder %s28, 0
      %p174 = por %p172, %p173
      %p175 = scmp.ne.s32.totalorder %s167, %s169
      %p176 = scmp.eq.s32.totalorder %s33, 1
      %p177 = por %p175, %p176
      %p178 = scmp.ne.s32.totalorder %s169, %s170
      %p179 = scmp.eq.s32.totalorder %s33, 0
      %p180 = por %p178, %p179
      %p181 = scmp.ne.s32.totalorder %s169, %s170
      %p182 = scmp.eq.s32.totalorder %s34, 1
      %p183 = por %p181, %p182
      %p185 = scmp.ne.s32.totalorder %s170, %s184
      %p186 = scmp.eq.s32.totalorder %s34, 0
      %p187 = por %p185, %p186
      %s189 = sadd.s32 %s188, 1
      %p192 = scmp.eq.s32.totalorder %s28, 1
      %p193 = scmp.ne.s32.totalorder %s188, %s190
      %p194 = scmp.eq.s32.totalorder %s28, 0
      %p195 = por %p193, %p194
      %p196 = scmp.ne.s32.totalorder %s188, %s190
      %p197 = scmp.eq.s32.totalorder %s33, 1
      %p198 = por %p196, %p197
      %p199 = scmp.ne.s32.totalorder %s190, %s191
      %p200 = scmp.eq.s32.totalorder %s33, 0
      %p201 = por %p199, %p200
      %p202 = scmp.ne.s32.totalorder %s190, %s191
      %p203 = scmp.eq.s32.totalorder %s34, 1
      %p204 = por %p202, %p203
      %p206 = scmp.ne.s32.totalorder %s191, %s205
      %p207 = scmp.eq.s32.totalorder %s34, 0
      %p208 = por %p206, %p207
      %s210 = sadd.s32 %s209, 1
      %p213 = scmp.eq.s32.totalorder %s28, 1
      %p214 = scmp.ne.s32.totalorder %s209, %s211
      %p215 = scmp.eq.s32.totalorder %s28, 0
      %p216 = por %p214, %p215
      %p217 = scmp.ne.s32.totalorder %s209, %s211
      %p218 = scmp.eq.s32.totalorder %s33, 1
      %p219 = por %p217, %p218
      %p220 = scmp.ne.s32.totalorder %s211, %s212
      %p221 = scmp.eq.s32.totalorder %s33, 0
      %p222 = por %p220, %p221
      %p223 = scmp.ne.s32.totalorder %s211, %s212
      %p224 = scmp.eq.s32.totalorder %s34, 1
      %p225 = por %p223, %p224
      %p227 = scmp.ne.s32.totalorder %s212, %s226
      %p228 = scmp.eq.s32.totalorder %s34, 0
      %p229 = por %p227, %p228
      %s231 = sadd.s32 %s230, 1
      %p234 = scmp.eq.s32.totalorder %s28, 1
      %p235 = scmp.ne.s32.totalorder %s230, %s232
      %p236 = scmp.eq.s32.totalorder %s28, 0
      %p237 = por %p235, %p236
      %p238 = scmp.ne.s32.totalorder %s230, %s232
      %p239 = scmp.eq.s32.totalorder %s33, 1
      %p240 = por %p238, %p239
      %p241 = scmp.ne.s32.totalorder %s232, %s233
      %p242 = scmp.eq.s32.totalorder %s33, 0
      %p243 = por %p241, %p242
      %p244 = scmp.ne.s32.totalorder %s232, %s233
      %p245 = scmp.eq.s32.totalorder %s34, 1
      %p246 = por %p244, %p245
      %p248 = scmp.ne.s32.totalorder %s233, %s247
      %p249 = scmp.eq.s32.totalorder %s34, 0
      %p250 = por %p248, %p249
      %s252 = sadd.s32 %s251, 1
      %p255 = scmp.eq.s32.totalorder %s28, 1
      %p256 = scmp.ne.s32.totalorder %s251, %s253
      %p257 = scmp.eq.s32.totalorder %s28, 0
      %p258 = por %p256, %p257
      %p259 = scmp.ne.s32.totalorder %s251, %s253
      %p260 = scmp.eq.s32.totalorder %s33, 1
      %p261 = por %p259, %p260
      %p262 = scmp.ne.s32.totalorder %s253, %s254
      %p263 = scmp.eq.s32.totalorder %s33, 0
      %p264 = por %p262, %p263
      %p265 = scmp.ne.s32.totalorder %s253, %s254
      %p266 = scmp.eq.s32.totalorder %s34, 1
      %p267 = por %p265, %p266
      %p269 = scmp.ne.s32.totalorder %s254, %s268
      %p270 = scmp.eq.s32.totalorder %s34, 0
      %p271 = por %p269, %p270
      %s273 = sadd.s32 %s272, 1
      %p276 = scmp.eq.s32.totalorder %s28, 1
      %p277 = scmp.ne.s32.totalorder %s272, %s274
      %p278 = scmp.eq.s32.totalorder %s28, 0
      %p279 = por %p277, %p278
      %p280 = scmp.ne.s32.totalorder %s272, %s274
      %p281 = scmp.eq.s32.totalorder %s33, 1
      %p282 = por %p280, %p281
      %p283 = scmp.ne.s32.totalorder %s274, %s275
      %p284 = scmp.eq.s32.totalorder %s33, 0
      %p285 = por %p283, %p284
      %p286 = scmp.ne.s32.totalorder %s274, %s275
      %p287 = scmp.eq.s32.totalorder %s34, 1
      %p288 = por %p286, %p287
      %p290 = scmp.ne.s32.totalorder %s275, %s289
      %p291 = scmp.eq.s32.totalorder %s34, 0
      %p292 = por %p290, %p291
      %s294 = sadd.s32 %s293, 1
      %p297 = scmp.eq.s32.totalorder %s28, 1
      %p298 = scmp.ne.s32.totalorder %s293, %s295
      %p299 = scmp.eq.s32.totalorder %s28, 0
      %p300 = por %p298, %p299
      %p301 = scmp.ne.s32.totalorder %s293, %s295
      %p302 = scmp.eq.s32.totalorder %s33, 1
      %p303 = por %p301, %p302
      %p304 = scmp.ne.s32.totalorder %s295, %s296
      %p305 = scmp.eq.s32.totalorder %s33, 0
      %p306 = por %p304, %p305
      %p307 = scmp.ne.s32.totalorder %s295, %s296
      %p308 = scmp.eq.s32.totalorder %s34, 1
      %p309 = por %p307, %p308
      %p311 = scmp.ne.s32.totalorder %s296, %s310
      %p312 = scmp.eq.s32.totalorder %s34, 0
      %p313 = por %p311, %p312
      %s315 = sadd.s32 %s314, 1
      %p318 = scmp.eq.s32.totalorder %s28, 1
      %p319 = scmp.ne.s32.totalorder %s314, %s316
      %p320 = scmp.eq.s32.totalorder %s28, 0
      %p321 = por %p319, %p320
      %p322 = scmp.ne.s32.totalorder %s314, %s316
      %p323 = scmp.eq.s32.totalorder %s33, 1
      %p324 = por %p322, %p323
      %p325 = scmp.ne.s32.totalorder %s316, %s317
      %p326 = scmp.eq.s32.totalorder %s33, 0
      %p327 = por %p325, %p326
      %p328 = scmp.ne.s32.totalorder %s316, %s317
      %p329 = scmp.eq.s32.totalorder %s34, 1
      %p330 = por %p328, %p329
      %p332 = scmp.ne.s32.totalorder %s317, %s331
      %p333 = scmp.eq.s32.totalorder %s34, 0
      %p334 = por %p332, %p333
      %s336 = sadd.s32 %s335, 1
      %p339 = scmp.eq.s32.totalorder %s28, 1
      %p340 = scmp.ne.s32.totalorder %s335, %s337
      %p341 = scmp.eq.s32.totalorder %s28, 0
      %p342 = por %p340, %p341
      %p343 = scmp.ne.s32.totalorder %s335, %s337
      %p344 = scmp.eq.s32.totalorder %s33, 1
      %p345 = por %p343, %p344
      %p346 = scmp.ne.s32.totalorder %s337, %s338
      %p347 = scmp.eq.s32.totalorder %s33, 0
      %p348 = por %p346, %p347
      %p349 = scmp.ne.s32.totalorder %s337, %s338
      %p350 = scmp.eq.s32.totalorder %s34, 1
      %p351 = por %p349, %p350
      %p353 = scmp.ne.s32.totalorder %s338, %s352
      %p354 = scmp.eq.s32.totalorder %s34, 0
      %p355 = por %p353, %p354
      %s357 = sadd.s32 %s356, 1
      %p360 = scmp.eq.s32.totalorder %s28, 1
      %p361 = scmp.ne.s32.totalorder %s356, %s358
      %p362 = scmp.eq.s32.totalorder %s28, 0
      %p363 = por %p361, %p362
      %p364 = scmp.ne.s32.totalorder %s356, %s358
      %p365 = scmp.eq.s32.totalorder %s33, 1
      %p366 = por %p364, %p365
      %p367 = scmp.ne.s32.totalorder %s358, %s359
      %p368 = scmp.eq.s32.totalorder %s33, 0
      %p369 = por %p367, %p368
      %p370 = scmp.ne.s32.totalorder %s358, %s359
      %p371 = scmp.eq.s32.totalorder %s34, 1
      %p372 = por %p370, %p371
      %p374 = scmp.ne.s32.totalorder %s359, %s373
      %p375 = scmp.eq.s32.totalorder %s34, 0
      %p376 = por %p374, %p375
      %s378 = sadd.s32 %s377, 1
      %p381 = scmp.eq.s32.totalorder %s28, 1
      %p382 = scmp.ne.s32.totalorder %s377, %s379
      %p383 = scmp.eq.s32.totalorder %s28, 0
      %p384 = por %p382, %p383
      %p385 = scmp.ne.s32.totalorder %s377, %s379
      %p386 = scmp.eq.s32.totalorder %s33, 1
      %p387 = por %p385, %p386
      %p388 = scmp.ne.s32.totalorder %s379, %s380
      %p389 = scmp.eq.s32.totalorder %s33, 0
      %p390 = por %p388, %p389
      %p391 = scmp.ne.s32.totalorder %s379, %s380
      %p392 = scmp.eq.s32.totalorder %s34, 1
      %p393 = por %p391, %p392
      %p395 = scmp.ne.s32.totalorder %s380, %s394
      %p396 = scmp.eq.s32.totalorder %s34, 0
      %p397 = por %p395, %p396
      %s398 = ssub.s32 %s28, %s35
      %p399 = scmp.eq.s32.totalorder %s398, 0
      %s401 = sadd.s32 %s400, 1
      %s402 = scalar_select %p399, %s400, %s401
      %p405 = pneg %p399
      %p406 = scmp.eq.s32.totalorder %s28, 1
      %p407 = por %p405, %p406
      %p408 = scmp.ne.s32.totalorder %s400, %s403
      %p409 = scmp.eq.s32.totalorder %s28, 0
      %p410 = por %p408, %p409
      %p411 = scmp.ne.s32.totalorder %s400, %s403
      %p412 = scmp.eq.s32.totalorder %s33, 1
      %p413 = por %p411, %p412
      %p414 = scmp.ne.s32.totalorder %s403, %s404
      %p415 = scmp.eq.s32.totalorder %s33, 0
      %p416 = por %p414, %p415
      %p417 = scmp.ne.s32.totalorder %s403, %s404
      %p418 = scmp.eq.s32.totalorder %s34, 1
      %p419 = por %p417, %p418
      %p421 = scmp.ne.s32.totalorder %s404, %s420
      %p422 = scmp.eq.s32.totalorder %s34, 0
      %p423 = por %p421, %p422
      %p424 = scmp.le.s32.totalorder 1, %s28
      %p425 = scmp.lt.s32.totalorder %s28, 3
      %p426 = pnand %p424, %p425
      %p427 = pneg %p426
      // Predicated region
      $region9: #{_lambda_.1} parent=5 // pred_check
        _
      $region10: #{_lambda_.1} parent=5 // pred_check_branch
        %429 = sbr.rel (%p426) target = $region12
      $region11: #{_lambda_.1} parent=5 // pred_region
        %s430 = ssub.s32 %s28, 1
        // Predicated region
        $region13: #{_lambda_.1} parent=11 // pred_check
          %p431 = pneg %p75
        $region14: #{_lambda_.1} parent=11 // pred_check_branch
          %433 = sbr.rel (%p431) target = $region16
        $region15: #{_lambda_.1} parent=11 // pred_region
          %435 = vsyncadd [#allocation3], 0
          %s436 = sshll.u32 %s1, 4
          %s437 = int_to_ptr.hbm [resolvable:$true] %s436
          %s438 = sshll.u32 [#allocation2], 4
          %s439 = int_to_ptr.vmem [resolvable:$true] %s438
          %444 = dma.hbm_to_vmem [thread:$0]  %s437, 1024, %s439, [#allocation3], 64, 64, 4
        $region16: #{_lambda_.1} parent=11 // pred_fallthru
          _
        // Predicated region
        $region17: #{_lambda_.1} parent=11 // pred_check
          %p445 = pneg %p96
        $region18: #{_lambda_.1} parent=11 // pred_check_branch
          %447 = sbr.rel (%p445) target = $region20
        $region19: #{_lambda_.1} parent=11 // pred_region
          %449 = vsyncadd [#allocation5], 0
          %s451 = sshll.u32 %s2, 4
          %s452 = int_to_ptr.hbm [resolvable:$true] %s451
          %s453 = sshll.u32 [#allocation4], 4
          %s454 = int_to_ptr.vmem [resolvable:$true] %s453
          %456 = dma.hbm_to_vmem [thread:$0]  %s452, 16, %s454, [#allocation5]
        $region20: #{_lambda_.1} parent=11 // pred_fallthru
          _
        // Predicated region
        $region21: #{_lambda_.1} parent=11 // pred_check
          %p457 = pneg %p117
        $region22: #{_lambda_.1} parent=11 // pred_check_branch
          %459 = sbr.rel (%p457) target = $region24
        $region23: #{_lambda_.1} parent=11 // pred_region
          _
        $region24: #{_lambda_.1} parent=11 // pred_fallthru
          _
        // Predicated region
        $region25: #{_lambda_.1} parent=11 // pred_check
          %p460 = pneg %p138
        $region26: #{_lambda_.1} parent=11 // pred_check_branch
          %462 = sbr.rel (%p460) target = $region28
        $region27: #{_lambda_.1} parent=11 // pred_region
          %464 = vsyncadd [#allocation5], 0
          %s465 = sshll.u32 %s4, 4
          %s466 = int_to_ptr.hbm [resolvable:$true] %s465
          %s467 = sshll.u32 [#allocation6], 4
          %s468 = int_to_ptr.vmem [resolvable:$true] %s467
          %473 = dma.hbm_to_vmem [thread:$0]  %s466, 4096, %s468, [#allocation5], 128, 128, 8
        $region28: #{_lambda_.1} parent=11 // pred_fallthru
          _
        // Predicated region
        $region29: #{_lambda_.1} parent=11 // pred_check
          %p474 = pneg %p159
        $region30: #{_lambda_.1} parent=11 // pred_check_branch
          %476 = sbr.rel (%p474) target = $region32
        $region31: #{_lambda_.1} parent=11 // pred_region
          %478 = vsyncadd [#allocation8], 0
          %s480 = sshll.u32 %s5, 4
          %s481 = int_to_ptr.hbm [resolvable:$true] %s480
          %s482 = sshll.u32 [#allocation7], 4
          %s483 = int_to_ptr.vmem [resolvable:$true] %s482
          %485 = dma.hbm_to_vmem [thread:$0]  %s481, 16, %s483, [#allocation8]
        $region32: #{_lambda_.1} parent=11 // pred_fallthru
          _
        // Predicated region
        $region33: #{_lambda_.1} parent=11 // pred_check
          %p486 = pneg %p180
        $region34: #{_lambda_.1} parent=11 // pred_check_branch
          %488 = sbr.rel (%p486) target = $region36
        $region35: #{_lambda_.1} parent=11 // pred_region
          %490 = vsyncadd [#allocation8], 0
          %s491 = sshll.u32 %s6, 4
          %s492 = int_to_ptr.hbm [resolvable:$true] %s491
          %s493 = sshll.u32 [#allocation9], 4
          %s494 = int_to_ptr.vmem [resolvable:$true] %s493
          %499 = dma.hbm_to_vmem [thread:$0]  %s492, 640, %s494, [#allocation8], 128, 128, 8
        $region36: #{_lambda_.1} parent=11 // pred_fallthru
          _
        // Predicated region
        $region37: #{_lambda_.1} parent=11 // pred_check
          %p500 = pneg %p201
        $region38: #{_lambda_.1} parent=11 // pred_check_branch
          %502 = sbr.rel (%p500) target = $region40
        $region39: #{_lambda_.1} parent=11 // pred_region
          _
        $region40: #{_lambda_.1} parent=11 // pred_fallthru
          _
        // Predicated region
        $region41: #{_lambda_.1} parent=11 // pred_check
          %p503 = pneg %p222
        $region42: #{_lambda_.1} parent=11 // pred_check_branch
          %505 = sbr.rel (%p503) target = $region44
        $region43: #{_lambda_.1} parent=11 // pred_region
          %507 = vsyncadd [#allocation11], 0
          %s509 = sshll.u32 %s8, 4
          %s510 = int_to_ptr.hbm [resolvable:$true] %s509
          %s511 = sshll.u32 [#allocation10], 4
          %s512 = int_to_ptr.vmem [resolvable:$true] %s511
          %514 = dma.hbm_to_vmem [thread:$0]  %s510, 16, %s512, [#allocation11]
        $region44: #{_lambda_.1} parent=11 // pred_fallthru
          _
        // Predicated region
        $region45: #{_lambda_.1} parent=11 // pred_check
          %p515 = pneg %p243
        $region46: #{_lambda_.1} parent=11 // pred_check_branch
          %517 = sbr.rel (%p515) target = $region48
        $region47: #{_lambda_.1} parent=11 // pred_region
          _
        $region48: #{_lambda_.1} parent=11 // pred_fallthru
          _
        // Predicated region
        $region49: #{_lambda_.1} parent=11 // pred_check
          %p518 = pneg %p264
        $region50: #{_lambda_.1} parent=11 // pred_check_branch
          %520 = sbr.rel (%p518) target = $region52
        $region51: #{_lambda_.1} parent=11 // pred_region
          _
        $region52: #{_lambda_.1} parent=11 // pred_fallthru
          _
        // Predicated region
        $region53: #{_lambda_.1} parent=11 // pred_check
          %p521 = pneg %p285
        $region54: #{_lambda_.1} parent=11 // pred_check_branch
          %523 = sbr.rel (%p521) target = $region56
        $region55: #{_lambda_.1} parent=11 // pred_region
          %525 = vsyncadd [#allocation11], 0
          %s527 = sshll.u32 %s11, 4
          %s528 = int_to_ptr.hbm [resolvable:$true] %s527
          %s529 = sshll.u32 [#allocation12], 4
          %s530 = int_to_ptr.vmem [resolvable:$true] %s529
          %532 = dma.hbm_to_vmem [thread:$0]  %s528, 128, %s530, [#allocation11]
        $region56: #{_lambda_.1} parent=11 // pred_fallthru
          _
        // Predicated region
        $region57: #{_lambda_.1} parent=11 // pred_check
          %p533 = pneg %p306
        $region58: #{_lambda_.1} parent=11 // pred_check_branch
          %535 = sbr.rel (%p533) target = $region60
        $region59: #{_lambda_.1} parent=11 // pred_region
          _
        $region60: #{_lambda_.1} parent=11 // pred_fallthru
          _
        // Predicated region
        $region61: #{_lambda_.1} parent=11 // pred_check
          %p536 = pneg %p327
        $region62: #{_lambda_.1} parent=11 // pred_check_branch
          %538 = sbr.rel (%p536) target = $region64
        $region63: #{_lambda_.1} parent=11 // pred_region
          _
        $region64: #{_lambda_.1} parent=11 // pred_fallthru
          _
        // Predicated region
        $region65: #{_lambda_.1} parent=11 // pred_check
          %p539 = pneg %p348
        $region66: #{_lambda_.1} parent=11 // pred_check_branch
          %541 = sbr.rel (%p539) target = $region68
        $region67: #{_lambda_.1} parent=11 // pred_region
          %543 = vsyncadd [#allocation14], 0
          %s544 = sshll.u32 %s14, 4
          %s545 = int_to_ptr.hbm [resolvable:$true] %s544
          %s546 = sshll.u32 [#allocation13], 4
          %s547 = int_to_ptr.vmem [resolvable:$true] %s546
          %552 = dma.hbm_to_vmem [thread:$0]  %s545, 256, %s547, [#allocation14], 128, 128, 8
        $region68: #{_lambda_.1} parent=11 // pred_fallthru
          _
        // Predicated region
        $region69: #{_lambda_.1} parent=11 // pred_check
          %p553 = pneg %p369
        $region70: #{_lambda_.1} parent=11 // pred_check_branch
          %555 = sbr.rel (%p553) target = $region72
        $region71: #{_lambda_.1} parent=11 // pred_region
          %557 = vsyncadd [#allocation14], 0
          %s558 = sshll.u32 %s15, 4
          %s559 = int_to_ptr.hbm [resolvable:$true] %s558
          %s560 = sshll.u32 [#allocation15], 4
          %s561 = int_to_ptr.vmem [resolvable:$true] %s560
          %566 = dma.hbm_to_vmem [thread:$0]  %s559, 512, %s561, [#allocation14], 128, 128, 8
        $region72: #{_lambda_.1} parent=11 // pred_fallthru
          _
        // Predicated region
        $region73: #{_lambda_.1} parent=11 // pred_check
          %p567 = pneg %p390
        $region74: #{_lambda_.1} parent=11 // pred_check_branch
          %569 = sbr.rel (%p567) target = $region76
        $region75: #{_lambda_.1} parent=11 // pred_region
          _
        $region76: #{_lambda_.1} parent=11 // pred_fallthru
          _
      $region12: #{_lambda_.1} parent=5 // pred_fallthru
        _
      %p570 = scmp.lt.s32.totalorder %s28, 2
      // Predicated region
      $region77: #{_lambda_.1} parent=5 // pred_check
        %p571 = pneg %p570
      $region78: #{_lambda_.1} parent=5 // pred_check_branch
        %573 = sbr.rel (%p571) target = $region80
      $region79: #{_lambda_.1} parent=5 // pred_region
        // Predicated region
        $region81: #{_lambda_.1} parent=79 // pred_check
          %p574 = pneg %p48
        $region82: #{_lambda_.1} parent=79 // pred_check_branch
          %576 = sbr.rel (%p574) target = $region84
        $region83: #{_lambda_.1} parent=79 // pred_region
          %p577 = scmp.lt.s32.totalorder %s28, 1
          %s578 = scalar_select %p577, %s28, 1
          %s579 = smul.addr %s578, 41
          %s580 = smul.addr %s579, 8
          %s581 = scalar_lea.vmem %s0, %s580
        $region84: #{_lambda_.1} parent=79 // pred_fallthru
          _
      $region80: #{_lambda_.1} parent=5 // pred_fallthru
        _
      %p582 = scmp.le.s32.totalorder 1, %s28
      %p583 = scmp.lt.s32.totalorder %s28, 3
      %p584 = pnand %p582, %p583
      %p585 = pneg %p584
      // Predicated region
      $region85: #{_lambda_.1} parent=5 // pred_check
        _
      $region86: #{_lambda_.1} parent=5 // pred_check_branch
        %587 = sbr.rel (%p584) target = $region88
      $region87: #{_lambda_.1} parent=5 // pred_region
        %s588 = ssub.s32 %s28, 1
        // Predicated region
        $region89: #{_lambda_.1} parent=87 // pred_check
          %p589 = pneg %p75
        $region90: #{_lambda_.1} parent=87 // pred_check_branch
          %591 = sbr.rel (%p589) target = $region92
        $region91: #{_lambda_.1} parent=87 // pred_region
          %593 = dma.done [#allocation3], 1024
        $region92: #{_lambda_.1} parent=87 // pred_fallthru
          _
        // Predicated region
        $region93: #{_lambda_.1} parent=87 // pred_check
          %p594 = pneg %p96
        $region94: #{_lambda_.1} parent=87 // pred_check_branch
          %596 = sbr.rel (%p594) target = $region96
        $region95: #{_lambda_.1} parent=87 // pred_region
          %598 = dma.done [#allocation5], 16
        $region96: #{_lambda_.1} parent=87 // pred_fallthru
          _
        // Predicated region
        $region97: #{_lambda_.1} parent=87 // pred_check
          %p599 = pneg %p138
        $region98: #{_lambda_.1} parent=87 // pred_check_branch
          %601 = sbr.rel (%p599) target = $region100
        $region99: #{_lambda_.1} parent=87 // pred_region
          %603 = dma.done [#allocation5], 4096
        $region100: #{_lambda_.1} parent=87 // pred_fallthru
          _
        // Predicated region
        $region101: #{_lambda_.1} parent=87 // pred_check
          %p604 = pneg %p159
        $region102: #{_lambda_.1} parent=87 // pred_check_branch
          %606 = sbr.rel (%p604) target = $region104
        $region103: #{_lambda_.1} parent=87 // pred_region
          %608 = dma.done [#allocation8], 16
        $region104: #{_lambda_.1} parent=87 // pred_fallthru
          _
        // Predicated region
        $region105: #{_lambda_.1} parent=87 // pred_check
          %p609 = pneg %p180
        $region106: #{_lambda_.1} parent=87 // pred_check_branch
          %611 = sbr.rel (%p609) target = $region108
        $region107: #{_lambda_.1} parent=87 // pred_region
          %613 = dma.done [#allocation8], 640
        $region108: #{_lambda_.1} parent=87 // pred_fallthru
          _
        // Predicated region
        $region109: #{_lambda_.1} parent=87 // pred_check
          %p614 = pneg %p222
        $region110: #{_lambda_.1} parent=87 // pred_check_branch
          %616 = sbr.rel (%p614) target = $region112
        $region111: #{_lambda_.1} parent=87 // pred_region
          %618 = dma.done [#allocation11], 16
        $region112: #{_lambda_.1} parent=87 // pred_fallthru
          _
        // Predicated region
        $region113: #{_lambda_.1} parent=87 // pred_check
          %p619 = pneg %p285
        $region114: #{_lambda_.1} parent=87 // pred_check_branch
          %621 = sbr.rel (%p619) target = $region116
        $region115: #{_lambda_.1} parent=87 // pred_region
          %623 = dma.done [#allocation11], 128
        $region116: #{_lambda_.1} parent=87 // pred_fallthru
          _
        // Predicated region
        $region117: #{_lambda_.1} parent=87 // pred_check
          %p624 = pneg %p348
        $region118: #{_lambda_.1} parent=87 // pred_check_branch
          %626 = sbr.rel (%p624) target = $region120
        $region119: #{_lambda_.1} parent=87 // pred_region
          %628 = dma.done [#allocation14], 256
        $region120: #{_lambda_.1} parent=87 // pred_fallthru
          _
        // Predicated region
        $region121: #{_lambda_.1} parent=87 // pred_check
          %p629 = pneg %p369
        $region122: #{_lambda_.1} parent=87 // pred_check_branch
          %631 = sbr.rel (%p629) target = $region124
        $region123: #{_lambda_.1} parent=87 // pred_region
          %633 = dma.done [#allocation14], 512
        $region124: #{_lambda_.1} parent=87 // pred_fallthru
          _
        %p634 = scmp.lt.s32.totalorder %s33, 1
        %s635 = scalar_select %p634, %s33, 1
        %s636 = smul.addr %s635, 41
        %s637 = smul.addr %s636, 8
        %s638 = scalar_lea.vmem %s0, %s637
        %p639 = pneg %p54
        %p640 = pneg %p51
        %p641 = pneg %p75
        %p642 = pneg %p72
        %p643 = pneg %p96
        %p644 = pneg %p93
        %p645 = pneg %p117
        %p646 = pneg %p114
        %p647 = pneg %p138
        %p648 = pneg %p135
        %p649 = pneg %p159
        %p650 = pneg %p156
        %p651 = pneg %p180
        %p652 = pneg %p177
        %p653 = pneg %p201
        %p654 = pneg %p198
        %p655 = pneg %p222
        %p656 = pneg %p219
        %p657 = pneg %p243
        %p658 = pneg %p240
        %p659 = pneg %p264
        %p660 = pneg %p261
        %p661 = pneg %p285
        %p662 = pneg %p282
        %p663 = pneg %p306
        %p664 = pneg %p303
        %p665 = pneg %p327
        %p666 = pneg %p324
        %p667 = pneg %p348
        %p668 = pneg %p345
        %p669 = pneg %p369
        %p670 = pneg %p366
        %p671 = pneg %p390
        %p672 = pneg %p387
        %p673 = pneg %p416
        %p674 = pneg %p413
        %p675 = scmp.lt.s32.totalorder %s33, 1
        %s676 = scalar_select %p675, %s33, 1
        %s677 = smul.addr %s676, 2
        %s678 = smul.addr %s677, 8
        %s679 = scalar_lea.vmem %s17, %s678
        %p680 = scmp.lt.s32.totalorder %s33, 1
        %s681 = scalar_select %p680, %s33, 1
        %s682 = smul.addr %s681, 41
        %s683 = smul.addr %s682, 8
        %s684 = scalar_lea.vmem %s0, %s683
        %p685 = scmp.lt.s32.totalorder %s33, 1
        %s686 = scalar_select %p685, %s33, 1
        %s687 = smul.addr %s686, 2
        %s688 = smul.addr %s687, 8
        %s689 = scalar_lea.vmem %s17, %s688
        %v690 = vld [vmem:[%s684] sm:$0xff]
        %v691 = vld [vmem:[%s684 + $0x8] sm:$0xff]
        %v692 = vld [vmem:[%s684 + $0x10] sm:$0xff]
        %v693 = vld [vmem:[%s684 + $0x18] sm:$0xff]
        %v694 = vld [vmem:[%s684 + $0x20] sm:$0xff]
        %v695 = vld [vmem:[%s684 + $0x28] sm:$0xff]
        %v696 = vld [vmem:[%s684 + $0x30] sm:$0xff]
        %v697 = vld [vmem:[%s684 + $0x38] sm:$0xff]
        %v698 = vld [vmem:[%s684 + $0x40] sm:$0xff]
        %v699 = vld [vmem:[%s684 + $0x48] sm:$0xff]
        %v700 = vld [vmem:[%s684 + $0x50] sm:$0xff]
        %v701 = vld [vmem:[%s684 + $0x58] sm:$0xff]
        %v702 = vld [vmem:[%s684 + $0x60] sm:$0xff]
        %v703 = vld [vmem:[%s684 + $0x68] sm:$0xff]
        %v704 = vld [vmem:[%s684 + $0x70] sm:$0xff]
        %v705 = vld [vmem:[%s684 + $0x78] sm:$0xff]
        %v706 = vld [vmem:[%s684 + $0x80] sm:$0xff]
        %v707 = vld [vmem:[%s684 + $0x88] sm:$0xff]
        %v708 = vld [vmem:[%s684 + $0x90] sm:$0xff]
        %v709 = vld [vmem:[%s684 + $0x98] sm:$0xff]
        %v710 = vld [vmem:[%s684 + $0xa0] sm:$0xff]
        %v711 = vld [vmem:[%s684 + $0xa8] sm:$0xff]
        %v712 = vld [vmem:[%s684 + $0xb0] sm:$0xff]
        %v713 = vld [vmem:[%s684 + $0xb8] sm:$0xff]
        %v714 = vld [vmem:[%s684 + $0xc0] sm:$0xff]
        %v715 = vld [vmem:[%s684 + $0xc8] sm:$0xff]
        %v716 = vld [vmem:[%s684 + $0xd0] sm:$0xff]
        %v717 = vld [vmem:[%s684 + $0xd8] sm:$0xff]
        %v718 = vld [vmem:[%s684 + $0xe0] sm:$0xff]
        %v719 = vld [vmem:[%s684 + $0xe8] sm:$0xff]
        %v720 = vld [vmem:[%s684 + $0xf0] sm:$0xff]
        %v721 = vld [vmem:[%s684 + $0xf8] sm:$0xff]
        %v722 = vld [vmem:[%s684 + $0x100] sm:$0xff]
        %v723 = vld [vmem:[%s684 + $0x108] sm:$0xff]
        %v724 = vld [vmem:[%s684 + $0x110] sm:$0xff]
        %v725 = vld [vmem:[%s684 + $0x118] sm:$0xff]
        %v726 = vld [vmem:[%s684 + $0x120] sm:$0xff]
        %v727 = vld [vmem:[%s684 + $0x128] sm:$0xff]
        %v728 = vld [vmem:[%s684 + $0x130] sm:$0xff]
        %v729 = vld [vmem:[%s684 + $0x138] sm:$0xff]
        %v730 = vld [vmem:[%s684 + $0x140] sm:$0xf]
        %v731 = vld [vmem:[#allocation2] sm:$0xf]
        %s732 = scalar_lea.vmem [#allocation2], 4
        %v733 = vld [vmem:[%s732] sm:$0xf]
        %vm768 = vcmask 1046528
        %v769 = vrot.slane %v690, 1
        %v770 = vrot.slane %v691, 1
        %v771 = vsel %vm768, %v769, %v770
        %v772 = vrot.slane %v692, 1
        %v773 = vsel %vm768, %v770, %v772
        %v774 = vrot.slane %v693, 1
        %v775 = vsel %vm768, %v772, %v774
        %v776 = vrot.slane %v694, 1
        %v777 = vsel %vm768, %v774, %v776
        %v778 = vrot.slane %v695, 1
        %v779 = vsel %vm768, %v776, %v778
        %v780 = vrot.slane %v696, 1
        %v781 = vsel %vm768, %v778, %v780
        %v782 = vrot.slane %v697, 1
        %v783 = vsel %vm768, %v780, %v782
        %v784 = vrot.slane %v698, 1
        %v785 = vsel %vm768, %v782, %v784
        %v786 = vrot.slane %v699, 1
        %v787 = vsel %vm768, %v784, %v786
        %v788 = vrot.slane %v700, 1
        %v789 = vsel %vm768, %v786, %v788
        %v790 = vrot.slane %v701, 1
        %v791 = vsel %vm768, %v788, %v790
        %v792 = vrot.slane %v702, 1
        %v793 = vsel %vm768, %v790, %v792
        %v794 = vrot.slane %v703, 1
        %v795 = vsel %vm768, %v792, %v794
        %v796 = vrot.slane %v704, 1
        %v797 = vsel %vm768, %v794, %v796
        %v798 = vrot.slane %v705, 1
        %v799 = vsel %vm768, %v796, %v798
        %v800 = vrot.slane %v706, 1
        %v801 = vsel %vm768, %v798, %v800
        %v802 = vrot.slane %v707, 1
        %v803 = vsel %vm768, %v800, %v802
        %v804 = vrot.slane %v708, 1
        %v805 = vsel %vm768, %v802, %v804
        %v806 = vrot.slane %v709, 1
        %v807 = vsel %vm768, %v804, %v806
        %v808 = vrot.slane %v710, 1
        %v809 = vsel %vm768, %v806, %v808
        %v810 = vrot.slane %v711, 1
        %v811 = vsel %vm768, %v808, %v810
        %v812 = vrot.slane %v712, 1
        %v813 = vsel %vm768, %v810, %v812
        %v814 = vrot.slane %v713, 1
        %v815 = vsel %vm768, %v812, %v814
        %v816 = vrot.slane %v714, 1
        %v817 = vsel %vm768, %v814, %v816
        %v818 = vrot.slane %v715, 1
        %v819 = vsel %vm768, %v816, %v818
        %v820 = vrot.slane %v716, 1
        %v821 = vsel %vm768, %v818, %v820
        %v822 = vrot.slane %v717, 1
        %v823 = vsel %vm768, %v820, %v822
        %v824 = vrot.slane %v718, 1
        %v825 = vsel %vm768, %v822, %v824
        %v826 = vrot.slane %v719, 1
        %v827 = vsel %vm768, %v824, %v826
        %v828 = vrot.slane %v720, 1
        %v829 = vsel %vm768, %v826, %v828
        %v830 = vrot.slane %v721, 1
        %v831 = vsel %vm768, %v828, %v830
        %v832 = vrot.slane %v722, 1
        %v833 = vsel %vm768, %v830, %v832
        %v834 = vrot.slane %v723, 1
        %v835 = vsel %vm768, %v832, %v834
        %vm836 = vcmask 31744
        %v837 = vsel %vm836, %v771, 0
        %v839 = vsel %vm836, %v773, 0
        %v841 = vsel %vm836, %v775, 0
        %v843 = vsel %vm836, %v777, 0
        %v845 = vsel %vm836, %v779, 0
        %v847 = vsel %vm836, %v781, 0
        %v849 = vsel %vm836, %v783, 0
        %v851 = vsel %vm836, %v785, 0
        %v853 = vsel %vm836, %v787, 0
        %v855 = vsel %vm836, %v789, 0
        %v857 = vsel %vm836, %v791, 0
        %v859 = vsel %vm836, %v793, 0
        %v861 = vsel %vm836, %v795, 0
        %v863 = vsel %vm836, %v797, 0
        %v865 = vsel %vm836, %v799, 0
        %v867 = vsel %vm836, %v801, 0
        %v869 = vsel %vm836, %v803, 0
        %v871 = vsel %vm836, %v805, 0
        %v873 = vsel %vm836, %v807, 0
        %v875 = vsel %vm836, %v809, 0
        %v877 = vsel %vm836, %v811, 0
        %v879 = vsel %vm836, %v813, 0
        %v881 = vsel %vm836, %v815, 0
        %v883 = vsel %vm836, %v817, 0
        %v885 = vsel %vm836, %v819, 0
        %v887 = vsel %vm836, %v821, 0
        %v889 = vsel %vm836, %v823, 0
        %v891 = vsel %vm836, %v825, 0
        %v893 = vsel %vm836, %v827, 0
        %v895 = vsel %vm836, %v829, 0
        %v897 = vsel %vm836, %v831, 0
        %v899 = vsel %vm836, %v833, 0
        %v901 = vsel %vm836, %v835, 0
        %v903 = vsel %vm836, %v834, 0
        %vm905 = vcmask 1043456
        %v907 = vsel %vm905, %v733, 0
        %909 = vmatpush.msra.mxu0 0.0
        %910 = vmatpush.msra.mxu0 0.0
        %911 = vmatpush.msra.mxu0 0.0
        %912 = vmatpush.msra.mxu0 0.0
        %913 = vmatpush.msra.mxu0 0.0
        %914 = vmatpush.msra.mxu0 0.0
        %915 = vmatpush.msra.mxu0 0.0
        %916 = vmatpush.msra.mxu0 0.0
        %917 = vmatpush.msra.mxu0 0.0
        %918 = vmatpush.msra.mxu0 0.0
        %919 = vmatpush.msra.mxu0 0.0
        %920 = vmatpush.msra.mxu0 0.0
        %921 = vmatpush.msra.mxu0 0.0
        %922 = vmatpush.msra.mxu0 0.0
        %923 = vmatpush.msra.mxu0 0.0
        %924 = vmatpush.msra.mxu0 %v907
        %925 = vmatmul.f32.gmra.mxu0 %v837
        %v926 = vpop.f32.mrf.mxu0
        %v927 = vadd.f32 0.0, %v926
        %928 = vmatmul.f32.gmra.mxu0 %v839
        %v929 = vpop.f32.mrf.mxu0
        %v930 = vadd.f32 0.0, %v929
        %931 = vmatmul.f32.gmra.mxu0 %v841
        %v932 = vpop.f32.mrf.mxu0
        %v933 = vadd.f32 0.0, %v932
        %934 = vmatmul.f32.gmra.mxu0 %v843
        %v935 = vpop.f32.mrf.mxu0
        %v936 = vadd.f32 0.0, %v935
        %937 = vmatmul.f32.gmra.mxu0 %v845
        %v938 = vpop.f32.mrf.mxu0
        %v939 = vadd.f32 0.0, %v938
        %940 = vmatmul.f32.gmra.mxu0 %v847
        %v941 = vpop.f32.mrf.mxu0
        %v942 = vadd.f32 0.0, %v941
        %943 = vmatmul.f32.gmra.mxu0 %v849
        %v944 = vpop.f32.mrf.mxu0
        %v945 = vadd.f32 0.0, %v944
        %946 = vmatmul.f32.gmra.mxu0 %v851
        %v947 = vpop.f32.mrf.mxu0
        %v948 = vadd.f32 0.0, %v947
        %949 = vmatmul.f32.gmra.mxu0 %v853
        %v950 = vpop.f32.mrf.mxu0
        %v951 = vadd.f32 0.0, %v950
        %952 = vmatmul.f32.gmra.mxu0 %v855
        %v953 = vpop.f32.mrf.mxu0
        %v954 = vadd.f32 0.0, %v953
        %955 = vmatmul.f32.gmra.mxu0 %v857
        %v956 = vpop.f32.mrf.mxu0
        %v957 = vadd.f32 0.0, %v956
        %958 = vmatmul.f32.gmra.mxu0 %v859
        %v959 = vpop.f32.mrf.mxu0
        %v960 = vadd.f32 0.0, %v959
        %961 = vmatmul.f32.gmra.mxu0 %v861
        %v962 = vpop.f32.mrf.mxu0
        %v963 = vadd.f32 0.0, %v962
        %964 = vmatmul.f32.gmra.mxu0 %v863
        %v965 = vpop.f32.mrf.mxu0
        %v966 = vadd.f32 0.0, %v965
        %967 = vmatmul.f32.gmra.mxu0 %v865
        %v968 = vpop.f32.mrf.mxu0
        %v969 = vadd.f32 0.0, %v968
        %970 = vmatmul.f32.gmra.mxu0 %v867
        %v971 = vpop.f32.mrf.mxu0
        %v972 = vadd.f32 0.0, %v971
        %973 = vmatmul.f32.gmra.mxu0 %v869
        %v974 = vpop.f32.mrf.mxu0
        %v975 = vadd.f32 0.0, %v974
        %976 = vmatmul.f32.gmra.mxu0 %v871
        %v977 = vpop.f32.mrf.mxu0
        %v978 = vadd.f32 0.0, %v977
        %979 = vmatmul.f32.gmra.mxu0 %v873
        %v980 = vpop.f32.mrf.mxu0
        %v981 = vadd.f32 0.0, %v980
        %982 = vmatmul.f32.gmra.mxu0 %v875
        %v983 = vpop.f32.mrf.mxu0
        %v984 = vadd.f32 0.0, %v983
        %985 = vmatmul.f32.gmra.mxu0 %v877
        %v986 = vpop.f32.mrf.mxu0
        %v987 = vadd.f32 0.0, %v986
        %988 = vmatmul.f32.gmra.mxu0 %v879
        %v989 = vpop.f32.mrf.mxu0
        %v990 = vadd.f32 0.0, %v989
        %991 = vmatmul.f32.gmra.mxu0 %v881
        %v992 = vpop.f32.mrf.mxu0
        %v993 = vadd.f32 0.0, %v992
        %994 = vmatmul.f32.gmra.mxu0 %v883
        %v995 = vpop.f32.mrf.mxu0
        %v996 = vadd.f32 0.0, %v995
        %997 = vmatmul.f32.gmra.mxu0 %v885
        %v998 = vpop.f32.mrf.mxu0
        %v999 = vadd.f32 0.0, %v998
        %1000 = vmatmul.f32.gmra.mxu0 %v887
        %v1001 = vpop.f32.mrf.mxu0
        %v1002 = vadd.f32 0.0, %v1001
        %1003 = vmatmul.f32.gmra.mxu0 %v889
        %v1004 = vpop.f32.mrf.mxu0
        %v1005 = vadd.f32 0.0, %v1004
        %1006 = vmatmul.f32.gmra.mxu0 %v891
        %v1007 = vpop.f32.mrf.mxu0
        %v1008 = vadd.f32 0.0, %v1007
        %1009 = vmatmul.f32.gmra.mxu0 %v893
        %v1010 = vpop.f32.mrf.mxu0
        %v1011 = vadd.f32 0.0, %v1010
        %1012 = vmatmul.f32.gmra.mxu0 %v895
        %v1013 = vpop.f32.mrf.mxu0
        %v1014 = vadd.f32 0.0, %v1013
        %1015 = vmatmul.f32.gmra.mxu0 %v897
        %v1016 = vpop.f32.mrf.mxu0
        %v1017 = vadd.f32 0.0, %v1016
        %1018 = vmatmul.f32.gmra.mxu0 %v899
        %v1019 = vpop.f32.mrf.mxu0
        %v1020 = vadd.f32 0.0, %v1019
        %1021 = vmatmul.f32.gmra.mxu0 %v901
        %v1022 = vpop.f32.mrf.mxu0
        %v1023 = vadd.f32 0.0, %v1022
        %1024 = vmatmul.f32.gmra.mxu0 %v903
        %v1025 = vpop.f32.mrf.mxu0
        %v1026 = vadd.f32 0.0, %v1025
        %1027 = vdwg.mxu0
        %v1028 = vsel %vm836, %v690, 0
        %v1030 = vsel %vm836, %v691, 0
        %v1032 = vsel %vm836, %v692, 0
        %v1034 = vsel %vm836, %v693, 0
        %v1036 = vsel %vm836, %v694, 0
        %v1038 = vsel %vm836, %v695, 0
        %v1040 = vsel %vm836, %v696, 0
        %v1042 = vsel %vm836, %v697, 0
        %v1044 = vsel %vm836, %v698, 0
        %v1046 = vsel %vm836, %v699, 0
        %v1048 = vsel %vm836, %v700, 0
        %v1050 = vsel %vm836, %v701, 0
        %v1052 = vsel %vm836, %v702, 0
        %v1054 = vsel %vm836, %v703, 0
        %v1056 = vsel %vm836, %v704, 0
        %v1058 = vsel %vm836, %v705, 0
        %v1060 = vsel %vm836, %v706, 0
        %v1062 = vsel %vm836, %v707, 0
        %v1064 = vsel %vm836, %v708, 0
        %v1066 = vsel %vm836, %v709, 0
        %v1068 = vsel %vm836, %v710, 0
        %v1070 = vsel %vm836, %v711, 0
        %v1072 = vsel %vm836, %v712, 0
        %v1074 = vsel %vm836, %v713, 0
        %v1076 = vsel %vm836, %v714, 0
        %v1078 = vsel %vm836, %v715, 0
        %v1080 = vsel %vm836, %v716, 0
        %v1082 = vsel %vm836, %v717, 0
        %v1084 = vsel %vm836, %v718, 0
        %v1086 = vsel %vm836, %v719, 0
        %v1088 = vsel %vm836, %v720, 0
        %v1090 = vsel %vm836, %v721, 0
        %v1092 = vsel %vm836, %v722, 0
        %v1094 = vsel %vm836, %v723, 0
        %v1097 = vsel %vm905, %v731, 0
        %1099 = vmatpush.msra.mxu0 0.0
        %1100 = vmatpush.msra.mxu0 0.0
        %1101 = vmatpush.msra.mxu0 0.0
        %1102 = vmatpush.msra.mxu0 0.0
        %1103 = vmatpush.msra.mxu0 0.0
        %1104 = vmatpush.msra.mxu0 0.0
        %1105 = vmatpush.msra.mxu0 0.0
        %1106 = vmatpush.msra.mxu0 0.0
        %1107 = vmatpush.msra.mxu0 0.0
        %1108 = vmatpush.msra.mxu0 0.0
        %1109 = vmatpush.msra.mxu0 0.0
        %1110 = vmatpush.msra.mxu0 0.0
        %1111 = vmatpush.msra.mxu0 0.0
        %1112 = vmatpush.msra.mxu0 0.0
        %1113 = vmatpush.msra.mxu0 0.0
        %1114 = vmatpush.msra.mxu0 %v1097
        %1115 = vmatmul.f32.gmra.mxu0 %v1028
        %v1116 = vpop.f32.mrf.mxu0
        %v1117 = vadd.f32 %v927, %v1116
        %1118 = vmatmul.f32.gmra.mxu0 %v1030
        %v1119 = vpop.f32.mrf.mxu0
        %v1120 = vadd.f32 %v930, %v1119
        %1121 = vmatmul.f32.gmra.mxu0 %v1032
        %v1122 = vpop.f32.mrf.mxu0
        %v1123 = vadd.f32 %v933, %v1122
        %1124 = vmatmul.f32.gmra.mxu0 %v1034
        %v1125 = vpop.f32.mrf.mxu0
        %v1126 = vadd.f32 %v936, %v1125
        %1127 = vmatmul.f32.gmra.mxu0 %v1036
        %v1128 = vpop.f32.mrf.mxu0
        %v1129 = vadd.f32 %v939, %v1128
        %1130 = vmatmul.f32.gmra.mxu0 %v1038
        %v1131 = vpop.f32.mrf.mxu0
        %v1132 = vadd.f32 %v942, %v1131
        %1133 = vmatmul.f32.gmra.mxu0 %v1040
        %v1134 = vpop.f32.mrf.mxu0
        %v1135 = vadd.f32 %v945, %v1134
        %1136 = vmatmul.f32.gmra.mxu0 %v1042
        %v1137 = vpop.f32.mrf.mxu0
        %v1138 = vadd.f32 %v948, %v1137
        %1139 = vmatmul.f32.gmra.mxu0 %v1044
        %v1140 = vpop.f32.mrf.mxu0
        %v1141 = vadd.f32 %v951, %v1140
        %1142 = vmatmul.f32.gmra.mxu0 %v1046
        %v1143 = vpop.f32.mrf.mxu0
        %v1144 = vadd.f32 %v954, %v1143
        %1145 = vmatmul.f32.gmra.mxu0 %v1048
        %v1146 = vpop.f32.mrf.mxu0
        %v1147 = vadd.f32 %v957, %v1146
        %1148 = vmatmul.f32.gmra.mxu0 %v1050
        %v1149 = vpop.f32.mrf.mxu0
        %v1150 = vadd.f32 %v960, %v1149
        %1151 = vmatmul.f32.gmra.mxu0 %v1052
        %v1152 = vpop.f32.mrf.mxu0
        %v1153 = vadd.f32 %v963, %v1152
        %1154 = vmatmul.f32.gmra.mxu0 %v1054
        %v1155 = vpop.f32.mrf.mxu0
        %v1156 = vadd.f32 %v966, %v1155
        %1157 = vmatmul.f32.gmra.mxu0 %v1056
        %v1158 = vpop.f32.mrf.mxu0
        %v1159 = vadd.f32 %v969, %v1158
        %1160 = vmatmul.f32.gmra.mxu0 %v1058
        %v1161 = vpop.f32.mrf.mxu0
        %v1162 = vadd.f32 %v972, %v1161
        %1163 = vmatmul.f32.gmra.mxu0 %v1060
        %v1164 = vpop.f32.mrf.mxu0
        %v1165 = vadd.f32 %v975, %v1164
        %1166 = vmatmul.f32.gmra.mxu0 %v1062
        %v1167 = vpop.f32.mrf.mxu0
        %v1168 = vadd.f32 %v978, %v1167
        %1169 = vmatmul.f32.gmra.mxu0 %v1064
        %v1170 = vpop.f32.mrf.mxu0
        %v1171 = vadd.f32 %v981, %v1170
        %1172 = vmatmul.f32.gmra.mxu0 %v1066
        %v1173 = vpop.f32.mrf.mxu0
        %v1174 = vadd.f32 %v984, %v1173
        %1175 = vmatmul.f32.gmra.mxu0 %v1068
        %v1176 = vpop.f32.mrf.mxu0
        %v1177 = vadd.f32 %v987, %v1176
        %1178 = vmatmul.f32.gmra.mxu0 %v1070
        %v1179 = vpop.f32.mrf.mxu0
        %v1180 = vadd.f32 %v990, %v1179
        %1181 = vmatmul.f32.gmra.mxu0 %v1072
        %v1182 = vpop.f32.mrf.mxu0
        %v1183 = vadd.f32 %v993, %v1182
        %1184 = vmatmul.f32.gmra.mxu0 %v1074
        %v1185 = vpop.f32.mrf.mxu0
        %v1186 = vadd.f32 %v996, %v1185
        %1187 = vmatmul.f32.gmra.mxu0 %v1076
        %v1188 = vpop.f32.mrf.mxu0
        %v1189 = vadd.f32 %v999, %v1188
        %1190 = vmatmul.f32.gmra.mxu0 %v1078
        %v1191 = vpop.f32.mrf.mxu0
        %v1192 = vadd.f32 %v1002, %v1191
        %1193 = vmatmul.f32.gmra.mxu0 %v1080
        %v1194 = vpop.f32.mrf.mxu0
        %v1195 = vadd.f32 %v1005, %v1194
        %1196 = vmatmul.f32.gmra.mxu0 %v1082
        %v1197 = vpop.f32.mrf.mxu0
        %v1198 = vadd.f32 %v1008, %v1197
        %1199 = vmatmul.f32.gmra.mxu0 %v1084
        %v1200 = vpop.f32.mrf.mxu0
        %v1201 = vadd.f32 %v1011, %v1200
        %1202 = vmatmul.f32.gmra.mxu0 %v1086
        %v1203 = vpop.f32.mrf.mxu0
        %v1204 = vadd.f32 %v1014, %v1203
        %1205 = vmatmul.f32.gmra.mxu0 %v1088
        %v1206 = vpop.f32.mrf.mxu0
        %v1207 = vadd.f32 %v1017, %v1206
        %1208 = vmatmul.f32.gmra.mxu0 %v1090
        %v1209 = vpop.f32.mrf.mxu0
        %v1210 = vadd.f32 %v1020, %v1209
        %1211 = vmatmul.f32.gmra.mxu0 %v1092
        %v1212 = vpop.f32.mrf.mxu0
        %v1213 = vadd.f32 %v1023, %v1212
        %1214 = vmatmul.f32.gmra.mxu0 %v1094
        %v1215 = vpop.f32.mrf.mxu0
        %v1216 = vadd.f32 %v1026, %v1215
        %1217 = vdwg.mxu0
        %s1218 = scalar_lea.vmem [#allocation2], 8
        %v1219 = vld [vmem:[%s1218] sm:$0xf]
        %vm1220 = vcmask 1045504
        %v1221 = vrot.slane %v690, 2
        %v1222 = vrot.slane %v691, 2
        %v1223 = vsel %vm1220, %v1221, %v1222
        %v1224 = vrot.slane %v692, 2
        %v1225 = vsel %vm1220, %v1222, %v1224
        %v1226 = vrot.slane %v693, 2
        %v1227 = vsel %vm1220, %v1224, %v1226
        %v1228 = vrot.slane %v694, 2
        %v1229 = vsel %vm1220, %v1226, %v1228
        %v1230 = vrot.slane %v695, 2
        %v1231 = vsel %vm1220, %v1228, %v1230
        %v1232 = vrot.slane %v696, 2
        %v1233 = vsel %vm1220, %v1230, %v1232
        %v1234 = vrot.slane %v697, 2
        %v1235 = vsel %vm1220, %v1232, %v1234
        %v1236 = vrot.slane %v698, 2
        %v1237 = vsel %vm1220, %v1234, %v1236
        %v1238 = vrot.slane %v699, 2
        %v1239 = vsel %vm1220, %v1236, %v1238
        %v1240 = vrot.slane %v700, 2
        %v1241 = vsel %vm1220, %v1238, %v1240
        %v1242 = vrot.slane %v701, 2
        %v1243 = vsel %vm1220, %v1240, %v1242
        %v1244 = vrot.slane %v702, 2
        %v1245 = vsel %vm1220, %v1242, %v1244
        %v1246 = vrot.slane %v703, 2
        %v1247 = vsel %vm1220, %v1244, %v1246
        %v1248 = vrot.slane %v704, 2
        %v1249 = vsel %vm1220, %v1246, %v1248
        %v1250 = vrot.slane %v705, 2
        %v1251 = vsel %vm1220, %v1248, %v1250
        %v1252 = vrot.slane %v706, 2
        %v1253 = vsel %vm1220, %v1250, %v1252
        %v1254 = vrot.slane %v707, 2
        %v1255 = vsel %vm1220, %v1252, %v1254
        %v1256 = vrot.slane %v708, 2
        %v1257 = vsel %vm1220, %v1254, %v1256
        %v1258 = vrot.slane %v709, 2
        %v1259 = vsel %vm1220, %v1256, %v1258
        %v1260 = vrot.slane %v710, 2
        %v1261 = vsel %vm1220, %v1258, %v1260
        %v1262 = vrot.slane %v711, 2
        %v1263 = vsel %vm1220, %v1260, %v1262
        %v1264 = vrot.slane %v712, 2
        %v1265 = vsel %vm1220, %v1262, %v1264
        %v1266 = vrot.slane %v713, 2
        %v1267 = vsel %vm1220, %v1264, %v1266
        %v1268 = vrot.slane %v714, 2
        %v1269 = vsel %vm1220, %v1266, %v1268
        %v1270 = vrot.slane %v715, 2
        %v1271 = vsel %vm1220, %v1268, %v1270
        %v1272 = vrot.slane %v716, 2
        %v1273 = vsel %vm1220, %v1270, %v1272
        %v1274 = vrot.slane %v717, 2
        %v1275 = vsel %vm1220, %v1272, %v1274
        %v1276 = vrot.slane %v718, 2
        %v1277 = vsel %vm1220, %v1274, %v1276
        %v1278 = vrot.slane %v719, 2
        %v1279 = vsel %vm1220, %v1276, %v1278
        %v1280 = vrot.slane %v720, 2
        %v1281 = vsel %vm1220, %v1278, %v1280
        %v1282 = vrot.slane %v721, 2
        %v1283 = vsel %vm1220, %v1280, %v1282
        %v1284 = vrot.slane %v722, 2
        %v1285 = vsel %vm1220, %v1282, %v1284
        %v1286 = vrot.slane %v723, 2
        %v1287 = vsel %vm1220, %v1284, %v1286
        %v1288 = vsel %vm836, %v1223, 0
        %v1290 = vsel %vm836, %v1225, 0
        %v1292 = vsel %vm836, %v1227, 0
        %v1294 = vsel %vm836, %v1229, 0
        %v1296 = vsel %vm836, %v1231, 0
        %v1298 = vsel %vm836, %v1233, 0
        %v1300 = vsel %vm836, %v1235, 0
        %v1302 = vsel %vm836, %v1237, 0
        %v1304 = vsel %vm836, %v1239, 0
        %v1306 = vsel %vm836, %v1241, 0
        %v1308 = vsel %vm836, %v1243, 0
        %v1310 = vsel %vm836, %v1245, 0
        %v1312 = vsel %vm836, %v1247, 0
        %v1314 = vsel %vm836, %v1249, 0
        %v1316 = vsel %vm836, %v1251, 0
        %v1318 = vsel %vm836, %v1253, 0
        %v1320 = vsel %vm836, %v1255, 0
        %v1322 = vsel %vm836, %v1257, 0
        %v1324 = vsel %vm836, %v1259, 0
        %v1326 = vsel %vm836, %v1261, 0
        %v1328 = vsel %vm836, %v1263, 0
        %v1330 = vsel %vm836, %v1265, 0
        %v1332 = vsel %vm836, %v1267, 0
        %v1334 = vsel %vm836, %v1269, 0
        %v1336 = vsel %vm836, %v1271, 0
        %v1338 = vsel %vm836, %v1273, 0
        %v1340 = vsel %vm836, %v1275, 0
        %v1342 = vsel %vm836, %v1277, 0
        %v1344 = vsel %vm836, %v1279, 0
        %v1346 = vsel %vm836, %v1281, 0
        %v1348 = vsel %vm836, %v1283, 0
        %v1350 = vsel %vm836, %v1285, 0
        %v1352 = vsel %vm836, %v1287, 0
        %v1354 = vsel %vm836, %v1286, 0
        %v1357 = vsel %vm905, %v1219, 0
        %1359 = vmatpush.msra.mxu0 0.0
        %1360 = vmatpush.msra.mxu0 0.0
        %1361 = vmatpush.msra.mxu0 0.0
        %1362 = vmatpush.msra.mxu0 0.0
        %1363 = vmatpush.msra.mxu0 0.0
        %1364 = vmatpush.msra.mxu0 0.0
        %1365 = vmatpush.msra.mxu0 0.0
        %1366 = vmatpush.msra.mxu0 0.0
        %1367 = vmatpush.msra.mxu0 0.0
        %1368 = vmatpush.msra.mxu0 0.0
        %1369 = vmatpush.msra.mxu0 0.0
        %1370 = vmatpush.msra.mxu0 0.0
        %1371 = vmatpush.msra.mxu0 0.0
        %1372 = vmatpush.msra.mxu0 0.0
        %1373 = vmatpush.msra.mxu0 0.0
        %1374 = vmatpush.msra.mxu0 %v1357
        %1375 = vmatmul.f32.gmra.mxu0 %v1288
        %v1376 = vpop.f32.mrf.mxu0
        %v1377 = vadd.f32 0.0, %v1376
        %1378 = vmatmul.f32.gmra.mxu0 %v1290
        %v1379 = vpop.f32.mrf.mxu0
        %v1380 = vadd.f32 0.0, %v1379
        %1381 = vmatmul.f32.gmra.mxu0 %v1292
        %v1382 = vpop.f32.mrf.mxu0
        %v1383 = vadd.f32 0.0, %v1382
        %1384 = vmatmul.f32.gmra.mxu0 %v1294
        %v1385 = vpop.f32.mrf.mxu0
        %v1386 = vadd.f32 0.0, %v1385
        %1387 = vmatmul.f32.gmra.mxu0 %v1296
        %v1388 = vpop.f32.mrf.mxu0
        %v1389 = vadd.f32 0.0, %v1388
        %1390 = vmatmul.f32.gmra.mxu0 %v1298
        %v1391 = vpop.f32.mrf.mxu0
        %v1392 = vadd.f32 0.0, %v1391
        %1393 = vmatmul.f32.gmra.mxu0 %v1300
        %v1394 = vpop.f32.mrf.mxu0
        %v1395 = vadd.f32 0.0, %v1394
        %1396 = vmatmul.f32.gmra.mxu0 %v1302
        %v1397 = vpop.f32.mrf.mxu0
        %v1398 = vadd.f32 0.0, %v1397
        %1399 = vmatmul.f32.gmra.mxu0 %v1304
        %v1400 = vpop.f32.mrf.mxu0
        %v1401 = vadd.f32 0.0, %v1400
        %1402 = vmatmul.f32.gmra.mxu0 %v1306
        %v1403 = vpop.f32.mrf.mxu0
        %v1404 = vadd.f32 0.0, %v1403
        %1405 = vmatmul.f32.gmra.mxu0 %v1308
        %v1406 = vpop.f32.mrf.mxu0
        %v1407 = vadd.f32 0.0, %v1406
        %1408 = vmatmul.f32.gmra.mxu0 %v1310
        %v1409 = vpop.f32.mrf.mxu0
        %v1410 = vadd.f32 0.0, %v1409
        %1411 = vmatmul.f32.gmra.mxu0 %v1312
        %v1412 = vpop.f32.mrf.mxu0
        %v1413 = vadd.f32 0.0, %v1412
        %1414 = vmatmul.f32.gmra.mxu0 %v1314
        %v1415 = vpop.f32.mrf.mxu0
        %v1416 = vadd.f32 0.0, %v1415
        %1417 = vmatmul.f32.gmra.mxu0 %v1316
        %v1418 = vpop.f32.mrf.mxu0
        %v1419 = vadd.f32 0.0, %v1418
        %1420 = vmatmul.f32.gmra.mxu0 %v1318
        %v1421 = vpop.f32.mrf.mxu0
        %v1422 = vadd.f32 0.0, %v1421
        %1423 = vmatmul.f32.gmra.mxu0 %v1320
        %v1424 = vpop.f32.mrf.mxu0
        %v1425 = vadd.f32 0.0, %v1424
        %1426 = vmatmul.f32.gmra.mxu0 %v1322
        %v1427 = vpop.f32.mrf.mxu0
        %v1428 = vadd.f32 0.0, %v1427
        %1429 = vmatmul.f32.gmra.mxu0 %v1324
        %v1430 = vpop.f32.mrf.mxu0
        %v1431 = vadd.f32 0.0, %v1430
        %1432 = vmatmul.f32.gmra.mxu0 %v1326
        %v1433 = vpop.f32.mrf.mxu0
        %v1434 = vadd.f32 0.0, %v1433
        %1435 = vmatmul.f32.gmra.mxu0 %v1328
        %v1436 = vpop.f32.mrf.mxu0
        %v1437 = vadd.f32 0.0, %v1436
        %1438 = vmatmul.f32.gmra.mxu0 %v1330
        %v1439 = vpop.f32.mrf.mxu0
        %v1440 = vadd.f32 0.0, %v1439
        %1441 = vmatmul.f32.gmra.mxu0 %v1332
        %v1442 = vpop.f32.mrf.mxu0
        %v1443 = vadd.f32 0.0, %v1442
        %1444 = vmatmul.f32.gmra.mxu0 %v1334
        %v1445 = vpop.f32.mrf.mxu0
        %v1446 = vadd.f32 0.0, %v1445
        %1447 = vmatmul.f32.gmra.mxu0 %v1336
        %v1448 = vpop.f32.mrf.mxu0
        %v1449 = vadd.f32 0.0, %v1448
        %1450 = vmatmul.f32.gmra.mxu0 %v1338
        %v1451 = vpop.f32.mrf.mxu0
        %v1452 = vadd.f32 0.0, %v1451
        %1453 = vmatmul.f32.gmra.mxu0 %v1340
        %v1454 = vpop.f32.mrf.mxu0
        %v1455 = vadd.f32 0.0, %v1454
        %1456 = vmatmul.f32.gmra.mxu0 %v1342
        %v1457 = vpop.f32.mrf.mxu0
        %v1458 = vadd.f32 0.0, %v1457
        %1459 = vmatmul.f32.gmra.mxu0 %v1344
        %v1460 = vpop.f32.mrf.mxu0
        %v1461 = vadd.f32 0.0, %v1460
        %1462 = vmatmul.f32.gmra.mxu0 %v1346
        %v1463 = vpop.f32.mrf.mxu0
        %v1464 = vadd.f32 0.0, %v1463
        %1465 = vmatmul.f32.gmra.mxu0 %v1348
        %v1466 = vpop.f32.mrf.mxu0
        %v1467 = vadd.f32 0.0, %v1466
        %1468 = vmatmul.f32.gmra.mxu0 %v1350
        %v1469 = vpop.f32.mrf.mxu0
        %v1470 = vadd.f32 0.0, %v1469
        %1471 = vmatmul.f32.gmra.mxu0 %v1352
        %v1472 = vpop.f32.mrf.mxu0
        %v1473 = vadd.f32 0.0, %v1472
        %1474 = vmatmul.f32.gmra.mxu0 %v1354
        %v1475 = vpop.f32.mrf.mxu0
        %v1476 = vadd.f32 0.0, %v1475
        %1477 = vdwg.mxu0
        %v1478 = vadd.f32 %v1117, %v1377
        %v1479 = vadd.f32 %v1120, %v1380
        %v1480 = vadd.f32 %v1123, %v1383
        %v1481 = vadd.f32 %v1126, %v1386
        %v1482 = vadd.f32 %v1129, %v1389
        %v1483 = vadd.f32 %v1132, %v1392
        %v1484 = vadd.f32 %v1135, %v1395
        %v1485 = vadd.f32 %v1138, %v1398
        %v1486 = vadd.f32 %v1141, %v1401
        %v1487 = vadd.f32 %v1144, %v1404
        %v1488 = vadd.f32 %v1147, %v1407
        %v1489 = vadd.f32 %v1150, %v1410
        %v1490 = vadd.f32 %v1153, %v1413
        %v1491 = vadd.f32 %v1156, %v1416
        %v1492 = vadd.f32 %v1159, %v1419
        %v1493 = vadd.f32 %v1162, %v1422
        %v1494 = vadd.f32 %v1165, %v1425
        %v1495 = vadd.f32 %v1168, %v1428
        %v1496 = vadd.f32 %v1171, %v1431
        %v1497 = vadd.f32 %v1174, %v1434
        %v1498 = vadd.f32 %v1177, %v1437
        %v1499 = vadd.f32 %v1180, %v1440
        %v1500 = vadd.f32 %v1183, %v1443
        %v1501 = vadd.f32 %v1186, %v1446
        %v1502 = vadd.f32 %v1189, %v1449
        %v1503 = vadd.f32 %v1192, %v1452
        %v1504 = vadd.f32 %v1195, %v1455
        %v1505 = vadd.f32 %v1198, %v1458
        %v1506 = vadd.f32 %v1201, %v1461
        %v1507 = vadd.f32 %v1204, %v1464
        %v1508 = vadd.f32 %v1207, %v1467
        %v1509 = vadd.f32 %v1210, %v1470
        %v1510 = vadd.f32 %v1213, %v1473
        %v1511 = vadd.f32 %v1216, %v1476
        %s1512 = scalar_lea.vmem [#allocation2], 12
        %v1513 = vld [vmem:[%s1512] sm:$0xf]
        %vm1514 = vcmask 1044480
        %v1515 = vrot.slane %v690, 3
        %v1516 = vrot.slane %v691, 3
        %v1517 = vsel %vm1514, %v1515, %v1516
        %v1518 = vrot.slane %v692, 3
        %v1519 = vsel %vm1514, %v1516, %v1518
        %v1520 = vrot.slane %v693, 3
        %v1521 = vsel %vm1514, %v1518, %v1520
        %v1522 = vrot.slane %v694, 3
        %v1523 = vsel %vm1514, %v1520, %v1522
        %v1524 = vrot.slane %v695, 3
        %v1525 = vsel %vm1514, %v1522, %v1524
        %v1526 = vrot.slane %v696, 3
        %v1527 = vsel %vm1514, %v1524, %v1526
        %v1528 = vrot.slane %v697, 3
        %v1529 = vsel %vm1514, %v1526, %v1528
        %v1530 = vrot.slane %v698, 3
        %v1531 = vsel %vm1514, %v1528, %v1530
        %v1532 = vrot.slane %v699, 3
        %v1533 = vsel %vm1514, %v1530, %v1532
        %v1534 = vrot.slane %v700, 3
        %v1535 = vsel %vm1514, %v1532, %v1534
        %v1536 = vrot.slane %v701, 3
        %v1537 = vsel %vm1514, %v1534, %v1536
        %v1538 = vrot.slane %v702, 3
        %v1539 = vsel %vm1514, %v1536, %v1538
        %v1540 = vrot.slane %v703, 3
        %v1541 = vsel %vm1514, %v1538, %v1540
        %v1542 = vrot.slane %v704, 3
        %v1543 = vsel %vm1514, %v1540, %v1542
        %v1544 = vrot.slane %v705, 3
        %v1545 = vsel %vm1514, %v1542, %v1544
        %v1546 = vrot.slane %v706, 3
        %v1547 = vsel %vm1514, %v1544, %v1546
        %v1548 = vrot.slane %v707, 3
        %v1549 = vsel %vm1514, %v1546, %v1548
        %v1550 = vrot.slane %v708, 3
        %v1551 = vsel %vm1514, %v1548, %v1550
        %v1552 = vrot.slane %v709, 3
        %v1553 = vsel %vm1514, %v1550, %v1552
        %v1554 = vrot.slane %v710, 3
        %v1555 = vsel %vm1514, %v1552, %v1554
        %v1556 = vrot.slane %v711, 3
        %v1557 = vsel %vm1514, %v1554, %v1556
        %v1558 = vrot.slane %v712, 3
        %v1559 = vsel %vm1514, %v1556, %v1558
        %v1560 = vrot.slane %v713, 3
        %v1561 = vsel %vm1514, %v1558, %v1560
        %v1562 = vrot.slane %v714, 3
        %v1563 = vsel %vm1514, %v1560, %v1562
        %v1564 = vrot.slane %v715, 3
        %v1565 = vsel %vm1514, %v1562, %v1564
        %v1566 = vrot.slane %v716, 3
        %v1567 = vsel %vm1514, %v1564, %v1566
        %v1568 = vrot.slane %v717, 3
        %v1569 = vsel %vm1514, %v1566, %v1568
        %v1570 = vrot.slane %v718, 3
        %v1571 = vsel %vm1514, %v1568, %v1570
        %v1572 = vrot.slane %v719, 3
        %v1573 = vsel %vm1514, %v1570, %v1572
        %v1574 = vrot.slane %v720, 3
        %v1575 = vsel %vm1514, %v1572, %v1574
        %v1576 = vrot.slane %v721, 3
        %v1577 = vsel %vm1514, %v1574, %v1576
        %v1578 = vrot.slane %v722, 3
        %v1579 = vsel %vm1514, %v1576, %v1578
        %v1580 = vrot.slane %v723, 3
        %v1581 = vsel %vm1514, %v1578, %v1580
        %v1582 = vsel %vm836, %v1517, 0
        %v1584 = vsel %vm836, %v1519, 0
        %v1586 = vsel %vm836, %v1521, 0
        %v1588 = vsel %vm836, %v1523, 0
        %v1590 = vsel %vm836, %v1525, 0
        %v1592 = vsel %vm836, %v1527, 0
        %v1594 = vsel %vm836, %v1529, 0
        %v1596 = vsel %vm836, %v1531, 0
        %v1598 = vsel %vm836, %v1533, 0
        %v1600 = vsel %vm836, %v1535, 0
        %v1602 = vsel %vm836, %v1537, 0
        %v1604 = vsel %vm836, %v1539, 0
        %v1606 = vsel %vm836, %v1541, 0
        %v1608 = vsel %vm836, %v1543, 0
        %v1610 = vsel %vm836, %v1545, 0
        %v1612 = vsel %vm836, %v1547, 0
        %v1614 = vsel %vm836, %v1549, 0
        %v1616 = vsel %vm836, %v1551, 0
        %v1618 = vsel %vm836, %v1553, 0
        %v1620 = vsel %vm836, %v1555, 0
        %v1622 = vsel %vm836, %v1557, 0
        %v1624 = vsel %vm836, %v1559, 0
        %v1626 = vsel %vm836, %v1561, 0
        %v1628 = vsel %vm836, %v1563, 0
        %v1630 = vsel %vm836, %v1565, 0
        %v1632 = vsel %vm836, %v1567, 0
        %v1634 = vsel %vm836, %v1569, 0
        %v1636 = vsel %vm836, %v1571, 0
        %v1638 = vsel %vm836, %v1573, 0
        %v1640 = vsel %vm836, %v1575, 0
        %v1642 = vsel %vm836, %v1577, 0
        %v1644 = vsel %vm836, %v1579, 0
        %v1646 = vsel %vm836, %v1581, 0
        %v1648 = vsel %vm836, %v1580, 0
        %v1651 = vsel %vm905, %v1513, 0
        %1653 = vmatpush.msra.mxu0 0.0
        %1654 = vmatpush.msra.mxu0 0.0
        %1655 = vmatpush.msra.mxu0 0.0
        %1656 = vmatpush.msra.mxu0 0.0
        %1657 = vmatpush.msra.mxu0 0.0
        %1658 = vmatpush.msra.mxu0 0.0
        %1659 = vmatpush.msra.mxu0 0.0
        %1660 = vmatpush.msra.mxu0 0.0
        %1661 = vmatpush.msra.mxu0 0.0
        %1662 = vmatpush.msra.mxu0 0.0
        %1663 = vmatpush.msra.mxu0 0.0
        %1664 = vmatpush.msra.mxu0 0.0
        %1665 = vmatpush.msra.mxu0 0.0
        %1666 = vmatpush.msra.mxu0 0.0
        %1667 = vmatpush.msra.mxu0 0.0
        %1668 = vmatpush.msra.mxu0 %v1651
        %1669 = vmatmul.f32.gmra.mxu0 %v1582
        %v1670 = vpop.f32.mrf.mxu0
        %v1671 = vadd.f32 0.0, %v1670
        %1672 = vmatmul.f32.gmra.mxu0 %v1584
        %v1673 = vpop.f32.mrf.mxu0
        %v1674 = vadd.f32 0.0, %v1673
        %1675 = vmatmul.f32.gmra.mxu0 %v1586
        %v1676 = vpop.f32.mrf.mxu0
        %v1677 = vadd.f32 0.0, %v1676
        %1678 = vmatmul.f32.gmra.mxu0 %v1588
        %v1679 = vpop.f32.mrf.mxu0
        %v1680 = vadd.f32 0.0, %v1679
        %1681 = vmatmul.f32.gmra.mxu0 %v1590
        %v1682 = vpop.f32.mrf.mxu0
        %v1683 = vadd.f32 0.0, %v1682
        %1684 = vmatmul.f32.gmra.mxu0 %v1592
        %v1685 = vpop.f32.mrf.mxu0
        %v1686 = vadd.f32 0.0, %v1685
        %1687 = vmatmul.f32.gmra.mxu0 %v1594
        %v1688 = vpop.f32.mrf.mxu0
        %v1689 = vadd.f32 0.0, %v1688
        %1690 = vmatmul.f32.gmra.mxu0 %v1596
        %v1691 = vpop.f32.mrf.mxu0
        %v1692 = vadd.f32 0.0, %v1691
        %1693 = vmatmul.f32.gmra.mxu0 %v1598
        %v1694 = vpop.f32.mrf.mxu0
        %v1695 = vadd.f32 0.0, %v1694
        %1696 = vmatmul.f32.gmra.mxu0 %v1600
        %v1697 = vpop.f32.mrf.mxu0
        %v1698 = vadd.f32 0.0, %v1697
        %1699 = vmatmul.f32.gmra.mxu0 %v1602
        %v1700 = vpop.f32.mrf.mxu0
        %v1701 = vadd.f32 0.0, %v1700
        %1702 = vmatmul.f32.gmra.mxu0 %v1604
        %v1703 = vpop.f32.mrf.mxu0
        %v1704 = vadd.f32 0.0, %v1703
        %1705 = vmatmul.f32.gmra.mxu0 %v1606
        %v1706 = vpop.f32.mrf.mxu0
        %v1707 = vadd.f32 0.0, %v1706
        %1708 = vmatmul.f32.gmra.mxu0 %v1608
        %v1709 = vpop.f32.mrf.mxu0
        %v1710 = vadd.f32 0.0, %v1709
        %1711 = vmatmul.f32.gmra.mxu0 %v1610
        %v1712 = vpop.f32.mrf.mxu0
        %v1713 = vadd.f32 0.0, %v1712
        %1714 = vmatmul.f32.gmra.mxu0 %v1612
        %v1715 = vpop.f32.mrf.mxu0
        %v1716 = vadd.f32 0.0, %v1715
        %1717 = vmatmul.f32.gmra.mxu0 %v1614
        %v1718 = vpop.f32.mrf.mxu0
        %v1719 = vadd.f32 0.0, %v1718
        %1720 = vmatmul.f32.gmra.mxu0 %v1616
        %v1721 = vpop.f32.mrf.mxu0
        %v1722 = vadd.f32 0.0, %v1721
        %1723 = vmatmul.f32.gmra.mxu0 %v1618
        %v1724 = vpop.f32.mrf.mxu0
        %v1725 = vadd.f32 0.0, %v1724
        %1726 = vmatmul.f32.gmra.mxu0 %v1620
        %v1727 = vpop.f32.mrf.mxu0
        %v1728 = vadd.f32 0.0, %v1727
        %1729 = vmatmul.f32.gmra.mxu0 %v1622
        %v1730 = vpop.f32.mrf.mxu0
        %v1731 = vadd.f32 0.0, %v1730
        %1732 = vmatmul.f32.gmra.mxu0 %v1624
        %v1733 = vpop.f32.mrf.mxu0
        %v1734 = vadd.f32 0.0, %v1733
        %1735 = vmatmul.f32.gmra.mxu0 %v1626
        %v1736 = vpop.f32.mrf.mxu0
        %v1737 = vadd.f32 0.0, %v1736
        %1738 = vmatmul.f32.gmra.mxu0 %v1628
        %v1739 = vpop.f32.mrf.mxu0
        %v1740 = vadd.f32 0.0, %v1739
        %1741 = vmatmul.f32.gmra.mxu0 %v1630
        %v1742 = vpop.f32.mrf.mxu0
        %v1743 = vadd.f32 0.0, %v1742
        %1744 = vmatmul.f32.gmra.mxu0 %v1632
        %v1745 = vpop.f32.mrf.mxu0
        %v1746 = vadd.f32 0.0, %v1745
        %1747 = vmatmul.f32.gmra.mxu0 %v1634
        %v1748 = vpop.f32.mrf.mxu0
        %v1749 = vadd.f32 0.0, %v1748
        %1750 = vmatmul.f32.gmra.mxu0 %v1636
        %v1751 = vpop.f32.mrf.mxu0
        %v1752 = vadd.f32 0.0, %v1751
        %1753 = vmatmul.f32.gmra.mxu0 %v1638
        %v1754 = vpop.f32.mrf.mxu0
        %v1755 = vadd.f32 0.0, %v1754
        %1756 = vmatmul.f32.gmra.mxu0 %v1640
        %v1757 = vpop.f32.mrf.mxu0
        %v1758 = vadd.f32 0.0, %v1757
        %1759 = vmatmul.f32.gmra.mxu0 %v1642
        %v1760 = vpop.f32.mrf.mxu0
        %v1761 = vadd.f32 0.0, %v1760
        %1762 = vmatmul.f32.gmra.mxu0 %v1644
        %v1763 = vpop.f32.mrf.mxu0
        %v1764 = vadd.f32 0.0, %v1763
        %1765 = vmatmul.f32.gmra.mxu0 %v1646
        %v1766 = vpop.f32.mrf.mxu0
        %v1767 = vadd.f32 0.0, %v1766
        %1768 = vmatmul.f32.gmra.mxu0 %v1648
        %v1769 = vpop.f32.mrf.mxu0
        %v1770 = vadd.f32 0.0, %v1769
        %1771 = vdwg.mxu0
        %v1772 = vadd.f32 %v1478, %v1671
        %v1773 = vadd.f32 %v1479, %v1674
        %v1774 = vadd.f32 %v1480, %v1677
        %v1775 = vadd.f32 %v1481, %v1680
        %v1776 = vadd.f32 %v1482, %v1683
        %v1777 = vadd.f32 %v1483, %v1686
        %v1778 = vadd.f32 %v1484, %v1689
        %v1779 = vadd.f32 %v1485, %v1692
        %v1780 = vadd.f32 %v1486, %v1695
        %v1781 = vadd.f32 %v1487, %v1698
        %v1782 = vadd.f32 %v1488, %v1701
        %v1783 = vadd.f32 %v1489, %v1704
        %v1784 = vadd.f32 %v1490, %v1707
        %v1785 = vadd.f32 %v1491, %v1710
        %v1786 = vadd.f32 %v1492, %v1713
        %v1787 = vadd.f32 %v1493, %v1716
        %v1788 = vadd.f32 %v1494, %v1719
        %v1789 = vadd.f32 %v1495, %v1722
        %v1790 = vadd.f32 %v1496, %v1725
        %v1791 = vadd.f32 %v1497, %v1728
        %v1792 = vadd.f32 %v1498, %v1731
        %v1793 = vadd.f32 %v1499, %v1734
        %v1794 = vadd.f32 %v1500, %v1737
        %v1795 = vadd.f32 %v1501, %v1740
        %v1796 = vadd.f32 %v1502, %v1743
        %v1797 = vadd.f32 %v1503, %v1746
        %v1798 = vadd.f32 %v1504, %v1749
        %v1799 = vadd.f32 %v1505, %v1752
        %v1800 = vadd.f32 %v1506, %v1755
        %v1801 = vadd.f32 %v1507, %v1758
        %v1802 = vadd.f32 %v1508, %v1761
        %v1803 = vadd.f32 %v1509, %v1764
        %v1804 = vadd.f32 %v1510, %v1767
        %v1805 = vadd.f32 %v1511, %v1770
        %s1806 = scalar_lea.vmem [#allocation2], 16
        %v1807 = vld [vmem:[%s1806] sm:$0xf]
        %v1810 = vrot.slane %v724, 2
        %v1811 = vsel %vm1220, %v1286, %v1810
        %v1812 = vrot.slane %v725, 2
        %v1813 = vsel %vm1220, %v1810, %v1812
        %v1814 = vsel %vm836, %v1811, 0
        %v1816 = vsel %vm836, %v1813, 0
        %v1818 = vsel %vm836, %v1812, 0
        %v1821 = vsel %vm905, %v1807, 0
        %1823 = vmatpush.msra.mxu0 0.0
        %1824 = vmatpush.msra.mxu0 0.0
        %1825 = vmatpush.msra.mxu0 0.0
        %1826 = vmatpush.msra.mxu0 0.0
        %1827 = vmatpush.msra.mxu0 0.0
        %1828 = vmatpush.msra.mxu0 0.0
        %1829 = vmatpush.msra.mxu0 0.0
        %1830 = vmatpush.msra.mxu0 0.0
        %1831 = vmatpush.msra.mxu0 0.0
        %1832 = vmatpush.msra.mxu0 0.0
        %1833 = vmatpush.msra.mxu0 0.0
        %1834 = vmatpush.msra.mxu0 0.0
        %1835 = vmatpush.msra.mxu0 0.0
        %1836 = vmatpush.msra.mxu0 0.0
        %1837 = vmatpush.msra.mxu0 0.0
        %1838 = vmatpush.msra.mxu0 %v1821
        %1839 = vmatmul.f32.gmra.mxu0 %v1292
        %v1840 = vpop.f32.mrf.mxu0
        %v1841 = vadd.f32 0.0, %v1840
        %1842 = vmatmul.f32.gmra.mxu0 %v1294
        %v1843 = vpop.f32.mrf.mxu0
        %v1844 = vadd.f32 0.0, %v1843
        %1845 = vmatmul.f32.gmra.mxu0 %v1296
        %v1846 = vpop.f32.mrf.mxu0
        %v1847 = vadd.f32 0.0, %v1846
        %1848 = vmatmul.f32.gmra.mxu0 %v1298
        %v1849 = vpop.f32.mrf.mxu0
        %v1850 = vadd.f32 0.0, %v1849
        %1851 = vmatmul.f32.gmra.mxu0 %v1300
        %v1852 = vpop.f32.mrf.mxu0
        %v1853 = vadd.f32 0.0, %v1852
        %1854 = vmatmul.f32.gmra.mxu0 %v1302
        %v1855 = vpop.f32.mrf.mxu0
        %v1856 = vadd.f32 0.0, %v1855
        %1857 = vmatmul.f32.gmra.mxu0 %v1304
        %v1858 = vpop.f32.mrf.mxu0
        %v1859 = vadd.f32 0.0, %v1858
        %1860 = vmatmul.f32.gmra.mxu0 %v1306
        %v1861 = vpop.f32.mrf.mxu0
        %v1862 = vadd.f32 0.0, %v1861
        %1863 = vmatmul.f32.gmra.mxu0 %v1308
        %v1864 = vpop.f32.mrf.mxu0
        %v1865 = vadd.f32 0.0, %v1864
        %1866 = vmatmul.f32.gmra.mxu0 %v1310
        %v1867 = vpop.f32.mrf.mxu0
        %v1868 = vadd.f32 0.0, %v1867
        %1869 = vmatmul.f32.gmra.mxu0 %v1312
        %v1870 = vpop.f32.mrf.mxu0
        %v1871 = vadd.f32 0.0, %v1870
        %1872 = vmatmul.f32.gmra.mxu0 %v1314
        %v1873 = vpop.f32.mrf.mxu0
        %v1874 = vadd.f32 0.0, %v1873
        %1875 = vmatmul.f32.gmra.mxu0 %v1316
        %v1876 = vpop.f32.mrf.mxu0
        %v1877 = vadd.f32 0.0, %v1876
        %1878 = vmatmul.f32.gmra.mxu0 %v1318
        %v1879 = vpop.f32.mrf.mxu0
        %v1880 = vadd.f32 0.0, %v1879
        %1881 = vmatmul.f32.gmra.mxu0 %v1320
        %v1882 = vpop.f32.mrf.mxu0
        %v1883 = vadd.f32 0.0, %v1882
        %1884 = vmatmul.f32.gmra.mxu0 %v1322
        %v1885 = vpop.f32.mrf.mxu0
        %v1886 = vadd.f32 0.0, %v1885
        %1887 = vmatmul.f32.gmra.mxu0 %v1324
        %v1888 = vpop.f32.mrf.mxu0
        %v1889 = vadd.f32 0.0, %v1888
        %1890 = vmatmul.f32.gmra.mxu0 %v1326
        %v1891 = vpop.f32.mrf.mxu0
        %v1892 = vadd.f32 0.0, %v1891
        %1893 = vmatmul.f32.gmra.mxu0 %v1328
        %v1894 = vpop.f32.mrf.mxu0
        %v1895 = vadd.f32 0.0, %v1894
        %1896 = vmatmul.f32.gmra.mxu0 %v1330
        %v1897 = vpop.f32.mrf.mxu0
        %v1898 = vadd.f32 0.0, %v1897
        %1899 = vmatmul.f32.gmra.mxu0 %v1332
        %v1900 = vpop.f32.mrf.mxu0
        %v1901 = vadd.f32 0.0, %v1900
        %1902 = vmatmul.f32.gmra.mxu0 %v1334
        %v1903 = vpop.f32.mrf.mxu0
        %v1904 = vadd.f32 0.0, %v1903
        %1905 = vmatmul.f32.gmra.mxu0 %v1336
        %v1906 = vpop.f32.mrf.mxu0
        %v1907 = vadd.f32 0.0, %v1906
        %1908 = vmatmul.f32.gmra.mxu0 %v1338
        %v1909 = vpop.f32.mrf.mxu0
        %v1910 = vadd.f32 0.0, %v1909
        %1911 = vmatmul.f32.gmra.mxu0 %v1340
        %v1912 = vpop.f32.mrf.mxu0
        %v1913 = vadd.f32 0.0, %v1912
        %1914 = vmatmul.f32.gmra.mxu0 %v1342
        %v1915 = vpop.f32.mrf.mxu0
        %v1916 = vadd.f32 0.0, %v1915
        %1917 = vmatmul.f32.gmra.mxu0 %v1344
        %v1918 = vpop.f32.mrf.mxu0
        %v1919 = vadd.f32 0.0, %v1918
        %1920 = vmatmul.f32.gmra.mxu0 %v1346
        %v1921 = vpop.f32.mrf.mxu0
        %v1922 = vadd.f32 0.0, %v1921
        %1923 = vmatmul.f32.gmra.mxu0 %v1348
        %v1924 = vpop.f32.mrf.mxu0
        %v1925 = vadd.f32 0.0, %v1924
        %1926 = vmatmul.f32.gmra.mxu0 %v1350
        %v1927 = vpop.f32.mrf.mxu0
        %v1928 = vadd.f32 0.0, %v1927
        %1929 = vmatmul.f32.gmra.mxu0 %v1352
        %v1930 = vpop.f32.mrf.mxu0
        %v1931 = vadd.f32 0.0, %v1930
        %1932 = vmatmul.f32.gmra.mxu0 %v1814
        %v1933 = vpop.f32.mrf.mxu0
        %v1934 = vadd.f32 0.0, %v1933
        %1935 = vmatmul.f32.gmra.mxu0 %v1816
        %v1936 = vpop.f32.mrf.mxu0
        %v1937 = vadd.f32 0.0, %v1936
        %1938 = vmatmul.f32.gmra.mxu0 %v1818
        %v1939 = vpop.f32.mrf.mxu0
        %v1940 = vadd.f32 0.0, %v1939
        %1941 = vdwg.mxu0
        %v1942 = vadd.f32 %v1772, %v1841
        %v1943 = vadd.f32 %v1773, %v1844
        %v1944 = vadd.f32 %v1774, %v1847
        %v1945 = vadd.f32 %v1775, %v1850
        %v1946 = vadd.f32 %v1776, %v1853
        %v1947 = vadd.f32 %v1777, %v1856
        %v1948 = vadd.f32 %v1778, %v1859
        %v1949 = vadd.f32 %v1779, %v1862
        %v1950 = vadd.f32 %v1780, %v1865
        %v1951 = vadd.f32 %v1781, %v1868
        %v1952 = vadd.f32 %v1782, %v1871
        %v1953 = vadd.f32 %v1783, %v1874
        %v1954 = vadd.f32 %v1784, %v1877
        %v1955 = vadd.f32 %v1785, %v1880
        %v1956 = vadd.f32 %v1786, %v1883
        %v1957 = vadd.f32 %v1787, %v1886
        %v1958 = vadd.f32 %v1788, %v1889
        %v1959 = vadd.f32 %v1789, %v1892
        %v1960 = vadd.f32 %v1790, %v1895
        %v1961 = vadd.f32 %v1791, %v1898
        %v1962 = vadd.f32 %v1792, %v1901
        %v1963 = vadd.f32 %v1793, %v1904
        %v1964 = vadd.f32 %v1794, %v1907
        %v1965 = vadd.f32 %v1795, %v1910
        %v1966 = vadd.f32 %v1796, %v1913
        %v1967 = vadd.f32 %v1797, %v1916
        %v1968 = vadd.f32 %v1798, %v1919
        %v1969 = vadd.f32 %v1799, %v1922
        %v1970 = vadd.f32 %v1800, %v1925
        %v1971 = vadd.f32 %v1801, %v1928
        %v1972 = vadd.f32 %v1802, %v1931
        %v1973 = vadd.f32 %v1803, %v1934
        %v1974 = vadd.f32 %v1804, %v1937
        %v1975 = vadd.f32 %v1805, %v1940
        %s1976 = scalar_lea.vmem [#allocation2], 20
        %v1977 = vld [vmem:[%s1976] sm:$0xf]
        %v1978 = vrot.slane %v724, 3
        %v1979 = vsel %vm1514, %v1580, %v1978
        %v1980 = vrot.slane %v725, 3
        %v1981 = vsel %vm1514, %v1978, %v1980
        %v1982 = vsel %vm836, %v1979, 0
        %v1984 = vsel %vm836, %v1981, 0
        %v1986 = vsel %vm836, %v1980, 0
        %v1989 = vsel %vm905, %v1977, 0
        %1991 = vmatpush.msra.mxu0 0.0
        %1992 = vmatpush.msra.mxu0 0.0
        %1993 = vmatpush.msra.mxu0 0.0
        %1994 = vmatpush.msra.mxu0 0.0
        %1995 = vmatpush.msra.mxu0 0.0
        %1996 = vmatpush.msra.mxu0 0.0
        %1997 = vmatpush.msra.mxu0 0.0
        %1998 = vmatpush.msra.mxu0 0.0
        %1999 = vmatpush.msra.mxu0 0.0
        %2000 = vmatpush.msra.mxu0 0.0
        %2001 = vmatpush.msra.mxu0 0.0
        %2002 = vmatpush.msra.mxu0 0.0
        %2003 = vmatpush.msra.mxu0 0.0
        %2004 = vmatpush.msra.mxu0 0.0
        %2005 = vmatpush.msra.mxu0 0.0
        %2006 = vmatpush.msra.mxu0 %v1989
        %2007 = vmatmul.f32.gmra.mxu0 %v1586
        %v2008 = vpop.f32.mrf.mxu0
        %v2009 = vadd.f32 0.0, %v2008
        %2010 = vmatmul.f32.gmra.mxu0 %v1588
        %v2011 = vpop.f32.mrf.mxu0
        %v2012 = vadd.f32 0.0, %v2011
        %2013 = vmatmul.f32.gmra.mxu0 %v1590
        %v2014 = vpop.f32.mrf.mxu0
        %v2015 = vadd.f32 0.0, %v2014
        %2016 = vmatmul.f32.gmra.mxu0 %v1592
        %v2017 = vpop.f32.mrf.mxu0
        %v2018 = vadd.f32 0.0, %v2017
        %2019 = vmatmul.f32.gmra.mxu0 %v1594
        %v2020 = vpop.f32.mrf.mxu0
        %v2021 = vadd.f32 0.0, %v2020
        %2022 = vmatmul.f32.gmra.mxu0 %v1596
        %v2023 = vpop.f32.mrf.mxu0
        %v2024 = vadd.f32 0.0, %v2023
        %2025 = vmatmul.f32.gmra.mxu0 %v1598
        %v2026 = vpop.f32.mrf.mxu0
        %v2027 = vadd.f32 0.0, %v2026
        %2028 = vmatmul.f32.gmra.mxu0 %v1600
        %v2029 = vpop.f32.mrf.mxu0
        %v2030 = vadd.f32 0.0, %v2029
        %2031 = vmatmul.f32.gmra.mxu0 %v1602
        %v2032 = vpop.f32.mrf.mxu0
        %v2033 = vadd.f32 0.0, %v2032
        %2034 = vmatmul.f32.gmra.mxu0 %v1604
        %v2035 = vpop.f32.mrf.mxu0
        %v2036 = vadd.f32 0.0, %v2035
        %2037 = vmatmul.f32.gmra.mxu0 %v1606
        %v2038 = vpop.f32.mrf.mxu0
        %v2039 = vadd.f32 0.0, %v2038
        %2040 = vmatmul.f32.gmra.mxu0 %v1608
        %v2041 = vpop.f32.mrf.mxu0
        %v2042 = vadd.f32 0.0, %v2041
        %2043 = vmatmul.f32.gmra.mxu0 %v1610
        %v2044 = vpop.f32.mrf.mxu0
        %v2045 = vadd.f32 0.0, %v2044
        %2046 = vmatmul.f32.gmra.mxu0 %v1612
        %v2047 = vpop.f32.mrf.mxu0
        %v2048 = vadd.f32 0.0, %v2047
        %2049 = vmatmul.f32.gmra.mxu0 %v1614
        %v2050 = vpop.f32.mrf.mxu0
        %v2051 = vadd.f32 0.0, %v2050
        %2052 = vmatmul.f32.gmra.mxu0 %v1616
        %v2053 = vpop.f32.mrf.mxu0
        %v2054 = vadd.f32 0.0, %v2053
        %2055 = vmatmul.f32.gmra.mxu0 %v1618
        %v2056 = vpop.f32.mrf.mxu0
        %v2057 = vadd.f32 0.0, %v2056
        %2058 = vmatmul.f32.gmra.mxu0 %v1620
        %v2059 = vpop.f32.mrf.mxu0
        %v2060 = vadd.f32 0.0, %v2059
        %2061 = vmatmul.f32.gmra.mxu0 %v1622
        %v2062 = vpop.f32.mrf.mxu0
        %v2063 = vadd.f32 0.0, %v2062
        %2064 = vmatmul.f32.gmra.mxu0 %v1624
        %v2065 = vpop.f32.mrf.mxu0
        %v2066 = vadd.f32 0.0, %v2065
        %2067 = vmatmul.f32.gmra.mxu0 %v1626
        %v2068 = vpop.f32.mrf.mxu0
        %v2069 = vadd.f32 0.0, %v2068
        %2070 = vmatmul.f32.gmra.mxu0 %v1628
        %v2071 = vpop.f32.mrf.mxu0
        %v2072 = vadd.f32 0.0, %v2071
        %2073 = vmatmul.f32.gmra.mxu0 %v1630
        %v2074 = vpop.f32.mrf.mxu0
        %v2075 = vadd.f32 0.0, %v2074
        %2076 = vmatmul.f32.gmra.mxu0 %v1632
        %v2077 = vpop.f32.mrf.mxu0
        %v2078 = vadd.f32 0.0, %v2077
        %2079 = vmatmul.f32.gmra.mxu0 %v1634
        %v2080 = vpop.f32.mrf.mxu0
        %v2081 = vadd.f32 0.0, %v2080
        %2082 = vmatmul.f32.gmra.mxu0 %v1636
        %v2083 = vpop.f32.mrf.mxu0
        %v2084 = vadd.f32 0.0, %v2083
        %2085 = vmatmul.f32.gmra.mxu0 %v1638
        %v2086 = vpop.f32.mrf.mxu0
        %v2087 = vadd.f32 0.0, %v2086
        %2088 = vmatmul.f32.gmra.mxu0 %v1640
        %v2089 = vpop.f32.mrf.mxu0
        %v2090 = vadd.f32 0.0, %v2089
        %2091 = vmatmul.f32.gmra.mxu0 %v1642
        %v2092 = vpop.f32.mrf.mxu0
        %v2093 = vadd.f32 0.0, %v2092
        %2094 = vmatmul.f32.gmra.mxu0 %v1644
        %v2095 = vpop.f32.mrf.mxu0
        %v2096 = vadd.f32 0.0, %v2095
        %2097 = vmatmul.f32.gmra.mxu0 %v1646
        %v2098 = vpop.f32.mrf.mxu0
        %v2099 = vadd.f32 0.0, %v2098
        %2100 = vmatmul.f32.gmra.mxu0 %v1982
        %v2101 = vpop.f32.mrf.mxu0
        %v2102 = vadd.f32 0.0, %v2101
        %2103 = vmatmul.f32.gmra.mxu0 %v1984
        %v2104 = vpop.f32.mrf.mxu0
        %v2105 = vadd.f32 0.0, %v2104
        %2106 = vmatmul.f32.gmra.mxu0 %v1986
        %v2107 = vpop.f32.mrf.mxu0
        %v2108 = vadd.f32 0.0, %v2107
        %2109 = vdwg.mxu0
        %v2110 = vadd.f32 %v1942, %v2009
        %v2111 = vadd.f32 %v1943, %v2012
        %v2112 = vadd.f32 %v1944, %v2015
        %v2113 = vadd.f32 %v1945, %v2018
        %v2114 = vadd.f32 %v1946, %v2021
        %v2115 = vadd.f32 %v1947, %v2024
        %v2116 = vadd.f32 %v1948, %v2027
        %v2117 = vadd.f32 %v1949, %v2030
        %v2118 = vadd.f32 %v1950, %v2033
        %v2119 = vadd.f32 %v1951, %v2036
        %v2120 = vadd.f32 %v1952, %v2039
        %v2121 = vadd.f32 %v1953, %v2042
        %v2122 = vadd.f32 %v1954, %v2045
        %v2123 = vadd.f32 %v1955, %v2048
        %v2124 = vadd.f32 %v1956, %v2051
        %v2125 = vadd.f32 %v1957, %v2054
        %v2126 = vadd.f32 %v1958, %v2057
        %v2127 = vadd.f32 %v1959, %v2060
        %v2128 = vadd.f32 %v1960, %v2063
        %v2129 = vadd.f32 %v1961, %v2066
        %v2130 = vadd.f32 %v1962, %v2069
        %v2131 = vadd.f32 %v1963, %v2072
        %v2132 = vadd.f32 %v1964, %v2075
        %v2133 = vadd.f32 %v1965, %v2078
        %v2134 = vadd.f32 %v1966, %v2081
        %v2135 = vadd.f32 %v1967, %v2084
        %v2136 = vadd.f32 %v1968, %v2087
        %v2137 = vadd.f32 %v1969, %v2090
        %v2138 = vadd.f32 %v1970, %v2093
        %v2139 = vadd.f32 %v1971, %v2096
        %v2140 = vadd.f32 %v1972, %v2099
        %v2141 = vadd.f32 %v1973, %v2102
        %v2142 = vadd.f32 %v1974, %v2105
        %v2143 = vadd.f32 %v1975, %v2108
        %s2144 = scalar_lea.vmem [#allocation2], 24
        %v2145 = vld [vmem:[%s2144] sm:$0xf]
        %v2146 = vrot.slane %v692, 4
        %v2147 = vrot.slane %v693, 4
        %v2148 = vsel %vm905, %v2146, %v2147
        %v2149 = vrot.slane %v694, 4
        %v2150 = vsel %vm905, %v2147, %v2149
        %v2151 = vrot.slane %v695, 4
        %v2152 = vsel %vm905, %v2149, %v2151
        %v2153 = vrot.slane %v696, 4
        %v2154 = vsel %vm905, %v2151, %v2153
        %v2155 = vrot.slane %v697, 4
        %v2156 = vsel %vm905, %v2153, %v2155
        %v2157 = vrot.slane %v698, 4
        %v2158 = vsel %vm905, %v2155, %v2157
        %v2159 = vrot.slane %v699, 4
        %v2160 = vsel %vm905, %v2157, %v2159
        %v2161 = vrot.slane %v700, 4
        %v2162 = vsel %vm905, %v2159, %v2161
        %v2163 = vrot.slane %v701, 4
        %v2164 = vsel %vm905, %v2161, %v2163
        %v2165 = vrot.slane %v702, 4
        %v2166 = vsel %vm905, %v2163, %v2165
        %v2167 = vrot.slane %v703, 4
        %v2168 = vsel %vm905, %v2165, %v2167
        %v2169 = vrot.slane %v704, 4
        %v2170 = vsel %vm905, %v2167, %v2169
        %v2171 = vrot.slane %v705, 4
        %v2172 = vsel %vm905, %v2169, %v2171
        %v2173 = vrot.slane %v706, 4
        %v2174 = vsel %vm905, %v2171, %v2173
        %v2175 = vrot.slane %v707, 4
        %v2176 = vsel %vm905, %v2173, %v2175
        %v2177 = vrot.slane %v708, 4
        %v2178 = vsel %vm905, %v2175, %v2177
        %v2179 = vrot.slane %v709, 4
        %v2180 = vsel %vm905, %v2177, %v2179
        %v2181 = vrot.slane %v710, 4
        %v2182 = vsel %vm905, %v2179, %v2181
        %v2183 = vrot.slane %v711, 4
        %v2184 = vsel %vm905, %v2181, %v2183
        %v2185 = vrot.slane %v712, 4
        %v2186 = vsel %vm905, %v2183, %v2185
        %v2187 = vrot.slane %v713, 4
        %v2188 = vsel %vm905, %v2185, %v2187
        %v2189 = vrot.slane %v714, 4
        %v2190 = vsel %vm905, %v2187, %v2189
        %v2191 = vrot.slane %v715, 4
        %v2192 = vsel %vm905, %v2189, %v2191
        %v2193 = vrot.slane %v716, 4
        %v2194 = vsel %vm905, %v2191, %v2193
        %v2195 = vrot.slane %v717, 4
        %v2196 = vsel %vm905, %v2193, %v2195
        %v2197 = vrot.slane %v718, 4
        %v2198 = vsel %vm905, %v2195, %v2197
        %v2199 = vrot.slane %v719, 4
        %v2200 = vsel %vm905, %v2197, %v2199
        %v2201 = vrot.slane %v720, 4
        %v2202 = vsel %vm905, %v2199, %v2201
        %v2203 = vrot.slane %v721, 4
        %v2204 = vsel %vm905, %v2201, %v2203
        %v2205 = vrot.slane %v722, 4
        %v2206 = vsel %vm905, %v2203, %v2205
        %v2207 = vrot.slane %v723, 4
        %v2208 = vsel %vm905, %v2205, %v2207
        %v2209 = vrot.slane %v724, 4
        %v2210 = vsel %vm905, %v2207, %v2209
        %v2211 = vrot.slane %v725, 4
        %v2212 = vsel %vm905, %v2209, %v2211
        %v2213 = vsel %vm836, %v2148, 0
        %v2215 = vsel %vm836, %v2150, 0
        %v2217 = vsel %vm836, %v2152, 0
        %v2219 = vsel %vm836, %v2154, 0
        %v2221 = vsel %vm836, %v2156, 0
        %v2223 = vsel %vm836, %v2158, 0
        %v2225 = vsel %vm836, %v2160, 0
        %v2227 = vsel %vm836, %v2162, 0
        %v2229 = vsel %vm836, %v2164, 0
        %v2231 = vsel %vm836, %v2166, 0
        %v2233 = vsel %vm836, %v2168, 0
        %v2235 = vsel %vm836, %v2170, 0
        %v2237 = vsel %vm836, %v2172, 0
        %v2239 = vsel %vm836, %v2174, 0
        %v2241 = vsel %vm836, %v2176, 0
        %v2243 = vsel %vm836, %v2178, 0
        %v2245 = vsel %vm836, %v2180, 0
        %v2247 = vsel %vm836, %v2182, 0
        %v2249 = vsel %vm836, %v2184, 0
        %v2251 = vsel %vm836, %v2186, 0
        %v2253 = vsel %vm836, %v2188, 0
        %v2255 = vsel %vm836, %v2190, 0
        %v2257 = vsel %vm836, %v2192, 0
        %v2259 = vsel %vm836, %v2194, 0
        %v2261 = vsel %vm836, %v2196, 0
        %v2263 = vsel %vm836, %v2198, 0
        %v2265 = vsel %vm836, %v2200, 0
        %v2267 = vsel %vm836, %v2202, 0
        %v2269 = vsel %vm836, %v2204, 0
        %v2271 = vsel %vm836, %v2206, 0
        %v2273 = vsel %vm836, %v2208, 0
        %v2275 = vsel %vm836, %v2210, 0
        %v2277 = vsel %vm836, %v2212, 0
        %v2279 = vsel %vm836, %v2211, 0
        %v2282 = vsel %vm905, %v2145, 0
        %2284 = vmatpush.msra.mxu0 0.0
        %2285 = vmatpush.msra.mxu0 0.0
        %2286 = vmatpush.msra.mxu0 0.0
        %2287 = vmatpush.msra.mxu0 0.0
        %2288 = vmatpush.msra.mxu0 0.0
        %2289 = vmatpush.msra.mxu0 0.0
        %2290 = vmatpush.msra.mxu0 0.0
        %2291 = vmatpush.msra.mxu0 0.0
        %2292 = vmatpush.msra.mxu0 0.0
        %2293 = vmatpush.msra.mxu0 0.0
        %2294 = vmatpush.msra.mxu0 0.0
        %2295 = vmatpush.msra.mxu0 0.0
        %2296 = vmatpush.msra.mxu0 0.0
        %2297 = vmatpush.msra.mxu0 0.0
        %2298 = vmatpush.msra.mxu0 0.0
        %2299 = vmatpush.msra.mxu0 %v2282
        %2300 = vmatmul.f32.gmra.mxu0 %v2213
        %v2301 = vpop.f32.mrf.mxu0
        %v2302 = vadd.f32 0.0, %v2301
        %2303 = vmatmul.f32.gmra.mxu0 %v2215
        %v2304 = vpop.f32.mrf.mxu0
        %v2305 = vadd.f32 0.0, %v2304
        %2306 = vmatmul.f32.gmra.mxu0 %v2217
        %v2307 = vpop.f32.mrf.mxu0
        %v2308 = vadd.f32 0.0, %v2307
        %2309 = vmatmul.f32.gmra.mxu0 %v2219
        %v2310 = vpop.f32.mrf.mxu0
        %v2311 = vadd.f32 0.0, %v2310
        %2312 = vmatmul.f32.gmra.mxu0 %v2221
        %v2313 = vpop.f32.mrf.mxu0
        %v2314 = vadd.f32 0.0, %v2313
        %2315 = vmatmul.f32.gmra.mxu0 %v2223
        %v2316 = vpop.f32.mrf.mxu0
        %v2317 = vadd.f32 0.0, %v2316
        %2318 = vmatmul.f32.gmra.mxu0 %v2225
        %v2319 = vpop.f32.mrf.mxu0
        %v2320 = vadd.f32 0.0, %v2319
        %2321 = vmatmul.f32.gmra.mxu0 %v2227
        %v2322 = vpop.f32.mrf.mxu0
        %v2323 = vadd.f32 0.0, %v2322
        %2324 = vmatmul.f32.gmra.mxu0 %v2229
        %v2325 = vpop.f32.mrf.mxu0
        %v2326 = vadd.f32 0.0, %v2325
        %2327 = vmatmul.f32.gmra.mxu0 %v2231
        %v2328 = vpop.f32.mrf.mxu0
        %v2329 = vadd.f32 0.0, %v2328
        %2330 = vmatmul.f32.gmra.mxu0 %v2233
        %v2331 = vpop.f32.mrf.mxu0
        %v2332 = vadd.f32 0.0, %v2331
        %2333 = vmatmul.f32.gmra.mxu0 %v2235
        %v2334 = vpop.f32.mrf.mxu0
        %v2335 = vadd.f32 0.0, %v2334
        %2336 = vmatmul.f32.gmra.mxu0 %v2237
        %v2337 = vpop.f32.mrf.mxu0
        %v2338 = vadd.f32 0.0, %v2337
        %2339 = vmatmul.f32.gmra.mxu0 %v2239
        %v2340 = vpop.f32.mrf.mxu0
        %v2341 = vadd.f32 0.0, %v2340
        %2342 = vmatmul.f32.gmra.mxu0 %v2241
        %v2343 = vpop.f32.mrf.mxu0
        %v2344 = vadd.f32 0.0, %v2343
        %2345 = vmatmul.f32.gmra.mxu0 %v2243
        %v2346 = vpop.f32.mrf.mxu0
        %v2347 = vadd.f32 0.0, %v2346
        %2348 = vmatmul.f32.gmra.mxu0 %v2245
        %v2349 = vpop.f32.mrf.mxu0
        %v2350 = vadd.f32 0.0, %v2349
        %2351 = vmatmul.f32.gmra.mxu0 %v2247
        %v2352 = vpop.f32.mrf.mxu0
        %v2353 = vadd.f32 0.0, %v2352
        %2354 = vmatmul.f32.gmra.mxu0 %v2249
        %v2355 = vpop.f32.mrf.mxu0
        %v2356 = vadd.f32 0.0, %v2355
        %2357 = vmatmul.f32.gmra.mxu0 %v2251
        %v2358 = vpop.f32.mrf.mxu0
        %v2359 = vadd.f32 0.0, %v2358
        %2360 = vmatmul.f32.gmra.mxu0 %v2253
        %v2361 = vpop.f32.mrf.mxu0
        %v2362 = vadd.f32 0.0, %v2361
        %2363 = vmatmul.f32.gmra.mxu0 %v2255
        %v2364 = vpop.f32.mrf.mxu0
        %v2365 = vadd.f32 0.0, %v2364
        %2366 = vmatmul.f32.gmra.mxu0 %v2257
        %v2367 = vpop.f32.mrf.mxu0
        %v2368 = vadd.f32 0.0, %v2367
        %2369 = vmatmul.f32.gmra.mxu0 %v2259
        %v2370 = vpop.f32.mrf.mxu0
        %v2371 = vadd.f32 0.0, %v2370
        %2372 = vmatmul.f32.gmra.mxu0 %v2261
        %v2373 = vpop.f32.mrf.mxu0
        %v2374 = vadd.f32 0.0, %v2373
        %2375 = vmatmul.f32.gmra.mxu0 %v2263
        %v2376 = vpop.f32.mrf.mxu0
        %v2377 = vadd.f32 0.0, %v2376
        %2378 = vmatmul.f32.gmra.mxu0 %v2265
        %v2379 = vpop.f32.mrf.mxu0
        %v2380 = vadd.f32 0.0, %v2379
        %2381 = vmatmul.f32.gmra.mxu0 %v2267
        %v2382 = vpop.f32.mrf.mxu0
        %v2383 = vadd.f32 0.0, %v2382
        %2384 = vmatmul.f32.gmra.mxu0 %v2269
        %v2385 = vpop.f32.mrf.mxu0
        %v2386 = vadd.f32 0.0, %v2385
        %2387 = vmatmul.f32.gmra.mxu0 %v2271
        %v2388 = vpop.f32.mrf.mxu0
        %v2389 = vadd.f32 0.0, %v2388
        %2390 = vmatmul.f32.gmra.mxu0 %v2273
        %v2391 = vpop.f32.mrf.mxu0
        %v2392 = vadd.f32 0.0, %v2391
        %2393 = vmatmul.f32.gmra.mxu0 %v2275
        %v2394 = vpop.f32.mrf.mxu0
        %v2395 = vadd.f32 0.0, %v2394
        %2396 = vmatmul.f32.gmra.mxu0 %v2277
        %v2397 = vpop.f32.mrf.mxu0
        %v2398 = vadd.f32 0.0, %v2397
        %2399 = vmatmul.f32.gmra.mxu0 %v2279
        %v2400 = vpop.f32.mrf.mxu0
        %v2401 = vadd.f32 0.0, %v2400
        %2402 = vdwg.mxu0
        %v2403 = vadd.f32 %v2110, %v2302
        %v2404 = vadd.f32 %v2111, %v2305
        %v2405 = vadd.f32 %v2112, %v2308
        %v2406 = vadd.f32 %v2113, %v2311
        %v2407 = vadd.f32 %v2114, %v2314
        %v2408 = vadd.f32 %v2115, %v2317
        %v2409 = vadd.f32 %v2116, %v2320
        %v2410 = vadd.f32 %v2117, %v2323
        %v2411 = vadd.f32 %v2118, %v2326
        %v2412 = vadd.f32 %v2119, %v2329
        %v2413 = vadd.f32 %v2120, %v2332
        %v2414 = vadd.f32 %v2121, %v2335
        %v2415 = vadd.f32 %v2122, %v2338
        %v2416 = vadd.f32 %v2123, %v2341
        %v2417 = vadd.f32 %v2124, %v2344
        %v2418 = vadd.f32 %v2125, %v2347
        %v2419 = vadd.f32 %v2126, %v2350
        %v2420 = vadd.f32 %v2127, %v2353
        %v2421 = vadd.f32 %v2128, %v2356
        %v2422 = vadd.f32 %v2129, %v2359
        %v2423 = vadd.f32 %v2130, %v2362
        %v2424 = vadd.f32 %v2131, %v2365
        %v2425 = vadd.f32 %v2132, %v2368
        %v2426 = vadd.f32 %v2133, %v2371
        %v2427 = vadd.f32 %v2134, %v2374
        %v2428 = vadd.f32 %v2135, %v2377
        %v2429 = vadd.f32 %v2136, %v2380
        %v2430 = vadd.f32 %v2137, %v2383
        %v2431 = vadd.f32 %v2138, %v2386
        %v2432 = vadd.f32 %v2139, %v2389
        %v2433 = vadd.f32 %v2140, %v2392
        %v2434 = vadd.f32 %v2141, %v2395
        %v2435 = vadd.f32 %v2142, %v2398
        %v2436 = vadd.f32 %v2143, %v2401
        %s2437 = scalar_lea.vmem [#allocation2], 28
        %v2438 = vld [vmem:[%s2437] sm:$0xf]
        %vm2439 = vcmask 1042432
        %v2440 = vrot.slane %v692, 5
        %v2441 = vrot.slane %v693, 5
        %v2442 = vsel %vm2439, %v2440, %v2441
        %v2443 = vrot.slane %v694, 5
        %v2444 = vsel %vm2439, %v2441, %v2443
        %v2445 = vrot.slane %v695, 5
        %v2446 = vsel %vm2439, %v2443, %v2445
        %v2447 = vrot.slane %v696, 5
        %v2448 = vsel %vm2439, %v2445, %v2447
        %v2449 = vrot.slane %v697, 5
        %v2450 = vsel %vm2439, %v2447, %v2449
        %v2451 = vrot.slane %v698, 5
        %v2452 = vsel %vm2439, %v2449, %v2451
        %v2453 = vrot.slane %v699, 5
        %v2454 = vsel %vm2439, %v2451, %v2453
        %v2455 = vrot.slane %v700, 5
        %v2456 = vsel %vm2439, %v2453, %v2455
        %v2457 = vrot.slane %v701, 5
        %v2458 = vsel %vm2439, %v2455, %v2457
        %v2459 = vrot.slane %v702, 5
        %v2460 = vsel %vm2439, %v2457, %v2459
        %v2461 = vrot.slane %v703, 5
        %v2462 = vsel %vm2439, %v2459, %v2461
        %v2463 = vrot.slane %v704, 5
        %v2464 = vsel %vm2439, %v2461, %v2463
        %v2465 = vrot.slane %v705, 5
        %v2466 = vsel %vm2439, %v2463, %v2465
        %v2467 = vrot.slane %v706, 5
        %v2468 = vsel %vm2439, %v2465, %v2467
        %v2469 = vrot.slane %v707, 5
        %v2470 = vsel %vm2439, %v2467, %v2469
        %v2471 = vrot.slane %v708, 5
        %v2472 = vsel %vm2439, %v2469, %v2471
        %v2473 = vrot.slane %v709, 5
        %v2474 = vsel %vm2439, %v2471, %v2473
        %v2475 = vrot.slane %v710, 5
        %v2476 = vsel %vm2439, %v2473, %v2475
        %v2477 = vrot.slane %v711, 5
        %v2478 = vsel %vm2439, %v2475, %v2477
        %v2479 = vrot.slane %v712, 5
        %v2480 = vsel %vm2439, %v2477, %v2479
        %v2481 = vrot.slane %v713, 5
        %v2482 = vsel %vm2439, %v2479, %v2481
        %v2483 = vrot.slane %v714, 5
        %v2484 = vsel %vm2439, %v2481, %v2483
        %v2485 = vrot.slane %v715, 5
        %v2486 = vsel %vm2439, %v2483, %v2485
        %v2487 = vrot.slane %v716, 5
        %v2488 = vsel %vm2439, %v2485, %v2487
        %v2489 = vrot.slane %v717, 5
        %v2490 = vsel %vm2439, %v2487, %v2489
        %v2491 = vrot.slane %v718, 5
        %v2492 = vsel %vm2439, %v2489, %v2491
        %v2493 = vrot.slane %v719, 5
        %v2494 = vsel %vm2439, %v2491, %v2493
        %v2495 = vrot.slane %v720, 5
        %v2496 = vsel %vm2439, %v2493, %v2495
        %v2497 = vrot.slane %v721, 5
        %v2498 = vsel %vm2439, %v2495, %v2497
        %v2499 = vrot.slane %v722, 5
        %v2500 = vsel %vm2439, %v2497, %v2499
        %v2501 = vrot.slane %v723, 5
        %v2502 = vsel %vm2439, %v2499, %v2501
        %v2503 = vrot.slane %v724, 5
        %v2504 = vsel %vm2439, %v2501, %v2503
        %v2505 = vrot.slane %v725, 5
        %v2506 = vsel %vm2439, %v2503, %v2505
        %v2507 = vsel %vm836, %v2442, 0
        %v2509 = vsel %vm836, %v2444, 0
        %v2511 = vsel %vm836, %v2446, 0
        %v2513 = vsel %vm836, %v2448, 0
        %v2515 = vsel %vm836, %v2450, 0
        %v2517 = vsel %vm836, %v2452, 0
        %v2519 = vsel %vm836, %v2454, 0
        %v2521 = vsel %vm836, %v2456, 0
        %v2523 = vsel %vm836, %v2458, 0
        %v2525 = vsel %vm836, %v2460, 0
        %v2527 = vsel %vm836, %v2462, 0
        %v2529 = vsel %vm836, %v2464, 0
        %v2531 = vsel %vm836, %v2466, 0
        %v2533 = vsel %vm836, %v2468, 0
        %v2535 = vsel %vm836, %v2470, 0
        %v2537 = vsel %vm836, %v2472, 0
        %v2539 = vsel %vm836, %v2474, 0
        %v2541 = vsel %vm836, %v2476, 0
        %v2543 = vsel %vm836, %v2478, 0
        %v2545 = vsel %vm836, %v2480, 0
        %v2547 = vsel %vm836, %v2482, 0
        %v2549 = vsel %vm836, %v2484, 0
        %v2551 = vsel %vm836, %v2486, 0
        %v2553 = vsel %vm836, %v2488, 0
        %v2555 = vsel %vm836, %v2490, 0
        %v2557 = vsel %vm836, %v2492, 0
        %v2559 = vsel %vm836, %v2494, 0
        %v2561 = vsel %vm836, %v2496, 0
        %v2563 = vsel %vm836, %v2498, 0
        %v2565 = vsel %vm836, %v2500, 0
        %v2567 = vsel %vm836, %v2502, 0
        %v2569 = vsel %vm836, %v2504, 0
        %v2571 = vsel %vm836, %v2506, 0
        %v2573 = vsel %vm836, %v2505, 0
        %v2576 = vsel %vm905, %v2438, 0
        %2578 = vmatpush.msra.mxu0 0.0
        %2579 = vmatpush.msra.mxu0 0.0
        %2580 = vmatpush.msra.mxu0 0.0
        %2581 = vmatpush.msra.mxu0 0.0
        %2582 = vmatpush.msra.mxu0 0.0
        %2583 = vmatpush.msra.mxu0 0.0
        %2584 = vmatpush.msra.mxu0 0.0
        %2585 = vmatpush.msra.mxu0 0.0
        %2586 = vmatpush.msra.mxu0 0.0
        %2587 = vmatpush.msra.mxu0 0.0
        %2588 = vmatpush.msra.mxu0 0.0
        %2589 = vmatpush.msra.mxu0 0.0
        %2590 = vmatpush.msra.mxu0 0.0
        %2591 = vmatpush.msra.mxu0 0.0
        %2592 = vmatpush.msra.mxu0 0.0
        %2593 = vmatpush.msra.mxu0 %v2576
        %2594 = vmatmul.f32.gmra.mxu0 %v2507
        %v2595 = vpop.f32.mrf.mxu0
        %v2596 = vadd.f32 0.0, %v2595
        %2597 = vmatmul.f32.gmra.mxu0 %v2509
        %v2598 = vpop.f32.mrf.mxu0
        %v2599 = vadd.f32 0.0, %v2598
        %2600 = vmatmul.f32.gmra.mxu0 %v2511
        %v2601 = vpop.f32.mrf.mxu0
        %v2602 = vadd.f32 0.0, %v2601
        %2603 = vmatmul.f32.gmra.mxu0 %v2513
        %v2604 = vpop.f32.mrf.mxu0
        %v2605 = vadd.f32 0.0, %v2604
        %2606 = vmatmul.f32.gmra.mxu0 %v2515
        %v2607 = vpop.f32.mrf.mxu0
        %v2608 = vadd.f32 0.0, %v2607
        %2609 = vmatmul.f32.gmra.mxu0 %v2517
        %v2610 = vpop.f32.mrf.mxu0
        %v2611 = vadd.f32 0.0, %v2610
        %2612 = vmatmul.f32.gmra.mxu0 %v2519
        %v2613 = vpop.f32.mrf.mxu0
        %v2614 = vadd.f32 0.0, %v2613
        %2615 = vmatmul.f32.gmra.mxu0 %v2521
        %v2616 = vpop.f32.mrf.mxu0
        %v2617 = vadd.f32 0.0, %v2616
        %2618 = vmatmul.f32.gmra.mxu0 %v2523
        %v2619 = vpop.f32.mrf.mxu0
        %v2620 = vadd.f32 0.0, %v2619
        %2621 = vmatmul.f32.gmra.mxu0 %v2525
        %v2622 = vpop.f32.mrf.mxu0
        %v2623 = vadd.f32 0.0, %v2622
        %2624 = vmatmul.f32.gmra.mxu0 %v2527
        %v2625 = vpop.f32.mrf.mxu0
        %v2626 = vadd.f32 0.0, %v2625
        %2627 = vmatmul.f32.gmra.mxu0 %v2529
        %v2628 = vpop.f32.mrf.mxu0
        %v2629 = vadd.f32 0.0, %v2628
        %2630 = vmatmul.f32.gmra.mxu0 %v2531
        %v2631 = vpop.f32.mrf.mxu0
        %v2632 = vadd.f32 0.0, %v2631
        %2633 = vmatmul.f32.gmra.mxu0 %v2533
        %v2634 = vpop.f32.mrf.mxu0
        %v2635 = vadd.f32 0.0, %v2634
        %2636 = vmatmul.f32.gmra.mxu0 %v2535
        %v2637 = vpop.f32.mrf.mxu0
        %v2638 = vadd.f32 0.0, %v2637
        %2639 = vmatmul.f32.gmra.mxu0 %v2537
        %v2640 = vpop.f32.mrf.mxu0
        %v2641 = vadd.f32 0.0, %v2640
        %2642 = vmatmul.f32.gmra.mxu0 %v2539
        %v2643 = vpop.f32.mrf.mxu0
        %v2644 = vadd.f32 0.0, %v2643
        %2645 = vmatmul.f32.gmra.mxu0 %v2541
        %v2646 = vpop.f32.mrf.mxu0
        %v2647 = vadd.f32 0.0, %v2646
        %2648 = vmatmul.f32.gmra.mxu0 %v2543
        %v2649 = vpop.f32.mrf.mxu0
        %v2650 = vadd.f32 0.0, %v2649
        %2651 = vmatmul.f32.gmra.mxu0 %v2545
        %v2652 = vpop.f32.mrf.mxu0
        %v2653 = vadd.f32 0.0, %v2652
        %2654 = vmatmul.f32.gmra.mxu0 %v2547
        %v2655 = vpop.f32.mrf.mxu0
        %v2656 = vadd.f32 0.0, %v2655
        %2657 = vmatmul.f32.gmra.mxu0 %v2549
        %v2658 = vpop.f32.mrf.mxu0
        %v2659 = vadd.f32 0.0, %v2658
        %2660 = vmatmul.f32.gmra.mxu0 %v2551
        %v2661 = vpop.f32.mrf.mxu0
        %v2662 = vadd.f32 0.0, %v2661
        %2663 = vmatmul.f32.gmra.mxu0 %v2553
        %v2664 = vpop.f32.mrf.mxu0
        %v2665 = vadd.f32 0.0, %v2664
        %2666 = vmatmul.f32.gmra.mxu0 %v2555
        %v2667 = vpop.f32.mrf.mxu0
        %v2668 = vadd.f32 0.0, %v2667
        %2669 = vmatmul.f32.gmra.mxu0 %v2557
        %v2670 = vpop.f32.mrf.mxu0
        %v2671 = vadd.f32 0.0, %v2670
        %2672 = vmatmul.f32.gmra.mxu0 %v2559
        %v2673 = vpop.f32.mrf.mxu0
        %v2674 = vadd.f32 0.0, %v2673
        %2675 = vmatmul.f32.gmra.mxu0 %v2561
        %v2676 = vpop.f32.mrf.mxu0
        %v2677 = vadd.f32 0.0, %v2676
        %2678 = vmatmul.f32.gmra.mxu0 %v2563
        %v2679 = vpop.f32.mrf.mxu0
        %v2680 = vadd.f32 0.0, %v2679
        %2681 = vmatmul.f32.gmra.mxu0 %v2565
        %v2682 = vpop.f32.mrf.mxu0
        %v2683 = vadd.f32 0.0, %v2682
        %2684 = vmatmul.f32.gmra.mxu0 %v2567
        %v2685 = vpop.f32.mrf.mxu0
        %v2686 = vadd.f32 0.0, %v2685
        %2687 = vmatmul.f32.gmra.mxu0 %v2569
        %v2688 = vpop.f32.mrf.mxu0
        %v2689 = vadd.f32 0.0, %v2688
        %2690 = vmatmul.f32.gmra.mxu0 %v2571
        %v2691 = vpop.f32.mrf.mxu0
        %v2692 = vadd.f32 0.0, %v2691
        %2693 = vmatmul.f32.gmra.mxu0 %v2573
        %v2694 = vpop.f32.mrf.mxu0
        %v2695 = vadd.f32 0.0, %v2694
        %2696 = vdwg.mxu0
        %v2697 = vadd.f32 %v2403, %v2596
        %v2698 = vadd.f32 %v2404, %v2599
        %v2699 = vadd.f32 %v2405, %v2602
        %v2700 = vadd.f32 %v2406, %v2605
        %v2701 = vadd.f32 %v2407, %v2608
        %v2702 = vadd.f32 %v2408, %v2611
        %v2703 = vadd.f32 %v2409, %v2614
        %v2704 = vadd.f32 %v2410, %v2617
        %v2705 = vadd.f32 %v2411, %v2620
        %v2706 = vadd.f32 %v2412, %v2623
        %v2707 = vadd.f32 %v2413, %v2626
        %v2708 = vadd.f32 %v2414, %v2629
        %v2709 = vadd.f32 %v2415, %v2632
        %v2710 = vadd.f32 %v2416, %v2635
        %v2711 = vadd.f32 %v2417, %v2638
        %v2712 = vadd.f32 %v2418, %v2641
        %v2713 = vadd.f32 %v2419, %v2644
        %v2714 = vadd.f32 %v2420, %v2647
        %v2715 = vadd.f32 %v2421, %v2650
        %v2716 = vadd.f32 %v2422, %v2653
        %v2717 = vadd.f32 %v2423, %v2656
        %v2718 = vadd.f32 %v2424, %v2659
        %v2719 = vadd.f32 %v2425, %v2662
        %v2720 = vadd.f32 %v2426, %v2665
        %v2721 = vadd.f32 %v2427, %v2668
        %v2722 = vadd.f32 %v2428, %v2671
        %v2723 = vadd.f32 %v2429, %v2674
        %v2724 = vadd.f32 %v2430, %v2677
        %v2725 = vadd.f32 %v2431, %v2680
        %v2726 = vadd.f32 %v2432, %v2683
        %v2727 = vadd.f32 %v2433, %v2686
        %v2728 = vadd.f32 %v2434, %v2689
        %v2729 = vadd.f32 %v2435, %v2692
        %v2730 = vadd.f32 %v2436, %v2695
        %s2731 = scalar_lea.vmem [#allocation2], 32
        %v2732 = vld [vmem:[%s2731] sm:$0xf]
        %v2735 = vrot.slane %v726, 4
        %v2736 = vsel %vm905, %v2211, %v2735
        %v2737 = vrot.slane %v727, 4
        %v2738 = vsel %vm905, %v2735, %v2737
        %v2739 = vsel %vm836, %v2736, 0
        %v2741 = vsel %vm836, %v2738, 0
        %v2743 = vsel %vm836, %v2737, 0
        %v2746 = vsel %vm905, %v2732, 0
        %2748 = vmatpush.msra.mxu0 0.0
        %2749 = vmatpush.msra.mxu0 0.0
        %2750 = vmatpush.msra.mxu0 0.0
        %2751 = vmatpush.msra.mxu0 0.0
        %2752 = vmatpush.msra.mxu0 0.0
        %2753 = vmatpush.msra.mxu0 0.0
        %2754 = vmatpush.msra.mxu0 0.0
        %2755 = vmatpush.msra.mxu0 0.0
        %2756 = vmatpush.msra.mxu0 0.0
        %2757 = vmatpush.msra.mxu0 0.0
        %2758 = vmatpush.msra.mxu0 0.0
        %2759 = vmatpush.msra.mxu0 0.0
        %2760 = vmatpush.msra.mxu0 0.0
        %2761 = vmatpush.msra.mxu0 0.0
        %2762 = vmatpush.msra.mxu0 0.0
        %2763 = vmatpush.msra.mxu0 %v2746
        %2764 = vmatmul.f32.gmra.mxu0 %v2217
        %v2765 = vpop.f32.mrf.mxu0
        %v2766 = vadd.f32 0.0, %v2765
        %2767 = vmatmul.f32.gmra.mxu0 %v2219
        %v2768 = vpop.f32.mrf.mxu0
        %v2769 = vadd.f32 0.0, %v2768
        %2770 = vmatmul.f32.gmra.mxu0 %v2221
        %v2771 = vpop.f32.mrf.mxu0
        %v2772 = vadd.f32 0.0, %v2771
        %2773 = vmatmul.f32.gmra.mxu0 %v2223
        %v2774 = vpop.f32.mrf.mxu0
        %v2775 = vadd.f32 0.0, %v2774
        %2776 = vmatmul.f32.gmra.mxu0 %v2225
        %v2777 = vpop.f32.mrf.mxu0
        %v2778 = vadd.f32 0.0, %v2777
        %2779 = vmatmul.f32.gmra.mxu0 %v2227
        %v2780 = vpop.f32.mrf.mxu0
        %v2781 = vadd.f32 0.0, %v2780
        %2782 = vmatmul.f32.gmra.mxu0 %v2229
        %v2783 = vpop.f32.mrf.mxu0
        %v2784 = vadd.f32 0.0, %v2783
        %2785 = vmatmul.f32.gmra.mxu0 %v2231
        %v2786 = vpop.f32.mrf.mxu0
        %v2787 = vadd.f32 0.0, %v2786
        %2788 = vmatmul.f32.gmra.mxu0 %v2233
        %v2789 = vpop.f32.mrf.mxu0
        %v2790 = vadd.f32 0.0, %v2789
        %2791 = vmatmul.f32.gmra.mxu0 %v2235
        %v2792 = vpop.f32.mrf.mxu0
        %v2793 = vadd.f32 0.0, %v2792
        %2794 = vmatmul.f32.gmra.mxu0 %v2237
        %v2795 = vpop.f32.mrf.mxu0
        %v2796 = vadd.f32 0.0, %v2795
        %2797 = vmatmul.f32.gmra.mxu0 %v2239
        %v2798 = vpop.f32.mrf.mxu0
        %v2799 = vadd.f32 0.0, %v2798
        %2800 = vmatmul.f32.gmra.mxu0 %v2241
        %v2801 = vpop.f32.mrf.mxu0
        %v2802 = vadd.f32 0.0, %v2801
        %2803 = vmatmul.f32.gmra.mxu0 %v2243
        %v2804 = vpop.f32.mrf.mxu0
        %v2805 = vadd.f32 0.0, %v2804
        %2806 = vmatmul.f32.gmra.mxu0 %v2245
        %v2807 = vpop.f32.mrf.mxu0
        %v2808 = vadd.f32 0.0, %v2807
        %2809 = vmatmul.f32.gmra.mxu0 %v2247
        %v2810 = vpop.f32.mrf.mxu0
        %v2811 = vadd.f32 0.0, %v2810
        %2812 = vmatmul.f32.gmra.mxu0 %v2249
        %v2813 = vpop.f32.mrf.mxu0
        %v2814 = vadd.f32 0.0, %v2813
        %2815 = vmatmul.f32.gmra.mxu0 %v2251
        %v2816 = vpop.f32.mrf.mxu0
        %v2817 = vadd.f32 0.0, %v2816
        %2818 = vmatmul.f32.gmra.mxu0 %v2253
        %v2819 = vpop.f32.mrf.mxu0
        %v2820 = vadd.f32 0.0, %v2819
        %2821 = vmatmul.f32.gmra.mxu0 %v2255
        %v2822 = vpop.f32.mrf.mxu0
        %v2823 = vadd.f32 0.0, %v2822
        %2824 = vmatmul.f32.gmra.mxu0 %v2257
        %v2825 = vpop.f32.mrf.mxu0
        %v2826 = vadd.f32 0.0, %v2825
        %2827 = vmatmul.f32.gmra.mxu0 %v2259
        %v2828 = vpop.f32.mrf.mxu0
        %v2829 = vadd.f32 0.0, %v2828
        %2830 = vmatmul.f32.gmra.mxu0 %v2261
        %v2831 = vpop.f32.mrf.mxu0
        %v2832 = vadd.f32 0.0, %v2831
        %2833 = vmatmul.f32.gmra.mxu0 %v2263
        %v2834 = vpop.f32.mrf.mxu0
        %v2835 = vadd.f32 0.0, %v2834
        %2836 = vmatmul.f32.gmra.mxu0 %v2265
        %v2837 = vpop.f32.mrf.mxu0
        %v2838 = vadd.f32 0.0, %v2837
        %2839 = vmatmul.f32.gmra.mxu0 %v2267
        %v2840 = vpop.f32.mrf.mxu0
        %v2841 = vadd.f32 0.0, %v2840
        %2842 = vmatmul.f32.gmra.mxu0 %v2269
        %v2843 = vpop.f32.mrf.mxu0
        %v2844 = vadd.f32 0.0, %v2843
        %2845 = vmatmul.f32.gmra.mxu0 %v2271
        %v2846 = vpop.f32.mrf.mxu0
        %v2847 = vadd.f32 0.0, %v2846
        %2848 = vmatmul.f32.gmra.mxu0 %v2273
        %v2849 = vpop.f32.mrf.mxu0
        %v2850 = vadd.f32 0.0, %v2849
        %2851 = vmatmul.f32.gmra.mxu0 %v2275
        %v2852 = vpop.f32.mrf.mxu0
        %v2853 = vadd.f32 0.0, %v2852
        %2854 = vmatmul.f32.gmra.mxu0 %v2277
        %v2855 = vpop.f32.mrf.mxu0
        %v2856 = vadd.f32 0.0, %v2855
        %2857 = vmatmul.f32.gmra.mxu0 %v2739
        %v2858 = vpop.f32.mrf.mxu0
        %v2859 = vadd.f32 0.0, %v2858
        %2860 = vmatmul.f32.gmra.mxu0 %v2741
        %v2861 = vpop.f32.mrf.mxu0
        %v2862 = vadd.f32 0.0, %v2861
        %2863 = vmatmul.f32.gmra.mxu0 %v2743
        %v2864 = vpop.f32.mrf.mxu0
        %v2865 = vadd.f32 0.0, %v2864
        %2866 = vdwg.mxu0
        %v2867 = vadd.f32 %v2697, %v2766
        %v2868 = vadd.f32 %v2698, %v2769
        %v2869 = vadd.f32 %v2699, %v2772
        %v2870 = vadd.f32 %v2700, %v2775
        %v2871 = vadd.f32 %v2701, %v2778
        %v2872 = vadd.f32 %v2702, %v2781
        %v2873 = vadd.f32 %v2703, %v2784
        %v2874 = vadd.f32 %v2704, %v2787
        %v2875 = vadd.f32 %v2705, %v2790
        %v2876 = vadd.f32 %v2706, %v2793
        %v2877 = vadd.f32 %v2707, %v2796
        %v2878 = vadd.f32 %v2708, %v2799
        %v2879 = vadd.f32 %v2709, %v2802
        %v2880 = vadd.f32 %v2710, %v2805
        %v2881 = vadd.f32 %v2711, %v2808
        %v2882 = vadd.f32 %v2712, %v2811
        %v2883 = vadd.f32 %v2713, %v2814
        %v2884 = vadd.f32 %v2714, %v2817
        %v2885 = vadd.f32 %v2715, %v2820
        %v2886 = vadd.f32 %v2716, %v2823
        %v2887 = vadd.f32 %v2717, %v2826
        %v2888 = vadd.f32 %v2718, %v2829
        %v2889 = vadd.f32 %v2719, %v2832
        %v2890 = vadd.f32 %v2720, %v2835
        %v2891 = vadd.f32 %v2721, %v2838
        %v2892 = vadd.f32 %v2722, %v2841
        %v2893 = vadd.f32 %v2723, %v2844
        %v2894 = vadd.f32 %v2724, %v2847
        %v2895 = vadd.f32 %v2725, %v2850
        %v2896 = vadd.f32 %v2726, %v2853
        %v2897 = vadd.f32 %v2727, %v2856
        %v2898 = vadd.f32 %v2728, %v2859
        %v2899 = vadd.f32 %v2729, %v2862
        %v2900 = vadd.f32 %v2730, %v2865
        %s2901 = scalar_lea.vmem [#allocation2], 36
        %v2902 = vld [vmem:[%s2901] sm:$0xf]
        %v2903 = vrot.slane %v726, 5
        %v2904 = vsel %vm2439, %v2505, %v2903
        %v2905 = vrot.slane %v727, 5
        %v2906 = vsel %vm2439, %v2903, %v2905
        %v2907 = vsel %vm836, %v2904, 0
        %v2909 = vsel %vm836, %v2906, 0
        %v2911 = vsel %vm836, %v2905, 0
        %v2914 = vsel %vm905, %v2902, 0
        %2916 = vmatpush.msra.mxu0 0.0
        %2917 = vmatpush.msra.mxu0 0.0
        %2918 = vmatpush.msra.mxu0 0.0
        %2919 = vmatpush.msra.mxu0 0.0
        %2920 = vmatpush.msra.mxu0 0.0
        %2921 = vmatpush.msra.mxu0 0.0
        %2922 = vmatpush.msra.mxu0 0.0
        %2923 = vmatpush.msra.mxu0 0.0
        %2924 = vmatpush.msra.mxu0 0.0
        %2925 = vmatpush.msra.mxu0 0.0
        %2926 = vmatpush.msra.mxu0 0.0
        %2927 = vmatpush.msra.mxu0 0.0
        %2928 = vmatpush.msra.mxu0 0.0
        %2929 = vmatpush.msra.mxu0 0.0
        %2930 = vmatpush.msra.mxu0 0.0
        %2931 = vmatpush.msra.mxu0 %v2914
        %2932 = vmatmul.f32.gmra.mxu0 %v2511
        %v2933 = vpop.f32.mrf.mxu0
        %v2934 = vadd.f32 0.0, %v2933
        %2935 = vmatmul.f32.gmra.mxu0 %v2513
        %v2936 = vpop.f32.mrf.mxu0
        %v2937 = vadd.f32 0.0, %v2936
        %2938 = vmatmul.f32.gmra.mxu0 %v2515
        %v2939 = vpop.f32.mrf.mxu0
        %v2940 = vadd.f32 0.0, %v2939
        %2941 = vmatmul.f32.gmra.mxu0 %v2517
        %v2942 = vpop.f32.mrf.mxu0
        %v2943 = vadd.f32 0.0, %v2942
        %2944 = vmatmul.f32.gmra.mxu0 %v2519
        %v2945 = vpop.f32.mrf.mxu0
        %v2946 = vadd.f32 0.0, %v2945
        %2947 = vmatmul.f32.gmra.mxu0 %v2521
        %v2948 = vpop.f32.mrf.mxu0
        %v2949 = vadd.f32 0.0, %v2948
        %2950 = vmatmul.f32.gmra.mxu0 %v2523
        %v2951 = vpop.f32.mrf.mxu0
        %v2952 = vadd.f32 0.0, %v2951
        %2953 = vmatmul.f32.gmra.mxu0 %v2525
        %v2954 = vpop.f32.mrf.mxu0
        %v2955 = vadd.f32 0.0, %v2954
        %2956 = vmatmul.f32.gmra.mxu0 %v2527
        %v2957 = vpop.f32.mrf.mxu0
        %v2958 = vadd.f32 0.0, %v2957
        %2959 = vmatmul.f32.gmra.mxu0 %v2529
        %v2960 = vpop.f32.mrf.mxu0
        %v2961 = vadd.f32 0.0, %v2960
        %2962 = vmatmul.f32.gmra.mxu0 %v2531
        %v2963 = vpop.f32.mrf.mxu0
        %v2964 = vadd.f32 0.0, %v2963
        %2965 = vmatmul.f32.gmra.mxu0 %v2533
        %v2966 = vpop.f32.mrf.mxu0
        %v2967 = vadd.f32 0.0, %v2966
        %2968 = vmatmul.f32.gmra.mxu0 %v2535
        %v2969 = vpop.f32.mrf.mxu0
        %v2970 = vadd.f32 0.0, %v2969
        %2971 = vmatmul.f32.gmra.mxu0 %v2537
        %v2972 = vpop.f32.mrf.mxu0
        %v2973 = vadd.f32 0.0, %v2972
        %2974 = vmatmul.f32.gmra.mxu0 %v2539
        %v2975 = vpop.f32.mrf.mxu0
        %v2976 = vadd.f32 0.0, %v2975
        %2977 = vmatmul.f32.gmra.mxu0 %v2541
        %v2978 = vpop.f32.mrf.mxu0
        %v2979 = vadd.f32 0.0, %v2978
        %2980 = vmatmul.f32.gmra.mxu0 %v2543
        %v2981 = vpop.f32.mrf.mxu0
        %v2982 = vadd.f32 0.0, %v2981
        %2983 = vmatmul.f32.gmra.mxu0 %v2545
        %v2984 = vpop.f32.mrf.mxu0
        %v2985 = vadd.f32 0.0, %v2984
        %2986 = vmatmul.f32.gmra.mxu0 %v2547
        %v2987 = vpop.f32.mrf.mxu0
        %v2988 = vadd.f32 0.0, %v2987
        %2989 = vmatmul.f32.gmra.mxu0 %v2549
        %v2990 = vpop.f32.mrf.mxu0
        %v2991 = vadd.f32 0.0, %v2990
        %2992 = vmatmul.f32.gmra.mxu0 %v2551
        %v2993 = vpop.f32.mrf.mxu0
        %v2994 = vadd.f32 0.0, %v2993
        %2995 = vmatmul.f32.gmra.mxu0 %v2553
        %v2996 = vpop.f32.mrf.mxu0
        %v2997 = vadd.f32 0.0, %v2996
        %2998 = vmatmul.f32.gmra.mxu0 %v2555
        %v2999 = vpop.f32.mrf.mxu0
        %v3000 = vadd.f32 0.0, %v2999
        %3001 = vmatmul.f32.gmra.mxu0 %v2557
        %v3002 = vpop.f32.mrf.mxu0
        %v3003 = vadd.f32 0.0, %v3002
        %3004 = vmatmul.f32.gmra.mxu0 %v2559
        %v3005 = vpop.f32.mrf.mxu0
        %v3006 = vadd.f32 0.0, %v3005
        %3007 = vmatmul.f32.gmra.mxu0 %v2561
        %v3008 = vpop.f32.mrf.mxu0
        %v3009 = vadd.f32 0.0, %v3008
        %3010 = vmatmul.f32.gmra.mxu0 %v2563
        %v3011 = vpop.f32.mrf.mxu0
        %v3012 = vadd.f32 0.0, %v3011
        %3013 = vmatmul.f32.gmra.mxu0 %v2565
        %v3014 = vpop.f32.mrf.mxu0
        %v3015 = vadd.f32 0.0, %v3014
        %3016 = vmatmul.f32.gmra.mxu0 %v2567
        %v3017 = vpop.f32.mrf.mxu0
        %v3018 = vadd.f32 0.0, %v3017
        %3019 = vmatmul.f32.gmra.mxu0 %v2569
        %v3020 = vpop.f32.mrf.mxu0
        %v3021 = vadd.f32 0.0, %v3020
        %3022 = vmatmul.f32.gmra.mxu0 %v2571
        %v3023 = vpop.f32.mrf.mxu0
        %v3024 = vadd.f32 0.0, %v3023
        %3025 = vmatmul.f32.gmra.mxu0 %v2907
        %v3026 = vpop.f32.mrf.mxu0
        %v3027 = vadd.f32 0.0, %v3026
        %3028 = vmatmul.f32.gmra.mxu0 %v2909
        %v3029 = vpop.f32.mrf.mxu0
        %v3030 = vadd.f32 0.0, %v3029
        %3031 = vmatmul.f32.gmra.mxu0 %v2911
        %v3032 = vpop.f32.mrf.mxu0
        %v3033 = vadd.f32 0.0, %v3032
        %3034 = vdwg.mxu0
        %v3035 = vadd.f32 %v2867, %v2934
        %v3036 = vadd.f32 %v2868, %v2937
        %v3037 = vadd.f32 %v2869, %v2940
        %v3038 = vadd.f32 %v2870, %v2943
        %v3039 = vadd.f32 %v2871, %v2946
        %v3040 = vadd.f32 %v2872, %v2949
        %v3041 = vadd.f32 %v2873, %v2952
        %v3042 = vadd.f32 %v2874, %v2955
        %v3043 = vadd.f32 %v2875, %v2958
        %v3044 = vadd.f32 %v2876, %v2961
        %v3045 = vadd.f32 %v2877, %v2964
        %v3046 = vadd.f32 %v2878, %v2967
        %v3047 = vadd.f32 %v2879, %v2970
        %v3048 = vadd.f32 %v2880, %v2973
        %v3049 = vadd.f32 %v2881, %v2976
        %v3050 = vadd.f32 %v2882, %v2979
        %v3051 = vadd.f32 %v2883, %v2982
        %v3052 = vadd.f32 %v2884, %v2985
        %v3053 = vadd.f32 %v2885, %v2988
        %v3054 = vadd.f32 %v2886, %v2991
        %v3055 = vadd.f32 %v2887, %v2994
        %v3056 = vadd.f32 %v2888, %v2997
        %v3057 = vadd.f32 %v2889, %v3000
        %v3058 = vadd.f32 %v2890, %v3003
        %v3059 = vadd.f32 %v2891, %v3006
        %v3060 = vadd.f32 %v2892, %v3009
        %v3061 = vadd.f32 %v2893, %v3012
        %v3062 = vadd.f32 %v2894, %v3015
        %v3063 = vadd.f32 %v2895, %v3018
        %v3064 = vadd.f32 %v2896, %v3021
        %v3065 = vadd.f32 %v2897, %v3024
        %v3066 = vadd.f32 %v2898, %v3027
        %v3067 = vadd.f32 %v2899, %v3030
        %v3068 = vadd.f32 %v2900, %v3033
        %s3069 = scalar_lea.vmem [#allocation2], 40
        %v3070 = vld [vmem:[%s3069] sm:$0xf]
        %vm3072 = vcmask 1041408
        %v3073 = vrot.slane %v694, 6
        %v3074 = vrot.slane %v695, 6
        %v3075 = vsel %vm3072, %v3073, %v3074
        %v3076 = vrot.slane %v696, 6
        %v3077 = vsel %vm3072, %v3074, %v3076
        %v3078 = vrot.slane %v697, 6
        %v3079 = vsel %vm3072, %v3076, %v3078
        %v3080 = vrot.slane %v698, 6
        %v3081 = vsel %vm3072, %v3078, %v3080
        %v3082 = vrot.slane %v699, 6
        %v3083 = vsel %vm3072, %v3080, %v3082
        %v3084 = vrot.slane %v700, 6
        %v3085 = vsel %vm3072, %v3082, %v3084
        %v3086 = vrot.slane %v701, 6
        %v3087 = vsel %vm3072, %v3084, %v3086
        %v3088 = vrot.slane %v702, 6
        %v3089 = vsel %vm3072, %v3086, %v3088
        %v3090 = vrot.slane %v703, 6
        %v3091 = vsel %vm3072, %v3088, %v3090
        %v3092 = vrot.slane %v704, 6
        %v3093 = vsel %vm3072, %v3090, %v3092
        %v3094 = vrot.slane %v705, 6
        %v3095 = vsel %vm3072, %v3092, %v3094
        %v3096 = vrot.slane %v706, 6
        %v3097 = vsel %vm3072, %v3094, %v3096
        %v3098 = vrot.slane %v707, 6
        %v3099 = vsel %vm3072, %v3096, %v3098
        %v3100 = vrot.slane %v708, 6
        %v3101 = vsel %vm3072, %v3098, %v3100
        %v3102 = vrot.slane %v709, 6
        %v3103 = vsel %vm3072, %v3100, %v3102
        %v3104 = vrot.slane %v710, 6
        %v3105 = vsel %vm3072, %v3102, %v3104
        %v3106 = vrot.slane %v711, 6
        %v3107 = vsel %vm3072, %v3104, %v3106
        %v3108 = vrot.slane %v712, 6
        %v3109 = vsel %vm3072, %v3106, %v3108
        %v3110 = vrot.slane %v713, 6
        %v3111 = vsel %vm3072, %v3108, %v3110
        %v3112 = vrot.slane %v714, 6
        %v3113 = vsel %vm3072, %v3110, %v3112
        %v3114 = vrot.slane %v715, 6
        %v3115 = vsel %vm3072, %v3112, %v3114
        %v3116 = vrot.slane %v716, 6
        %v3117 = vsel %vm3072, %v3114, %v3116
        %v3118 = vrot.slane %v717, 6
        %v3119 = vsel %vm3072, %v3116, %v3118
        %v3120 = vrot.slane %v718, 6
        %v3121 = vsel %vm3072, %v3118, %v3120
        %v3122 = vrot.slane %v719, 6
        %v3123 = vsel %vm3072, %v3120, %v3122
        %v3124 = vrot.slane %v720, 6
        %v3125 = vsel %vm3072, %v3122, %v3124
        %v3126 = vrot.slane %v721, 6
        %v3127 = vsel %vm3072, %v3124, %v3126
        %v3128 = vrot.slane %v722, 6
        %v3129 = vsel %vm3072, %v3126, %v3128
        %v3130 = vrot.slane %v723, 6
        %v3131 = vsel %vm3072, %v3128, %v3130
        %v3132 = vrot.slane %v724, 6
        %v3133 = vsel %vm3072, %v3130, %v3132
        %v3134 = vrot.slane %v725, 6
        %v3135 = vsel %vm3072, %v3132, %v3134
        %v3136 = vrot.slane %v726, 6
        %v3137 = vsel %vm3072, %v3134, %v3136
        %v3138 = vrot.slane %v727, 6
        %v3139 = vsel %vm3072, %v3136, %v3138
        %v3140 = vrot.slane %v728, 6
        %v3141 = vsel %vm3072, %v3138, %v3140
        %v3142 = vsel %vm836, %v3075, 0
        %v3144 = vsel %vm836, %v3077, 0
        %v3146 = vsel %vm836, %v3079, 0
        %v3148 = vsel %vm836, %v3081, 0
        %v3150 = vsel %vm836, %v3083, 0
        %v3152 = vsel %vm836, %v3085, 0
        %v3154 = vsel %vm836, %v3087, 0
        %v3156 = vsel %vm836, %v3089, 0
        %v3158 = vsel %vm836, %v3091, 0
        %v3160 = vsel %vm836, %v3093, 0
        %v3162 = vsel %vm836, %v3095, 0
        %v3164 = vsel %vm836, %v3097, 0
        %v3166 = vsel %vm836, %v3099, 0
        %v3168 = vsel %vm836, %v3101, 0
        %v3170 = vsel %vm836, %v3103, 0
        %v3172 = vsel %vm836, %v3105, 0
        %v3174 = vsel %vm836, %v3107, 0
        %v3176 = vsel %vm836, %v3109, 0
        %v3178 = vsel %vm836, %v3111, 0
        %v3180 = vsel %vm836, %v3113, 0
        %v3182 = vsel %vm836, %v3115, 0
        %v3184 = vsel %vm836, %v3117, 0
        %v3186 = vsel %vm836, %v3119, 0
        %v3188 = vsel %vm836, %v3121, 0
        %v3190 = vsel %vm836, %v3123, 0
        %v3192 = vsel %vm836, %v3125, 0
        %v3194 = vsel %vm836, %v3127, 0
        %v3196 = vsel %vm836, %v3129, 0
        %v3198 = vsel %vm836, %v3131, 0
        %v3200 = vsel %vm836, %v3133, 0
        %v3202 = vsel %vm836, %v3135, 0
        %v3204 = vsel %vm836, %v3137, 0
        %v3206 = vsel %vm836, %v3139, 0
        %v3208 = vsel %vm836, %v3141, 0
        %v3211 = vsel %vm905, %v3070, 0
        %3213 = vmatpush.msra.mxu0 0.0
        %3214 = vmatpush.msra.mxu0 0.0
        %3215 = vmatpush.msra.mxu0 0.0
        %3216 = vmatpush.msra.mxu0 0.0
        %3217 = vmatpush.msra.mxu0 0.0
        %3218 = vmatpush.msra.mxu0 0.0
        %3219 = vmatpush.msra.mxu0 0.0
        %3220 = vmatpush.msra.mxu0 0.0
        %3221 = vmatpush.msra.mxu0 0.0
        %3222 = vmatpush.msra.mxu0 0.0
        %3223 = vmatpush.msra.mxu0 0.0
        %3224 = vmatpush.msra.mxu0 0.0
        %3225 = vmatpush.msra.mxu0 0.0
        %3226 = vmatpush.msra.mxu0 0.0
        %3227 = vmatpush.msra.mxu0 0.0
        %3228 = vmatpush.msra.mxu0 %v3211
        %3229 = vmatmul.f32.gmra.mxu0 %v3142
        %v3230 = vpop.f32.mrf.mxu0
        %v3231 = vadd.f32 0.0, %v3230
        %3232 = vmatmul.f32.gmra.mxu0 %v3144
        %v3233 = vpop.f32.mrf.mxu0
        %v3234 = vadd.f32 0.0, %v3233
        %3235 = vmatmul.f32.gmra.mxu0 %v3146
        %v3236 = vpop.f32.mrf.mxu0
        %v3237 = vadd.f32 0.0, %v3236
        %3238 = vmatmul.f32.gmra.mxu0 %v3148
        %v3239 = vpop.f32.mrf.mxu0
        %v3240 = vadd.f32 0.0, %v3239
        %3241 = vmatmul.f32.gmra.mxu0 %v3150
        %v3242 = vpop.f32.mrf.mxu0
        %v3243 = vadd.f32 0.0, %v3242
        %3244 = vmatmul.f32.gmra.mxu0 %v3152
        %v3245 = vpop.f32.mrf.mxu0
        %v3246 = vadd.f32 0.0, %v3245
        %3247 = vmatmul.f32.gmra.mxu0 %v3154
        %v3248 = vpop.f32.mrf.mxu0
        %v3249 = vadd.f32 0.0, %v3248
        %3250 = vmatmul.f32.gmra.mxu0 %v3156
        %v3251 = vpop.f32.mrf.mxu0
        %v3252 = vadd.f32 0.0, %v3251
        %3253 = vmatmul.f32.gmra.mxu0 %v3158
        %v3254 = vpop.f32.mrf.mxu0
        %v3255 = vadd.f32 0.0, %v3254
        %3256 = vmatmul.f32.gmra.mxu0 %v3160
        %v3257 = vpop.f32.mrf.mxu0
        %v3258 = vadd.f32 0.0, %v3257
        %3259 = vmatmul.f32.gmra.mxu0 %v3162
        %v3260 = vpop.f32.mrf.mxu0
        %v3261 = vadd.f32 0.0, %v3260
        %3262 = vmatmul.f32.gmra.mxu0 %v3164
        %v3263 = vpop.f32.mrf.mxu0
        %v3264 = vadd.f32 0.0, %v3263
        %3265 = vmatmul.f32.gmra.mxu0 %v3166
        %v3266 = vpop.f32.mrf.mxu0
        %v3267 = vadd.f32 0.0, %v3266
        %3268 = vmatmul.f32.gmra.mxu0 %v3168
        %v3269 = vpop.f32.mrf.mxu0
        %v3270 = vadd.f32 0.0, %v3269
        %3271 = vmatmul.f32.gmra.mxu0 %v3170
        %v3272 = vpop.f32.mrf.mxu0
        %v3273 = vadd.f32 0.0, %v3272
        %3274 = vmatmul.f32.gmra.mxu0 %v3172
        %v3275 = vpop.f32.mrf.mxu0
        %v3276 = vadd.f32 0.0, %v3275
        %3277 = vmatmul.f32.gmra.mxu0 %v3174
        %v3278 = vpop.f32.mrf.mxu0
        %v3279 = vadd.f32 0.0, %v3278
        %3280 = vmatmul.f32.gmra.mxu0 %v3176
        %v3281 = vpop.f32.mrf.mxu0
        %v3282 = vadd.f32 0.0, %v3281
        %3283 = vmatmul.f32.gmra.mxu0 %v3178
        %v3284 = vpop.f32.mrf.mxu0
        %v3285 = vadd.f32 0.0, %v3284
        %3286 = vmatmul.f32.gmra.mxu0 %v3180
        %v3287 = vpop.f32.mrf.mxu0
        %v3288 = vadd.f32 0.0, %v3287
        %3289 = vmatmul.f32.gmra.mxu0 %v3182
        %v3290 = vpop.f32.mrf.mxu0
        %v3291 = vadd.f32 0.0, %v3290
        %3292 = vmatmul.f32.gmra.mxu0 %v3184
        %v3293 = vpop.f32.mrf.mxu0
        %v3294 = vadd.f32 0.0, %v3293
        %3295 = vmatmul.f32.gmra.mxu0 %v3186
        %v3296 = vpop.f32.mrf.mxu0
        %v3297 = vadd.f32 0.0, %v3296
        %3298 = vmatmul.f32.gmra.mxu0 %v3188
        %v3299 = vpop.f32.mrf.mxu0
        %v3300 = vadd.f32 0.0, %v3299
        %3301 = vmatmul.f32.gmra.mxu0 %v3190
        %v3302 = vpop.f32.mrf.mxu0
        %v3303 = vadd.f32 0.0, %v3302
        %3304 = vmatmul.f32.gmra.mxu0 %v3192
        %v3305 = vpop.f32.mrf.mxu0
        %v3306 = vadd.f32 0.0, %v3305
        %3307 = vmatmul.f32.gmra.mxu0 %v3194
        %v3308 = vpop.f32.mrf.mxu0
        %v3309 = vadd.f32 0.0, %v3308
        %3310 = vmatmul.f32.gmra.mxu0 %v3196
        %v3311 = vpop.f32.mrf.mxu0
        %v3312 = vadd.f32 0.0, %v3311
        %3313 = vmatmul.f32.gmra.mxu0 %v3198
        %v3314 = vpop.f32.mrf.mxu0
        %v3315 = vadd.f32 0.0, %v3314
        %3316 = vmatmul.f32.gmra.mxu0 %v3200
        %v3317 = vpop.f32.mrf.mxu0
        %v3318 = vadd.f32 0.0, %v3317
        %3319 = vmatmul.f32.gmra.mxu0 %v3202
        %v3320 = vpop.f32.mrf.mxu0
        %v3321 = vadd.f32 0.0, %v3320
        %3322 = vmatmul.f32.gmra.mxu0 %v3204
        %v3323 = vpop.f32.mrf.mxu0
        %v3324 = vadd.f32 0.0, %v3323
        %3325 = vmatmul.f32.gmra.mxu0 %v3206
        %v3326 = vpop.f32.mrf.mxu0
        %v3327 = vadd.f32 0.0, %v3326
        %3328 = vmatmul.f32.gmra.mxu0 %v3208
        %v3329 = vpop.f32.mrf.mxu0
        %v3330 = vadd.f32 0.0, %v3329
        %3331 = vdwg.mxu0
        %v3332 = vadd.f32 %v3035, %v3231
        %v3333 = vadd.f32 %v3036, %v3234
        %v3334 = vadd.f32 %v3037, %v3237
        %v3335 = vadd.f32 %v3038, %v3240
        %v3336 = vadd.f32 %v3039, %v3243
        %v3337 = vadd.f32 %v3040, %v3246
        %v3338 = vadd.f32 %v3041, %v3249
        %v3339 = vadd.f32 %v3042, %v3252
        %v3340 = vadd.f32 %v3043, %v3255
        %v3341 = vadd.f32 %v3044, %v3258
        %v3342 = vadd.f32 %v3045, %v3261
        %v3343 = vadd.f32 %v3046, %v3264
        %v3344 = vadd.f32 %v3047, %v3267
        %v3345 = vadd.f32 %v3048, %v3270
        %v3346 = vadd.f32 %v3049, %v3273
        %v3347 = vadd.f32 %v3050, %v3276
        %v3348 = vadd.f32 %v3051, %v3279
        %v3349 = vadd.f32 %v3052, %v3282
        %v3350 = vadd.f32 %v3053, %v3285
        %v3351 = vadd.f32 %v3054, %v3288
        %v3352 = vadd.f32 %v3055, %v3291
        %v3353 = vadd.f32 %v3056, %v3294
        %v3354 = vadd.f32 %v3057, %v3297
        %v3355 = vadd.f32 %v3058, %v3300
        %v3356 = vadd.f32 %v3059, %v3303
        %v3357 = vadd.f32 %v3060, %v3306
        %v3358 = vadd.f32 %v3061, %v3309
        %v3359 = vadd.f32 %v3062, %v3312
        %v3360 = vadd.f32 %v3063, %v3315
        %v3361 = vadd.f32 %v3064, %v3318
        %v3362 = vadd.f32 %v3065, %v3321
        %v3363 = vadd.f32 %v3066, %v3324
        %v3364 = vadd.f32 %v3067, %v3327
        %v3365 = vadd.f32 %v3068, %v3330
        %s3366 = scalar_lea.vmem [#allocation2], 44
        %v3367 = vld [vmem:[%s3366] sm:$0xf]
        %vm3368 = vcmask 1040384
        %v3369 = vrot.slane %v694, 7
        %v3370 = vrot.slane %v695, 7
        %v3371 = vsel %vm3368, %v3369, %v3370
        %v3372 = vrot.slane %v696, 7
        %v3373 = vsel %vm3368, %v3370, %v3372
        %v3374 = vrot.slane %v697, 7
        %v3375 = vsel %vm3368, %v3372, %v3374
        %v3376 = vrot.slane %v698, 7
        %v3377 = vsel %vm3368, %v3374, %v3376
        %v3378 = vrot.slane %v699, 7
        %v3379 = vsel %vm3368, %v3376, %v3378
        %v3380 = vrot.slane %v700, 7
        %v3381 = vsel %vm3368, %v3378, %v3380
        %v3382 = vrot.slane %v701, 7
        %v3383 = vsel %vm3368, %v3380, %v3382
        %v3384 = vrot.slane %v702, 7
        %v3385 = vsel %vm3368, %v3382, %v3384
        %v3386 = vrot.slane %v703, 7
        %v3387 = vsel %vm3368, %v3384, %v3386
        %v3388 = vrot.slane %v704, 7
        %v3389 = vsel %vm3368, %v3386, %v3388
        %v3390 = vrot.slane %v705, 7
        %v3391 = vsel %vm3368, %v3388, %v3390
        %v3392 = vrot.slane %v706, 7
        %v3393 = vsel %vm3368, %v3390, %v3392
        %v3394 = vrot.slane %v707, 7
        %v3395 = vsel %vm3368, %v3392, %v3394
        %v3396 = vrot.slane %v708, 7
        %v3397 = vsel %vm3368, %v3394, %v3396
        %v3398 = vrot.slane %v709, 7
        %v3399 = vsel %vm3368, %v3396, %v3398
        %v3400 = vrot.slane %v710, 7
        %v3401 = vsel %vm3368, %v3398, %v3400
        %v3402 = vrot.slane %v711, 7
        %v3403 = vsel %vm3368, %v3400, %v3402
        %v3404 = vrot.slane %v712, 7
        %v3405 = vsel %vm3368, %v3402, %v3404
        %v3406 = vrot.slane %v713, 7
        %v3407 = vsel %vm3368, %v3404, %v3406
        %v3408 = vrot.slane %v714, 7
        %v3409 = vsel %vm3368, %v3406, %v3408
        %v3410 = vrot.slane %v715, 7
        %v3411 = vsel %vm3368, %v3408, %v3410
        %v3412 = vrot.slane %v716, 7
        %v3413 = vsel %vm3368, %v3410, %v3412
        %v3414 = vrot.slane %v717, 7
        %v3415 = vsel %vm3368, %v3412, %v3414
        %v3416 = vrot.slane %v718, 7
        %v3417 = vsel %vm3368, %v3414, %v3416
        %v3418 = vrot.slane %v719, 7
        %v3419 = vsel %vm3368, %v3416, %v3418
        %v3420 = vrot.slane %v720, 7
        %v3421 = vsel %vm3368, %v3418, %v3420
        %v3422 = vrot.slane %v721, 7
        %v3423 = vsel %vm3368, %v3420, %v3422
        %v3424 = vrot.slane %v722, 7
        %v3425 = vsel %vm3368, %v3422, %v3424
        %v3426 = vrot.slane %v723, 7
        %v3427 = vsel %vm3368, %v3424, %v3426
        %v3428 = vrot.slane %v724, 7
        %v3429 = vsel %vm3368, %v3426, %v3428
        %v3430 = vrot.slane %v725, 7
        %v3431 = vsel %vm3368, %v3428, %v3430
        %v3432 = vrot.slane %v726, 7
        %v3433 = vsel %vm3368, %v3430, %v3432
        %v3434 = vrot.slane %v727, 7
        %v3435 = vsel %vm3368, %v3432, %v3434
        %v3436 = vrot.slane %v728, 7
        %v3437 = vsel %vm3368, %v3434, %v3436
        %v3438 = vsel %vm836, %v3371, 0
        %v3440 = vsel %vm836, %v3373, 0
        %v3442 = vsel %vm836, %v3375, 0
        %v3444 = vsel %vm836, %v3377, 0
        %v3446 = vsel %vm836, %v3379, 0
        %v3448 = vsel %vm836, %v3381, 0
        %v3450 = vsel %vm836, %v3383, 0
        %v3452 = vsel %vm836, %v3385, 0
        %v3454 = vsel %vm836, %v3387, 0
        %v3456 = vsel %vm836, %v3389, 0
        %v3458 = vsel %vm836, %v3391, 0
        %v3460 = vsel %vm836, %v3393, 0
        %v3462 = vsel %vm836, %v3395, 0
        %v3464 = vsel %vm836, %v3397, 0
        %v3466 = vsel %vm836, %v3399, 0
        %v3468 = vsel %vm836, %v3401, 0
        %v3470 = vsel %vm836, %v3403, 0
        %v3472 = vsel %vm836, %v3405, 0
        %v3474 = vsel %vm836, %v3407, 0
        %v3476 = vsel %vm836, %v3409, 0
        %v3478 = vsel %vm836, %v3411, 0
        %v3480 = vsel %vm836, %v3413, 0
        %v3482 = vsel %vm836, %v3415, 0
        %v3484 = vsel %vm836, %v3417, 0
        %v3486 = vsel %vm836, %v3419, 0
        %v3488 = vsel %vm836, %v3421, 0
        %v3490 = vsel %vm836, %v3423, 0
        %v3492 = vsel %vm836, %v3425, 0
        %v3494 = vsel %vm836, %v3427, 0
        %v3496 = vsel %vm836, %v3429, 0
        %v3498 = vsel %vm836, %v3431, 0
        %v3500 = vsel %vm836, %v3433, 0
        %v3502 = vsel %vm836, %v3435, 0
        %v3504 = vsel %vm836, %v3437, 0
        %v3507 = vsel %vm905, %v3367, 0
        %3509 = vmatpush.msra.mxu0 0.0
        %3510 = vmatpush.msra.mxu0 0.0
        %3511 = vmatpush.msra.mxu0 0.0
        %3512 = vmatpush.msra.mxu0 0.0
        %3513 = vmatpush.msra.mxu0 0.0
        %3514 = vmatpush.msra.mxu0 0.0
        %3515 = vmatpush.msra.mxu0 0.0
        %3516 = vmatpush.msra.mxu0 0.0
        %3517 = vmatpush.msra.mxu0 0.0
        %3518 = vmatpush.msra.mxu0 0.0
        %3519 = vmatpush.msra.mxu0 0.0
        %3520 = vmatpush.msra.mxu0 0.0
        %3521 = vmatpush.msra.mxu0 0.0
        %3522 = vmatpush.msra.mxu0 0.0
        %3523 = vmatpush.msra.mxu0 0.0
        %3524 = vmatpush.msra.mxu0 %v3507
        %3525 = vmatmul.f32.gmra.mxu0 %v3438
        %v3526 = vpop.f32.mrf.mxu0
        %v3527 = vadd.f32 0.0, %v3526
        %3528 = vmatmul.f32.gmra.mxu0 %v3440
        %v3529 = vpop.f32.mrf.mxu0
        %v3530 = vadd.f32 0.0, %v3529
        %3531 = vmatmul.f32.gmra.mxu0 %v3442
        %v3532 = vpop.f32.mrf.mxu0
        %v3533 = vadd.f32 0.0, %v3532
        %3534 = vmatmul.f32.gmra.mxu0 %v3444
        %v3535 = vpop.f32.mrf.mxu0
        %v3536 = vadd.f32 0.0, %v3535
        %3537 = vmatmul.f32.gmra.mxu0 %v3446
        %v3538 = vpop.f32.mrf.mxu0
        %v3539 = vadd.f32 0.0, %v3538
        %3540 = vmatmul.f32.gmra.mxu0 %v3448
        %v3541 = vpop.f32.mrf.mxu0
        %v3542 = vadd.f32 0.0, %v3541
        %3543 = vmatmul.f32.gmra.mxu0 %v3450
        %v3544 = vpop.f32.mrf.mxu0
        %v3545 = vadd.f32 0.0, %v3544
        %3546 = vmatmul.f32.gmra.mxu0 %v3452
        %v3547 = vpop.f32.mrf.mxu0
        %v3548 = vadd.f32 0.0, %v3547
        %3549 = vmatmul.f32.gmra.mxu0 %v3454
        %v3550 = vpop.f32.mrf.mxu0
        %v3551 = vadd.f32 0.0, %v3550
        %3552 = vmatmul.f32.gmra.mxu0 %v3456
        %v3553 = vpop.f32.mrf.mxu0
        %v3554 = vadd.f32 0.0, %v3553
        %3555 = vmatmul.f32.gmra.mxu0 %v3458
        %v3556 = vpop.f32.mrf.mxu0
        %v3557 = vadd.f32 0.0, %v3556
        %3558 = vmatmul.f32.gmra.mxu0 %v3460
        %v3559 = vpop.f32.mrf.mxu0
        %v3560 = vadd.f32 0.0, %v3559
        %3561 = vmatmul.f32.gmra.mxu0 %v3462
        %v3562 = vpop.f32.mrf.mxu0
        %v3563 = vadd.f32 0.0, %v3562
        %3564 = vmatmul.f32.gmra.mxu0 %v3464
        %v3565 = vpop.f32.mrf.mxu0
        %v3566 = vadd.f32 0.0, %v3565
        %3567 = vmatmul.f32.gmra.mxu0 %v3466
        %v3568 = vpop.f32.mrf.mxu0
        %v3569 = vadd.f32 0.0, %v3568
        %3570 = vmatmul.f32.gmra.mxu0 %v3468
        %v3571 = vpop.f32.mrf.mxu0
        %v3572 = vadd.f32 0.0, %v3571
        %3573 = vmatmul.f32.gmra.mxu0 %v3470
        %v3574 = vpop.f32.mrf.mxu0
        %v3575 = vadd.f32 0.0, %v3574
        %3576 = vmatmul.f32.gmra.mxu0 %v3472
        %v3577 = vpop.f32.mrf.mxu0
        %v3578 = vadd.f32 0.0, %v3577
        %3579 = vmatmul.f32.gmra.mxu0 %v3474
        %v3580 = vpop.f32.mrf.mxu0
        %v3581 = vadd.f32 0.0, %v3580
        %3582 = vmatmul.f32.gmra.mxu0 %v3476
        %v3583 = vpop.f32.mrf.mxu0
        %v3584 = vadd.f32 0.0, %v3583
        %3585 = vmatmul.f32.gmra.mxu0 %v3478
        %v3586 = vpop.f32.mrf.mxu0
        %v3587 = vadd.f32 0.0, %v3586
        %3588 = vmatmul.f32.gmra.mxu0 %v3480
        %v3589 = vpop.f32.mrf.mxu0
        %v3590 = vadd.f32 0.0, %v3589
        %3591 = vmatmul.f32.gmra.mxu0 %v3482
        %v3592 = vpop.f32.mrf.mxu0
        %v3593 = vadd.f32 0.0, %v3592
        %3594 = vmatmul.f32.gmra.mxu0 %v3484
        %v3595 = vpop.f32.mrf.mxu0
        %v3596 = vadd.f32 0.0, %v3595
        %3597 = vmatmul.f32.gmra.mxu0 %v3486
        %v3598 = vpop.f32.mrf.mxu0
        %v3599 = vadd.f32 0.0, %v3598
        %3600 = vmatmul.f32.gmra.mxu0 %v3488
        %v3601 = vpop.f32.mrf.mxu0
        %v3602 = vadd.f32 0.0, %v3601
        %3603 = vmatmul.f32.gmra.mxu0 %v3490
        %v3604 = vpop.f32.mrf.mxu0
        %v3605 = vadd.f32 0.0, %v3604
        %3606 = vmatmul.f32.gmra.mxu0 %v3492
        %v3607 = vpop.f32.mrf.mxu0
        %v3608 = vadd.f32 0.0, %v3607
        %3609 = vmatmul.f32.gmra.mxu0 %v3494
        %v3610 = vpop.f32.mrf.mxu0
        %v3611 = vadd.f32 0.0, %v3610
        %3612 = vmatmul.f32.gmra.mxu0 %v3496
        %v3613 = vpop.f32.mrf.mxu0
        %v3614 = vadd.f32 0.0, %v3613
        %3615 = vmatmul.f32.gmra.mxu0 %v3498
        %v3616 = vpop.f32.mrf.mxu0
        %v3617 = vadd.f32 0.0, %v3616
        %3618 = vmatmul.f32.gmra.mxu0 %v3500
        %v3619 = vpop.f32.mrf.mxu0
        %v3620 = vadd.f32 0.0, %v3619
        %3621 = vmatmul.f32.gmra.mxu0 %v3502
        %v3622 = vpop.f32.mrf.mxu0
        %v3623 = vadd.f32 0.0, %v3622
        %3624 = vmatmul.f32.gmra.mxu0 %v3504
        %v3625 = vpop.f32.mrf.mxu0
        %v3626 = vadd.f32 0.0, %v3625
        %3627 = vdwg.mxu0
        %v3628 = vadd.f32 %v3332, %v3527
        %v3629 = vadd.f32 %v3333, %v3530
        %v3630 = vadd.f32 %v3334, %v3533
        %v3631 = vadd.f32 %v3335, %v3536
        %v3632 = vadd.f32 %v3336, %v3539
        %v3633 = vadd.f32 %v3337, %v3542
        %v3634 = vadd.f32 %v3338, %v3545
        %v3635 = vadd.f32 %v3339, %v3548
        %v3636 = vadd.f32 %v3340, %v3551
        %v3637 = vadd.f32 %v3341, %v3554
        %v3638 = vadd.f32 %v3342, %v3557
        %v3639 = vadd.f32 %v3343, %v3560
        %v3640 = vadd.f32 %v3344, %v3563
        %v3641 = vadd.f32 %v3345, %v3566
        %v3642 = vadd.f32 %v3346, %v3569
        %v3643 = vadd.f32 %v3347, %v3572
        %v3644 = vadd.f32 %v3348, %v3575
        %v3645 = vadd.f32 %v3349, %v3578
        %v3646 = vadd.f32 %v3350, %v3581
        %v3647 = vadd.f32 %v3351, %v3584
        %v3648 = vadd.f32 %v3352, %v3587
        %v3649 = vadd.f32 %v3353, %v3590
        %v3650 = vadd.f32 %v3354, %v3593
        %v3651 = vadd.f32 %v3355, %v3596
        %v3652 = vadd.f32 %v3356, %v3599
        %v3653 = vadd.f32 %v3357, %v3602
        %v3654 = vadd.f32 %v3358, %v3605
        %v3655 = vadd.f32 %v3359, %v3608
        %v3656 = vadd.f32 %v3360, %v3611
        %v3657 = vadd.f32 %v3361, %v3614
        %v3658 = vadd.f32 %v3362, %v3617
        %v3659 = vadd.f32 %v3363, %v3620
        %v3660 = vadd.f32 %v3364, %v3623
        %v3661 = vadd.f32 %v3365, %v3626
        %s3662 = scalar_lea.vmem [#allocation2], 48
        %v3663 = vld [vmem:[%s3662] sm:$0xf]
        %v3666 = vrot.slane %v729, 6
        %v3667 = vsel %vm3072, %v3140, %v3666
        %v3668 = vrot.slane %v730, 6
        %v3669 = vsel %vm3072, %v3666, %v3668
        %v3670 = vsel %vm836, %v3667, 0
        %v3672 = vsel %vm836, %v3669, 0
        %v3675 = vsel %vm905, %v3663, 0
        %3677 = vmatpush.msra.mxu0 0.0
        %3678 = vmatpush.msra.mxu0 0.0
        %3679 = vmatpush.msra.mxu0 0.0
        %3680 = vmatpush.msra.mxu0 0.0
        %3681 = vmatpush.msra.mxu0 0.0
        %3682 = vmatpush.msra.mxu0 0.0
        %3683 = vmatpush.msra.mxu0 0.0
        %3684 = vmatpush.msra.mxu0 0.0
        %3685 = vmatpush.msra.mxu0 0.0
        %3686 = vmatpush.msra.mxu0 0.0
        %3687 = vmatpush.msra.mxu0 0.0
        %3688 = vmatpush.msra.mxu0 0.0
        %3689 = vmatpush.msra.mxu0 0.0
        %3690 = vmatpush.msra.mxu0 0.0
        %3691 = vmatpush.msra.mxu0 0.0
        %3692 = vmatpush.msra.mxu0 %v3675
        %3693 = vmatmul.f32.gmra.mxu0 %v3146
        %v3694 = vpop.f32.mrf.mxu0
        %v3695 = vadd.f32 0.0, %v3694
        %3696 = vmatmul.f32.gmra.mxu0 %v3148
        %v3697 = vpop.f32.mrf.mxu0
        %v3698 = vadd.f32 0.0, %v3697
        %3699 = vmatmul.f32.gmra.mxu0 %v3150
        %v3700 = vpop.f32.mrf.mxu0
        %v3701 = vadd.f32 0.0, %v3700
        %3702 = vmatmul.f32.gmra.mxu0 %v3152
        %v3703 = vpop.f32.mrf.mxu0
        %v3704 = vadd.f32 0.0, %v3703
        %3705 = vmatmul.f32.gmra.mxu0 %v3154
        %v3706 = vpop.f32.mrf.mxu0
        %v3707 = vadd.f32 0.0, %v3706
        %3708 = vmatmul.f32.gmra.mxu0 %v3156
        %v3709 = vpop.f32.mrf.mxu0
        %v3710 = vadd.f32 0.0, %v3709
        %3711 = vmatmul.f32.gmra.mxu0 %v3158
        %v3712 = vpop.f32.mrf.mxu0
        %v3713 = vadd.f32 0.0, %v3712
        %3714 = vmatmul.f32.gmra.mxu0 %v3160
        %v3715 = vpop.f32.mrf.mxu0
        %v3716 = vadd.f32 0.0, %v3715
        %3717 = vmatmul.f32.gmra.mxu0 %v3162
        %v3718 = vpop.f32.mrf.mxu0
        %v3719 = vadd.f32 0.0, %v3718
        %3720 = vmatmul.f32.gmra.mxu0 %v3164
        %v3721 = vpop.f32.mrf.mxu0
        %v3722 = vadd.f32 0.0, %v3721
        %3723 = vmatmul.f32.gmra.mxu0 %v3166
        %v3724 = vpop.f32.mrf.mxu0
        %v3725 = vadd.f32 0.0, %v3724
        %3726 = vmatmul.f32.gmra.mxu0 %v3168
        %v3727 = vpop.f32.mrf.mxu0
        %v3728 = vadd.f32 0.0, %v3727
        %3729 = vmatmul.f32.gmra.mxu0 %v3170
        %v3730 = vpop.f32.mrf.mxu0
        %v3731 = vadd.f32 0.0, %v3730
        %3732 = vmatmul.f32.gmra.mxu0 %v3172
        %v3733 = vpop.f32.mrf.mxu0
        %v3734 = vadd.f32 0.0, %v3733
        %3735 = vmatmul.f32.gmra.mxu0 %v3174
        %v3736 = vpop.f32.mrf.mxu0
        %v3737 = vadd.f32 0.0, %v3736
        %3738 = vmatmul.f32.gmra.mxu0 %v3176
        %v3739 = vpop.f32.mrf.mxu0
        %v3740 = vadd.f32 0.0, %v3739
        %3741 = vmatmul.f32.gmra.mxu0 %v3178
        %v3742 = vpop.f32.mrf.mxu0
        %v3743 = vadd.f32 0.0, %v3742
        %3744 = vmatmul.f32.gmra.mxu0 %v3180
        %v3745 = vpop.f32.mrf.mxu0
        %v3746 = vadd.f32 0.0, %v3745
        %3747 = vmatmul.f32.gmra.mxu0 %v3182
        %v3748 = vpop.f32.mrf.mxu0
        %v3749 = vadd.f32 0.0, %v3748
        %3750 = vmatmul.f32.gmra.mxu0 %v3184
        %v3751 = vpop.f32.mrf.mxu0
        %v3752 = vadd.f32 0.0, %v3751
        %3753 = vmatmul.f32.gmra.mxu0 %v3186
        %v3754 = vpop.f32.mrf.mxu0
        %v3755 = vadd.f32 0.0, %v3754
        %3756 = vmatmul.f32.gmra.mxu0 %v3188
        %v3757 = vpop.f32.mrf.mxu0
        %v3758 = vadd.f32 0.0, %v3757
        %3759 = vmatmul.f32.gmra.mxu0 %v3190
        %v3760 = vpop.f32.mrf.mxu0
        %v3761 = vadd.f32 0.0, %v3760
        %3762 = vmatmul.f32.gmra.mxu0 %v3192
        %v3763 = vpop.f32.mrf.mxu0
        %v3764 = vadd.f32 0.0, %v3763
        %3765 = vmatmul.f32.gmra.mxu0 %v3194
        %v3766 = vpop.f32.mrf.mxu0
        %v3767 = vadd.f32 0.0, %v3766
        %3768 = vmatmul.f32.gmra.mxu0 %v3196
        %v3769 = vpop.f32.mrf.mxu0
        %v3770 = vadd.f32 0.0, %v3769
        %3771 = vmatmul.f32.gmra.mxu0 %v3198
        %v3772 = vpop.f32.mrf.mxu0
        %v3773 = vadd.f32 0.0, %v3772
        %3774 = vmatmul.f32.gmra.mxu0 %v3200
        %v3775 = vpop.f32.mrf.mxu0
        %v3776 = vadd.f32 0.0, %v3775
        %3777 = vmatmul.f32.gmra.mxu0 %v3202
        %v3778 = vpop.f32.mrf.mxu0
        %v3779 = vadd.f32 0.0, %v3778
        %3780 = vmatmul.f32.gmra.mxu0 %v3204
        %v3781 = vpop.f32.mrf.mxu0
        %v3782 = vadd.f32 0.0, %v3781
        %3783 = vmatmul.f32.gmra.mxu0 %v3206
        %v3784 = vpop.f32.mrf.mxu0
        %v3785 = vadd.f32 0.0, %v3784
        %3786 = vmatmul.f32.gmra.mxu0 %v3208
        %v3787 = vpop.f32.mrf.mxu0
        %v3788 = vadd.f32 0.0, %v3787
        %3789 = vmatmul.f32.gmra.mxu0 %v3670
        %v3790 = vpop.f32.mrf.mxu0
        %v3791 = vadd.f32 0.0, %v3790
        %3792 = vmatmul.f32.gmra.mxu0 %v3672
        %v3793 = vpop.f32.mrf.mxu0
        %v3794 = vadd.f32 0.0, %v3793
        %3795 = vdwg.mxu0
        %v3796 = vadd.f32 %v3628, %v3695
        %v3797 = vadd.f32 %v3629, %v3698
        %v3798 = vadd.f32 %v3630, %v3701
        %v3799 = vadd.f32 %v3631, %v3704
        %v3800 = vadd.f32 %v3632, %v3707
        %v3801 = vadd.f32 %v3633, %v3710
        %v3802 = vadd.f32 %v3634, %v3713
        %v3803 = vadd.f32 %v3635, %v3716
        %v3804 = vadd.f32 %v3636, %v3719
        %v3805 = vadd.f32 %v3637, %v3722
        %v3806 = vadd.f32 %v3638, %v3725
        %v3807 = vadd.f32 %v3639, %v3728
        %v3808 = vadd.f32 %v3640, %v3731
        %v3809 = vadd.f32 %v3641, %v3734
        %v3810 = vadd.f32 %v3642, %v3737
        %v3811 = vadd.f32 %v3643, %v3740
        %v3812 = vadd.f32 %v3644, %v3743
        %v3813 = vadd.f32 %v3645, %v3746
        %v3814 = vadd.f32 %v3646, %v3749
        %v3815 = vadd.f32 %v3647, %v3752
        %v3816 = vadd.f32 %v3648, %v3755
        %v3817 = vadd.f32 %v3649, %v3758
        %v3818 = vadd.f32 %v3650, %v3761
        %v3819 = vadd.f32 %v3651, %v3764
        %v3820 = vadd.f32 %v3652, %v3767
        %v3821 = vadd.f32 %v3653, %v3770
        %v3822 = vadd.f32 %v3654, %v3773
        %v3823 = vadd.f32 %v3655, %v3776
        %v3824 = vadd.f32 %v3656, %v3779
        %v3825 = vadd.f32 %v3657, %v3782
        %v3826 = vadd.f32 %v3658, %v3785
        %v3827 = vadd.f32 %v3659, %v3788
        %v3828 = vadd.f32 %v3660, %v3791
        %v3829 = vadd.f32 %v3661, %v3794
        %s3830 = scalar_lea.vmem [#allocation2], 52
        %v3831 = vld [vmem:[%s3830] sm:$0xf]
        %v3832 = vrot.slane %v729, 7
        %v3833 = vsel %vm3368, %v3436, %v3832
        %v3834 = vrot.slane %v730, 7
        %v3835 = vsel %vm3368, %v3832, %v3834
        %v3836 = vsel %vm836, %v3833, 0
        %v3838 = vsel %vm836, %v3835, 0
        %v3841 = vsel %vm905, %v3831, 0
        %3843 = vmatpush.msra.mxu0 0.0
        %3844 = vmatpush.msra.mxu0 0.0
        %3845 = vmatpush.msra.mxu0 0.0
        %3846 = vmatpush.msra.mxu0 0.0
        %3847 = vmatpush.msra.mxu0 0.0
        %3848 = vmatpush.msra.mxu0 0.0
        %3849 = vmatpush.msra.mxu0 0.0
        %3850 = vmatpush.msra.mxu0 0.0
        %3851 = vmatpush.msra.mxu0 0.0
        %3852 = vmatpush.msra.mxu0 0.0
        %3853 = vmatpush.msra.mxu0 0.0
        %3854 = vmatpush.msra.mxu0 0.0
        %3855 = vmatpush.msra.mxu0 0.0
        %3856 = vmatpush.msra.mxu0 0.0
        %3857 = vmatpush.msra.mxu0 0.0
        %3858 = vmatpush.msra.mxu0 %v3841
        %3859 = vmatmul.f32.gmra.mxu0 %v3442
        %v3860 = vpop.f32.mrf.mxu0
        %v3861 = vadd.f32 0.0, %v3860
        %3862 = vmatmul.f32.gmra.mxu0 %v3444
        %v3863 = vpop.f32.mrf.mxu0
        %v3864 = vadd.f32 0.0, %v3863
        %3865 = vmatmul.f32.gmra.mxu0 %v3446
        %v3866 = vpop.f32.mrf.mxu0
        %v3867 = vadd.f32 0.0, %v3866
        %3868 = vmatmul.f32.gmra.mxu0 %v3448
        %v3869 = vpop.f32.mrf.mxu0
        %v3870 = vadd.f32 0.0, %v3869
        %3871 = vmatmul.f32.gmra.mxu0 %v3450
        %v3872 = vpop.f32.mrf.mxu0
        %v3873 = vadd.f32 0.0, %v3872
        %3874 = vmatmul.f32.gmra.mxu0 %v3452
        %v3875 = vpop.f32.mrf.mxu0
        %v3876 = vadd.f32 0.0, %v3875
        %3877 = vmatmul.f32.gmra.mxu0 %v3454
        %v3878 = vpop.f32.mrf.mxu0
        %v3879 = vadd.f32 0.0, %v3878
        %3880 = vmatmul.f32.gmra.mxu0 %v3456
        %v3881 = vpop.f32.mrf.mxu0
        %v3882 = vadd.f32 0.0, %v3881
        %3883 = vmatmul.f32.gmra.mxu0 %v3458
        %v3884 = vpop.f32.mrf.mxu0
        %v3885 = vadd.f32 0.0, %v3884
        %3886 = vmatmul.f32.gmra.mxu0 %v3460
        %v3887 = vpop.f32.mrf.mxu0
        %v3888 = vadd.f32 0.0, %v3887
        %3889 = vmatmul.f32.gmra.mxu0 %v3462
        %v3890 = vpop.f32.mrf.mxu0
        %v3891 = vadd.f32 0.0, %v3890
        %3892 = vmatmul.f32.gmra.mxu0 %v3464
        %v3893 = vpop.f32.mrf.mxu0
        %v3894 = vadd.f32 0.0, %v3893
        %3895 = vmatmul.f32.gmra.mxu0 %v3466
        %v3896 = vpop.f32.mrf.mxu0
        %v3897 = vadd.f32 0.0, %v3896
        %3898 = vmatmul.f32.gmra.mxu0 %v3468
        %v3899 = vpop.f32.mrf.mxu0
        %v3900 = vadd.f32 0.0, %v3899
        %3901 = vmatmul.f32.gmra.mxu0 %v3470
        %v3902 = vpop.f32.mrf.mxu0
        %v3903 = vadd.f32 0.0, %v3902
        %3904 = vmatmul.f32.gmra.mxu0 %v3472
        %v3905 = vpop.f32.mrf.mxu0
        %v3906 = vadd.f32 0.0, %v3905
        %3907 = vmatmul.f32.gmra.mxu0 %v3474
        %v3908 = vpop.f32.mrf.mxu0
        %v3909 = vadd.f32 0.0, %v3908
        %3910 = vmatmul.f32.gmra.mxu0 %v3476
        %v3911 = vpop.f32.mrf.mxu0
        %v3912 = vadd.f32 0.0, %v3911
        %3913 = vmatmul.f32.gmra.mxu0 %v3478
        %v3914 = vpop.f32.mrf.mxu0
        %v3915 = vadd.f32 0.0, %v3914
        %3916 = vmatmul.f32.gmra.mxu0 %v3480
        %v3917 = vpop.f32.mrf.mxu0
        %v3918 = vadd.f32 0.0, %v3917
        %3919 = vmatmul.f32.gmra.mxu0 %v3482
        %v3920 = vpop.f32.mrf.mxu0
        %v3921 = vadd.f32 0.0, %v3920
        %3922 = vmatmul.f32.gmra.mxu0 %v3484
        %v3923 = vpop.f32.mrf.mxu0
        %v3924 = vadd.f32 0.0, %v3923
        %3925 = vmatmul.f32.gmra.mxu0 %v3486
        %v3926 = vpop.f32.mrf.mxu0
        %v3927 = vadd.f32 0.0, %v3926
        %3928 = vmatmul.f32.gmra.mxu0 %v3488
        %v3929 = vpop.f32.mrf.mxu0
        %v3930 = vadd.f32 0.0, %v3929
        %3931 = vmatmul.f32.gmra.mxu0 %v3490
        %v3932 = vpop.f32.mrf.mxu0
        %v3933 = vadd.f32 0.0, %v3932
        %3934 = vmatmul.f32.gmra.mxu0 %v3492
        %v3935 = vpop.f32.mrf.mxu0
        %v3936 = vadd.f32 0.0, %v3935
        %3937 = vmatmul.f32.gmra.mxu0 %v3494
        %v3938 = vpop.f32.mrf.mxu0
        %v3939 = vadd.f32 0.0, %v3938
        %3940 = vmatmul.f32.gmra.mxu0 %v3496
        %v3941 = vpop.f32.mrf.mxu0
        %v3942 = vadd.f32 0.0, %v3941
        %3943 = vmatmul.f32.gmra.mxu0 %v3498
        %v3944 = vpop.f32.mrf.mxu0
        %v3945 = vadd.f32 0.0, %v3944
        %3946 = vmatmul.f32.gmra.mxu0 %v3500
        %v3947 = vpop.f32.mrf.mxu0
        %v3948 = vadd.f32 0.0, %v3947
        %3949 = vmatmul.f32.gmra.mxu0 %v3502
        %v3950 = vpop.f32.mrf.mxu0
        %v3951 = vadd.f32 0.0, %v3950
        %3952 = vmatmul.f32.gmra.mxu0 %v3504
        %v3953 = vpop.f32.mrf.mxu0
        %v3954 = vadd.f32 0.0, %v3953
        %3955 = vmatmul.f32.gmra.mxu0 %v3836
        %v3956 = vpop.f32.mrf.mxu0
        %v3957 = vadd.f32 0.0, %v3956
        %3958 = vmatmul.f32.gmra.mxu0 %v3838
        %v3959 = vpop.f32.mrf.mxu0
        %v3960 = vadd.f32 0.0, %v3959
        %3961 = vdwg.mxu0
        %v3962 = vadd.f32 %v3796, %v3861
        %v3963 = vadd.f32 %v3797, %v3864
        %v3964 = vadd.f32 %v3798, %v3867
        %v3965 = vadd.f32 %v3799, %v3870
        %v3966 = vadd.f32 %v3800, %v3873
        %v3967 = vadd.f32 %v3801, %v3876
        %v3968 = vadd.f32 %v3802, %v3879
        %v3969 = vadd.f32 %v3803, %v3882
        %v3970 = vadd.f32 %v3804, %v3885
        %v3971 = vadd.f32 %v3805, %v3888
        %v3972 = vadd.f32 %v3806, %v3891
        %v3973 = vadd.f32 %v3807, %v3894
        %v3974 = vadd.f32 %v3808, %v3897
        %v3975 = vadd.f32 %v3809, %v3900
        %v3976 = vadd.f32 %v3810, %v3903
        %v3977 = vadd.f32 %v3811, %v3906
        %v3978 = vadd.f32 %v3812, %v3909
        %v3979 = vadd.f32 %v3813, %v3912
        %v3980 = vadd.f32 %v3814, %v3915
        %v3981 = vadd.f32 %v3815, %v3918
        %v3982 = vadd.f32 %v3816, %v3921
        %v3983 = vadd.f32 %v3817, %v3924
        %v3984 = vadd.f32 %v3818, %v3927
        %v3985 = vadd.f32 %v3819, %v3930
        %v3986 = vadd.f32 %v3820, %v3933
        %v3987 = vadd.f32 %v3821, %v3936
        %v3988 = vadd.f32 %v3822, %v3939
        %v3989 = vadd.f32 %v3823, %v3942
        %v3990 = vadd.f32 %v3824, %v3945
        %v3991 = vadd.f32 %v3825, %v3948
        %v3992 = vadd.f32 %v3826, %v3951
        %v3993 = vadd.f32 %v3827, %v3954
        %v3994 = vadd.f32 %v3828, %v3957
        %v3995 = vadd.f32 %v3829, %v3960
        %s3996 = scalar_lea.vmem [#allocation2], 56
        %v3997 = vld [vmem:[%s3996] sm:$0xf]
        %v3998 = vsel %vm836, %v724, 0
        %v4000 = vsel %vm836, %v725, 0
        %v4002 = vsel %vm836, %v726, 0
        %v4004 = vsel %vm836, %v727, 0
        %v4006 = vsel %vm836, %v728, 0
        %v4008 = vsel %vm836, %v729, 0
        %v4010 = vsel %vm836, %v730, 0
        %v4013 = vsel %vm905, %v3997, 0
        %4015 = vmatpush.msra.mxu0 0.0
        %4016 = vmatpush.msra.mxu0 0.0
        %4017 = vmatpush.msra.mxu0 0.0
        %4018 = vmatpush.msra.mxu0 0.0
        %4019 = vmatpush.msra.mxu0 0.0
        %4020 = vmatpush.msra.mxu0 0.0
        %4021 = vmatpush.msra.mxu0 0.0
        %4022 = vmatpush.msra.mxu0 0.0
        %4023 = vmatpush.msra.mxu0 0.0
        %4024 = vmatpush.msra.mxu0 0.0
        %4025 = vmatpush.msra.mxu0 0.0
        %4026 = vmatpush.msra.mxu0 0.0
        %4027 = vmatpush.msra.mxu0 0.0
        %4028 = vmatpush.msra.mxu0 0.0
        %4029 = vmatpush.msra.mxu0 0.0
        %4030 = vmatpush.msra.mxu0 %v4013
        %4031 = vmatmul.f32.gmra.mxu0 %v1042
        %v4032 = vpop.f32.mrf.mxu0
        %v4033 = vadd.f32 0.0, %v4032
        %4034 = vmatmul.f32.gmra.mxu0 %v1044
        %v4035 = vpop.f32.mrf.mxu0
        %v4036 = vadd.f32 0.0, %v4035
        %4037 = vmatmul.f32.gmra.mxu0 %v1046
        %v4038 = vpop.f32.mrf.mxu0
        %v4039 = vadd.f32 0.0, %v4038
        %4040 = vmatmul.f32.gmra.mxu0 %v1048
        %v4041 = vpop.f32.mrf.mxu0
        %v4042 = vadd.f32 0.0, %v4041
        %4043 = vmatmul.f32.gmra.mxu0 %v1050
        %v4044 = vpop.f32.mrf.mxu0
        %v4045 = vadd.f32 0.0, %v4044
        %4046 = vmatmul.f32.gmra.mxu0 %v1052
        %v4047 = vpop.f32.mrf.mxu0
        %v4048 = vadd.f32 0.0, %v4047
        %4049 = vmatmul.f32.gmra.mxu0 %v1054
        %v4050 = vpop.f32.mrf.mxu0
        %v4051 = vadd.f32 0.0, %v4050
        %4052 = vmatmul.f32.gmra.mxu0 %v1056
        %v4053 = vpop.f32.mrf.mxu0
        %v4054 = vadd.f32 0.0, %v4053
        %4055 = vmatmul.f32.gmra.mxu0 %v1058
        %v4056 = vpop.f32.mrf.mxu0
        %v4057 = vadd.f32 0.0, %v4056
        %4058 = vmatmul.f32.gmra.mxu0 %v1060
        %v4059 = vpop.f32.mrf.mxu0
        %v4060 = vadd.f32 0.0, %v4059
        %4061 = vmatmul.f32.gmra.mxu0 %v1062
        %v4062 = vpop.f32.mrf.mxu0
        %v4063 = vadd.f32 0.0, %v4062
        %4064 = vmatmul.f32.gmra.mxu0 %v1064
        %v4065 = vpop.f32.mrf.mxu0
        %v4066 = vadd.f32 0.0, %v4065
        %4067 = vmatmul.f32.gmra.mxu0 %v1066
        %v4068 = vpop.f32.mrf.mxu0
        %v4069 = vadd.f32 0.0, %v4068
        %4070 = vmatmul.f32.gmra.mxu0 %v1068
        %v4071 = vpop.f32.mrf.mxu0
        %v4072 = vadd.f32 0.0, %v4071
        %4073 = vmatmul.f32.gmra.mxu0 %v1070
        %v4074 = vpop.f32.mrf.mxu0
        %v4075 = vadd.f32 0.0, %v4074
        %4076 = vmatmul.f32.gmra.mxu0 %v1072
        %v4077 = vpop.f32.mrf.mxu0
        %v4078 = vadd.f32 0.0, %v4077
        %4079 = vmatmul.f32.gmra.mxu0 %v1074
        %v4080 = vpop.f32.mrf.mxu0
        %v4081 = vadd.f32 0.0, %v4080
        %4082 = vmatmul.f32.gmra.mxu0 %v1076
        %v4083 = vpop.f32.mrf.mxu0
        %v4084 = vadd.f32 0.0, %v4083
        %4085 = vmatmul.f32.gmra.mxu0 %v1078
        %v4086 = vpop.f32.mrf.mxu0
        %v4087 = vadd.f32 0.0, %v4086
        %4088 = vmatmul.f32.gmra.mxu0 %v1080
        %v4089 = vpop.f32.mrf.mxu0
        %v4090 = vadd.f32 0.0, %v4089
        %4091 = vmatmul.f32.gmra.mxu0 %v1082
        %v4092 = vpop.f32.mrf.mxu0
        %v4093 = vadd.f32 0.0, %v4092
        %4094 = vmatmul.f32.gmra.mxu0 %v1084
        %v4095 = vpop.f32.mrf.mxu0
        %v4096 = vadd.f32 0.0, %v4095
        %4097 = vmatmul.f32.gmra.mxu0 %v1086
        %v4098 = vpop.f32.mrf.mxu0
        %v4099 = vadd.f32 0.0, %v4098
        %4100 = vmatmul.f32.gmra.mxu0 %v1088
        %v4101 = vpop.f32.mrf.mxu0
        %v4102 = vadd.f32 0.0, %v4101
        %4103 = vmatmul.f32.gmra.mxu0 %v1090
        %v4104 = vpop.f32.mrf.mxu0
        %v4105 = vadd.f32 0.0, %v4104
        %4106 = vmatmul.f32.gmra.mxu0 %v1092
        %v4107 = vpop.f32.mrf.mxu0
        %v4108 = vadd.f32 0.0, %v4107
        %4109 = vmatmul.f32.gmra.mxu0 %v1094
        %v4110 = vpop.f32.mrf.mxu0
        %v4111 = vadd.f32 0.0, %v4110
        %4112 = vmatmul.f32.gmra.mxu0 %v3998
        %v4113 = vpop.f32.mrf.mxu0
        %v4114 = vadd.f32 0.0, %v4113
        %4115 = vmatmul.f32.gmra.mxu0 %v4000
        %v4116 = vpop.f32.mrf.mxu0
        %v4117 = vadd.f32 0.0, %v4116
        %4118 = vmatmul.f32.gmra.mxu0 %v4002
        %v4119 = vpop.f32.mrf.mxu0
        %v4120 = vadd.f32 0.0, %v4119
        %4121 = vmatmul.f32.gmra.mxu0 %v4004
        %v4122 = vpop.f32.mrf.mxu0
        %v4123 = vadd.f32 0.0, %v4122
        %4124 = vmatmul.f32.gmra.mxu0 %v4006
        %v4125 = vpop.f32.mrf.mxu0
        %v4126 = vadd.f32 0.0, %v4125
        %4127 = vmatmul.f32.gmra.mxu0 %v4008
        %v4128 = vpop.f32.mrf.mxu0
        %v4129 = vadd.f32 0.0, %v4128
        %4130 = vmatmul.f32.gmra.mxu0 %v4010
        %v4131 = vpop.f32.mrf.mxu0
        %v4132 = vadd.f32 0.0, %v4131
        %4133 = vdwg.mxu0
        %v4134 = vadd.f32 %v3962, %v4033
        %v4135 = vadd.f32 %v3963, %v4036
        %v4136 = vadd.f32 %v3964, %v4039
        %v4137 = vadd.f32 %v3965, %v4042
        %v4138 = vadd.f32 %v3966, %v4045
        %v4139 = vadd.f32 %v3967, %v4048
        %v4140 = vadd.f32 %v3968, %v4051
        %v4141 = vadd.f32 %v3969, %v4054
        %v4142 = vadd.f32 %v3970, %v4057
        %v4143 = vadd.f32 %v3971, %v4060
        %v4144 = vadd.f32 %v3972, %v4063
        %v4145 = vadd.f32 %v3973, %v4066
        %v4146 = vadd.f32 %v3974, %v4069
        %v4147 = vadd.f32 %v3975, %v4072
        %v4148 = vadd.f32 %v3976, %v4075
        %v4149 = vadd.f32 %v3977, %v4078
        %v4150 = vadd.f32 %v3978, %v4081
        %v4151 = vadd.f32 %v3979, %v4084
        %v4152 = vadd.f32 %v3980, %v4087
        %v4153 = vadd.f32 %v3981, %v4090
        %v4154 = vadd.f32 %v3982, %v4093
        %v4155 = vadd.f32 %v3983, %v4096
        %v4156 = vadd.f32 %v3984, %v4099
        %v4157 = vadd.f32 %v3985, %v4102
        %v4158 = vadd.f32 %v3986, %v4105
        %v4159 = vadd.f32 %v3987, %v4108
        %v4160 = vadd.f32 %v3988, %v4111
        %v4161 = vadd.f32 %v3989, %v4114
        %v4162 = vadd.f32 %v3990, %v4117
        %v4163 = vadd.f32 %v3991, %v4120
        %v4164 = vadd.f32 %v3992, %v4123
        %v4165 = vadd.f32 %v3993, %v4126
        %v4166 = vadd.f32 %v3994, %v4129
        %v4167 = vadd.f32 %v3995, %v4132
        %s4168 = scalar_lea.vmem [#allocation2], 60
        %v4169 = vld [vmem:[%s4168] sm:$0xf]
        %v4170 = vrot.slane %v724, 1
        %v4171 = vsel %vm768, %v834, %v4170
        %v4172 = vrot.slane %v725, 1
        %v4173 = vsel %vm768, %v4170, %v4172
        %v4174 = vrot.slane %v726, 1
        %v4175 = vsel %vm768, %v4172, %v4174
        %v4176 = vrot.slane %v727, 1
        %v4177 = vsel %vm768, %v4174, %v4176
        %v4178 = vrot.slane %v728, 1
        %v4179 = vsel %vm768, %v4176, %v4178
        %v4180 = vrot.slane %v729, 1
        %v4181 = vsel %vm768, %v4178, %v4180
        %v4182 = vrot.slane %v730, 1
        %v4183 = vsel %vm768, %v4180, %v4182
        %v4184 = vsel %vm836, %v4171, 0
        %v4186 = vsel %vm836, %v4173, 0
        %v4188 = vsel %vm836, %v4175, 0
        %v4190 = vsel %vm836, %v4177, 0
        %v4192 = vsel %vm836, %v4179, 0
        %v4194 = vsel %vm836, %v4181, 0
        %v4196 = vsel %vm836, %v4183, 0
        %v4198 = vsel %vm836, %v4182, 0
        %v4201 = vsel %vm905, %v4169, 0
        %4203 = vmatpush.msra.mxu0 0.0
        %4204 = vmatpush.msra.mxu0 0.0
        %4205 = vmatpush.msra.mxu0 0.0
        %4206 = vmatpush.msra.mxu0 0.0
        %4207 = vmatpush.msra.mxu0 0.0
        %4208 = vmatpush.msra.mxu0 0.0
        %4209 = vmatpush.msra.mxu0 0.0
        %4210 = vmatpush.msra.mxu0 0.0
        %4211 = vmatpush.msra.mxu0 0.0
        %4212 = vmatpush.msra.mxu0 0.0
        %4213 = vmatpush.msra.mxu0 0.0
        %4214 = vmatpush.msra.mxu0 0.0
        %4215 = vmatpush.msra.mxu0 0.0
        %4216 = vmatpush.msra.mxu0 0.0
        %4217 = vmatpush.msra.mxu0 0.0
        %4218 = vmatpush.msra.mxu0 %v4201
        %4219 = vmatmul.f32.gmra.mxu0 %v851
        %v4220 = vpop.f32.mrf.mxu0
        %v4221 = vadd.f32 0.0, %v4220
        %4222 = vmatmul.f32.gmra.mxu0 %v853
        %v4223 = vpop.f32.mrf.mxu0
        %v4224 = vadd.f32 0.0, %v4223
        %4225 = vmatmul.f32.gmra.mxu0 %v855
        %v4226 = vpop.f32.mrf.mxu0
        %v4227 = vadd.f32 0.0, %v4226
        %4228 = vmatmul.f32.gmra.mxu0 %v857
        %v4229 = vpop.f32.mrf.mxu0
        %v4230 = vadd.f32 0.0, %v4229
        %4231 = vmatmul.f32.gmra.mxu0 %v859
        %v4232 = vpop.f32.mrf.mxu0
        %v4233 = vadd.f32 0.0, %v4232
        %4234 = vmatmul.f32.gmra.mxu0 %v861
        %v4235 = vpop.f32.mrf.mxu0
        %v4236 = vadd.f32 0.0, %v4235
        %4237 = vmatmul.f32.gmra.mxu0 %v863
        %v4238 = vpop.f32.mrf.mxu0
        %v4239 = vadd.f32 0.0, %v4238
        %4240 = vmatmul.f32.gmra.mxu0 %v865
        %v4241 = vpop.f32.mrf.mxu0
        %v4242 = vadd.f32 0.0, %v4241
        %4243 = vmatmul.f32.gmra.mxu0 %v867
        %v4244 = vpop.f32.mrf.mxu0
        %v4245 = vadd.f32 0.0, %v4244
        %4246 = vmatmul.f32.gmra.mxu0 %v869
        %v4247 = vpop.f32.mrf.mxu0
        %v4248 = vadd.f32 0.0, %v4247
        %4249 = vmatmul.f32.gmra.mxu0 %v871
        %v4250 = vpop.f32.mrf.mxu0
        %v4251 = vadd.f32 0.0, %v4250
        %4252 = vmatmul.f32.gmra.mxu0 %v873
        %v4253 = vpop.f32.mrf.mxu0
        %v4254 = vadd.f32 0.0, %v4253
        %4255 = vmatmul.f32.gmra.mxu0 %v875
        %v4256 = vpop.f32.mrf.mxu0
        %v4257 = vadd.f32 0.0, %v4256
        %4258 = vmatmul.f32.gmra.mxu0 %v877
        %v4259 = vpop.f32.mrf.mxu0
        %v4260 = vadd.f32 0.0, %v4259
        %4261 = vmatmul.f32.gmra.mxu0 %v879
        %v4262 = vpop.f32.mrf.mxu0
        %v4263 = vadd.f32 0.0, %v4262
        %4264 = vmatmul.f32.gmra.mxu0 %v881
        %v4265 = vpop.f32.mrf.mxu0
        %v4266 = vadd.f32 0.0, %v4265
        %4267 = vmatmul.f32.gmra.mxu0 %v883
        %v4268 = vpop.f32.mrf.mxu0
        %v4269 = vadd.f32 0.0, %v4268
        %4270 = vmatmul.f32.gmra.mxu0 %v885
        %v4271 = vpop.f32.mrf.mxu0
        %v4272 = vadd.f32 0.0, %v4271
        %4273 = vmatmul.f32.gmra.mxu0 %v887
        %v4274 = vpop.f32.mrf.mxu0
        %v4275 = vadd.f32 0.0, %v4274
        %4276 = vmatmul.f32.gmra.mxu0 %v889
        %v4277 = vpop.f32.mrf.mxu0
        %v4278 = vadd.f32 0.0, %v4277
        %4279 = vmatmul.f32.gmra.mxu0 %v891
        %v4280 = vpop.f32.mrf.mxu0
        %v4281 = vadd.f32 0.0, %v4280
        %4282 = vmatmul.f32.gmra.mxu0 %v893
        %v4283 = vpop.f32.mrf.mxu0
        %v4284 = vadd.f32 0.0, %v4283
        %4285 = vmatmul.f32.gmra.mxu0 %v895
        %v4286 = vpop.f32.mrf.mxu0
        %v4287 = vadd.f32 0.0, %v4286
        %4288 = vmatmul.f32.gmra.mxu0 %v897
        %v4289 = vpop.f32.mrf.mxu0
        %v4290 = vadd.f32 0.0, %v4289
        %4291 = vmatmul.f32.gmra.mxu0 %v899
        %v4292 = vpop.f32.mrf.mxu0
        %v4293 = vadd.f32 0.0, %v4292
        %4294 = vmatmul.f32.gmra.mxu0 %v901
        %v4295 = vpop.f32.mrf.mxu0
        %v4296 = vadd.f32 0.0, %v4295
        %4297 = vmatmul.f32.gmra.mxu0 %v4184
        %v4298 = vpop.f32.mrf.mxu0
        %v4299 = vadd.f32 0.0, %v4298
        %4300 = vmatmul.f32.gmra.mxu0 %v4186
        %v4301 = vpop.f32.mrf.mxu0
        %v4302 = vadd.f32 0.0, %v4301
        %4303 = vmatmul.f32.gmra.mxu0 %v4188
        %v4304 = vpop.f32.mrf.mxu0
        %v4305 = vadd.f32 0.0, %v4304
        %4306 = vmatmul.f32.gmra.mxu0 %v4190
        %v4307 = vpop.f32.mrf.mxu0
        %v4308 = vadd.f32 0.0, %v4307
        %4309 = vmatmul.f32.gmra.mxu0 %v4192
        %v4310 = vpop.f32.mrf.mxu0
        %v4311 = vadd.f32 0.0, %v4310
        %4312 = vmatmul.f32.gmra.mxu0 %v4194
        %v4313 = vpop.f32.mrf.mxu0
        %v4314 = vadd.f32 0.0, %v4313
        %4315 = vmatmul.f32.gmra.mxu0 %v4196
        %v4316 = vpop.f32.mrf.mxu0
        %v4317 = vadd.f32 0.0, %v4316
        %4318 = vmatmul.f32.gmra.mxu0 %v4198
        %v4319 = vpop.f32.mrf.mxu0
        %v4320 = vadd.f32 0.0, %v4319
        %4321 = vdwg.mxu0
        %v4322 = vadd.f32 %v4134, %v4221
        %v4323 = vadd.f32 %v4135, %v4224
        %v4324 = vadd.f32 %v4136, %v4227
        %v4325 = vadd.f32 %v4137, %v4230
        %v4326 = vadd.f32 %v4138, %v4233
        %v4327 = vadd.f32 %v4139, %v4236
        %v4328 = vadd.f32 %v4140, %v4239
        %v4329 = vadd.f32 %v4141, %v4242
        %v4330 = vadd.f32 %v4142, %v4245
        %v4331 = vadd.f32 %v4143, %v4248
        %v4332 = vadd.f32 %v4144, %v4251
        %v4333 = vadd.f32 %v4145, %v4254
        %v4334 = vadd.f32 %v4146, %v4257
        %v4335 = vadd.f32 %v4147, %v4260
        %v4336 = vadd.f32 %v4148, %v4263
        %v4337 = vadd.f32 %v4149, %v4266
        %v4338 = vadd.f32 %v4150, %v4269
        %v4339 = vadd.f32 %v4151, %v4272
        %v4340 = vadd.f32 %v4152, %v4275
        %v4341 = vadd.f32 %v4153, %v4278
        %v4342 = vadd.f32 %v4154, %v4281
        %v4343 = vadd.f32 %v4155, %v4284
        %v4344 = vadd.f32 %v4156, %v4287
        %v4345 = vadd.f32 %v4157, %v4290
        %v4346 = vadd.f32 %v4158, %v4293
        %v4347 = vadd.f32 %v4159, %v4296
        %v4348 = vadd.f32 %v4160, %v4299
        %v4349 = vadd.f32 %v4161, %v4302
        %v4350 = vadd.f32 %v4162, %v4305
        %v4351 = vadd.f32 %v4163, %v4308
        %v4352 = vadd.f32 %v4164, %v4311
        %v4353 = vadd.f32 %v4165, %v4314
        %v4354 = vadd.f32 %v4166, %v4317
        %v4355 = vadd.f32 %v4167, %v4320
        %v4356 = vld [vmem:[#allocation4] sm:$0x1]
        %v4358 = vperm.slane %v4356, 0
        %v4360 = vadd.f32 %v4322, %v4358
        %v4361 = vadd.f32 %v4323, %v4358
        %v4362 = vadd.f32 %v4324, %v4358
        %v4363 = vadd.f32 %v4325, %v4358
        %v4364 = vadd.f32 %v4326, %v4358
        %v4365 = vadd.f32 %v4327, %v4358
        %v4366 = vadd.f32 %v4328, %v4358
        %v4367 = vadd.f32 %v4329, %v4358
        %v4368 = vadd.f32 %v4330, %v4358
        %v4369 = vadd.f32 %v4331, %v4358
        %v4370 = vadd.f32 %v4332, %v4358
        %v4371 = vadd.f32 %v4333, %v4358
        %v4372 = vadd.f32 %v4334, %v4358
        %v4373 = vadd.f32 %v4335, %v4358
        %v4374 = vadd.f32 %v4336, %v4358
        %v4375 = vadd.f32 %v4337, %v4358
        %v4376 = vadd.f32 %v4338, %v4358
        %v4377 = vadd.f32 %v4339, %v4358
        %v4378 = vadd.f32 %v4340, %v4358
        %v4379 = vadd.f32 %v4341, %v4358
        %v4380 = vadd.f32 %v4342, %v4358
        %v4381 = vadd.f32 %v4343, %v4358
        %v4382 = vadd.f32 %v4344, %v4358
        %v4383 = vadd.f32 %v4345, %v4358
        %v4384 = vadd.f32 %v4346, %v4358
        %v4385 = vadd.f32 %v4347, %v4358
        %v4386 = vadd.f32 %v4348, %v4358
        %v4387 = vadd.f32 %v4349, %v4358
        %v4388 = vadd.f32 %v4350, %v4358
        %v4389 = vadd.f32 %v4351, %v4358
        %v4390 = vadd.f32 %v4352, %v4358
        %v4391 = vadd.f32 %v4353, %v4358
        %v4392 = vadd.f32 %v4354, %v4358
        %v4393 = vadd.f32 %v4355, %v4358
        %v4394 = vmax.f32 %v4360, 0.0
        %v4395 = vmax.f32 %v4361, 0.0
        %v4396 = vmax.f32 %v4362, 0.0
        %v4397 = vmax.f32 %v4363, 0.0
        %v4398 = vmax.f32 %v4364, 0.0
        %v4399 = vmax.f32 %v4365, 0.0
        %v4400 = vmax.f32 %v4366, 0.0
        %v4401 = vmax.f32 %v4367, 0.0
        %v4402 = vmax.f32 %v4368, 0.0
        %v4403 = vmax.f32 %v4369, 0.0
        %v4404 = vmax.f32 %v4370, 0.0
        %v4405 = vmax.f32 %v4371, 0.0
        %v4406 = vmax.f32 %v4372, 0.0
        %v4407 = vmax.f32 %v4373, 0.0
        %v4408 = vmax.f32 %v4374, 0.0
        %v4409 = vmax.f32 %v4375, 0.0
        %v4410 = vmax.f32 %v4376, 0.0
        %v4411 = vmax.f32 %v4377, 0.0
        %v4412 = vmax.f32 %v4378, 0.0
        %v4413 = vmax.f32 %v4379, 0.0
        %v4414 = vmax.f32 %v4380, 0.0
        %v4415 = vmax.f32 %v4381, 0.0
        %v4416 = vmax.f32 %v4382, 0.0
        %v4417 = vmax.f32 %v4383, 0.0
        %v4418 = vmax.f32 %v4384, 0.0
        %v4419 = vmax.f32 %v4385, 0.0
        %v4420 = vmax.f32 %v4386, 0.0
        %v4421 = vmax.f32 %v4387, 0.0
        %v4422 = vmax.f32 %v4388, 0.0
        %v4423 = vmax.f32 %v4389, 0.0
        %v4424 = vmax.f32 %v4390, 0.0
        %v4425 = vmax.f32 %v4391, 0.0
        %v4426 = vmax.f32 %v4392, 0.0
        %v4427 = vmax.f32 %v4393, 0.0
        %v4428 = vld [vmem:[%s3] sm:$0xff]
        %v4429 = vld [vmem:[%s3 + $0x8] sm:$0xff]
        %v4430 = vld [vmem:[%s3 + $0x10] sm:$0xff]
        %v4431 = vld [vmem:[%s3 + $0x18] sm:$0xff]
        %v4432 = vld [vmem:[%s3 + $0x20] sm:$0xff]
        %v4433 = vld [vmem:[%s3 + $0x28] sm:$0xff]
        %v4434 = vld [vmem:[%s3 + $0x30] sm:$0xff]
        %v4435 = vld [vmem:[%s3 + $0x38] sm:$0xff]
        %v4436 = vld [vmem:[%s3 + $0x40] sm:$0xff]
        %v4437 = vld [vmem:[%s3 + $0x48] sm:$0xff]
        %v4438 = vld [vmem:[%s3 + $0x50] sm:$0xff]
        %v4439 = vld [vmem:[%s3 + $0x58] sm:$0xff]
        %v4440 = vld [vmem:[%s3 + $0x60] sm:$0xff]
        %v4441 = vld [vmem:[%s3 + $0x68] sm:$0xff]
        %v4442 = vld [vmem:[%s3 + $0x70] sm:$0xff]
        %v4443 = vld [vmem:[%s3 + $0x78] sm:$0xff]
        %v4444 = vld [vmem:[%s3 + $0x80] sm:$0xff]
        %v4445 = vld [vmem:[%s3 + $0x88] sm:$0xff]
        %v4446 = vld [vmem:[%s3 + $0x90] sm:$0xff]
        %v4447 = vld [vmem:[%s3 + $0x98] sm:$0xff]
        %v4448 = vld [vmem:[%s3 + $0xa0] sm:$0xff]
        %v4449 = vld [vmem:[%s3 + $0xa8] sm:$0xff]
        %v4450 = vld [vmem:[%s3 + $0xb0] sm:$0xff]
        %v4451 = vld [vmem:[%s3 + $0xb8] sm:$0xff]
        %v4452 = vld [vmem:[%s3 + $0xc0] sm:$0xff]
        %v4453 = vld [vmem:[%s3 + $0xc8] sm:$0xff]
        %v4454 = vld [vmem:[%s3 + $0xd0] sm:$0xff]
        %v4455 = vld [vmem:[%s3 + $0xd8] sm:$0xff]
        %v4456 = vld [vmem:[%s3 + $0xe0] sm:$0xff]
        %v4457 = vld [vmem:[%s3 + $0xe8] sm:$0xff]
        %v4458 = vld [vmem:[%s3 + $0xf0] sm:$0xff]
        %v4459 = vld [vmem:[%s3 + $0xf8] sm:$0xff]
        %v4460 = vld [vmem:[%s3 + $0x100] sm:$0xff]
        %v4461 = vld [vmem:[%s3 + $0x108] sm:$0xff]
        %v4462 = vld [vmem:[%s3 + $0x110] sm:$0xff]
        %v4463 = vld [vmem:[%s3 + $0x118] sm:$0xff]
        %v4464 = vld [vmem:[%s3 + $0x120] sm:$0xf]
        %v4465 = vld [vmem:[%s3 + $0x128] sm:$0xf]
        %v4466 = vld [vmem:[%s3 + $0x130] sm:$0xf]
        %vm4467 = vcmask 89088
        %v4469 = vsel %vm4467, %v4430, 0
        %v4472 = vsel %vm4467, %v4433, 0
        %v4475 = vsel %vm4467, %v4436, 0
        %v4478 = vsel %vm4467, %v4439, 0
        %v4481 = vsel %vm4467, %v4442, 0
        %v4484 = vsel %vm4467, %v4445, 0
        %v4487 = vsel %vm4467, %v4448, 0
        %v4490 = vsel %vm4467, %v4451, 0
        %v4493 = vsel %vm4467, %v4454, 0
        %v4496 = vsel %vm4467, %v4457, 0
        %v4499 = vsel %vm4467, %v4460, 0
        %v4502 = vsel %vm4467, %v4463, 0
        %v4505 = vsel %vm4467, %v4466, 0
        %v4508 = vsel %vm2439, %v4427, 0
        %4510 = vmatpush.msra.mxu0 %v4409
        %4511 = vmatpush.msra.mxu0 %v4408
        %4512 = vmatpush.msra.mxu0 %v4407
        %4513 = vmatpush.msra.mxu0 %v4406
        %4514 = vmatpush.msra.mxu0 %v4405
        %4515 = vmatpush.msra.mxu0 %v4404
        %4516 = vmatpush.msra.mxu0 %v4403
        %4517 = vmatpush.msra.mxu0 %v4402
        %4518 = vmatpush.msra.mxu0 %v4401
        %4519 = vmatpush.msra.mxu0 %v4400
        %4520 = vmatpush.msra.mxu0 %v4399
        %4521 = vmatpush.msra.mxu0 %v4398
        %4522 = vmatpush.msra.mxu0 %v4397
        %4523 = vmatpush.msra.mxu0 %v4396
        %4524 = vmatpush.msra.mxu0 %v4395
        %4525 = vmatpush.msra.mxu0 %v4394
        %4526 = vmatmul.f32.gmra.mxu0 %v4428
        %v4527 = vpop.f32.mrf.mxu0
        %v4528 = vadd.f32 0.0, %v4527
        %4529 = vmatmul.f32.gmra.mxu0 %v4431
        %v4530 = vpop.f32.mrf.mxu0
        %v4531 = vadd.f32 0.0, %v4530
        %4532 = vmatmul.f32.gmra.mxu0 %v4434
        %v4533 = vpop.f32.mrf.mxu0
        %v4534 = vadd.f32 0.0, %v4533
        %4535 = vmatmul.f32.gmra.mxu0 %v4437
        %v4536 = vpop.f32.mrf.mxu0
        %v4537 = vadd.f32 0.0, %v4536
        %4538 = vmatmul.f32.gmra.mxu0 %v4440
        %v4539 = vpop.f32.mrf.mxu0
        %v4540 = vadd.f32 0.0, %v4539
        %4541 = vmatmul.f32.gmra.mxu0 %v4443
        %v4542 = vpop.f32.mrf.mxu0
        %v4543 = vadd.f32 0.0, %v4542
        %4544 = vmatmul.f32.gmra.mxu0 %v4446
        %v4545 = vpop.f32.mrf.mxu0
        %v4546 = vadd.f32 0.0, %v4545
        %4547 = vmatmul.f32.gmra.mxu0 %v4449
        %v4548 = vpop.f32.mrf.mxu0
        %v4549 = vadd.f32 0.0, %v4548
        %4550 = vmatmul.f32.gmra.mxu0 %v4452
        %v4551 = vpop.f32.mrf.mxu0
        %v4552 = vadd.f32 0.0, %v4551
        %4553 = vmatmul.f32.gmra.mxu0 %v4455
        %v4554 = vpop.f32.mrf.mxu0
        %v4555 = vadd.f32 0.0, %v4554
        %4556 = vmatmul.f32.gmra.mxu0 %v4458
        %v4557 = vpop.f32.mrf.mxu0
        %v4558 = vadd.f32 0.0, %v4557
        %4559 = vmatmul.f32.gmra.mxu0 %v4461
        %v4560 = vpop.f32.mrf.mxu0
        %v4561 = vadd.f32 0.0, %v4560
        %4562 = vmatmul.f32.gmra.mxu0 %v4464
        %v4563 = vpop.f32.mrf.mxu0
        %v4564 = vadd.f32 0.0, %v4563
        %4565 = vdwg.mxu0
        %4566 = vmatpush.msra.mxu0 %v4425
        %4567 = vmatpush.msra.mxu0 %v4424
        %4568 = vmatpush.msra.mxu0 %v4423
        %4569 = vmatpush.msra.mxu0 %v4422
        %4570 = vmatpush.msra.mxu0 %v4421
        %4571 = vmatpush.msra.mxu0 %v4420
        %4572 = vmatpush.msra.mxu0 %v4419
        %4573 = vmatpush.msra.mxu0 %v4418
        %4574 = vmatpush.msra.mxu0 %v4417
        %4575 = vmatpush.msra.mxu0 %v4416
        %4576 = vmatpush.msra.mxu0 %v4415
        %4577 = vmatpush.msra.mxu0 %v4414
        %4578 = vmatpush.msra.mxu0 %v4413
        %4579 = vmatpush.msra.mxu0 %v4412
        %4580 = vmatpush.msra.mxu0 %v4411
        %4581 = vmatpush.msra.mxu0 %v4410
        %4582 = vmatmul.f32.gmra.mxu0 %v4429
        %v4583 = vpop.f32.mrf.mxu0
        %v4584 = vadd.f32 %v4528, %v4583
        %4585 = vmatmul.f32.gmra.mxu0 %v4432
        %v4586 = vpop.f32.mrf.mxu0
        %v4587 = vadd.f32 %v4531, %v4586
        %4588 = vmatmul.f32.gmra.mxu0 %v4435
        %v4589 = vpop.f32.mrf.mxu0
        %v4590 = vadd.f32 %v4534, %v4589
        %4591 = vmatmul.f32.gmra.mxu0 %v4438
        %v4592 = vpop.f32.mrf.mxu0
        %v4593 = vadd.f32 %v4537, %v4592
        %4594 = vmatmul.f32.gmra.mxu0 %v4441
        %v4595 = vpop.f32.mrf.mxu0
        %v4596 = vadd.f32 %v4540, %v4595
        %4597 = vmatmul.f32.gmra.mxu0 %v4444
        %v4598 = vpop.f32.mrf.mxu0
        %v4599 = vadd.f32 %v4543, %v4598
        %4600 = vmatmul.f32.gmra.mxu0 %v4447
        %v4601 = vpop.f32.mrf.mxu0
        %v4602 = vadd.f32 %v4546, %v4601
        %4603 = vmatmul.f32.gmra.mxu0 %v4450
        %v4604 = vpop.f32.mrf.mxu0
        %v4605 = vadd.f32 %v4549, %v4604
        %4606 = vmatmul.f32.gmra.mxu0 %v4453
        %v4607 = vpop.f32.mrf.mxu0
        %v4608 = vadd.f32 %v4552, %v4607
        %4609 = vmatmul.f32.gmra.mxu0 %v4456
        %v4610 = vpop.f32.mrf.mxu0
        %v4611 = vadd.f32 %v4555, %v4610
        %4612 = vmatmul.f32.gmra.mxu0 %v4459
        %v4613 = vpop.f32.mrf.mxu0
        %v4614 = vadd.f32 %v4558, %v4613
        %4615 = vmatmul.f32.gmra.mxu0 %v4462
        %v4616 = vpop.f32.mrf.mxu0
        %v4617 = vadd.f32 %v4561, %v4616
        %4618 = vmatmul.f32.gmra.mxu0 %v4465
        %v4619 = vpop.f32.mrf.mxu0
        %v4620 = vadd.f32 %v4564, %v4619
        %4621 = vdwg.mxu0
        %4622 = vmatpush.msra.mxu0 0.0
        %4623 = vmatpush.msra.mxu0 0.0
        %4624 = vmatpush.msra.mxu0 0.0
        %4625 = vmatpush.msra.mxu0 0.0
        %4626 = vmatpush.msra.mxu0 0.0
        %4627 = vmatpush.msra.mxu0 0.0
        %4628 = vmatpush.msra.mxu0 0.0
        %4629 = vmatpush.msra.mxu0 0.0
        %4630 = vmatpush.msra.mxu0 0.0
        %4631 = vmatpush.msra.mxu0 0.0
        %4632 = vmatpush.msra.mxu0 0.0
        %4633 = vmatpush.msra.mxu0 0.0
        %4634 = vmatpush.msra.mxu0 0.0
        %4635 = vmatpush.msra.mxu0 0.0
        %4636 = vmatpush.msra.mxu0 %v4508
        %4637 = vmatpush.msra.mxu0 %v4426
        %4638 = vmatmul.f32.gmra.mxu0 %v4469
        %v4639 = vpop.f32.mrf.mxu0
        %v4640 = vadd.f32 %v4584, %v4639
        %4641 = vmatmul.f32.gmra.mxu0 %v4472
        %v4642 = vpop.f32.mrf.mxu0
        %v4643 = vadd.f32 %v4587, %v4642
        %4644 = vmatmul.f32.gmra.mxu0 %v4475
        %v4645 = vpop.f32.mrf.mxu0
        %v4646 = vadd.f32 %v4590, %v4645
        %4647 = vmatmul.f32.gmra.mxu0 %v4478
        %v4648 = vpop.f32.mrf.mxu0
        %v4649 = vadd.f32 %v4593, %v4648
        %4650 = vmatmul.f32.gmra.mxu0 %v4481
        %v4651 = vpop.f32.mrf.mxu0
        %v4652 = vadd.f32 %v4596, %v4651
        %4653 = vmatmul.f32.gmra.mxu0 %v4484
        %v4654 = vpop.f32.mrf.mxu0
        %v4655 = vadd.f32 %v4599, %v4654
        %4656 = vmatmul.f32.gmra.mxu0 %v4487
        %v4657 = vpop.f32.mrf.mxu0
        %v4658 = vadd.f32 %v4602, %v4657
        %4659 = vmatmul.f32.gmra.mxu0 %v4490
        %v4660 = vpop.f32.mrf.mxu0
        %v4661 = vadd.f32 %v4605, %v4660
        %4662 = vmatmul.f32.gmra.mxu0 %v4493
        %v4663 = vpop.f32.mrf.mxu0
        %v4664 = vadd.f32 %v4608, %v4663
        %4665 = vmatmul.f32.gmra.mxu0 %v4496
        %v4666 = vpop.f32.mrf.mxu0
        %v4667 = vadd.f32 %v4611, %v4666
        %4668 = vmatmul.f32.gmra.mxu0 %v4499
        %v4669 = vpop.f32.mrf.mxu0
        %v4670 = vadd.f32 %v4614, %v4669
        %4671 = vmatmul.f32.gmra.mxu0 %v4502
        %v4672 = vpop.f32.mrf.mxu0
        %v4673 = vadd.f32 %v4617, %v4672
        %4674 = vmatmul.f32.gmra.mxu0 %v4505
        %v4675 = vpop.f32.mrf.mxu0
        %v4676 = vadd.f32 %v4620, %v4675
        %4677 = vdwg.mxu0
        %v4678 = vld [vmem:[#allocation6] sm:$0xff]
        %v4679 = vld [vmem:[#allocation6 + $0x8] sm:$0xff]
        %s4680 = scalar_lea.vmem [#allocation6], 16
        %v4681 = vld [vmem:[%s4680] sm:$0xff]
        %v4682 = vld [vmem:[%s4680 + $0x8] sm:$0xff]
        %v4692 = vrot.slane %v4640, 1
        %v4693 = vrot.slane %v4643, 1
        %v4694 = vsel %vm768, %v4692, %v4693
        %v4695 = vrot.slane %v4646, 1
        %v4696 = vsel %vm768, %v4693, %v4695
        %v4697 = vrot.slane %v4649, 1
        %v4698 = vsel %vm768, %v4695, %v4697
        %v4699 = vrot.slane %v4652, 1
        %v4700 = vsel %vm768, %v4697, %v4699
        %v4701 = vrot.slane %v4655, 1
        %v4702 = vsel %vm768, %v4699, %v4701
        %v4703 = vrot.slane %v4658, 1
        %v4704 = vsel %vm768, %v4701, %v4703
        %v4705 = vrot.slane %v4661, 1
        %v4706 = vsel %vm768, %v4703, %v4705
        %v4707 = vrot.slane %v4664, 1
        %v4708 = vsel %vm768, %v4705, %v4707
        %vm4709 = vcmask 130048
        %v4710 = vsel %vm4709, %v4694, 0
        %v4712 = vsel %vm4709, %v4696, 0
        %v4714 = vsel %vm4709, %v4698, 0
        %v4716 = vsel %vm4709, %v4700, 0
        %v4718 = vsel %vm4709, %v4702, 0
        %v4720 = vsel %vm4709, %v4704, 0
        %v4722 = vsel %vm4709, %v4706, 0
        %v4724 = vsel %vm4709, %v4708, 0
        %v4726 = vsel %vm4709, %v4707, 0
        %4728 = vmatpush.msra.mxu0 0.0
        %4729 = vmatpush.msra.mxu0 0.0
        %4730 = vmatpush.msra.mxu0 0.0
        %4731 = vmatpush.msra.mxu0 0.0
        %4732 = vmatpush.msra.mxu0 0.0
        %4733 = vmatpush.msra.mxu0 0.0
        %4734 = vmatpush.msra.mxu0 0.0
        %4735 = vmatpush.msra.mxu0 0.0
        %4736 = vmatpush.msra.mxu0 0.0
        %4737 = vmatpush.msra.mxu0 0.0
        %4738 = vmatpush.msra.mxu0 0.0
        %4739 = vmatpush.msra.mxu0 0.0
        %4740 = vmatpush.msra.mxu0 0.0
        %4741 = vmatpush.msra.mxu0 0.0
        %4742 = vmatpush.msra.mxu0 %v4682
        %4743 = vmatpush.msra.mxu0 %v4681
        %4744 = vmatmul.f32.gmra.mxu0 %v4710
        %v4745 = vpop.f32.mrf.mxu0
        %v4746 = vadd.f32 0.0, %v4745
        %4747 = vmatmul.f32.gmra.mxu0 %v4712
        %v4748 = vpop.f32.mrf.mxu0
        %v4749 = vadd.f32 0.0, %v4748
        %4750 = vmatmul.f32.gmra.mxu0 %v4714
        %v4751 = vpop.f32.mrf.mxu0
        %v4752 = vadd.f32 0.0, %v4751
        %4753 = vmatmul.f32.gmra.mxu0 %v4716
        %v4754 = vpop.f32.mrf.mxu0
        %v4755 = vadd.f32 0.0, %v4754
        %4756 = vmatmul.f32.gmra.mxu0 %v4718
        %v4757 = vpop.f32.mrf.mxu0
        %v4758 = vadd.f32 0.0, %v4757
        %4759 = vmatmul.f32.gmra.mxu0 %v4720
        %v4760 = vpop.f32.mrf.mxu0
        %v4761 = vadd.f32 0.0, %v4760
        %4762 = vmatmul.f32.gmra.mxu0 %v4722
        %v4763 = vpop.f32.mrf.mxu0
        %v4764 = vadd.f32 0.0, %v4763
        %4765 = vmatmul.f32.gmra.mxu0 %v4724
        %v4766 = vpop.f32.mrf.mxu0
        %v4767 = vadd.f32 0.0, %v4766
        %4768 = vmatmul.f32.gmra.mxu0 %v4726
        %v4769 = vpop.f32.mrf.mxu0
        %v4770 = vadd.f32 0.0, %v4769
        %4771 = vdwg.mxu0
        %v4772 = vsel %vm4709, %v4640, 0
        %v4774 = vsel %vm4709, %v4643, 0
        %v4776 = vsel %vm4709, %v4646, 0
        %v4778 = vsel %vm4709, %v4649, 0
        %v4780 = vsel %vm4709, %v4652, 0
        %v4782 = vsel %vm4709, %v4655, 0
        %v4784 = vsel %vm4709, %v4658, 0
        %v4786 = vsel %vm4709, %v4661, 0
        %v4788 = vsel %vm4709, %v4664, 0
        %4790 = vmatpush.msra.mxu0 0.0
        %4791 = vmatpush.msra.mxu0 0.0
        %4792 = vmatpush.msra.mxu0 0.0
        %4793 = vmatpush.msra.mxu0 0.0
        %4794 = vmatpush.msra.mxu0 0.0
        %4795 = vmatpush.msra.mxu0 0.0
        %4796 = vmatpush.msra.mxu0 0.0
        %4797 = vmatpush.msra.mxu0 0.0
        %4798 = vmatpush.msra.mxu0 0.0
        %4799 = vmatpush.msra.mxu0 0.0
        %4800 = vmatpush.msra.mxu0 0.0
        %4801 = vmatpush.msra.mxu0 0.0
        %4802 = vmatpush.msra.mxu0 0.0
        %4803 = vmatpush.msra.mxu0 0.0
        %4804 = vmatpush.msra.mxu0 %v4679
        %4805 = vmatpush.msra.mxu0 %v4678
        %4806 = vmatmul.f32.gmra.mxu0 %v4772
        %v4807 = vpop.f32.mrf.mxu0
        %v4808 = vadd.f32 %v4746, %v4807
        %4809 = vmatmul.f32.gmra.mxu0 %v4774
        %v4810 = vpop.f32.mrf.mxu0
        %v4811 = vadd.f32 %v4749, %v4810
        %4812 = vmatmul.f32.gmra.mxu0 %v4776
        %v4813 = vpop.f32.mrf.mxu0
        %v4814 = vadd.f32 %v4752, %v4813
        %4815 = vmatmul.f32.gmra.mxu0 %v4778
        %v4816 = vpop.f32.mrf.mxu0
        %v4817 = vadd.f32 %v4755, %v4816
        %4818 = vmatmul.f32.gmra.mxu0 %v4780
        %v4819 = vpop.f32.mrf.mxu0
        %v4820 = vadd.f32 %v4758, %v4819
        %4821 = vmatmul.f32.gmra.mxu0 %v4782
        %v4822 = vpop.f32.mrf.mxu0
        %v4823 = vadd.f32 %v4761, %v4822
        %4824 = vmatmul.f32.gmra.mxu0 %v4784
        %v4825 = vpop.f32.mrf.mxu0
        %v4826 = vadd.f32 %v4764, %v4825
        %4827 = vmatmul.f32.gmra.mxu0 %v4786
        %v4828 = vpop.f32.mrf.mxu0
        %v4829 = vadd.f32 %v4767, %v4828
        %4830 = vmatmul.f32.gmra.mxu0 %v4788
        %v4831 = vpop.f32.mrf.mxu0
        %v4832 = vadd.f32 %v4770, %v4831
        %4833 = vdwg.mxu0
        %s4834 = scalar_lea.vmem [#allocation6], 32
        %v4835 = vld [vmem:[%s4834] sm:$0xff]
        %v4836 = vld [vmem:[%s4834 + $0x8] sm:$0xff]
        %v4837 = vrot.slane %v4640, 2
        %v4838 = vrot.slane %v4643, 2
        %v4839 = vsel %vm1220, %v4837, %v4838
        %v4840 = vrot.slane %v4646, 2
        %v4841 = vsel %vm1220, %v4838, %v4840
        %v4842 = vrot.slane %v4649, 2
        %v4843 = vsel %vm1220, %v4840, %v4842
        %v4844 = vrot.slane %v4652, 2
        %v4845 = vsel %vm1220, %v4842, %v4844
        %v4846 = vrot.slane %v4655, 2
        %v4847 = vsel %vm1220, %v4844, %v4846
        %v4848 = vrot.slane %v4658, 2
        %v4849 = vsel %vm1220, %v4846, %v4848
        %v4850 = vrot.slane %v4661, 2
        %v4851 = vsel %vm1220, %v4848, %v4850
        %v4852 = vrot.slane %v4664, 2
        %v4853 = vsel %vm1220, %v4850, %v4852
        %v4854 = vsel %vm4709, %v4839, 0
        %v4856 = vsel %vm4709, %v4841, 0
        %v4858 = vsel %vm4709, %v4843, 0
        %v4860 = vsel %vm4709, %v4845, 0
        %v4862 = vsel %vm4709, %v4847, 0
        %v4864 = vsel %vm4709, %v4849, 0
        %v4866 = vsel %vm4709, %v4851, 0
        %v4868 = vsel %vm4709, %v4853, 0
        %v4870 = vsel %vm4709, %v4852, 0
        %4872 = vmatpush.msra.mxu0 0.0
        %4873 = vmatpush.msra.mxu0 0.0
        %4874 = vmatpush.msra.mxu0 0.0
        %4875 = vmatpush.msra.mxu0 0.0
        %4876 = vmatpush.msra.mxu0 0.0
        %4877 = vmatpush.msra.mxu0 0.0
        %4878 = vmatpush.msra.mxu0 0.0
        %4879 = vmatpush.msra.mxu0 0.0
        %4880 = vmatpush.msra.mxu0 0.0
        %4881 = vmatpush.msra.mxu0 0.0
        %4882 = vmatpush.msra.mxu0 0.0
        %4883 = vmatpush.msra.mxu0 0.0
        %4884 = vmatpush.msra.mxu0 0.0
        %4885 = vmatpush.msra.mxu0 0.0
        %4886 = vmatpush.msra.mxu0 %v4836
        %4887 = vmatpush.msra.mxu0 %v4835
        %4888 = vmatmul.f32.gmra.mxu0 %v4854
        %v4889 = vpop.f32.mrf.mxu0
        %v4890 = vadd.f32 0.0, %v4889
        %4891 = vmatmul.f32.gmra.mxu0 %v4856
        %v4892 = vpop.f32.mrf.mxu0
        %v4893 = vadd.f32 0.0, %v4892
        %4894 = vmatmul.f32.gmra.mxu0 %v4858
        %v4895 = vpop.f32.mrf.mxu0
        %v4896 = vadd.f32 0.0, %v4895
        %4897 = vmatmul.f32.gmra.mxu0 %v4860
        %v4898 = vpop.f32.mrf.mxu0
        %v4899 = vadd.f32 0.0, %v4898
        %4900 = vmatmul.f32.gmra.mxu0 %v4862
        %v4901 = vpop.f32.mrf.mxu0
        %v4902 = vadd.f32 0.0, %v4901
        %4903 = vmatmul.f32.gmra.mxu0 %v4864
        %v4904 = vpop.f32.mrf.mxu0
        %v4905 = vadd.f32 0.0, %v4904
        %4906 = vmatmul.f32.gmra.mxu0 %v4866
        %v4907 = vpop.f32.mrf.mxu0
        %v4908 = vadd.f32 0.0, %v4907
        %4909 = vmatmul.f32.gmra.mxu0 %v4868
        %v4910 = vpop.f32.mrf.mxu0
        %v4911 = vadd.f32 0.0, %v4910
        %4912 = vmatmul.f32.gmra.mxu0 %v4870
        %v4913 = vpop.f32.mrf.mxu0
        %v4914 = vadd.f32 0.0, %v4913
        %4915 = vdwg.mxu0
        %v4916 = vadd.f32 %v4808, %v4890
        %v4917 = vadd.f32 %v4811, %v4893
        %v4918 = vadd.f32 %v4814, %v4896
        %v4919 = vadd.f32 %v4817, %v4899
        %v4920 = vadd.f32 %v4820, %v4902
        %v4921 = vadd.f32 %v4823, %v4905
        %v4922 = vadd.f32 %v4826, %v4908
        %v4923 = vadd.f32 %v4829, %v4911
        %v4924 = vadd.f32 %v4832, %v4914
        %s4925 = scalar_lea.vmem [#allocation6], 48
        %v4926 = vld [vmem:[%s4925] sm:$0xff]
        %v4927 = vld [vmem:[%s4925 + $0x8] sm:$0xff]
        %v4928 = vrot.slane %v4640, 3
        %v4929 = vrot.slane %v4643, 3
        %v4930 = vsel %vm1514, %v4928, %v4929
        %v4931 = vrot.slane %v4646, 3
        %v4932 = vsel %vm1514, %v4929, %v4931
        %v4933 = vrot.slane %v4649, 3
        %v4934 = vsel %vm1514, %v4931, %v4933
        %v4935 = vrot.slane %v4652, 3
        %v4936 = vsel %vm1514, %v4933, %v4935
        %v4937 = vrot.slane %v4655, 3
        %v4938 = vsel %vm1514, %v4935, %v4937
        %v4939 = vrot.slane %v4658, 3
        %v4940 = vsel %vm1514, %v4937, %v4939
        %v4941 = vrot.slane %v4661, 3
        %v4942 = vsel %vm1514, %v4939, %v4941
        %v4943 = vrot.slane %v4664, 3
        %v4944 = vsel %vm1514, %v4941, %v4943
        %v4945 = vsel %vm4709, %v4930, 0
        %v4947 = vsel %vm4709, %v4932, 0
        %v4949 = vsel %vm4709, %v4934, 0
        %v4951 = vsel %vm4709, %v4936, 0
        %v4953 = vsel %vm4709, %v4938, 0
        %v4955 = vsel %vm4709, %v4940, 0
        %v4957 = vsel %vm4709, %v4942, 0
        %v4959 = vsel %vm4709, %v4944, 0
        %v4961 = vsel %vm4709, %v4943, 0
        %4963 = vmatpush.msra.mxu0 0.0
        %4964 = vmatpush.msra.mxu0 0.0
        %4965 = vmatpush.msra.mxu0 0.0
        %4966 = vmatpush.msra.mxu0 0.0
        %4967 = vmatpush.msra.mxu0 0.0
        %4968 = vmatpush.msra.mxu0 0.0
        %4969 = vmatpush.msra.mxu0 0.0
        %4970 = vmatpush.msra.mxu0 0.0
        %4971 = vmatpush.msra.mxu0 0.0
        %4972 = vmatpush.msra.mxu0 0.0
        %4973 = vmatpush.msra.mxu0 0.0
        %4974 = vmatpush.msra.mxu0 0.0
        %4975 = vmatpush.msra.mxu0 0.0
        %4976 = vmatpush.msra.mxu0 0.0
        %4977 = vmatpush.msra.mxu0 %v4927
        %4978 = vmatpush.msra.mxu0 %v4926
        %4979 = vmatmul.f32.gmra.mxu0 %v4945
        %v4980 = vpop.f32.mrf.mxu0
        %v4981 = vadd.f32 0.0, %v4980
        %4982 = vmatmul.f32.gmra.mxu0 %v4947
        %v4983 = vpop.f32.mrf.mxu0
        %v4984 = vadd.f32 0.0, %v4983
        %4985 = vmatmul.f32.gmra.mxu0 %v4949
        %v4986 = vpop.f32.mrf.mxu0
        %v4987 = vadd.f32 0.0, %v4986
        %4988 = vmatmul.f32.gmra.mxu0 %v4951
        %v4989 = vpop.f32.mrf.mxu0
        %v4990 = vadd.f32 0.0, %v4989
        %4991 = vmatmul.f32.gmra.mxu0 %v4953
        %v4992 = vpop.f32.mrf.mxu0
        %v4993 = vadd.f32 0.0, %v4992
        %4994 = vmatmul.f32.gmra.mxu0 %v4955
        %v4995 = vpop.f32.mrf.mxu0
        %v4996 = vadd.f32 0.0, %v4995
        %4997 = vmatmul.f32.gmra.mxu0 %v4957
        %v4998 = vpop.f32.mrf.mxu0
        %v4999 = vadd.f32 0.0, %v4998
        %5000 = vmatmul.f32.gmra.mxu0 %v4959
        %v5001 = vpop.f32.mrf.mxu0
        %v5002 = vadd.f32 0.0, %v5001
        %5003 = vmatmul.f32.gmra.mxu0 %v4961
        %v5004 = vpop.f32.mrf.mxu0
        %v5005 = vadd.f32 0.0, %v5004
        %5006 = vdwg.mxu0
        %v5007 = vadd.f32 %v4916, %v4981
        %v5008 = vadd.f32 %v4917, %v4984
        %v5009 = vadd.f32 %v4918, %v4987
        %v5010 = vadd.f32 %v4919, %v4990
        %v5011 = vadd.f32 %v4920, %v4993
        %v5012 = vadd.f32 %v4921, %v4996
        %v5013 = vadd.f32 %v4922, %v4999
        %v5014 = vadd.f32 %v4923, %v5002
        %v5015 = vadd.f32 %v4924, %v5005
        %s5016 = scalar_lea.vmem [#allocation6], 64
        %v5017 = vld [vmem:[%s5016] sm:$0xff]
        %v5018 = vld [vmem:[%s5016 + $0x8] sm:$0xff]
        %v5020 = vrot.slane %v4667, 2
        %v5021 = vsel %vm1220, %v4852, %v5020
        %v5022 = vsel %vm4709, %v5021, 0
        %v5024 = vsel %vm4709, %v5020, 0
        %5026 = vmatpush.msra.mxu0 0.0
        %5027 = vmatpush.msra.mxu0 0.0
        %5028 = vmatpush.msra.mxu0 0.0
        %5029 = vmatpush.msra.mxu0 0.0
        %5030 = vmatpush.msra.mxu0 0.0
        %5031 = vmatpush.msra.mxu0 0.0
        %5032 = vmatpush.msra.mxu0 0.0
        %5033 = vmatpush.msra.mxu0 0.0
        %5034 = vmatpush.msra.mxu0 0.0
        %5035 = vmatpush.msra.mxu0 0.0
        %5036 = vmatpush.msra.mxu0 0.0
        %5037 = vmatpush.msra.mxu0 0.0
        %5038 = vmatpush.msra.mxu0 0.0
        %5039 = vmatpush.msra.mxu0 0.0
        %5040 = vmatpush.msra.mxu0 %v5018
        %5041 = vmatpush.msra.mxu0 %v5017
        %5042 = vmatmul.f32.gmra.mxu0 %v4856
        %v5043 = vpop.f32.mrf.mxu0
        %v5044 = vadd.f32 0.0, %v5043
        %5045 = vmatmul.f32.gmra.mxu0 %v4858
        %v5046 = vpop.f32.mrf.mxu0
        %v5047 = vadd.f32 0.0, %v5046
        %5048 = vmatmul.f32.gmra.mxu0 %v4860
        %v5049 = vpop.f32.mrf.mxu0
        %v5050 = vadd.f32 0.0, %v5049
        %5051 = vmatmul.f32.gmra.mxu0 %v4862
        %v5052 = vpop.f32.mrf.mxu0
        %v5053 = vadd.f32 0.0, %v5052
        %5054 = vmatmul.f32.gmra.mxu0 %v4864
        %v5055 = vpop.f32.mrf.mxu0
        %v5056 = vadd.f32 0.0, %v5055
        %5057 = vmatmul.f32.gmra.mxu0 %v4866
        %v5058 = vpop.f32.mrf.mxu0
        %v5059 = vadd.f32 0.0, %v5058
        %5060 = vmatmul.f32.gmra.mxu0 %v4868
        %v5061 = vpop.f32.mrf.mxu0
        %v5062 = vadd.f32 0.0, %v5061
        %5063 = vmatmul.f32.gmra.mxu0 %v5022
        %v5064 = vpop.f32.mrf.mxu0
        %v5065 = vadd.f32 0.0, %v5064
        %5066 = vmatmul.f32.gmra.mxu0 %v5024
        %v5067 = vpop.f32.mrf.mxu0
        %v5068 = vadd.f32 0.0, %v5067
        %5069 = vdwg.mxu0
        %v5070 = vadd.f32 %v5007, %v5044
        %v5071 = vadd.f32 %v5008, %v5047
        %v5072 = vadd.f32 %v5009, %v5050
        %v5073 = vadd.f32 %v5010, %v5053
        %v5074 = vadd.f32 %v5011, %v5056
        %v5075 = vadd.f32 %v5012, %v5059
        %v5076 = vadd.f32 %v5013, %v5062
        %v5077 = vadd.f32 %v5014, %v5065
        %v5078 = vadd.f32 %v5015, %v5068
        %s5079 = scalar_lea.vmem [#allocation6], 80
        %v5080 = vld [vmem:[%s5079] sm:$0xff]
        %v5081 = vld [vmem:[%s5079 + $0x8] sm:$0xff]
        %v5082 = vrot.slane %v4667, 3
        %v5083 = vsel %vm1514, %v4943, %v5082
        %v5084 = vsel %vm4709, %v5083, 0
        %v5086 = vsel %vm4709, %v5082, 0
        %5088 = vmatpush.msra.mxu0 0.0
        %5089 = vmatpush.msra.mxu0 0.0
        %5090 = vmatpush.msra.mxu0 0.0
        %5091 = vmatpush.msra.mxu0 0.0
        %5092 = vmatpush.msra.mxu0 0.0
        %5093 = vmatpush.msra.mxu0 0.0
        %5094 = vmatpush.msra.mxu0 0.0
        %5095 = vmatpush.msra.mxu0 0.0
        %5096 = vmatpush.msra.mxu0 0.0
        %5097 = vmatpush.msra.mxu0 0.0
        %5098 = vmatpush.msra.mxu0 0.0
        %5099 = vmatpush.msra.mxu0 0.0
        %5100 = vmatpush.msra.mxu0 0.0
        %5101 = vmatpush.msra.mxu0 0.0
        %5102 = vmatpush.msra.mxu0 %v5081
        %5103 = vmatpush.msra.mxu0 %v5080
        %5104 = vmatmul.f32.gmra.mxu0 %v4947
        %v5105 = vpop.f32.mrf.mxu0
        %v5106 = vadd.f32 0.0, %v5105
        %5107 = vmatmul.f32.gmra.mxu0 %v4949
        %v5108 = vpop.f32.mrf.mxu0
        %v5109 = vadd.f32 0.0, %v5108
        %5110 = vmatmul.f32.gmra.mxu0 %v4951
        %v5111 = vpop.f32.mrf.mxu0
        %v5112 = vadd.f32 0.0, %v5111
        %5113 = vmatmul.f32.gmra.mxu0 %v4953
        %v5114 = vpop.f32.mrf.mxu0
        %v5115 = vadd.f32 0.0, %v5114
        %5116 = vmatmul.f32.gmra.mxu0 %v4955
        %v5117 = vpop.f32.mrf.mxu0
        %v5118 = vadd.f32 0.0, %v5117
        %5119 = vmatmul.f32.gmra.mxu0 %v4957
        %v5120 = vpop.f32.mrf.mxu0
        %v5121 = vadd.f32 0.0, %v5120
        %5122 = vmatmul.f32.gmra.mxu0 %v4959
        %v5123 = vpop.f32.mrf.mxu0
        %v5124 = vadd.f32 0.0, %v5123
        %5125 = vmatmul.f32.gmra.mxu0 %v5084
        %v5126 = vpop.f32.mrf.mxu0
        %v5127 = vadd.f32 0.0, %v5126
        %5128 = vmatmul.f32.gmra.mxu0 %v5086
        %v5129 = vpop.f32.mrf.mxu0
        %v5130 = vadd.f32 0.0, %v5129
        %5131 = vdwg.mxu0
        %v5132 = vadd.f32 %v5070, %v5106
        %v5133 = vadd.f32 %v5071, %v5109
        %v5134 = vadd.f32 %v5072, %v5112
        %v5135 = vadd.f32 %v5073, %v5115
        %v5136 = vadd.f32 %v5074, %v5118
        %v5137 = vadd.f32 %v5075, %v5121
        %v5138 = vadd.f32 %v5076, %v5124
        %v5139 = vadd.f32 %v5077, %v5127
        %v5140 = vadd.f32 %v5078, %v5130
        %s5141 = scalar_lea.vmem [#allocation6], 96
        %v5142 = vld [vmem:[%s5141] sm:$0xff]
        %v5143 = vld [vmem:[%s5141 + $0x8] sm:$0xff]
        %v5144 = vrot.slane %v4643, 4
        %v5145 = vrot.slane %v4646, 4
        %v5146 = vsel %vm905, %v5144, %v5145
        %v5147 = vrot.slane %v4649, 4
        %v5148 = vsel %vm905, %v5145, %v5147
        %v5149 = vrot.slane %v4652, 4
        %v5150 = vsel %vm905, %v5147, %v5149
        %v5151 = vrot.slane %v4655, 4
        %v5152 = vsel %vm905, %v5149, %v5151
        %v5153 = vrot.slane %v4658, 4
        %v5154 = vsel %vm905, %v5151, %v5153
        %v5155 = vrot.slane %v4661, 4
        %v5156 = vsel %vm905, %v5153, %v5155
        %v5157 = vrot.slane %v4664, 4
        %v5158 = vsel %vm905, %v5155, %v5157
        %v5159 = vrot.slane %v4667, 4
        %v5160 = vsel %vm905, %v5157, %v5159
        %v5161 = vsel %vm4709, %v5146, 0
        %v5163 = vsel %vm4709, %v5148, 0
        %v5165 = vsel %vm4709, %v5150, 0
        %v5167 = vsel %vm4709, %v5152, 0
        %v5169 = vsel %vm4709, %v5154, 0
        %v5171 = vsel %vm4709, %v5156, 0
        %v5173 = vsel %vm4709, %v5158, 0
        %v5175 = vsel %vm4709, %v5160, 0
        %v5177 = vsel %vm4709, %v5159, 0
        %5179 = vmatpush.msra.mxu0 0.0
        %5180 = vmatpush.msra.mxu0 0.0
        %5181 = vmatpush.msra.mxu0 0.0
        %5182 = vmatpush.msra.mxu0 0.0
        %5183 = vmatpush.msra.mxu0 0.0
        %5184 = vmatpush.msra.mxu0 0.0
        %5185 = vmatpush.msra.mxu0 0.0
        %5186 = vmatpush.msra.mxu0 0.0
        %5187 = vmatpush.msra.mxu0 0.0
        %5188 = vmatpush.msra.mxu0 0.0
        %5189 = vmatpush.msra.mxu0 0.0
        %5190 = vmatpush.msra.mxu0 0.0
        %5191 = vmatpush.msra.mxu0 0.0
        %5192 = vmatpush.msra.mxu0 0.0
        %5193 = vmatpush.msra.mxu0 %v5143
        %5194 = vmatpush.msra.mxu0 %v5142
        %5195 = vmatmul.f32.gmra.mxu0 %v5161
        %v5196 = vpop.f32.mrf.mxu0
        %v5197 = vadd.f32 0.0, %v5196
        %5198 = vmatmul.f32.gmra.mxu0 %v5163
        %v5199 = vpop.f32.mrf.mxu0
        %v5200 = vadd.f32 0.0, %v5199
        %5201 = vmatmul.f32.gmra.mxu0 %v5165
        %v5202 = vpop.f32.mrf.mxu0
        %v5203 = vadd.f32 0.0, %v5202
        %5204 = vmatmul.f32.gmra.mxu0 %v5167
        %v5205 = vpop.f32.mrf.mxu0
        %v5206 = vadd.f32 0.0, %v5205
        %5207 = vmatmul.f32.gmra.mxu0 %v5169
        %v5208 = vpop.f32.mrf.mxu0
        %v5209 = vadd.f32 0.0, %v5208
        %5210 = vmatmul.f32.gmra.mxu0 %v5171
        %v5211 = vpop.f32.mrf.mxu0
        %v5212 = vadd.f32 0.0, %v5211
        %5213 = vmatmul.f32.gmra.mxu0 %v5173
        %v5214 = vpop.f32.mrf.mxu0
        %v5215 = vadd.f32 0.0, %v5214
        %5216 = vmatmul.f32.gmra.mxu0 %v5175
        %v5217 = vpop.f32.mrf.mxu0
        %v5218 = vadd.f32 0.0, %v5217
        %5219 = vmatmul.f32.gmra.mxu0 %v5177
        %v5220 = vpop.f32.mrf.mxu0
        %v5221 = vadd.f32 0.0, %v5220
        %5222 = vdwg.mxu0
        %v5223 = vadd.f32 %v5132, %v5197
        %v5224 = vadd.f32 %v5133, %v5200
        %v5225 = vadd.f32 %v5134, %v5203
        %v5226 = vadd.f32 %v5135, %v5206
        %v5227 = vadd.f32 %v5136, %v5209
        %v5228 = vadd.f32 %v5137, %v5212
        %v5229 = vadd.f32 %v5138, %v5215
        %v5230 = vadd.f32 %v5139, %v5218
        %v5231 = vadd.f32 %v5140, %v5221
        %s5232 = scalar_lea.vmem [#allocation6], 112
        %v5233 = vld [vmem:[%s5232] sm:$0xff]
        %v5234 = vld [vmem:[%s5232 + $0x8] sm:$0xff]
        %v5235 = vrot.slane %v4643, 5
        %v5236 = vrot.slane %v4646, 5
        %v5237 = vsel %vm2439, %v5235, %v5236
        %v5238 = vrot.slane %v4649, 5
        %v5239 = vsel %vm2439, %v5236, %v5238
        %v5240 = vrot.slane %v4652, 5
        %v5241 = vsel %vm2439, %v5238, %v5240
        %v5242 = vrot.slane %v4655, 5
        %v5243 = vsel %vm2439, %v5240, %v5242
        %v5244 = vrot.slane %v4658, 5
        %v5245 = vsel %vm2439, %v5242, %v5244
        %v5246 = vrot.slane %v4661, 5
        %v5247 = vsel %vm2439, %v5244, %v5246
        %v5248 = vrot.slane %v4664, 5
        %v5249 = vsel %vm2439, %v5246, %v5248
        %v5250 = vrot.slane %v4667, 5
        %v5251 = vsel %vm2439, %v5248, %v5250
        %v5252 = vsel %vm4709, %v5237, 0
        %v5254 = vsel %vm4709, %v5239, 0
        %v5256 = vsel %vm4709, %v5241, 0
        %v5258 = vsel %vm4709, %v5243, 0
        %v5260 = vsel %vm4709, %v5245, 0
        %v5262 = vsel %vm4709, %v5247, 0
        %v5264 = vsel %vm4709, %v5249, 0
        %v5266 = vsel %vm4709, %v5251, 0
        %v5268 = vsel %vm4709, %v5250, 0
        %5270 = vmatpush.msra.mxu0 0.0
        %5271 = vmatpush.msra.mxu0 0.0
        %5272 = vmatpush.msra.mxu0 0.0
        %5273 = vmatpush.msra.mxu0 0.0
        %5274 = vmatpush.msra.mxu0 0.0
        %5275 = vmatpush.msra.mxu0 0.0
        %5276 = vmatpush.msra.mxu0 0.0
        %5277 = vmatpush.msra.mxu0 0.0
        %5278 = vmatpush.msra.mxu0 0.0
        %5279 = vmatpush.msra.mxu0 0.0
        %5280 = vmatpush.msra.mxu0 0.0
        %5281 = vmatpush.msra.mxu0 0.0
        %5282 = vmatpush.msra.mxu0 0.0
        %5283 = vmatpush.msra.mxu0 0.0
        %5284 = vmatpush.msra.mxu0 %v5234
        %5285 = vmatpush.msra.mxu0 %v5233
        %5286 = vmatmul.f32.gmra.mxu0 %v5252
        %v5287 = vpop.f32.mrf.mxu0
        %v5288 = vadd.f32 0.0, %v5287
        %5289 = vmatmul.f32.gmra.mxu0 %v5254
        %v5290 = vpop.f32.mrf.mxu0
        %v5291 = vadd.f32 0.0, %v5290
        %5292 = vmatmul.f32.gmra.mxu0 %v5256
        %v5293 = vpop.f32.mrf.mxu0
        %v5294 = vadd.f32 0.0, %v5293
        %5295 = vmatmul.f32.gmra.mxu0 %v5258
        %v5296 = vpop.f32.mrf.mxu0
        %v5297 = vadd.f32 0.0, %v5296
        %5298 = vmatmul.f32.gmra.mxu0 %v5260
        %v5299 = vpop.f32.mrf.mxu0
        %v5300 = vadd.f32 0.0, %v5299
        %5301 = vmatmul.f32.gmra.mxu0 %v5262
        %v5302 = vpop.f32.mrf.mxu0
        %v5303 = vadd.f32 0.0, %v5302
        %5304 = vmatmul.f32.gmra.mxu0 %v5264
        %v5305 = vpop.f32.mrf.mxu0
        %v5306 = vadd.f32 0.0, %v5305
        %5307 = vmatmul.f32.gmra.mxu0 %v5266
        %v5308 = vpop.f32.mrf.mxu0
        %v5309 = vadd.f32 0.0, %v5308
        %5310 = vmatmul.f32.gmra.mxu0 %v5268
        %v5311 = vpop.f32.mrf.mxu0
        %v5312 = vadd.f32 0.0, %v5311
        %5313 = vdwg.mxu0
        %v5314 = vadd.f32 %v5223, %v5288
        %v5315 = vadd.f32 %v5224, %v5291
        %v5316 = vadd.f32 %v5225, %v5294
        %v5317 = vadd.f32 %v5226, %v5297
        %v5318 = vadd.f32 %v5227, %v5300
        %v5319 = vadd.f32 %v5228, %v5303
        %v5320 = vadd.f32 %v5229, %v5306
        %v5321 = vadd.f32 %v5230, %v5309
        %v5322 = vadd.f32 %v5231, %v5312
        %s5323 = scalar_lea.vmem [#allocation6], 128
        %v5324 = vld [vmem:[%s5323] sm:$0xff]
        %v5325 = vld [vmem:[%s5323 + $0x8] sm:$0xff]
        %v5327 = vrot.slane %v4670, 4
        %v5328 = vsel %vm905, %v5159, %v5327
        %v5329 = vsel %vm4709, %v5328, 0
        %v5331 = vsel %vm4709, %v5327, 0
        %5333 = vmatpush.msra.mxu0 0.0
        %5334 = vmatpush.msra.mxu0 0.0
        %5335 = vmatpush.msra.mxu0 0.0
        %5336 = vmatpush.msra.mxu0 0.0
        %5337 = vmatpush.msra.mxu0 0.0
        %5338 = vmatpush.msra.mxu0 0.0
        %5339 = vmatpush.msra.mxu0 0.0
        %5340 = vmatpush.msra.mxu0 0.0
        %5341 = vmatpush.msra.mxu0 0.0
        %5342 = vmatpush.msra.mxu0 0.0
        %5343 = vmatpush.msra.mxu0 0.0
        %5344 = vmatpush.msra.mxu0 0.0
        %5345 = vmatpush.msra.mxu0 0.0
        %5346 = vmatpush.msra.mxu0 0.0
        %5347 = vmatpush.msra.mxu0 %v5325
        %5348 = vmatpush.msra.mxu0 %v5324
        %5349 = vmatmul.f32.gmra.mxu0 %v5163
        %v5350 = vpop.f32.mrf.mxu0
        %v5351 = vadd.f32 0.0, %v5350
        %5352 = vmatmul.f32.gmra.mxu0 %v5165
        %v5353 = vpop.f32.mrf.mxu0
        %v5354 = vadd.f32 0.0, %v5353
        %5355 = vmatmul.f32.gmra.mxu0 %v5167
        %v5356 = vpop.f32.mrf.mxu0
        %v5357 = vadd.f32 0.0, %v5356
        %5358 = vmatmul.f32.gmra.mxu0 %v5169
        %v5359 = vpop.f32.mrf.mxu0
        %v5360 = vadd.f32 0.0, %v5359
        %5361 = vmatmul.f32.gmra.mxu0 %v5171
        %v5362 = vpop.f32.mrf.mxu0
        %v5363 = vadd.f32 0.0, %v5362
        %5364 = vmatmul.f32.gmra.mxu0 %v5173
        %v5365 = vpop.f32.mrf.mxu0
        %v5366 = vadd.f32 0.0, %v5365
        %5367 = vmatmul.f32.gmra.mxu0 %v5175
        %v5368 = vpop.f32.mrf.mxu0
        %v5369 = vadd.f32 0.0, %v5368
        %5370 = vmatmul.f32.gmra.mxu0 %v5329
        %v5371 = vpop.f32.mrf.mxu0
        %v5372 = vadd.f32 0.0, %v5371
        %5373 = vmatmul.f32.gmra.mxu0 %v5331
        %v5374 = vpop.f32.mrf.mxu0
        %v5375 = vadd.f32 0.0, %v5374
        %5376 = vdwg.mxu0
        %v5377 = vadd.f32 %v5314, %v5351
        %v5378 = vadd.f32 %v5315, %v5354
        %v5379 = vadd.f32 %v5316, %v5357
        %v5380 = vadd.f32 %v5317, %v5360
        %v5381 = vadd.f32 %v5318, %v5363
        %v5382 = vadd.f32 %v5319, %v5366
        %v5383 = vadd.f32 %v5320, %v5369
        %v5384 = vadd.f32 %v5321, %v5372
        %v5385 = vadd.f32 %v5322, %v5375
        %s5386 = scalar_lea.vmem [#allocation6], 144
        %v5387 = vld [vmem:[%s5386] sm:$0xff]
        %v5388 = vld [vmem:[%s5386 + $0x8] sm:$0xff]
        %v5389 = vrot.slane %v4670, 5
        %v5390 = vsel %vm2439, %v5250, %v5389
        %v5391 = vsel %vm4709, %v5390, 0
        %v5393 = vsel %vm4709, %v5389, 0
        %5395 = vmatpush.msra.mxu0 0.0
        %5396 = vmatpush.msra.mxu0 0.0
        %5397 = vmatpush.msra.mxu0 0.0
        %5398 = vmatpush.msra.mxu0 0.0
        %5399 = vmatpush.msra.mxu0 0.0
        %5400 = vmatpush.msra.mxu0 0.0
        %5401 = vmatpush.msra.mxu0 0.0
        %5402 = vmatpush.msra.mxu0 0.0
        %5403 = vmatpush.msra.mxu0 0.0
        %5404 = vmatpush.msra.mxu0 0.0
        %5405 = vmatpush.msra.mxu0 0.0
        %5406 = vmatpush.msra.mxu0 0.0
        %5407 = vmatpush.msra.mxu0 0.0
        %5408 = vmatpush.msra.mxu0 0.0
        %5409 = vmatpush.msra.mxu0 %v5388
        %5410 = vmatpush.msra.mxu0 %v5387
        %5411 = vmatmul.f32.gmra.mxu0 %v5254
        %v5412 = vpop.f32.mrf.mxu0
        %v5413 = vadd.f32 0.0, %v5412
        %5414 = vmatmul.f32.gmra.mxu0 %v5256
        %v5415 = vpop.f32.mrf.mxu0
        %v5416 = vadd.f32 0.0, %v5415
        %5417 = vmatmul.f32.gmra.mxu0 %v5258
        %v5418 = vpop.f32.mrf.mxu0
        %v5419 = vadd.f32 0.0, %v5418
        %5420 = vmatmul.f32.gmra.mxu0 %v5260
        %v5421 = vpop.f32.mrf.mxu0
        %v5422 = vadd.f32 0.0, %v5421
        %5423 = vmatmul.f32.gmra.mxu0 %v5262
        %v5424 = vpop.f32.mrf.mxu0
        %v5425 = vadd.f32 0.0, %v5424
        %5426 = vmatmul.f32.gmra.mxu0 %v5264
        %v5427 = vpop.f32.mrf.mxu0
        %v5428 = vadd.f32 0.0, %v5427
        %5429 = vmatmul.f32.gmra.mxu0 %v5266
        %v5430 = vpop.f32.mrf.mxu0
        %v5431 = vadd.f32 0.0, %v5430
        %5432 = vmatmul.f32.gmra.mxu0 %v5391
        %v5433 = vpop.f32.mrf.mxu0
        %v5434 = vadd.f32 0.0, %v5433
        %5435 = vmatmul.f32.gmra.mxu0 %v5393
        %v5436 = vpop.f32.mrf.mxu0
        %v5437 = vadd.f32 0.0, %v5436
        %5438 = vdwg.mxu0
        %v5439 = vadd.f32 %v5377, %v5413
        %v5440 = vadd.f32 %v5378, %v5416
        %v5441 = vadd.f32 %v5379, %v5419
        %v5442 = vadd.f32 %v5380, %v5422
        %v5443 = vadd.f32 %v5381, %v5425
        %v5444 = vadd.f32 %v5382, %v5428
        %v5445 = vadd.f32 %v5383, %v5431
        %v5446 = vadd.f32 %v5384, %v5434
        %v5447 = vadd.f32 %v5385, %v5437
        %s5448 = scalar_lea.vmem [#allocation6], 160
        %v5449 = vld [vmem:[%s5448] sm:$0xff]
        %v5450 = vld [vmem:[%s5448 + $0x8] sm:$0xff]
        %v5452 = vrot.slane %v4646, 6
        %v5453 = vrot.slane %v4649, 6
        %v5454 = vsel %vm3072, %v5452, %v5453
        %v5455 = vrot.slane %v4652, 6
        %v5456 = vsel %vm3072, %v5453, %v5455
        %v5457 = vrot.slane %v4655, 6
        %v5458 = vsel %vm3072, %v5455, %v5457
        %v5459 = vrot.slane %v4658, 6
        %v5460 = vsel %vm3072, %v5457, %v5459
        %v5461 = vrot.slane %v4661, 6
        %v5462 = vsel %vm3072, %v5459, %v5461
        %v5463 = vrot.slane %v4664, 6
        %v5464 = vsel %vm3072, %v5461, %v5463
        %v5465 = vrot.slane %v4667, 6
        %v5466 = vsel %vm3072, %v5463, %v5465
        %v5467 = vrot.slane %v4670, 6
        %v5468 = vsel %vm3072, %v5465, %v5467
        %v5469 = vrot.slane %v4673, 6
        %v5470 = vsel %vm3072, %v5467, %v5469
        %v5471 = vsel %vm4709, %v5454, 0
        %v5473 = vsel %vm4709, %v5456, 0
        %v5475 = vsel %vm4709, %v5458, 0
        %v5477 = vsel %vm4709, %v5460, 0
        %v5479 = vsel %vm4709, %v5462, 0
        %v5481 = vsel %vm4709, %v5464, 0
        %v5483 = vsel %vm4709, %v5466, 0
        %v5485 = vsel %vm4709, %v5468, 0
        %v5487 = vsel %vm4709, %v5470, 0
        %5489 = vmatpush.msra.mxu0 0.0
        %5490 = vmatpush.msra.mxu0 0.0
        %5491 = vmatpush.msra.mxu0 0.0
        %5492 = vmatpush.msra.mxu0 0.0
        %5493 = vmatpush.msra.mxu0 0.0
        %5494 = vmatpush.msra.mxu0 0.0
        %5495 = vmatpush.msra.mxu0 0.0
        %5496 = vmatpush.msra.mxu0 0.0
        %5497 = vmatpush.msra.mxu0 0.0
        %5498 = vmatpush.msra.mxu0 0.0
        %5499 = vmatpush.msra.mxu0 0.0
        %5500 = vmatpush.msra.mxu0 0.0
        %5501 = vmatpush.msra.mxu0 0.0
        %5502 = vmatpush.msra.mxu0 0.0
        %5503 = vmatpush.msra.mxu0 %v5450
        %5504 = vmatpush.msra.mxu0 %v5449
        %5505 = vmatmul.f32.gmra.mxu0 %v5471
        %v5506 = vpop.f32.mrf.mxu0
        %v5507 = vadd.f32 0.0, %v5506
        %5508 = vmatmul.f32.gmra.mxu0 %v5473
        %v5509 = vpop.f32.mrf.mxu0
        %v5510 = vadd.f32 0.0, %v5509
        %5511 = vmatmul.f32.gmra.mxu0 %v5475
        %v5512 = vpop.f32.mrf.mxu0
        %v5513 = vadd.f32 0.0, %v5512
        %5514 = vmatmul.f32.gmra.mxu0 %v5477
        %v5515 = vpop.f32.mrf.mxu0
        %v5516 = vadd.f32 0.0, %v5515
        %5517 = vmatmul.f32.gmra.mxu0 %v5479
        %v5518 = vpop.f32.mrf.mxu0
        %v5519 = vadd.f32 0.0, %v5518
        %5520 = vmatmul.f32.gmra.mxu0 %v5481
        %v5521 = vpop.f32.mrf.mxu0
        %v5522 = vadd.f32 0.0, %v5521
        %5523 = vmatmul.f32.gmra.mxu0 %v5483
        %v5524 = vpop.f32.mrf.mxu0
        %v5525 = vadd.f32 0.0, %v5524
        %5526 = vmatmul.f32.gmra.mxu0 %v5485
        %v5527 = vpop.f32.mrf.mxu0
        %v5528 = vadd.f32 0.0, %v5527
        %5529 = vmatmul.f32.gmra.mxu0 %v5487
        %v5530 = vpop.f32.mrf.mxu0
        %v5531 = vadd.f32 0.0, %v5530
        %5532 = vdwg.mxu0
        %v5533 = vadd.f32 %v5439, %v5507
        %v5534 = vadd.f32 %v5440, %v5510
        %v5535 = vadd.f32 %v5441, %v5513
        %v5536 = vadd.f32 %v5442, %v5516
        %v5537 = vadd.f32 %v5443, %v5519
        %v5538 = vadd.f32 %v5444, %v5522
        %v5539 = vadd.f32 %v5445, %v5525
        %v5540 = vadd.f32 %v5446, %v5528
        %v5541 = vadd.f32 %v5447, %v5531
        %s5542 = scalar_lea.vmem [#allocation6], 176
        %v5543 = vld [vmem:[%s5542] sm:$0xff]
        %v5544 = vld [vmem:[%s5542 + $0x8] sm:$0xff]
        %v5545 = vrot.slane %v4646, 7
        %v5546 = vrot.slane %v4649, 7
        %v5547 = vsel %vm3368, %v5545, %v5546
        %v5548 = vrot.slane %v4652, 7
        %v5549 = vsel %vm3368, %v5546, %v5548
        %v5550 = vrot.slane %v4655, 7
        %v5551 = vsel %vm3368, %v5548, %v5550
        %v5552 = vrot.slane %v4658, 7
        %v5553 = vsel %vm3368, %v5550, %v5552
        %v5554 = vrot.slane %v4661, 7
        %v5555 = vsel %vm3368, %v5552, %v5554
        %v5556 = vrot.slane %v4664, 7
        %v5557 = vsel %vm3368, %v5554, %v5556
        %v5558 = vrot.slane %v4667, 7
        %v5559 = vsel %vm3368, %v5556, %v5558
        %v5560 = vrot.slane %v4670, 7
        %v5561 = vsel %vm3368, %v5558, %v5560
        %v5562 = vrot.slane %v4673, 7
        %v5563 = vsel %vm3368, %v5560, %v5562
        %v5564 = vsel %vm4709, %v5547, 0
        %v5566 = vsel %vm4709, %v5549, 0
        %v5568 = vsel %vm4709, %v5551, 0
        %v5570 = vsel %vm4709, %v5553, 0
        %v5572 = vsel %vm4709, %v5555, 0
        %v5574 = vsel %vm4709, %v5557, 0
        %v5576 = vsel %vm4709, %v5559, 0
        %v5578 = vsel %vm4709, %v5561, 0
        %v5580 = vsel %vm4709, %v5563, 0
        %5582 = vmatpush.msra.mxu0 0.0
        %5583 = vmatpush.msra.mxu0 0.0
        %5584 = vmatpush.msra.mxu0 0.0
        %5585 = vmatpush.msra.mxu0 0.0
        %5586 = vmatpush.msra.mxu0 0.0
        %5587 = vmatpush.msra.mxu0 0.0
        %5588 = vmatpush.msra.mxu0 0.0
        %5589 = vmatpush.msra.mxu0 0.0
        %5590 = vmatpush.msra.mxu0 0.0
        %5591 = vmatpush.msra.mxu0 0.0
        %5592 = vmatpush.msra.mxu0 0.0
        %5593 = vmatpush.msra.mxu0 0.0
        %5594 = vmatpush.msra.mxu0 0.0
        %5595 = vmatpush.msra.mxu0 0.0
        %5596 = vmatpush.msra.mxu0 %v5544
        %5597 = vmatpush.msra.mxu0 %v5543
        %5598 = vmatmul.f32.gmra.mxu0 %v5564
        %v5599 = vpop.f32.mrf.mxu0
        %v5600 = vadd.f32 0.0, %v5599
        %5601 = vmatmul.f32.gmra.mxu0 %v5566
        %v5602 = vpop.f32.mrf.mxu0
        %v5603 = vadd.f32 0.0, %v5602
        %5604 = vmatmul.f32.gmra.mxu0 %v5568
        %v5605 = vpop.f32.mrf.mxu0
        %v5606 = vadd.f32 0.0, %v5605
        %5607 = vmatmul.f32.gmra.mxu0 %v5570
        %v5608 = vpop.f32.mrf.mxu0
        %v5609 = vadd.f32 0.0, %v5608
        %5610 = vmatmul.f32.gmra.mxu0 %v5572
        %v5611 = vpop.f32.mrf.mxu0
        %v5612 = vadd.f32 0.0, %v5611
        %5613 = vmatmul.f32.gmra.mxu0 %v5574
        %v5614 = vpop.f32.mrf.mxu0
        %v5615 = vadd.f32 0.0, %v5614
        %5616 = vmatmul.f32.gmra.mxu0 %v5576
        %v5617 = vpop.f32.mrf.mxu0
        %v5618 = vadd.f32 0.0, %v5617
        %5619 = vmatmul.f32.gmra.mxu0 %v5578
        %v5620 = vpop.f32.mrf.mxu0
        %v5621 = vadd.f32 0.0, %v5620
        %5622 = vmatmul.f32.gmra.mxu0 %v5580
        %v5623 = vpop.f32.mrf.mxu0
        %v5624 = vadd.f32 0.0, %v5623
        %5625 = vdwg.mxu0
        %v5626 = vadd.f32 %v5533, %v5600
        %v5627 = vadd.f32 %v5534, %v5603
        %v5628 = vadd.f32 %v5535, %v5606
        %v5629 = vadd.f32 %v5536, %v5609
        %v5630 = vadd.f32 %v5537, %v5612
        %v5631 = vadd.f32 %v5538, %v5615
        %v5632 = vadd.f32 %v5539, %v5618
        %v5633 = vadd.f32 %v5540, %v5621
        %v5634 = vadd.f32 %v5541, %v5624
        %s5635 = scalar_lea.vmem [#allocation6], 192
        %v5636 = vld [vmem:[%s5635] sm:$0xff]
        %v5637 = vld [vmem:[%s5635 + $0x8] sm:$0xff]
        %v5639 = vrot.slane %v4676, 6
        %v5640 = vsel %vm3072, %v5469, %v5639
        %v5641 = vsel %vm4709, %v5640, 0
        %5643 = vmatpush.msra.mxu0 0.0
        %5644 = vmatpush.msra.mxu0 0.0
        %5645 = vmatpush.msra.mxu0 0.0
        %5646 = vmatpush.msra.mxu0 0.0
        %5647 = vmatpush.msra.mxu0 0.0
        %5648 = vmatpush.msra.mxu0 0.0
        %5649 = vmatpush.msra.mxu0 0.0
        %5650 = vmatpush.msra.mxu0 0.0
        %5651 = vmatpush.msra.mxu0 0.0
        %5652 = vmatpush.msra.mxu0 0.0
        %5653 = vmatpush.msra.mxu0 0.0
        %5654 = vmatpush.msra.mxu0 0.0
        %5655 = vmatpush.msra.mxu0 0.0
        %5656 = vmatpush.msra.mxu0 0.0
        %5657 = vmatpush.msra.mxu0 %v5637
        %5658 = vmatpush.msra.mxu0 %v5636
        %5659 = vmatmul.f32.gmra.mxu0 %v5473
        %v5660 = vpop.f32.mrf.mxu0
        %v5661 = vadd.f32 0.0, %v5660
        %5662 = vmatmul.f32.gmra.mxu0 %v5475
        %v5663 = vpop.f32.mrf.mxu0
        %v5664 = vadd.f32 0.0, %v5663
        %5665 = vmatmul.f32.gmra.mxu0 %v5477
        %v5666 = vpop.f32.mrf.mxu0
        %v5667 = vadd.f32 0.0, %v5666
        %5668 = vmatmul.f32.gmra.mxu0 %v5479
        %v5669 = vpop.f32.mrf.mxu0
        %v5670 = vadd.f32 0.0, %v5669
        %5671 = vmatmul.f32.gmra.mxu0 %v5481
        %v5672 = vpop.f32.mrf.mxu0
        %v5673 = vadd.f32 0.0, %v5672
        %5674 = vmatmul.f32.gmra.mxu0 %v5483
        %v5675 = vpop.f32.mrf.mxu0
        %v5676 = vadd.f32 0.0, %v5675
        %5677 = vmatmul.f32.gmra.mxu0 %v5485
        %v5678 = vpop.f32.mrf.mxu0
        %v5679 = vadd.f32 0.0, %v5678
        %5680 = vmatmul.f32.gmra.mxu0 %v5487
        %v5681 = vpop.f32.mrf.mxu0
        %v5682 = vadd.f32 0.0, %v5681
        %5683 = vmatmul.f32.gmra.mxu0 %v5641
        %v5684 = vpop.f32.mrf.mxu0
        %v5685 = vadd.f32 0.0, %v5684
        %5686 = vdwg.mxu0
        %v5687 = vadd.f32 %v5626, %v5661
        %v5688 = vadd.f32 %v5627, %v5664
        %v5689 = vadd.f32 %v5628, %v5667
        %v5690 = vadd.f32 %v5629, %v5670
        %v5691 = vadd.f32 %v5630, %v5673
        %v5692 = vadd.f32 %v5631, %v5676
        %v5693 = vadd.f32 %v5632, %v5679
        %v5694 = vadd.f32 %v5633, %v5682
        %v5695 = vadd.f32 %v5634, %v5685
        %s5696 = scalar_lea.vmem [#allocation6], 208
        %v5697 = vld [vmem:[%s5696] sm:$0xff]
        %v5698 = vld [vmem:[%s5696 + $0x8] sm:$0xff]
        %v5699 = vrot.slane %v4676, 7
        %v5700 = vsel %vm3368, %v5562, %v5699
        %v5701 = vsel %vm4709, %v5700, 0
        %5703 = vmatpush.msra.mxu0 0.0
        %5704 = vmatpush.msra.mxu0 0.0
        %5705 = vmatpush.msra.mxu0 0.0
        %5706 = vmatpush.msra.mxu0 0.0
        %5707 = vmatpush.msra.mxu0 0.0
        %5708 = vmatpush.msra.mxu0 0.0
        %5709 = vmatpush.msra.mxu0 0.0
        %5710 = vmatpush.msra.mxu0 0.0
        %5711 = vmatpush.msra.mxu0 0.0
        %5712 = vmatpush.msra.mxu0 0.0
        %5713 = vmatpush.msra.mxu0 0.0
        %5714 = vmatpush.msra.mxu0 0.0
        %5715 = vmatpush.msra.mxu0 0.0
        %5716 = vmatpush.msra.mxu0 0.0
        %5717 = vmatpush.msra.mxu0 %v5698
        %5718 = vmatpush.msra.mxu0 %v5697
        %5719 = vmatmul.f32.gmra.mxu0 %v5566
        %v5720 = vpop.f32.mrf.mxu0
        %v5721 = vadd.f32 0.0, %v5720
        %5722 = vmatmul.f32.gmra.mxu0 %v5568
        %v5723 = vpop.f32.mrf.mxu0
        %v5724 = vadd.f32 0.0, %v5723
        %5725 = vmatmul.f32.gmra.mxu0 %v5570
        %v5726 = vpop.f32.mrf.mxu0
        %v5727 = vadd.f32 0.0, %v5726
        %5728 = vmatmul.f32.gmra.mxu0 %v5572
        %v5729 = vpop.f32.mrf.mxu0
        %v5730 = vadd.f32 0.0, %v5729
        %5731 = vmatmul.f32.gmra.mxu0 %v5574
        %v5732 = vpop.f32.mrf.mxu0
        %v5733 = vadd.f32 0.0, %v5732
        %5734 = vmatmul.f32.gmra.mxu0 %v5576
        %v5735 = vpop.f32.mrf.mxu0
        %v5736 = vadd.f32 0.0, %v5735
        %5737 = vmatmul.f32.gmra.mxu0 %v5578
        %v5738 = vpop.f32.mrf.mxu0
        %v5739 = vadd.f32 0.0, %v5738
        %5740 = vmatmul.f32.gmra.mxu0 %v5580
        %v5741 = vpop.f32.mrf.mxu0
        %v5742 = vadd.f32 0.0, %v5741
        %5743 = vmatmul.f32.gmra.mxu0 %v5701
        %v5744 = vpop.f32.mrf.mxu0
        %v5745 = vadd.f32 0.0, %v5744
        %5746 = vdwg.mxu0
        %v5747 = vadd.f32 %v5687, %v5721
        %v5748 = vadd.f32 %v5688, %v5724
        %v5749 = vadd.f32 %v5689, %v5727
        %v5750 = vadd.f32 %v5690, %v5730
        %v5751 = vadd.f32 %v5691, %v5733
        %v5752 = vadd.f32 %v5692, %v5736
        %v5753 = vadd.f32 %v5693, %v5739
        %v5754 = vadd.f32 %v5694, %v5742
        %v5755 = vadd.f32 %v5695, %v5745
        %s5756 = scalar_lea.vmem [#allocation6], 224
        %v5757 = vld [vmem:[%s5756] sm:$0xff]
        %v5758 = vld [vmem:[%s5756 + $0x8] sm:$0xff]
        %v5759 = vsel %vm4709, %v4667, 0
        %v5761 = vsel %vm4709, %v4670, 0
        %v5763 = vsel %vm4709, %v4673, 0
        %v5765 = vsel %vm4709, %v4676, 0
        %5767 = vmatpush.msra.mxu0 0.0
        %5768 = vmatpush.msra.mxu0 0.0
        %5769 = vmatpush.msra.mxu0 0.0
        %5770 = vmatpush.msra.mxu0 0.0
        %5771 = vmatpush.msra.mxu0 0.0
        %5772 = vmatpush.msra.mxu0 0.0
        %5773 = vmatpush.msra.mxu0 0.0
        %5774 = vmatpush.msra.mxu0 0.0
        %5775 = vmatpush.msra.mxu0 0.0
        %5776 = vmatpush.msra.mxu0 0.0
        %5777 = vmatpush.msra.mxu0 0.0
        %5778 = vmatpush.msra.mxu0 0.0
        %5779 = vmatpush.msra.mxu0 0.0
        %5780 = vmatpush.msra.mxu0 0.0
        %5781 = vmatpush.msra.mxu0 %v5758
        %5782 = vmatpush.msra.mxu0 %v5757
        %5783 = vmatmul.f32.gmra.mxu0 %v4780
        %v5784 = vpop.f32.mrf.mxu0
        %v5785 = vadd.f32 0.0, %v5784
        %5786 = vmatmul.f32.gmra.mxu0 %v4782
        %v5787 = vpop.f32.mrf.mxu0
        %v5788 = vadd.f32 0.0, %v5787
        %5789 = vmatmul.f32.gmra.mxu0 %v4784
        %v5790 = vpop.f32.mrf.mxu0
        %v5791 = vadd.f32 0.0, %v5790
        %5792 = vmatmul.f32.gmra.mxu0 %v4786
        %v5793 = vpop.f32.mrf.mxu0
        %v5794 = vadd.f32 0.0, %v5793
        %5795 = vmatmul.f32.gmra.mxu0 %v4788
        %v5796 = vpop.f32.mrf.mxu0
        %v5797 = vadd.f32 0.0, %v5796
        %5798 = vmatmul.f32.gmra.mxu0 %v5759
        %v5799 = vpop.f32.mrf.mxu0
        %v5800 = vadd.f32 0.0, %v5799
        %5801 = vmatmul.f32.gmra.mxu0 %v5761
        %v5802 = vpop.f32.mrf.mxu0
        %v5803 = vadd.f32 0.0, %v5802
        %5804 = vmatmul.f32.gmra.mxu0 %v5763
        %v5805 = vpop.f32.mrf.mxu0
        %v5806 = vadd.f32 0.0, %v5805
        %5807 = vmatmul.f32.gmra.mxu0 %v5765
        %v5808 = vpop.f32.mrf.mxu0
        %v5809 = vadd.f32 0.0, %v5808
        %5810 = vdwg.mxu0
        %v5811 = vadd.f32 %v5747, %v5785
        %v5812 = vadd.f32 %v5748, %v5788
        %v5813 = vadd.f32 %v5749, %v5791
        %v5814 = vadd.f32 %v5750, %v5794
        %v5815 = vadd.f32 %v5751, %v5797
        %v5816 = vadd.f32 %v5752, %v5800
        %v5817 = vadd.f32 %v5753, %v5803
        %v5818 = vadd.f32 %v5754, %v5806
        %v5819 = vadd.f32 %v5755, %v5809
        %s5820 = scalar_lea.vmem [#allocation6], 240
        %v5821 = vld [vmem:[%s5820] sm:$0xff]
        %v5822 = vld [vmem:[%s5820 + $0x8] sm:$0xff]
        %v5823 = vrot.slane %v4667, 1
        %v5824 = vsel %vm768, %v4707, %v5823
        %v5825 = vrot.slane %v4670, 1
        %v5826 = vsel %vm768, %v5823, %v5825
        %v5827 = vrot.slane %v4673, 1
        %v5828 = vsel %vm768, %v5825, %v5827
        %v5829 = vrot.slane %v4676, 1
        %v5830 = vsel %vm768, %v5827, %v5829
        %v5831 = vsel %vm4709, %v5824, 0
        %v5833 = vsel %vm4709, %v5826, 0
        %v5835 = vsel %vm4709, %v5828, 0
        %v5837 = vsel %vm4709, %v5830, 0
        %v5839 = vsel %vm4709, %v5829, 0
        %5841 = vmatpush.msra.mxu0 0.0
        %5842 = vmatpush.msra.mxu0 0.0
        %5843 = vmatpush.msra.mxu0 0.0
        %5844 = vmatpush.msra.mxu0 0.0
        %5845 = vmatpush.msra.mxu0 0.0
        %5846 = vmatpush.msra.mxu0 0.0
        %5847 = vmatpush.msra.mxu0 0.0
        %5848 = vmatpush.msra.mxu0 0.0
        %5849 = vmatpush.msra.mxu0 0.0
        %5850 = vmatpush.msra.mxu0 0.0
        %5851 = vmatpush.msra.mxu0 0.0
        %5852 = vmatpush.msra.mxu0 0.0
        %5853 = vmatpush.msra.mxu0 0.0
        %5854 = vmatpush.msra.mxu0 0.0
        %5855 = vmatpush.msra.mxu0 %v5822
        %5856 = vmatpush.msra.mxu0 %v5821
        %5857 = vmatmul.f32.gmra.mxu0 %v4718
        %v5858 = vpop.f32.mrf.mxu0
        %v5859 = vadd.f32 0.0, %v5858
        %5860 = vmatmul.f32.gmra.mxu0 %v4720
        %v5861 = vpop.f32.mrf.mxu0
        %v5862 = vadd.f32 0.0, %v5861
        %5863 = vmatmul.f32.gmra.mxu0 %v4722
        %v5864 = vpop.f32.mrf.mxu0
        %v5865 = vadd.f32 0.0, %v5864
        %5866 = vmatmul.f32.gmra.mxu0 %v4724
        %v5867 = vpop.f32.mrf.mxu0
        %v5868 = vadd.f32 0.0, %v5867
        %5869 = vmatmul.f32.gmra.mxu0 %v5831
        %v5870 = vpop.f32.mrf.mxu0
        %v5871 = vadd.f32 0.0, %v5870
        %5872 = vmatmul.f32.gmra.mxu0 %v5833
        %v5873 = vpop.f32.mrf.mxu0
        %v5874 = vadd.f32 0.0, %v5873
        %5875 = vmatmul.f32.gmra.mxu0 %v5835
        %v5876 = vpop.f32.mrf.mxu0
        %v5877 = vadd.f32 0.0, %v5876
        %5878 = vmatmul.f32.gmra.mxu0 %v5837
        %v5879 = vpop.f32.mrf.mxu0
        %v5880 = vadd.f32 0.0, %v5879
        %5881 = vmatmul.f32.gmra.mxu0 %v5839
        %v5882 = vpop.f32.mrf.mxu0
        %v5883 = vadd.f32 0.0, %v5882
        %5884 = vdwg.mxu0
        %v5885 = vadd.f32 %v5811, %v5859
        %v5886 = vadd.f32 %v5812, %v5862
        %v5887 = vadd.f32 %v5813, %v5865
        %v5888 = vadd.f32 %v5814, %v5868
        %v5889 = vadd.f32 %v5815, %v5871
        %v5890 = vadd.f32 %v5816, %v5874
        %v5891 = vadd.f32 %v5817, %v5877
        %v5892 = vadd.f32 %v5818, %v5880
        %v5893 = vadd.f32 %v5819, %v5883
        %v5894 = vld [vmem:[#allocation7] sm:$0x1]
        %v5896 = vperm.slane %v5894, 0
        %v5898 = vadd.f32 %v5885, %v5896
        %v5899 = vadd.f32 %v5886, %v5896
        %v5900 = vadd.f32 %v5887, %v5896
        %v5901 = vadd.f32 %v5888, %v5896
        %v5902 = vadd.f32 %v5889, %v5896
        %v5903 = vadd.f32 %v5890, %v5896
        %v5904 = vadd.f32 %v5891, %v5896
        %v5905 = vadd.f32 %v5892, %v5896
        %v5906 = vadd.f32 %v5893, %v5896
        %v5907 = vmax.f32 %v5898, 0.0
        %v5908 = vmax.f32 %v5899, 0.0
        %v5909 = vmax.f32 %v5900, 0.0
        %v5910 = vmax.f32 %v5901, 0.0
        %v5911 = vmax.f32 %v5902, 0.0
        %v5912 = vmax.f32 %v5903, 0.0
        %v5913 = vmax.f32 %v5904, 0.0
        %v5914 = vmax.f32 %v5905, 0.0
        %v5915 = vmax.f32 %v5906, 0.0
        %v5916 = vld [vmem:[#allocation9] sm:$0xff]
        %v5917 = vld [vmem:[#allocation9 + $0x8] sm:$0xff]
        %v5918 = vld [vmem:[#allocation9 + $0x10] sm:$0xff]
        %v5919 = vld [vmem:[#allocation9 + $0x18] sm:$0xff]
        %v5920 = vld [vmem:[#allocation9 + $0x20] sm:$0xf]
        %vm5921 = vcmask 547840
        %v5923 = vsel %vm5921, %v5916, 0
        %v5926 = vsel %vm5921, %v5917, 0
        %v5929 = vsel %vm5921, %v5918, 0
        %v5932 = vsel %vm5921, %v5919, 0
        %v5935 = vsel %vm5921, %v5920, 0
        %v5938 = vsel %vm2439, %v5915, 0
        %5940 = vmatpush.msra.mxu0 0.0
        %5941 = vmatpush.msra.mxu0 0.0
        %5942 = vmatpush.msra.mxu0 0.0
        %5943 = vmatpush.msra.mxu0 0.0
        %5944 = vmatpush.msra.mxu0 0.0
        %5945 = vmatpush.msra.mxu0 0.0
        %5946 = vmatpush.msra.mxu0 0.0
        %5947 = vmatpush.msra.mxu0 %v5938
        %5948 = vmatpush.msra.mxu0 %v5914
        %5949 = vmatpush.msra.mxu0 %v5913
        %5950 = vmatpush.msra.mxu0 %v5912
        %5951 = vmatpush.msra.mxu0 %v5911
        %5952 = vmatpush.msra.mxu0 %v5910
        %5953 = vmatpush.msra.mxu0 %v5909
        %5954 = vmatpush.msra.mxu0 %v5908
        %5955 = vmatpush.msra.mxu0 %v5907
        %5956 = vmatmul.f32.gmra.mxu0 %v5923
        %v5957 = vpop.f32.mrf.mxu0
        %v5958 = vadd.f32 0.0, %v5957
        %5959 = vmatmul.f32.gmra.mxu0 %v5926
        %v5960 = vpop.f32.mrf.mxu0
        %v5961 = vadd.f32 0.0, %v5960
        %5962 = vmatmul.f32.gmra.mxu0 %v5929
        %v5963 = vpop.f32.mrf.mxu0
        %v5964 = vadd.f32 0.0, %v5963
        %5965 = vmatmul.f32.gmra.mxu0 %v5932
        %v5966 = vpop.f32.mrf.mxu0
        %v5967 = vadd.f32 0.0, %v5966
        %5968 = vmatmul.f32.gmra.mxu0 %v5935
        %v5969 = vpop.f32.mrf.mxu0
        %v5970 = vadd.f32 0.0, %v5969
        %5971 = vdwg.mxu0
        %v5972 = vld [vmem:[%s7] sm:$0xff]
        %v5973 = vld [vmem:[%s7 + $0x8] sm:$0xff]
        %v5974 = vld [vmem:[%s7 + $0x10] sm:$0xff]
        %v5975 = vld [vmem:[%s7 + $0x18] sm:$0xff]
        %s5976 = scalar_lea.vmem %s7, 32
        %v5977 = vld [vmem:[%s5976] sm:$0xff]
        %v5978 = vld [vmem:[%s5976 + $0x8] sm:$0xff]
        %v5979 = vld [vmem:[%s5976 + $0x10] sm:$0xff]
        %v5980 = vld [vmem:[%s5976 + $0x18] sm:$0xff]
        %v5984 = vrot.slane %v5958, 1
        %v5985 = vrot.slane %v5961, 1
        %v5986 = vsel %vm768, %v5984, %v5985
        %v5987 = vrot.slane %v5964, 1
        %v5988 = vsel %vm768, %v5985, %v5987
        %vm5989 = vcmask 261120
        %v5990 = vsel %vm5989, %v5986, 0
        %v5992 = vsel %vm5989, %v5988, 0
        %v5994 = vsel %vm5989, %v5987, 0
        %5996 = vmatpush.msra.mxu0 0.0
        %5997 = vmatpush.msra.mxu0 0.0
        %5998 = vmatpush.msra.mxu0 0.0
        %5999 = vmatpush.msra.mxu0 0.0
        %6000 = vmatpush.msra.mxu0 0.0
        %6001 = vmatpush.msra.mxu0 0.0
        %6002 = vmatpush.msra.mxu0 0.0
        %6003 = vmatpush.msra.mxu0 0.0
        %6004 = vmatpush.msra.mxu0 0.0
        %6005 = vmatpush.msra.mxu0 0.0
        %6006 = vmatpush.msra.mxu0 0.0
        %6007 = vmatpush.msra.mxu0 0.0
        %6008 = vmatpush.msra.mxu0 %v5980
        %6009 = vmatpush.msra.mxu0 %v5979
        %6010 = vmatpush.msra.mxu0 %v5978
        %6011 = vmatpush.msra.mxu0 %v5977
        %6012 = vmatmul.f32.gmra.mxu0 %v5990
        %v6013 = vpop.f32.mrf.mxu0
        %v6014 = vadd.f32 0.0, %v6013
        %6015 = vmatmul.f32.gmra.mxu0 %v5992
        %v6016 = vpop.f32.mrf.mxu0
        %v6017 = vadd.f32 0.0, %v6016
        %6018 = vmatmul.f32.gmra.mxu0 %v5994
        %v6019 = vpop.f32.mrf.mxu0
        %v6020 = vadd.f32 0.0, %v6019
        %6021 = vdwg.mxu0
        %v6022 = vsel %vm5989, %v5958, 0
        %v6024 = vsel %vm5989, %v5961, 0
        %v6026 = vsel %vm5989, %v5964, 0
        %6028 = vmatpush.msra.mxu0 0.0
        %6029 = vmatpush.msra.mxu0 0.0
        %6030 = vmatpush.msra.mxu0 0.0
        %6031 = vmatpush.msra.mxu0 0.0
        %6032 = vmatpush.msra.mxu0 0.0
        %6033 = vmatpush.msra.mxu0 0.0
        %6034 = vmatpush.msra.mxu0 0.0
        %6035 = vmatpush.msra.mxu0 0.0
        %6036 = vmatpush.msra.mxu0 0.0
        %6037 = vmatpush.msra.mxu0 0.0
        %6038 = vmatpush.msra.mxu0 0.0
        %6039 = vmatpush.msra.mxu0 0.0
        %6040 = vmatpush.msra.mxu0 %v5975
        %6041 = vmatpush.msra.mxu0 %v5974
        %6042 = vmatpush.msra.mxu0 %v5973
        %6043 = vmatpush.msra.mxu0 %v5972
        %6044 = vmatmul.f32.gmra.mxu0 %v6022
        %v6045 = vpop.f32.mrf.mxu0
        %v6046 = vadd.f32 %v6014, %v6045
        %6047 = vmatmul.f32.gmra.mxu0 %v6024
        %v6048 = vpop.f32.mrf.mxu0
        %v6049 = vadd.f32 %v6017, %v6048
        %6050 = vmatmul.f32.gmra.mxu0 %v6026
        %v6051 = vpop.f32.mrf.mxu0
        %v6052 = vadd.f32 %v6020, %v6051
        %6053 = vdwg.mxu0
        %s6054 = scalar_lea.vmem %s7, 64
        %v6055 = vld [vmem:[%s6054] sm:$0xff]
        %v6056 = vld [vmem:[%s6054 + $0x8] sm:$0xff]
        %v6057 = vld [vmem:[%s6054 + $0x10] sm:$0xff]
        %v6058 = vld [vmem:[%s6054 + $0x18] sm:$0xff]
        %v6059 = vrot.slane %v5958, 2
        %v6060 = vrot.slane %v5961, 2
        %v6061 = vsel %vm1220, %v6059, %v6060
        %v6062 = vrot.slane %v5964, 2
        %v6063 = vsel %vm1220, %v6060, %v6062
        %v6064 = vsel %vm5989, %v6061, 0
        %v6066 = vsel %vm5989, %v6063, 0
        %v6068 = vsel %vm5989, %v6062, 0
        %6070 = vmatpush.msra.mxu0 0.0
        %6071 = vmatpush.msra.mxu0 0.0
        %6072 = vmatpush.msra.mxu0 0.0
        %6073 = vmatpush.msra.mxu0 0.0
        %6074 = vmatpush.msra.mxu0 0.0
        %6075 = vmatpush.msra.mxu0 0.0
        %6076 = vmatpush.msra.mxu0 0.0
        %6077 = vmatpush.msra.mxu0 0.0
        %6078 = vmatpush.msra.mxu0 0.0
        %6079 = vmatpush.msra.mxu0 0.0
        %6080 = vmatpush.msra.mxu0 0.0
        %6081 = vmatpush.msra.mxu0 0.0
        %6082 = vmatpush.msra.mxu0 %v6058
        %6083 = vmatpush.msra.mxu0 %v6057
        %6084 = vmatpush.msra.mxu0 %v6056
        %6085 = vmatpush.msra.mxu0 %v6055
        %6086 = vmatmul.f32.gmra.mxu0 %v6064
        %v6087 = vpop.f32.mrf.mxu0
        %v6088 = vadd.f32 0.0, %v6087
        %6089 = vmatmul.f32.gmra.mxu0 %v6066
        %v6090 = vpop.f32.mrf.mxu0
        %v6091 = vadd.f32 0.0, %v6090
        %6092 = vmatmul.f32.gmra.mxu0 %v6068
        %v6093 = vpop.f32.mrf.mxu0
        %v6094 = vadd.f32 0.0, %v6093
        %6095 = vdwg.mxu0
        %v6096 = vadd.f32 %v6046, %v6088
        %v6097 = vadd.f32 %v6049, %v6091
        %v6098 = vadd.f32 %v6052, %v6094
        %s6099 = scalar_lea.vmem %s7, 96
        %v6100 = vld [vmem:[%s6099] sm:$0xff]
        %v6101 = vld [vmem:[%s6099 + $0x8] sm:$0xff]
        %v6102 = vld [vmem:[%s6099 + $0x10] sm:$0xff]
        %v6103 = vld [vmem:[%s6099 + $0x18] sm:$0xff]
        %v6105 = vrot.slane %v5958, 6
        %v6106 = vrot.slane %v5961, 6
        %v6107 = vsel %vm3072, %v6105, %v6106
        %v6108 = vrot.slane %v5964, 6
        %v6109 = vsel %vm3072, %v6106, %v6108
        %v6110 = vrot.slane %v5967, 6
        %v6111 = vsel %vm3072, %v6108, %v6110
        %v6112 = vsel %vm5989, %v6107, 0
        %v6114 = vsel %vm5989, %v6109, 0
        %v6116 = vsel %vm5989, %v6111, 0
        %6118 = vmatpush.msra.mxu0 0.0
        %6119 = vmatpush.msra.mxu0 0.0
        %6120 = vmatpush.msra.mxu0 0.0
        %6121 = vmatpush.msra.mxu0 0.0
        %6122 = vmatpush.msra.mxu0 0.0
        %6123 = vmatpush.msra.mxu0 0.0
        %6124 = vmatpush.msra.mxu0 0.0
        %6125 = vmatpush.msra.mxu0 0.0
        %6126 = vmatpush.msra.mxu0 0.0
        %6127 = vmatpush.msra.mxu0 0.0
        %6128 = vmatpush.msra.mxu0 0.0
        %6129 = vmatpush.msra.mxu0 0.0
        %6130 = vmatpush.msra.mxu0 %v6103
        %6131 = vmatpush.msra.mxu0 %v6102
        %6132 = vmatpush.msra.mxu0 %v6101
        %6133 = vmatpush.msra.mxu0 %v6100
        %6134 = vmatmul.f32.gmra.mxu0 %v6112
        %v6135 = vpop.f32.mrf.mxu0
        %v6136 = vadd.f32 0.0, %v6135
        %6137 = vmatmul.f32.gmra.mxu0 %v6114
        %v6138 = vpop.f32.mrf.mxu0
        %v6139 = vadd.f32 0.0, %v6138
        %6140 = vmatmul.f32.gmra.mxu0 %v6116
        %v6141 = vpop.f32.mrf.mxu0
        %v6142 = vadd.f32 0.0, %v6141
        %6143 = vdwg.mxu0
        %v6144 = vadd.f32 %v6096, %v6136
        %v6145 = vadd.f32 %v6097, %v6139
        %v6146 = vadd.f32 %v6098, %v6142
        %s6147 = scalar_lea.vmem %s7, 128
        %v6148 = vld [vmem:[%s6147] sm:$0xff]
        %v6149 = vld [vmem:[%s6147 + $0x8] sm:$0xff]
        %v6150 = vld [vmem:[%s6147 + $0x10] sm:$0xff]
        %v6151 = vld [vmem:[%s6147 + $0x18] sm:$0xff]
        %v6152 = vrot.slane %v5958, 7
        %v6153 = vrot.slane %v5961, 7
        %v6154 = vsel %vm3368, %v6152, %v6153
        %v6155 = vrot.slane %v5964, 7
        %v6156 = vsel %vm3368, %v6153, %v6155
        %v6157 = vrot.slane %v5967, 7
        %v6158 = vsel %vm3368, %v6155, %v6157
        %v6159 = vsel %vm5989, %v6154, 0
        %v6161 = vsel %vm5989, %v6156, 0
        %v6163 = vsel %vm5989, %v6158, 0
        %6165 = vmatpush.msra.mxu0 0.0
        %6166 = vmatpush.msra.mxu0 0.0
        %6167 = vmatpush.msra.mxu0 0.0
        %6168 = vmatpush.msra.mxu0 0.0
        %6169 = vmatpush.msra.mxu0 0.0
        %6170 = vmatpush.msra.mxu0 0.0
        %6171 = vmatpush.msra.mxu0 0.0
        %6172 = vmatpush.msra.mxu0 0.0
        %6173 = vmatpush.msra.mxu0 0.0
        %6174 = vmatpush.msra.mxu0 0.0
        %6175 = vmatpush.msra.mxu0 0.0
        %6176 = vmatpush.msra.mxu0 0.0
        %6177 = vmatpush.msra.mxu0 %v6151
        %6178 = vmatpush.msra.mxu0 %v6150
        %6179 = vmatpush.msra.mxu0 %v6149
        %6180 = vmatpush.msra.mxu0 %v6148
        %6181 = vmatmul.f32.gmra.mxu0 %v6159
        %v6182 = vpop.f32.mrf.mxu0
        %v6183 = vadd.f32 0.0, %v6182
        %6184 = vmatmul.f32.gmra.mxu0 %v6161
        %v6185 = vpop.f32.mrf.mxu0
        %v6186 = vadd.f32 0.0, %v6185
        %6187 = vmatmul.f32.gmra.mxu0 %v6163
        %v6188 = vpop.f32.mrf.mxu0
        %v6189 = vadd.f32 0.0, %v6188
        %6190 = vdwg.mxu0
        %v6191 = vadd.f32 %v6144, %v6183
        %v6192 = vadd.f32 %v6145, %v6186
        %v6193 = vadd.f32 %v6146, %v6189
        %s6194 = scalar_lea.vmem %s7, 160
        %v6195 = vld [vmem:[%s6194] sm:$0xff]
        %v6196 = vld [vmem:[%s6194 + $0x8] sm:$0xff]
        %v6197 = vld [vmem:[%s6194 + $0x10] sm:$0xff]
        %v6198 = vld [vmem:[%s6194 + $0x18] sm:$0xff]
        %v6199 = vsel %vm5989, %v5967, 0
        %6201 = vmatpush.msra.mxu0 0.0
        %6202 = vmatpush.msra.mxu0 0.0
        %6203 = vmatpush.msra.mxu0 0.0
        %6204 = vmatpush.msra.mxu0 0.0
        %6205 = vmatpush.msra.mxu0 0.0
        %6206 = vmatpush.msra.mxu0 0.0
        %6207 = vmatpush.msra.mxu0 0.0
        %6208 = vmatpush.msra.mxu0 0.0
        %6209 = vmatpush.msra.mxu0 0.0
        %6210 = vmatpush.msra.mxu0 0.0
        %6211 = vmatpush.msra.mxu0 0.0
        %6212 = vmatpush.msra.mxu0 0.0
        %6213 = vmatpush.msra.mxu0 %v6198
        %6214 = vmatpush.msra.mxu0 %v6197
        %6215 = vmatpush.msra.mxu0 %v6196
        %6216 = vmatpush.msra.mxu0 %v6195
        %6217 = vmatmul.f32.gmra.mxu0 %v6024
        %v6218 = vpop.f32.mrf.mxu0
        %v6219 = vadd.f32 0.0, %v6218
        %6220 = vmatmul.f32.gmra.mxu0 %v6026
        %v6221 = vpop.f32.mrf.mxu0
        %v6222 = vadd.f32 0.0, %v6221
        %6223 = vmatmul.f32.gmra.mxu0 %v6199
        %v6224 = vpop.f32.mrf.mxu0
        %v6225 = vadd.f32 0.0, %v6224
        %6226 = vdwg.mxu0
        %v6227 = vadd.f32 %v6191, %v6219
        %v6228 = vadd.f32 %v6192, %v6222
        %v6229 = vadd.f32 %v6193, %v6225
        %s6230 = scalar_lea.vmem %s7, 192
        %v6231 = vld [vmem:[%s6230] sm:$0xff]
        %v6232 = vld [vmem:[%s6230 + $0x8] sm:$0xff]
        %v6233 = vld [vmem:[%s6230 + $0x10] sm:$0xff]
        %v6234 = vld [vmem:[%s6230 + $0x18] sm:$0xff]
        %v6236 = vrot.slane %v5961, 4
        %v6237 = vrot.slane %v5964, 4
        %v6238 = vsel %vm905, %v6236, %v6237
        %v6239 = vrot.slane %v5967, 4
        %v6240 = vsel %vm905, %v6237, %v6239
        %v6241 = vrot.slane %v5970, 4
        %v6242 = vsel %vm905, %v6239, %v6241
        %v6243 = vsel %vm5989, %v6238, 0
        %v6245 = vsel %vm5989, %v6240, 0
        %v6247 = vsel %vm5989, %v6242, 0
        %6249 = vmatpush.msra.mxu0 0.0
        %6250 = vmatpush.msra.mxu0 0.0
        %6251 = vmatpush.msra.mxu0 0.0
        %6252 = vmatpush.msra.mxu0 0.0
        %6253 = vmatpush.msra.mxu0 0.0
        %6254 = vmatpush.msra.mxu0 0.0
        %6255 = vmatpush.msra.mxu0 0.0
        %6256 = vmatpush.msra.mxu0 0.0
        %6257 = vmatpush.msra.mxu0 0.0
        %6258 = vmatpush.msra.mxu0 0.0
        %6259 = vmatpush.msra.mxu0 0.0
        %6260 = vmatpush.msra.mxu0 0.0
        %6261 = vmatpush.msra.mxu0 %v6234
        %6262 = vmatpush.msra.mxu0 %v6233
        %6263 = vmatpush.msra.mxu0 %v6232
        %6264 = vmatpush.msra.mxu0 %v6231
        %6265 = vmatmul.f32.gmra.mxu0 %v6243
        %v6266 = vpop.f32.mrf.mxu0
        %v6267 = vadd.f32 0.0, %v6266
        %6268 = vmatmul.f32.gmra.mxu0 %v6245
        %v6269 = vpop.f32.mrf.mxu0
        %v6270 = vadd.f32 0.0, %v6269
        %6271 = vmatmul.f32.gmra.mxu0 %v6247
        %v6272 = vpop.f32.mrf.mxu0
        %v6273 = vadd.f32 0.0, %v6272
        %6274 = vdwg.mxu0
        %v6275 = vadd.f32 %v6227, %v6267
        %v6276 = vadd.f32 %v6228, %v6270
        %v6277 = vadd.f32 %v6229, %v6273
        %s6278 = scalar_lea.vmem %s7, 224
        %v6279 = vld [vmem:[%s6278] sm:$0xff]
        %v6280 = vld [vmem:[%s6278 + $0x8] sm:$0xff]
        %v6281 = vld [vmem:[%s6278 + $0x10] sm:$0xff]
        %v6282 = vld [vmem:[%s6278 + $0x18] sm:$0xff]
        %v6283 = vrot.slane %v5961, 5
        %v6284 = vrot.slane %v5964, 5
        %v6285 = vsel %vm2439, %v6283, %v6284
        %v6286 = vrot.slane %v5967, 5
        %v6287 = vsel %vm2439, %v6284, %v6286
        %v6288 = vrot.slane %v5970, 5
        %v6289 = vsel %vm2439, %v6286, %v6288
        %v6290 = vsel %vm5989, %v6285, 0
        %v6292 = vsel %vm5989, %v6287, 0
        %v6294 = vsel %vm5989, %v6289, 0
        %6296 = vmatpush.msra.mxu0 0.0
        %6297 = vmatpush.msra.mxu0 0.0
        %6298 = vmatpush.msra.mxu0 0.0
        %6299 = vmatpush.msra.mxu0 0.0
        %6300 = vmatpush.msra.mxu0 0.0
        %6301 = vmatpush.msra.mxu0 0.0
        %6302 = vmatpush.msra.mxu0 0.0
        %6303 = vmatpush.msra.mxu0 0.0
        %6304 = vmatpush.msra.mxu0 0.0
        %6305 = vmatpush.msra.mxu0 0.0
        %6306 = vmatpush.msra.mxu0 0.0
        %6307 = vmatpush.msra.mxu0 0.0
        %6308 = vmatpush.msra.mxu0 %v6282
        %6309 = vmatpush.msra.mxu0 %v6281
        %6310 = vmatpush.msra.mxu0 %v6280
        %6311 = vmatpush.msra.mxu0 %v6279
        %6312 = vmatmul.f32.gmra.mxu0 %v6290
        %v6313 = vpop.f32.mrf.mxu0
        %v6314 = vadd.f32 0.0, %v6313
        %6315 = vmatmul.f32.gmra.mxu0 %v6292
        %v6316 = vpop.f32.mrf.mxu0
        %v6317 = vadd.f32 0.0, %v6316
        %6318 = vmatmul.f32.gmra.mxu0 %v6294
        %v6319 = vpop.f32.mrf.mxu0
        %v6320 = vadd.f32 0.0, %v6319
        %6321 = vdwg.mxu0
        %v6322 = vadd.f32 %v6275, %v6314
        %v6323 = vadd.f32 %v6276, %v6317
        %v6324 = vadd.f32 %v6277, %v6320
        %s6325 = scalar_lea.vmem %s7, 256
        %v6326 = vld [vmem:[%s6325] sm:$0xff]
        %v6327 = vld [vmem:[%s6325 + $0x8] sm:$0xff]
        %v6328 = vld [vmem:[%s6325 + $0x10] sm:$0xff]
        %v6329 = vld [vmem:[%s6325 + $0x18] sm:$0xff]
        %v6330 = vrot.slane %v5970, 6
        %v6331 = vsel %vm3072, %v6110, %v6330
        %v6332 = vsel %vm5989, %v6331, 0
        %6334 = vmatpush.msra.mxu0 0.0
        %6335 = vmatpush.msra.mxu0 0.0
        %6336 = vmatpush.msra.mxu0 0.0
        %6337 = vmatpush.msra.mxu0 0.0
        %6338 = vmatpush.msra.mxu0 0.0
        %6339 = vmatpush.msra.mxu0 0.0
        %6340 = vmatpush.msra.mxu0 0.0
        %6341 = vmatpush.msra.mxu0 0.0
        %6342 = vmatpush.msra.mxu0 0.0
        %6343 = vmatpush.msra.mxu0 0.0
        %6344 = vmatpush.msra.mxu0 0.0
        %6345 = vmatpush.msra.mxu0 0.0
        %6346 = vmatpush.msra.mxu0 %v6329
        %6347 = vmatpush.msra.mxu0 %v6328
        %6348 = vmatpush.msra.mxu0 %v6327
        %6349 = vmatpush.msra.mxu0 %v6326
        %6350 = vmatmul.f32.gmra.mxu0 %v6114
        %v6351 = vpop.f32.mrf.mxu0
        %v6352 = vadd.f32 0.0, %v6351
        %6353 = vmatmul.f32.gmra.mxu0 %v6116
        %v6354 = vpop.f32.mrf.mxu0
        %v6355 = vadd.f32 0.0, %v6354
        %6356 = vmatmul.f32.gmra.mxu0 %v6332
        %v6357 = vpop.f32.mrf.mxu0
        %v6358 = vadd.f32 0.0, %v6357
        %6359 = vdwg.mxu0
        %v6360 = vadd.f32 %v6322, %v6352
        %v6361 = vadd.f32 %v6323, %v6355
        %v6362 = vadd.f32 %v6324, %v6358
        %v6363 = vld [vmem:[#allocation10] sm:$0x1]
        %v6365 = vperm.slane %v6363, 0
        %v6367 = vadd.f32 %v6360, %v6365
        %v6368 = vadd.f32 %v6361, %v6365
        %v6369 = vadd.f32 %v6362, %v6365
        %v6370 = vld [vmem:[%s9] sm:$0xff]
        %v6371 = vld [vmem:[%s9 + $0x8] sm:$0xff]
        %v6372 = vld [vmem:[%s9 + $0x10] sm:$0xff]
        %v6373 = vld [vmem:[%s9 + $0x18] sm:$0xff]
        %v6374 = vld [vmem:[%s9 + $0x20] sm:$0xf]
        %vm6375 = vcmask 179200
        %v6377 = vsel %vm6375, %v6370, 0
        %v6380 = vsel %vm6375, %v6371, 0
        %v6383 = vsel %vm6375, %v6372, 0
        %v6386 = vsel %vm6375, %v6373, 0
        %v6389 = vsel %vm6375, %v6374, 0
        %v6392 = vsel %vm1220, %v6369, 0
        %6394 = vmatpush.msra.mxu0 0.0
        %6395 = vmatpush.msra.mxu0 0.0
        %6396 = vmatpush.msra.mxu0 0.0
        %6397 = vmatpush.msra.mxu0 0.0
        %6398 = vmatpush.msra.mxu0 0.0
        %6399 = vmatpush.msra.mxu0 0.0
        %6400 = vmatpush.msra.mxu0 0.0
        %6401 = vmatpush.msra.mxu0 0.0
        %6402 = vmatpush.msra.mxu0 0.0
        %6403 = vmatpush.msra.mxu0 0.0
        %6404 = vmatpush.msra.mxu0 0.0
        %6405 = vmatpush.msra.mxu0 0.0
        %6406 = vmatpush.msra.mxu0 0.0
        %6407 = vmatpush.msra.mxu0 %v6392
        %6408 = vmatpush.msra.mxu0 %v6368
        %6409 = vmatpush.msra.mxu0 %v6367
        %6410 = vmatmul.f32.gmra.mxu0 %v6377
        %v6411 = vpop.f32.mrf.mxu0
        %v6412 = vadd.f32 0.0, %v6411
        %6413 = vmatmul.f32.gmra.mxu0 %v6380
        %v6414 = vpop.f32.mrf.mxu0
        %v6415 = vadd.f32 0.0, %v6414
        %6416 = vmatmul.f32.gmra.mxu0 %v6383
        %v6417 = vpop.f32.mrf.mxu0
        %v6418 = vadd.f32 0.0, %v6417
        %6419 = vmatmul.f32.gmra.mxu0 %v6386
        %v6420 = vpop.f32.mrf.mxu0
        %v6421 = vadd.f32 0.0, %v6420
        %6422 = vmatmul.f32.gmra.mxu0 %v6389
        %v6423 = vpop.f32.mrf.mxu0
        %v6424 = vadd.f32 0.0, %v6423
        %6425 = vdwg.mxu0
        %v6426 = vmax.f32 %v6412, 0.0
        %v6427 = vmax.f32 %v6415, 0.0
        %v6428 = vmax.f32 %v6418, 0.0
        %v6429 = vmax.f32 %v6421, 0.0
        %v6430 = vmax.f32 %v6424, 0.0
        %v6431 = vld [vmem:[%s10] sm:$0xff]
        %v6432 = vld [vmem:[%s10 + $0x8] sm:$0xff]
        %v6433 = vld [vmem:[%s10 + $0x10] sm:$0xff]
        %v6434 = vld [vmem:[%s10 + $0x18] sm:$0xff]
        %s6435 = scalar_lea.vmem %s10, 32
        %v6436 = vld [vmem:[%s6435] sm:$0xff]
        %v6437 = vld [vmem:[%s6435 + $0x8] sm:$0xff]
        %v6438 = vld [vmem:[%s6435 + $0x10] sm:$0xff]
        %v6439 = vld [vmem:[%s6435 + $0x18] sm:$0xff]
        %v6443 = vrot.slane %v6426, 1
        %v6444 = vrot.slane %v6427, 1
        %v6445 = vsel %vm768, %v6443, %v6444
        %v6446 = vrot.slane %v6428, 1
        %v6447 = vsel %vm768, %v6444, %v6446
        %v6448 = vsel %vm5989, %v6445, 0
        %v6450 = vsel %vm5989, %v6447, 0
        %v6452 = vsel %vm5989, %v6446, 0
        %6454 = vmatpush.msra.mxu0 0.0
        %6455 = vmatpush.msra.mxu0 0.0
        %6456 = vmatpush.msra.mxu0 0.0
        %6457 = vmatpush.msra.mxu0 0.0
        %6458 = vmatpush.msra.mxu0 0.0
        %6459 = vmatpush.msra.mxu0 0.0
        %6460 = vmatpush.msra.mxu0 0.0
        %6461 = vmatpush.msra.mxu0 0.0
        %6462 = vmatpush.msra.mxu0 0.0
        %6463 = vmatpush.msra.mxu0 0.0
        %6464 = vmatpush.msra.mxu0 0.0
        %6465 = vmatpush.msra.mxu0 0.0
        %6466 = vmatpush.msra.mxu0 %v6439
        %6467 = vmatpush.msra.mxu0 %v6438
        %6468 = vmatpush.msra.mxu0 %v6437
        %6469 = vmatpush.msra.mxu0 %v6436
        %6470 = vmatmul.f32.gmra.mxu0 %v6448
        %v6471 = vpop.f32.mrf.mxu0
        %v6472 = vadd.f32 0.0, %v6471
        %6473 = vmatmul.f32.gmra.mxu0 %v6450
        %v6474 = vpop.f32.mrf.mxu0
        %v6475 = vadd.f32 0.0, %v6474
        %6476 = vmatmul.f32.gmra.mxu0 %v6452
        %v6477 = vpop.f32.mrf.mxu0
        %v6478 = vadd.f32 0.0, %v6477
        %6479 = vdwg.mxu0
        %v6480 = vsel %vm5989, %v6426, 0
        %v6482 = vsel %vm5989, %v6427, 0
        %v6484 = vsel %vm5989, %v6428, 0
        %6486 = vmatpush.msra.mxu0 0.0
        %6487 = vmatpush.msra.mxu0 0.0
        %6488 = vmatpush.msra.mxu0 0.0
        %6489 = vmatpush.msra.mxu0 0.0
        %6490 = vmatpush.msra.mxu0 0.0
        %6491 = vmatpush.msra.mxu0 0.0
        %6492 = vmatpush.msra.mxu0 0.0
        %6493 = vmatpush.msra.mxu0 0.0
        %6494 = vmatpush.msra.mxu0 0.0
        %6495 = vmatpush.msra.mxu0 0.0
        %6496 = vmatpush.msra.mxu0 0.0
        %6497 = vmatpush.msra.mxu0 0.0
        %6498 = vmatpush.msra.mxu0 %v6434
        %6499 = vmatpush.msra.mxu0 %v6433
        %6500 = vmatpush.msra.mxu0 %v6432
        %6501 = vmatpush.msra.mxu0 %v6431
        %6502 = vmatmul.f32.gmra.mxu0 %v6480
        %v6503 = vpop.f32.mrf.mxu0
        %v6504 = vadd.f32 %v6472, %v6503
        %6505 = vmatmul.f32.gmra.mxu0 %v6482
        %v6506 = vpop.f32.mrf.mxu0
        %v6507 = vadd.f32 %v6475, %v6506
        %6508 = vmatmul.f32.gmra.mxu0 %v6484
        %v6509 = vpop.f32.mrf.mxu0
        %v6510 = vadd.f32 %v6478, %v6509
        %6511 = vdwg.mxu0
        %s6512 = scalar_lea.vmem %s10, 64
        %v6513 = vld [vmem:[%s6512] sm:$0xff]
        %v6514 = vld [vmem:[%s6512 + $0x8] sm:$0xff]
        %v6515 = vld [vmem:[%s6512 + $0x10] sm:$0xff]
        %v6516 = vld [vmem:[%s6512 + $0x18] sm:$0xff]
        %v6517 = vrot.slane %v6426, 2
        %v6518 = vrot.slane %v6427, 2
        %v6519 = vsel %vm1220, %v6517, %v6518
        %v6520 = vrot.slane %v6428, 2
        %v6521 = vsel %vm1220, %v6518, %v6520
        %v6522 = vsel %vm5989, %v6519, 0
        %v6524 = vsel %vm5989, %v6521, 0
        %v6526 = vsel %vm5989, %v6520, 0
        %6528 = vmatpush.msra.mxu0 0.0
        %6529 = vmatpush.msra.mxu0 0.0
        %6530 = vmatpush.msra.mxu0 0.0
        %6531 = vmatpush.msra.mxu0 0.0
        %6532 = vmatpush.msra.mxu0 0.0
        %6533 = vmatpush.msra.mxu0 0.0
        %6534 = vmatpush.msra.mxu0 0.0
        %6535 = vmatpush.msra.mxu0 0.0
        %6536 = vmatpush.msra.mxu0 0.0
        %6537 = vmatpush.msra.mxu0 0.0
        %6538 = vmatpush.msra.mxu0 0.0
        %6539 = vmatpush.msra.mxu0 0.0
        %6540 = vmatpush.msra.mxu0 %v6516
        %6541 = vmatpush.msra.mxu0 %v6515
        %6542 = vmatpush.msra.mxu0 %v6514
        %6543 = vmatpush.msra.mxu0 %v6513
        %6544 = vmatmul.f32.gmra.mxu0 %v6522
        %v6545 = vpop.f32.mrf.mxu0
        %v6546 = vadd.f32 0.0, %v6545
        %6547 = vmatmul.f32.gmra.mxu0 %v6524
        %v6548 = vpop.f32.mrf.mxu0
        %v6549 = vadd.f32 0.0, %v6548
        %6550 = vmatmul.f32.gmra.mxu0 %v6526
        %v6551 = vpop.f32.mrf.mxu0
        %v6552 = vadd.f32 0.0, %v6551
        %6553 = vdwg.mxu0
        %v6554 = vadd.f32 %v6504, %v6546
        %v6555 = vadd.f32 %v6507, %v6549
        %v6556 = vadd.f32 %v6510, %v6552
        %s6557 = scalar_lea.vmem %s10, 96
        %v6558 = vld [vmem:[%s6557] sm:$0xff]
        %v6559 = vld [vmem:[%s6557 + $0x8] sm:$0xff]
        %v6560 = vld [vmem:[%s6557 + $0x10] sm:$0xff]
        %v6561 = vld [vmem:[%s6557 + $0x18] sm:$0xff]
        %v6563 = vrot.slane %v6426, 6
        %v6564 = vrot.slane %v6427, 6
        %v6565 = vsel %vm3072, %v6563, %v6564
        %v6566 = vrot.slane %v6428, 6
        %v6567 = vsel %vm3072, %v6564, %v6566
        %v6568 = vrot.slane %v6429, 6
        %v6569 = vsel %vm3072, %v6566, %v6568
        %v6570 = vsel %vm5989, %v6565, 0
        %v6572 = vsel %vm5989, %v6567, 0
        %v6574 = vsel %vm5989, %v6569, 0
        %6576 = vmatpush.msra.mxu0 0.0
        %6577 = vmatpush.msra.mxu0 0.0
        %6578 = vmatpush.msra.mxu0 0.0
        %6579 = vmatpush.msra.mxu0 0.0
        %6580 = vmatpush.msra.mxu0 0.0
        %6581 = vmatpush.msra.mxu0 0.0
        %6582 = vmatpush.msra.mxu0 0.0
        %6583 = vmatpush.msra.mxu0 0.0
        %6584 = vmatpush.msra.mxu0 0.0
        %6585 = vmatpush.msra.mxu0 0.0
        %6586 = vmatpush.msra.mxu0 0.0
        %6587 = vmatpush.msra.mxu0 0.0
        %6588 = vmatpush.msra.mxu0 %v6561
        %6589 = vmatpush.msra.mxu0 %v6560
        %6590 = vmatpush.msra.mxu0 %v6559
        %6591 = vmatpush.msra.mxu0 %v6558
        %6592 = vmatmul.f32.gmra.mxu0 %v6570
        %v6593 = vpop.f32.mrf.mxu0
        %v6594 = vadd.f32 0.0, %v6593
        %6595 = vmatmul.f32.gmra.mxu0 %v6572
        %v6596 = vpop.f32.mrf.mxu0
        %v6597 = vadd.f32 0.0, %v6596
        %6598 = vmatmul.f32.gmra.mxu0 %v6574
        %v6599 = vpop.f32.mrf.mxu0
        %v6600 = vadd.f32 0.0, %v6599
        %6601 = vdwg.mxu0
        %v6602 = vadd.f32 %v6554, %v6594
        %v6603 = vadd.f32 %v6555, %v6597
        %v6604 = vadd.f32 %v6556, %v6600
        %s6605 = scalar_lea.vmem %s10, 128
        %v6606 = vld [vmem:[%s6605] sm:$0xff]
        %v6607 = vld [vmem:[%s6605 + $0x8] sm:$0xff]
        %v6608 = vld [vmem:[%s6605 + $0x10] sm:$0xff]
        %v6609 = vld [vmem:[%s6605 + $0x18] sm:$0xff]
        %v6610 = vrot.slane %v6426, 7
        %v6611 = vrot.slane %v6427, 7
        %v6612 = vsel %vm3368, %v6610, %v6611
        %v6613 = vrot.slane %v6428, 7
        %v6614 = vsel %vm3368, %v6611, %v6613
        %v6615 = vrot.slane %v6429, 7
        %v6616 = vsel %vm3368, %v6613, %v6615
        %v6617 = vsel %vm5989, %v6612, 0
        %v6619 = vsel %vm5989, %v6614, 0
        %v6621 = vsel %vm5989, %v6616, 0
        %6623 = vmatpush.msra.mxu0 0.0
        %6624 = vmatpush.msra.mxu0 0.0
        %6625 = vmatpush.msra.mxu0 0.0
        %6626 = vmatpush.msra.mxu0 0.0
        %6627 = vmatpush.msra.mxu0 0.0
        %6628 = vmatpush.msra.mxu0 0.0
        %6629 = vmatpush.msra.mxu0 0.0
        %6630 = vmatpush.msra.mxu0 0.0
        %6631 = vmatpush.msra.mxu0 0.0
        %6632 = vmatpush.msra.mxu0 0.0
        %6633 = vmatpush.msra.mxu0 0.0
        %6634 = vmatpush.msra.mxu0 0.0
        %6635 = vmatpush.msra.mxu0 %v6609
        %6636 = vmatpush.msra.mxu0 %v6608
        %6637 = vmatpush.msra.mxu0 %v6607
        %6638 = vmatpush.msra.mxu0 %v6606
        %6639 = vmatmul.f32.gmra.mxu0 %v6617
        %v6640 = vpop.f32.mrf.mxu0
        %v6641 = vadd.f32 0.0, %v6640
        %6642 = vmatmul.f32.gmra.mxu0 %v6619
        %v6643 = vpop.f32.mrf.mxu0
        %v6644 = vadd.f32 0.0, %v6643
        %6645 = vmatmul.f32.gmra.mxu0 %v6621
        %v6646 = vpop.f32.mrf.mxu0
        %v6647 = vadd.f32 0.0, %v6646
        %6648 = vdwg.mxu0
        %v6649 = vadd.f32 %v6602, %v6641
        %v6650 = vadd.f32 %v6603, %v6644
        %v6651 = vadd.f32 %v6604, %v6647
        %s6652 = scalar_lea.vmem %s10, 160
        %v6653 = vld [vmem:[%s6652] sm:$0xff]
        %v6654 = vld [vmem:[%s6652 + $0x8] sm:$0xff]
        %v6655 = vld [vmem:[%s6652 + $0x10] sm:$0xff]
        %v6656 = vld [vmem:[%s6652 + $0x18] sm:$0xff]
        %v6657 = vsel %vm5989, %v6429, 0
        %6659 = vmatpush.msra.mxu0 0.0
        %6660 = vmatpush.msra.mxu0 0.0
        %6661 = vmatpush.msra.mxu0 0.0
        %6662 = vmatpush.msra.mxu0 0.0
        %6663 = vmatpush.msra.mxu0 0.0
        %6664 = vmatpush.msra.mxu0 0.0
        %6665 = vmatpush.msra.mxu0 0.0
        %6666 = vmatpush.msra.mxu0 0.0
        %6667 = vmatpush.msra.mxu0 0.0
        %6668 = vmatpush.msra.mxu0 0.0
        %6669 = vmatpush.msra.mxu0 0.0
        %6670 = vmatpush.msra.mxu0 0.0
        %6671 = vmatpush.msra.mxu0 %v6656
        %6672 = vmatpush.msra.mxu0 %v6655
        %6673 = vmatpush.msra.mxu0 %v6654
        %6674 = vmatpush.msra.mxu0 %v6653
        %6675 = vmatmul.f32.gmra.mxu0 %v6482
        %v6676 = vpop.f32.mrf.mxu0
        %v6677 = vadd.f32 0.0, %v6676
        %6678 = vmatmul.f32.gmra.mxu0 %v6484
        %v6679 = vpop.f32.mrf.mxu0
        %v6680 = vadd.f32 0.0, %v6679
        %6681 = vmatmul.f32.gmra.mxu0 %v6657
        %v6682 = vpop.f32.mrf.mxu0
        %v6683 = vadd.f32 0.0, %v6682
        %6684 = vdwg.mxu0
        %v6685 = vadd.f32 %v6649, %v6677
        %v6686 = vadd.f32 %v6650, %v6680
        %v6687 = vadd.f32 %v6651, %v6683
        %s6688 = scalar_lea.vmem %s10, 192
        %v6689 = vld [vmem:[%s6688] sm:$0xff]
        %v6690 = vld [vmem:[%s6688 + $0x8] sm:$0xff]
        %v6691 = vld [vmem:[%s6688 + $0x10] sm:$0xff]
        %v6692 = vld [vmem:[%s6688 + $0x18] sm:$0xff]
        %v6694 = vrot.slane %v6427, 4
        %v6695 = vrot.slane %v6428, 4
        %v6696 = vsel %vm905, %v6694, %v6695
        %v6697 = vrot.slane %v6429, 4
        %v6698 = vsel %vm905, %v6695, %v6697
        %v6699 = vrot.slane %v6430, 4
        %v6700 = vsel %vm905, %v6697, %v6699
        %v6701 = vsel %vm5989, %v6696, 0
        %v6703 = vsel %vm5989, %v6698, 0
        %v6705 = vsel %vm5989, %v6700, 0
        %6707 = vmatpush.msra.mxu0 0.0
        %6708 = vmatpush.msra.mxu0 0.0
        %6709 = vmatpush.msra.mxu0 0.0
        %6710 = vmatpush.msra.mxu0 0.0
        %6711 = vmatpush.msra.mxu0 0.0
        %6712 = vmatpush.msra.mxu0 0.0
        %6713 = vmatpush.msra.mxu0 0.0
        %6714 = vmatpush.msra.mxu0 0.0
        %6715 = vmatpush.msra.mxu0 0.0
        %6716 = vmatpush.msra.mxu0 0.0
        %6717 = vmatpush.msra.mxu0 0.0
        %6718 = vmatpush.msra.mxu0 0.0
        %6719 = vmatpush.msra.mxu0 %v6692
        %6720 = vmatpush.msra.mxu0 %v6691
        %6721 = vmatpush.msra.mxu0 %v6690
        %6722 = vmatpush.msra.mxu0 %v6689
        %6723 = vmatmul.f32.gmra.mxu0 %v6701
        %v6724 = vpop.f32.mrf.mxu0
        %v6725 = vadd.f32 0.0, %v6724
        %6726 = vmatmul.f32.gmra.mxu0 %v6703
        %v6727 = vpop.f32.mrf.mxu0
        %v6728 = vadd.f32 0.0, %v6727
        %6729 = vmatmul.f32.gmra.mxu0 %v6705
        %v6730 = vpop.f32.mrf.mxu0
        %v6731 = vadd.f32 0.0, %v6730
        %6732 = vdwg.mxu0
        %v6733 = vadd.f32 %v6685, %v6725
        %v6734 = vadd.f32 %v6686, %v6728
        %v6735 = vadd.f32 %v6687, %v6731
        %s6736 = scalar_lea.vmem %s10, 224
        %v6737 = vld [vmem:[%s6736] sm:$0xff]
        %v6738 = vld [vmem:[%s6736 + $0x8] sm:$0xff]
        %v6739 = vld [vmem:[%s6736 + $0x10] sm:$0xff]
        %v6740 = vld [vmem:[%s6736 + $0x18] sm:$0xff]
        %v6741 = vrot.slane %v6427, 5
        %v6742 = vrot.slane %v6428, 5
        %v6743 = vsel %vm2439, %v6741, %v6742
        %v6744 = vrot.slane %v6429, 5
        %v6745 = vsel %vm2439, %v6742, %v6744
        %v6746 = vrot.slane %v6430, 5
        %v6747 = vsel %vm2439, %v6744, %v6746
        %v6748 = vsel %vm5989, %v6743, 0
        %v6750 = vsel %vm5989, %v6745, 0
        %v6752 = vsel %vm5989, %v6747, 0
        %6754 = vmatpush.msra.mxu0 0.0
        %6755 = vmatpush.msra.mxu0 0.0
        %6756 = vmatpush.msra.mxu0 0.0
        %6757 = vmatpush.msra.mxu0 0.0
        %6758 = vmatpush.msra.mxu0 0.0
        %6759 = vmatpush.msra.mxu0 0.0
        %6760 = vmatpush.msra.mxu0 0.0
        %6761 = vmatpush.msra.mxu0 0.0
        %6762 = vmatpush.msra.mxu0 0.0
        %6763 = vmatpush.msra.mxu0 0.0
        %6764 = vmatpush.msra.mxu0 0.0
        %6765 = vmatpush.msra.mxu0 0.0
        %6766 = vmatpush.msra.mxu0 %v6740
        %6767 = vmatpush.msra.mxu0 %v6739
        %6768 = vmatpush.msra.mxu0 %v6738
        %6769 = vmatpush.msra.mxu0 %v6737
        %6770 = vmatmul.f32.gmra.mxu0 %v6748
        %v6771 = vpop.f32.mrf.mxu0
        %v6772 = vadd.f32 0.0, %v6771
        %6773 = vmatmul.f32.gmra.mxu0 %v6750
        %v6774 = vpop.f32.mrf.mxu0
        %v6775 = vadd.f32 0.0, %v6774
        %6776 = vmatmul.f32.gmra.mxu0 %v6752
        %v6777 = vpop.f32.mrf.mxu0
        %v6778 = vadd.f32 0.0, %v6777
        %6779 = vdwg.mxu0
        %v6780 = vadd.f32 %v6733, %v6772
        %v6781 = vadd.f32 %v6734, %v6775
        %v6782 = vadd.f32 %v6735, %v6778
        %s6783 = scalar_lea.vmem %s10, 256
        %v6784 = vld [vmem:[%s6783] sm:$0xff]
        %v6785 = vld [vmem:[%s6783 + $0x8] sm:$0xff]
        %v6786 = vld [vmem:[%s6783 + $0x10] sm:$0xff]
        %v6787 = vld [vmem:[%s6783 + $0x18] sm:$0xff]
        %v6788 = vrot.slane %v6430, 6
        %v6789 = vsel %vm3072, %v6568, %v6788
        %v6790 = vsel %vm5989, %v6789, 0
        %6792 = vmatpush.msra.mxu0 0.0
        %6793 = vmatpush.msra.mxu0 0.0
        %6794 = vmatpush.msra.mxu0 0.0
        %6795 = vmatpush.msra.mxu0 0.0
        %6796 = vmatpush.msra.mxu0 0.0
        %6797 = vmatpush.msra.mxu0 0.0
        %6798 = vmatpush.msra.mxu0 0.0
        %6799 = vmatpush.msra.mxu0 0.0
        %6800 = vmatpush.msra.mxu0 0.0
        %6801 = vmatpush.msra.mxu0 0.0
        %6802 = vmatpush.msra.mxu0 0.0
        %6803 = vmatpush.msra.mxu0 0.0
        %6804 = vmatpush.msra.mxu0 %v6787
        %6805 = vmatpush.msra.mxu0 %v6786
        %6806 = vmatpush.msra.mxu0 %v6785
        %6807 = vmatpush.msra.mxu0 %v6784
        %6808 = vmatmul.f32.gmra.mxu0 %v6572
        %v6809 = vpop.f32.mrf.mxu0
        %v6810 = vadd.f32 0.0, %v6809
        %6811 = vmatmul.f32.gmra.mxu0 %v6574
        %v6812 = vpop.f32.mrf.mxu0
        %v6813 = vadd.f32 0.0, %v6812
        %6814 = vmatmul.f32.gmra.mxu0 %v6790
        %v6815 = vpop.f32.mrf.mxu0
        %v6816 = vadd.f32 0.0, %v6815
        %6817 = vdwg.mxu0
        %v6818 = vadd.f32 %v6780, %v6810
        %v6819 = vadd.f32 %v6781, %v6813
        %v6820 = vadd.f32 %v6782, %v6816
        %v6821 = vmax.f32 %v6818, 0.0
        %v6822 = vmax.f32 %v6819, 0.0
        %v6823 = vmax.f32 %v6820, 0.0
        %v6824 = vld [vmem:[#allocation12] sm:$0xff]
        %vm6825 = vcmask 64512
        %v6827 = vsel %vm6825, %v6821, 0
        %v6830 = vsel %vm6825, %v6822, 0
        %v6833 = vsel %vm6825, %v6823, 0
        %6835 = vmatpush.msra.mxu0 0.0
        %6836 = vmatpush.msra.mxu0 0.0
        %6837 = vmatpush.msra.mxu0 0.0
        %6838 = vmatpush.msra.mxu0 0.0
        %6839 = vmatpush.msra.mxu0 0.0
        %6840 = vmatpush.msra.mxu0 0.0
        %6841 = vmatpush.msra.mxu0 0.0
        %6842 = vmatpush.msra.mxu0 0.0
        %6843 = vmatpush.msra.mxu0 0.0
        %6844 = vmatpush.msra.mxu0 0.0
        %6845 = vmatpush.msra.mxu0 0.0
        %6846 = vmatpush.msra.mxu0 0.0
        %6847 = vmatpush.msra.mxu0 0.0
        %6848 = vmatpush.msra.mxu0 0.0
        %6849 = vmatpush.msra.mxu0 0.0
        %6850 = vmatpush.msra.mxu0 %v6824
        %6851 = vmatmul.f32.gmra.mxu0 %v6827
        %v6852 = vpop.f32.mrf.mxu0
        %v6853 = vadd.f32 0.0, %v6852
        %6854 = vmatmul.f32.gmra.mxu0 %v6830
        %v6855 = vpop.f32.mrf.mxu0
        %v6856 = vadd.f32 0.0, %v6855
        %6857 = vmatmul.f32.gmra.mxu0 %v6833
        %v6858 = vpop.f32.mrf.mxu0
        %v6859 = vadd.f32 0.0, %v6858
        %6860 = vdwg.mxu0
        %v6862 = vsel %vm1220, %v6859, 0
        %6864 = vmatpush.msra.mxu0 0.0
        %6865 = vmatpush.msra.mxu0 0.0
        %6866 = vmatpush.msra.mxu0 0.0
        %6867 = vmatpush.msra.mxu0 0.0
        %6868 = vmatpush.msra.mxu0 0.0
        %6869 = vmatpush.msra.mxu0 0.0
        %6870 = vmatpush.msra.mxu0 0.0
        %6871 = vmatpush.msra.mxu0 0.0
        %6872 = vmatpush.msra.mxu0 0.0
        %6873 = vmatpush.msra.mxu0 0.0
        %6874 = vmatpush.msra.mxu0 0.0
        %6875 = vmatpush.msra.mxu0 0.0
        %6876 = vmatpush.msra.mxu0 0.0
        %6877 = vmatpush.msra.mxu0 %v6862
        %6878 = vmatpush.msra.mxu0 %v6856
        %6879 = vmatpush.msra.mxu0 %v6853
        %6880 = vmatmul.f32.gmra.mxu0 %v6377
        %v6881 = vpop.f32.mrf.mxu0
        %v6882 = vadd.f32 0.0, %v6881
        %6883 = vmatmul.f32.gmra.mxu0 %v6380
        %v6884 = vpop.f32.mrf.mxu0
        %v6885 = vadd.f32 0.0, %v6884
        %6886 = vmatmul.f32.gmra.mxu0 %v6383
        %v6887 = vpop.f32.mrf.mxu0
        %v6888 = vadd.f32 0.0, %v6887
        %6889 = vmatmul.f32.gmra.mxu0 %v6386
        %v6890 = vpop.f32.mrf.mxu0
        %v6891 = vadd.f32 0.0, %v6890
        %6892 = vmatmul.f32.gmra.mxu0 %v6389
        %v6893 = vpop.f32.mrf.mxu0
        %v6894 = vadd.f32 0.0, %v6893
        %6895 = vdwg.mxu0
        %v6896 = vadd.f32 %v6412, %v6882
        %v6897 = vadd.f32 %v6415, %v6885
        %v6898 = vadd.f32 %v6418, %v6888
        %v6899 = vadd.f32 %v6421, %v6891
        %v6900 = vadd.f32 %v6424, %v6894
        %v6901 = vmax.f32 %v6896, 0.0
        %v6902 = vmax.f32 %v6897, 0.0
        %v6903 = vmax.f32 %v6898, 0.0
        %v6904 = vmax.f32 %v6899, 0.0
        %v6905 = vmax.f32 %v6900, 0.0
        %v6906 = vld [vmem:[%s12] sm:$0xff]
        %v6907 = vld [vmem:[%s12 + $0x8] sm:$0xff]
        %v6908 = vld [vmem:[%s12 + $0x10] sm:$0xff]
        %v6909 = vld [vmem:[%s12 + $0x18] sm:$0xff]
        %s6910 = scalar_lea.vmem %s12, 32
        %v6911 = vld [vmem:[%s6910] sm:$0xff]
        %v6912 = vld [vmem:[%s6910 + $0x8] sm:$0xff]
        %v6913 = vld [vmem:[%s6910 + $0x10] sm:$0xff]
        %v6914 = vld [vmem:[%s6910 + $0x18] sm:$0xff]
        %v6918 = vrot.slane %v6901, 1
        %v6919 = vrot.slane %v6902, 1
        %v6920 = vsel %vm768, %v6918, %v6919
        %v6921 = vrot.slane %v6903, 1
        %v6922 = vsel %vm768, %v6919, %v6921
        %v6923 = vsel %vm5989, %v6920, 0
        %v6925 = vsel %vm5989, %v6922, 0
        %v6927 = vsel %vm5989, %v6921, 0
        %6929 = vmatpush.msra.mxu0 0.0
        %6930 = vmatpush.msra.mxu0 0.0
        %6931 = vmatpush.msra.mxu0 0.0
        %6932 = vmatpush.msra.mxu0 0.0
        %6933 = vmatpush.msra.mxu0 0.0
        %6934 = vmatpush.msra.mxu0 0.0
        %6935 = vmatpush.msra.mxu0 0.0
        %6936 = vmatpush.msra.mxu0 0.0
        %6937 = vmatpush.msra.mxu0 0.0
        %6938 = vmatpush.msra.mxu0 0.0
        %6939 = vmatpush.msra.mxu0 0.0
        %6940 = vmatpush.msra.mxu0 0.0
        %6941 = vmatpush.msra.mxu0 %v6914
        %6942 = vmatpush.msra.mxu0 %v6913
        %6943 = vmatpush.msra.mxu0 %v6912
        %6944 = vmatpush.msra.mxu0 %v6911
        %6945 = vmatmul.f32.gmra.mxu0 %v6923
        %v6946 = vpop.f32.mrf.mxu0
        %v6947 = vadd.f32 0.0, %v6946
        %6948 = vmatmul.f32.gmra.mxu0 %v6925
        %v6949 = vpop.f32.mrf.mxu0
        %v6950 = vadd.f32 0.0, %v6949
        %6951 = vmatmul.f32.gmra.mxu0 %v6927
        %v6952 = vpop.f32.mrf.mxu0
        %v6953 = vadd.f32 0.0, %v6952
        %6954 = vdwg.mxu0
        %v6955 = vsel %vm5989, %v6901, 0
        %v6957 = vsel %vm5989, %v6902, 0
        %v6959 = vsel %vm5989, %v6903, 0
        %6961 = vmatpush.msra.mxu0 0.0
        %6962 = vmatpush.msra.mxu0 0.0
        %6963 = vmatpush.msra.mxu0 0.0
        %6964 = vmatpush.msra.mxu0 0.0
        %6965 = vmatpush.msra.mxu0 0.0
        %6966 = vmatpush.msra.mxu0 0.0
        %6967 = vmatpush.msra.mxu0 0.0
        %6968 = vmatpush.msra.mxu0 0.0
        %6969 = vmatpush.msra.mxu0 0.0
        %6970 = vmatpush.msra.mxu0 0.0
        %6971 = vmatpush.msra.mxu0 0.0
        %6972 = vmatpush.msra.mxu0 0.0
        %6973 = vmatpush.msra.mxu0 %v6909
        %6974 = vmatpush.msra.mxu0 %v6908
        %6975 = vmatpush.msra.mxu0 %v6907
        %6976 = vmatpush.msra.mxu0 %v6906
        %6977 = vmatmul.f32.gmra.mxu0 %v6955
        %v6978 = vpop.f32.mrf.mxu0
        %v6979 = vadd.f32 %v6947, %v6978
        %6980 = vmatmul.f32.gmra.mxu0 %v6957
        %v6981 = vpop.f32.mrf.mxu0
        %v6982 = vadd.f32 %v6950, %v6981
        %6983 = vmatmul.f32.gmra.mxu0 %v6959
        %v6984 = vpop.f32.mrf.mxu0
        %v6985 = vadd.f32 %v6953, %v6984
        %6986 = vdwg.mxu0
        %s6987 = scalar_lea.vmem %s12, 64
        %v6988 = vld [vmem:[%s6987] sm:$0xff]
        %v6989 = vld [vmem:[%s6987 + $0x8] sm:$0xff]
        %v6990 = vld [vmem:[%s6987 + $0x10] sm:$0xff]
        %v6991 = vld [vmem:[%s6987 + $0x18] sm:$0xff]
        %v6992 = vrot.slane %v6901, 2
        %v6993 = vrot.slane %v6902, 2
        %v6994 = vsel %vm1220, %v6992, %v6993
        %v6995 = vrot.slane %v6903, 2
        %v6996 = vsel %vm1220, %v6993, %v6995
        %v6997 = vsel %vm5989, %v6994, 0
        %v6999 = vsel %vm5989, %v6996, 0
        %v7001 = vsel %vm5989, %v6995, 0
        %7003 = vmatpush.msra.mxu0 0.0
        %7004 = vmatpush.msra.mxu0 0.0
        %7005 = vmatpush.msra.mxu0 0.0
        %7006 = vmatpush.msra.mxu0 0.0
        %7007 = vmatpush.msra.mxu0 0.0
        %7008 = vmatpush.msra.mxu0 0.0
        %7009 = vmatpush.msra.mxu0 0.0
        %7010 = vmatpush.msra.mxu0 0.0
        %7011 = vmatpush.msra.mxu0 0.0
        %7012 = vmatpush.msra.mxu0 0.0
        %7013 = vmatpush.msra.mxu0 0.0
        %7014 = vmatpush.msra.mxu0 0.0
        %7015 = vmatpush.msra.mxu0 %v6991
        %7016 = vmatpush.msra.mxu0 %v6990
        %7017 = vmatpush.msra.mxu0 %v6989
        %7018 = vmatpush.msra.mxu0 %v6988
        %7019 = vmatmul.f32.gmra.mxu0 %v6997
        %v7020 = vpop.f32.mrf.mxu0
        %v7021 = vadd.f32 0.0, %v7020
        %7022 = vmatmul.f32.gmra.mxu0 %v6999
        %v7023 = vpop.f32.mrf.mxu0
        %v7024 = vadd.f32 0.0, %v7023
        %7025 = vmatmul.f32.gmra.mxu0 %v7001
        %v7026 = vpop.f32.mrf.mxu0
        %v7027 = vadd.f32 0.0, %v7026
        %7028 = vdwg.mxu0
        %v7029 = vadd.f32 %v6979, %v7021
        %v7030 = vadd.f32 %v6982, %v7024
        %v7031 = vadd.f32 %v6985, %v7027
        %s7032 = scalar_lea.vmem %s12, 96
        %v7033 = vld [vmem:[%s7032] sm:$0xff]
        %v7034 = vld [vmem:[%s7032 + $0x8] sm:$0xff]
        %v7035 = vld [vmem:[%s7032 + $0x10] sm:$0xff]
        %v7036 = vld [vmem:[%s7032 + $0x18] sm:$0xff]
        %v7038 = vrot.slane %v6901, 6
        %v7039 = vrot.slane %v6902, 6
        %v7040 = vsel %vm3072, %v7038, %v7039
        %v7041 = vrot.slane %v6903, 6
        %v7042 = vsel %vm3072, %v7039, %v7041
        %v7043 = vrot.slane %v6904, 6
        %v7044 = vsel %vm3072, %v7041, %v7043
        %v7045 = vsel %vm5989, %v7040, 0
        %v7047 = vsel %vm5989, %v7042, 0
        %v7049 = vsel %vm5989, %v7044, 0
        %7051 = vmatpush.msra.mxu0 0.0
        %7052 = vmatpush.msra.mxu0 0.0
        %7053 = vmatpush.msra.mxu0 0.0
        %7054 = vmatpush.msra.mxu0 0.0
        %7055 = vmatpush.msra.mxu0 0.0
        %7056 = vmatpush.msra.mxu0 0.0
        %7057 = vmatpush.msra.mxu0 0.0
        %7058 = vmatpush.msra.mxu0 0.0
        %7059 = vmatpush.msra.mxu0 0.0
        %7060 = vmatpush.msra.mxu0 0.0
        %7061 = vmatpush.msra.mxu0 0.0
        %7062 = vmatpush.msra.mxu0 0.0
        %7063 = vmatpush.msra.mxu0 %v7036
        %7064 = vmatpush.msra.mxu0 %v7035
        %7065 = vmatpush.msra.mxu0 %v7034
        %7066 = vmatpush.msra.mxu0 %v7033
        %7067 = vmatmul.f32.gmra.mxu0 %v7045
        %v7068 = vpop.f32.mrf.mxu0
        %v7069 = vadd.f32 0.0, %v7068
        %7070 = vmatmul.f32.gmra.mxu0 %v7047
        %v7071 = vpop.f32.mrf.mxu0
        %v7072 = vadd.f32 0.0, %v7071
        %7073 = vmatmul.f32.gmra.mxu0 %v7049
        %v7074 = vpop.f32.mrf.mxu0
        %v7075 = vadd.f32 0.0, %v7074
        %7076 = vdwg.mxu0
        %v7077 = vadd.f32 %v7029, %v7069
        %v7078 = vadd.f32 %v7030, %v7072
        %v7079 = vadd.f32 %v7031, %v7075
        %s7080 = scalar_lea.vmem %s12, 128
        %v7081 = vld [vmem:[%s7080] sm:$0xff]
        %v7082 = vld [vmem:[%s7080 + $0x8] sm:$0xff]
        %v7083 = vld [vmem:[%s7080 + $0x10] sm:$0xff]
        %v7084 = vld [vmem:[%s7080 + $0x18] sm:$0xff]
        %v7085 = vrot.slane %v6901, 7
        %v7086 = vrot.slane %v6902, 7
        %v7087 = vsel %vm3368, %v7085, %v7086
        %v7088 = vrot.slane %v6903, 7
        %v7089 = vsel %vm3368, %v7086, %v7088
        %v7090 = vrot.slane %v6904, 7
        %v7091 = vsel %vm3368, %v7088, %v7090
        %v7092 = vsel %vm5989, %v7087, 0
        %v7094 = vsel %vm5989, %v7089, 0
        %v7096 = vsel %vm5989, %v7091, 0
        %7098 = vmatpush.msra.mxu0 0.0
        %7099 = vmatpush.msra.mxu0 0.0
        %7100 = vmatpush.msra.mxu0 0.0
        %7101 = vmatpush.msra.mxu0 0.0
        %7102 = vmatpush.msra.mxu0 0.0
        %7103 = vmatpush.msra.mxu0 0.0
        %7104 = vmatpush.msra.mxu0 0.0
        %7105 = vmatpush.msra.mxu0 0.0
        %7106 = vmatpush.msra.mxu0 0.0
        %7107 = vmatpush.msra.mxu0 0.0
        %7108 = vmatpush.msra.mxu0 0.0
        %7109 = vmatpush.msra.mxu0 0.0
        %7110 = vmatpush.msra.mxu0 %v7084
        %7111 = vmatpush.msra.mxu0 %v7083
        %7112 = vmatpush.msra.mxu0 %v7082
        %7113 = vmatpush.msra.mxu0 %v7081
        %7114 = vmatmul.f32.gmra.mxu0 %v7092
        %v7115 = vpop.f32.mrf.mxu0
        %v7116 = vadd.f32 0.0, %v7115
        %7117 = vmatmul.f32.gmra.mxu0 %v7094
        %v7118 = vpop.f32.mrf.mxu0
        %v7119 = vadd.f32 0.0, %v7118
        %7120 = vmatmul.f32.gmra.mxu0 %v7096
        %v7121 = vpop.f32.mrf.mxu0
        %v7122 = vadd.f32 0.0, %v7121
        %7123 = vdwg.mxu0
        %v7124 = vadd.f32 %v7077, %v7116
        %v7125 = vadd.f32 %v7078, %v7119
        %v7126 = vadd.f32 %v7079, %v7122
        %s7127 = scalar_lea.vmem %s12, 160
        %v7128 = vld [vmem:[%s7127] sm:$0xff]
        %v7129 = vld [vmem:[%s7127 + $0x8] sm:$0xff]
        %v7130 = vld [vmem:[%s7127 + $0x10] sm:$0xff]
        %v7131 = vld [vmem:[%s7127 + $0x18] sm:$0xff]
        %v7132 = vsel %vm5989, %v6904, 0
        %7134 = vmatpush.msra.mxu0 0.0
        %7135 = vmatpush.msra.mxu0 0.0
        %7136 = vmatpush.msra.mxu0 0.0
        %7137 = vmatpush.msra.mxu0 0.0
        %7138 = vmatpush.msra.mxu0 0.0
        %7139 = vmatpush.msra.mxu0 0.0
        %7140 = vmatpush.msra.mxu0 0.0
        %7141 = vmatpush.msra.mxu0 0.0
        %7142 = vmatpush.msra.mxu0 0.0
        %7143 = vmatpush.msra.mxu0 0.0
        %7144 = vmatpush.msra.mxu0 0.0
        %7145 = vmatpush.msra.mxu0 0.0
        %7146 = vmatpush.msra.mxu0 %v7131
        %7147 = vmatpush.msra.mxu0 %v7130
        %7148 = vmatpush.msra.mxu0 %v7129
        %7149 = vmatpush.msra.mxu0 %v7128
        %7150 = vmatmul.f32.gmra.mxu0 %v6957
        %v7151 = vpop.f32.mrf.mxu0
        %v7152 = vadd.f32 0.0, %v7151
        %7153 = vmatmul.f32.gmra.mxu0 %v6959
        %v7154 = vpop.f32.mrf.mxu0
        %v7155 = vadd.f32 0.0, %v7154
        %7156 = vmatmul.f32.gmra.mxu0 %v7132
        %v7157 = vpop.f32.mrf.mxu0
        %v7158 = vadd.f32 0.0, %v7157
        %7159 = vdwg.mxu0
        %v7160 = vadd.f32 %v7124, %v7152
        %v7161 = vadd.f32 %v7125, %v7155
        %v7162 = vadd.f32 %v7126, %v7158
        %s7163 = scalar_lea.vmem %s12, 192
        %v7164 = vld [vmem:[%s7163] sm:$0xff]
        %v7165 = vld [vmem:[%s7163 + $0x8] sm:$0xff]
        %v7166 = vld [vmem:[%s7163 + $0x10] sm:$0xff]
        %v7167 = vld [vmem:[%s7163 + $0x18] sm:$0xff]
        %v7169 = vrot.slane %v6902, 4
        %v7170 = vrot.slane %v6903, 4
        %v7171 = vsel %vm905, %v7169, %v7170
        %v7172 = vrot.slane %v6904, 4
        %v7173 = vsel %vm905, %v7170, %v7172
        %v7174 = vrot.slane %v6905, 4
        %v7175 = vsel %vm905, %v7172, %v7174
        %v7176 = vsel %vm5989, %v7171, 0
        %v7178 = vsel %vm5989, %v7173, 0
        %v7180 = vsel %vm5989, %v7175, 0
        %7182 = vmatpush.msra.mxu0 0.0
        %7183 = vmatpush.msra.mxu0 0.0
        %7184 = vmatpush.msra.mxu0 0.0
        %7185 = vmatpush.msra.mxu0 0.0
        %7186 = vmatpush.msra.mxu0 0.0
        %7187 = vmatpush.msra.mxu0 0.0
        %7188 = vmatpush.msra.mxu0 0.0
        %7189 = vmatpush.msra.mxu0 0.0
        %7190 = vmatpush.msra.mxu0 0.0
        %7191 = vmatpush.msra.mxu0 0.0
        %7192 = vmatpush.msra.mxu0 0.0
        %7193 = vmatpush.msra.mxu0 0.0
        %7194 = vmatpush.msra.mxu0 %v7167
        %7195 = vmatpush.msra.mxu0 %v7166
        %7196 = vmatpush.msra.mxu0 %v7165
        %7197 = vmatpush.msra.mxu0 %v7164
        %7198 = vmatmul.f32.gmra.mxu0 %v7176
        %v7199 = vpop.f32.mrf.mxu0
        %v7200 = vadd.f32 0.0, %v7199
        %7201 = vmatmul.f32.gmra.mxu0 %v7178
        %v7202 = vpop.f32.mrf.mxu0
        %v7203 = vadd.f32 0.0, %v7202
        %7204 = vmatmul.f32.gmra.mxu0 %v7180
        %v7205 = vpop.f32.mrf.mxu0
        %v7206 = vadd.f32 0.0, %v7205
        %7207 = vdwg.mxu0
        %v7208 = vadd.f32 %v7160, %v7200
        %v7209 = vadd.f32 %v7161, %v7203
        %v7210 = vadd.f32 %v7162, %v7206
        %s7211 = scalar_lea.vmem %s12, 224
        %v7212 = vld [vmem:[%s7211] sm:$0xff]
        %v7213 = vld [vmem:[%s7211 + $0x8] sm:$0xff]
        %v7214 = vld [vmem:[%s7211 + $0x10] sm:$0xff]
        %v7215 = vld [vmem:[%s7211 + $0x18] sm:$0xff]
        %v7216 = vrot.slane %v6902, 5
        %v7217 = vrot.slane %v6903, 5
        %v7218 = vsel %vm2439, %v7216, %v7217
        %v7219 = vrot.slane %v6904, 5
        %v7220 = vsel %vm2439, %v7217, %v7219
        %v7221 = vrot.slane %v6905, 5
        %v7222 = vsel %vm2439, %v7219, %v7221
        %v7223 = vsel %vm5989, %v7218, 0
        %v7225 = vsel %vm5989, %v7220, 0
        %v7227 = vsel %vm5989, %v7222, 0
        %7229 = vmatpush.msra.mxu0 0.0
        %7230 = vmatpush.msra.mxu0 0.0
        %7231 = vmatpush.msra.mxu0 0.0
        %7232 = vmatpush.msra.mxu0 0.0
        %7233 = vmatpush.msra.mxu0 0.0
        %7234 = vmatpush.msra.mxu0 0.0
        %7235 = vmatpush.msra.mxu0 0.0
        %7236 = vmatpush.msra.mxu0 0.0
        %7237 = vmatpush.msra.mxu0 0.0
        %7238 = vmatpush.msra.mxu0 0.0
        %7239 = vmatpush.msra.mxu0 0.0
        %7240 = vmatpush.msra.mxu0 0.0
        %7241 = vmatpush.msra.mxu0 %v7215
        %7242 = vmatpush.msra.mxu0 %v7214
        %7243 = vmatpush.msra.mxu0 %v7213
        %7244 = vmatpush.msra.mxu0 %v7212
        %7245 = vmatmul.f32.gmra.mxu0 %v7223
        %v7246 = vpop.f32.mrf.mxu0
        %v7247 = vadd.f32 0.0, %v7246
        %7248 = vmatmul.f32.gmra.mxu0 %v7225
        %v7249 = vpop.f32.mrf.mxu0
        %v7250 = vadd.f32 0.0, %v7249
        %7251 = vmatmul.f32.gmra.mxu0 %v7227
        %v7252 = vpop.f32.mrf.mxu0
        %v7253 = vadd.f32 0.0, %v7252
        %7254 = vdwg.mxu0
        %v7255 = vadd.f32 %v7208, %v7247
        %v7256 = vadd.f32 %v7209, %v7250
        %v7257 = vadd.f32 %v7210, %v7253
        %s7258 = scalar_lea.vmem %s12, 256
        %v7259 = vld [vmem:[%s7258] sm:$0xff]
        %v7260 = vld [vmem:[%s7258 + $0x8] sm:$0xff]
        %v7261 = vld [vmem:[%s7258 + $0x10] sm:$0xff]
        %v7262 = vld [vmem:[%s7258 + $0x18] sm:$0xff]
        %v7263 = vrot.slane %v6905, 6
        %v7264 = vsel %vm3072, %v7043, %v7263
        %v7265 = vsel %vm5989, %v7264, 0
        %7267 = vmatpush.msra.mxu0 0.0
        %7268 = vmatpush.msra.mxu0 0.0
        %7269 = vmatpush.msra.mxu0 0.0
        %7270 = vmatpush.msra.mxu0 0.0
        %7271 = vmatpush.msra.mxu0 0.0
        %7272 = vmatpush.msra.mxu0 0.0
        %7273 = vmatpush.msra.mxu0 0.0
        %7274 = vmatpush.msra.mxu0 0.0
        %7275 = vmatpush.msra.mxu0 0.0
        %7276 = vmatpush.msra.mxu0 0.0
        %7277 = vmatpush.msra.mxu0 0.0
        %7278 = vmatpush.msra.mxu0 0.0
        %7279 = vmatpush.msra.mxu0 %v7262
        %7280 = vmatpush.msra.mxu0 %v7261
        %7281 = vmatpush.msra.mxu0 %v7260
        %7282 = vmatpush.msra.mxu0 %v7259
        %7283 = vmatmul.f32.gmra.mxu0 %v7047
        %v7284 = vpop.f32.mrf.mxu0
        %v7285 = vadd.f32 0.0, %v7284
        %7286 = vmatmul.f32.gmra.mxu0 %v7049
        %v7287 = vpop.f32.mrf.mxu0
        %v7288 = vadd.f32 0.0, %v7287
        %7289 = vmatmul.f32.gmra.mxu0 %v7265
        %v7290 = vpop.f32.mrf.mxu0
        %v7291 = vadd.f32 0.0, %v7290
        %7292 = vdwg.mxu0
        %v7293 = vadd.f32 %v7255, %v7285
        %v7294 = vadd.f32 %v7256, %v7288
        %v7295 = vadd.f32 %v7257, %v7291
        %v7296 = vmax.f32 %v7293, 0.0
        %v7297 = vmax.f32 %v7294, 0.0
        %v7298 = vmax.f32 %v7295, 0.0
        %v7299 = vld [vmem:[%s13] sm:$0xff]
        %v7301 = vsel %vm6825, %v7296, 0
        %v7304 = vsel %vm6825, %v7297, 0
        %v7307 = vsel %vm6825, %v7298, 0
        %7309 = vmatpush.msra.mxu0 0.0
        %7310 = vmatpush.msra.mxu0 0.0
        %7311 = vmatpush.msra.mxu0 0.0
        %7312 = vmatpush.msra.mxu0 0.0
        %7313 = vmatpush.msra.mxu0 0.0
        %7314 = vmatpush.msra.mxu0 0.0
        %7315 = vmatpush.msra.mxu0 0.0
        %7316 = vmatpush.msra.mxu0 0.0
        %7317 = vmatpush.msra.mxu0 0.0
        %7318 = vmatpush.msra.mxu0 0.0
        %7319 = vmatpush.msra.mxu0 0.0
        %7320 = vmatpush.msra.mxu0 0.0
        %7321 = vmatpush.msra.mxu0 0.0
        %7322 = vmatpush.msra.mxu0 0.0
        %7323 = vmatpush.msra.mxu0 0.0
        %7324 = vmatpush.msra.mxu0 %v7299
        %7325 = vmatmul.f32.gmra.mxu0 %v7301
        %v7326 = vpop.f32.mrf.mxu0
        %v7327 = vadd.f32 0.0, %v7326
        %7328 = vmatmul.f32.gmra.mxu0 %v7304
        %v7329 = vpop.f32.mrf.mxu0
        %v7330 = vadd.f32 0.0, %v7329
        %7331 = vmatmul.f32.gmra.mxu0 %v7307
        %v7332 = vpop.f32.mrf.mxu0
        %v7333 = vadd.f32 0.0, %v7332
        %7334 = vdwg.mxu0
        %v7336 = vsel %vm1220, %v7333, 0
        %7338 = vmatpush.msra.mxu0 0.0
        %7339 = vmatpush.msra.mxu0 0.0
        %7340 = vmatpush.msra.mxu0 0.0
        %7341 = vmatpush.msra.mxu0 0.0
        %7342 = vmatpush.msra.mxu0 0.0
        %7343 = vmatpush.msra.mxu0 0.0
        %7344 = vmatpush.msra.mxu0 0.0
        %7345 = vmatpush.msra.mxu0 0.0
        %7346 = vmatpush.msra.mxu0 0.0
        %7347 = vmatpush.msra.mxu0 0.0
        %7348 = vmatpush.msra.mxu0 0.0
        %7349 = vmatpush.msra.mxu0 0.0
        %7350 = vmatpush.msra.mxu0 0.0
        %7351 = vmatpush.msra.mxu0 %v7336
        %7352 = vmatpush.msra.mxu0 %v7330
        %7353 = vmatpush.msra.mxu0 %v7327
        %7354 = vmatmul.f32.gmra.mxu0 %v6377
        %v7355 = vpop.f32.mrf.mxu0
        %v7356 = vadd.f32 0.0, %v7355
        %7357 = vmatmul.f32.gmra.mxu0 %v6380
        %v7358 = vpop.f32.mrf.mxu0
        %v7359 = vadd.f32 0.0, %v7358
        %7360 = vmatmul.f32.gmra.mxu0 %v6383
        %v7361 = vpop.f32.mrf.mxu0
        %v7362 = vadd.f32 0.0, %v7361
        %7363 = vmatmul.f32.gmra.mxu0 %v6386
        %v7364 = vpop.f32.mrf.mxu0
        %v7365 = vadd.f32 0.0, %v7364
        %7366 = vmatmul.f32.gmra.mxu0 %v6389
        %v7367 = vpop.f32.mrf.mxu0
        %v7368 = vadd.f32 0.0, %v7367
        %7369 = vdwg.mxu0
        %v7370 = vadd.f32 %v6896, %v7356
        %v7371 = vadd.f32 %v6897, %v7359
        %v7372 = vadd.f32 %v6898, %v7362
        %v7373 = vadd.f32 %v6899, %v7365
        %v7374 = vadd.f32 %v6900, %v7368
        %v7375 = vmax.f32 %v7370, 0.0
        %v7376 = vmax.f32 %v7371, 0.0
        %v7377 = vmax.f32 %v7372, 0.0
        %v7378 = vmax.f32 %v7373, 0.0
        %v7379 = vmax.f32 %v7374, 0.0
        %v7380 = vld [vmem:[#allocation13] sm:$0xff]
        %v7381 = vld [vmem:[#allocation13 + $0x8] sm:$0xff]
        %vm7382 = vcmask 293888
        %v7384 = vsel %vm7382, %v7380, 0
        %v7387 = vsel %vm7382, %v7381, 0
        %v7390 = vsel %vm905, %v7379, 0
        %7392 = vmatpush.msra.mxu0 0.0
        %7393 = vmatpush.msra.mxu0 0.0
        %7394 = vmatpush.msra.mxu0 0.0
        %7395 = vmatpush.msra.mxu0 0.0
        %7396 = vmatpush.msra.mxu0 0.0
        %7397 = vmatpush.msra.mxu0 0.0
        %7398 = vmatpush.msra.mxu0 0.0
        %7399 = vmatpush.msra.mxu0 0.0
        %7400 = vmatpush.msra.mxu0 0.0
        %7401 = vmatpush.msra.mxu0 0.0
        %7402 = vmatpush.msra.mxu0 0.0
        %7403 = vmatpush.msra.mxu0 %v7390
        %7404 = vmatpush.msra.mxu0 %v7378
        %7405 = vmatpush.msra.mxu0 %v7377
        %7406 = vmatpush.msra.mxu0 %v7376
        %7407 = vmatpush.msra.mxu0 %v7375
        %7408 = vmatmul.f32.gmra.mxu0 %v7384
        %v7409 = vpop.f32.mrf.mxu0
        %v7410 = vadd.f32 0.0, %v7409
        %7411 = vmatmul.f32.gmra.mxu0 %v7387
        %v7412 = vpop.f32.mrf.mxu0
        %v7413 = vadd.f32 0.0, %v7412
        %7414 = vdwg.mxu0
        %v7415 = vld [vmem:[#allocation15] sm:$0xff]
        %v7416 = vld [vmem:[#allocation15 + $0x8] sm:$0xff]
        %v7417 = vld [vmem:[#allocation15 + $0x10] sm:$0xff]
        %v7418 = vld [vmem:[#allocation15 + $0x18] sm:$0xff]
        %v7419 = vld [vmem:[%s16] sm:$0x1]
        %v7421 = vperm.slane %v7419, 0
        %v7424 = vsel %vm5989, %v7410, 0
        %v7427 = vsel %vm5989, %v7413, 0
        %7429 = vmatpush.msra.mxu0 0.0
        %7430 = vmatpush.msra.mxu0 0.0
        %7431 = vmatpush.msra.mxu0 0.0
        %7432 = vmatpush.msra.mxu0 0.0
        %7433 = vmatpush.msra.mxu0 0.0
        %7434 = vmatpush.msra.mxu0 0.0
        %7435 = vmatpush.msra.mxu0 0.0
        %7436 = vmatpush.msra.mxu0 0.0
        %7437 = vmatpush.msra.mxu0 0.0
        %7438 = vmatpush.msra.mxu0 0.0
        %7439 = vmatpush.msra.mxu0 0.0
        %7440 = vmatpush.msra.mxu0 0.0
        %7441 = vmatpush.msra.mxu0 %v7418
        %7442 = vmatpush.msra.mxu0 %v7417
        %7443 = vmatpush.msra.mxu0 %v7416
        %7444 = vmatpush.msra.mxu0 %v7415
        %7445 = vmatmul.f32.gmra.mxu0 %v7424
        %v7446 = vpop.f32.mrf.mxu0
        %v7447 = vadd.f32 %v7421, %v7446
        %7448 = vmatmul.f32.gmra.mxu0 %v7427
        %v7449 = vpop.f32.mrf.mxu0
        %v7450 = vadd.f32 %v7421, %v7449
        %7451 = vdwg.mxu0
        %7452 = vxpose.xlu0.b32.start [1/16] %v7447, 128
        %7453 = vxpose.xlu0.b32.cont [2/16] %v7450, 128
        %7454 = vxpose.xlu0.b32.cont [3/16] 0.0, 128
        %7455 = vxpose.xlu0.b32.cont [4/16] 0.0, 128
        %7456 = vxpose.xlu0.b32.cont [5/16] 0.0, 128
        %7457 = vxpose.xlu0.b32.cont [6/16] 0.0, 128
        %7458 = vxpose.xlu0.b32.cont [7/16] 0.0, 128
        %7459 = vxpose.xlu0.b32.cont [8/16] 0.0, 128
        %7460 = vxpose.xlu0.b32.cont [9/16] 0.0, 128
        %7461 = vxpose.xlu0.b32.cont [10/16] 0.0, 128
        %7462 = vxpose.xlu0.b32.cont [11/16] 0.0, 128
        %7463 = vxpose.xlu0.b32.cont [12/16] 0.0, 128
        %7464 = vxpose.xlu0.b32.cont [13/16] 0.0, 128
        %7465 = vxpose.xlu0.b32.cont [14/16] 0.0, 128
        %7466 = vxpose.xlu0.b32.cont [15/16] 0.0, 128
        %7467 = vxpose.xlu0.b32.end [16/16] 0.0, 128
        %v7468 = vpop.trf.xlu0
        %v7469 = vpop.trf.xlu0
        %v7470 = vpop.trf.xlu0
        %v7471 = vpop.trf.xlu0
        %v7472 = vpop.trf.xlu0
        %v7473 = vpop.trf.xlu0
        %v7474 = vpop.trf.xlu0
        %v7475 = vpop.trf.xlu0
        %v7476 = vpop.trf.xlu0
        %v7477 = vpop.trf.xlu0
        %v7478 = vpop.trf.xlu0
        %v7479 = vpop.trf.xlu0
        %v7480 = vpop.trf.xlu0
        %v7481 = vpop.trf.xlu0
        %v7482 = vpop.trf.xlu0
        %v7483 = vpop.trf.xlu0
        %7484 = vst.msk [vmem:[%s689] sm:$0xff] %vm4709, %v7468
        %7485 = vst.msk [vmem:[%s689 + $0x8] sm:$0xff] %vm4709, %v7469
        %p7486 = scmp.lt.s32.totalorder %s33, 1
        %s7487 = scalar_select %p7486, %s33, 1
        %s7488 = smul.addr %s7487, 2
        %s7489 = smul.addr %s7488, 8
        %s7490 = scalar_lea.vmem %s17, %s7489
        // Predicated region
        $region125: #{_lambda_.1} parent=87 // pred_check
          %p7491 = pneg %p413
        $region126: #{_lambda_.1} parent=87 // pred_check_branch
          %7493 = sbr.rel (%p7491) target = $region128
        $region127: #{_lambda_.1} parent=87 // pred_region
          _
        $region128: #{_lambda_.1} parent=87 // pred_fallthru
          _
      $region88: #{_lambda_.1} parent=5 // pred_fallthru
        _
      %p7494 = scmp.le.s32.totalorder 2, %s28
      // Predicated region
      $region129: #{_lambda_.1} parent=5 // pred_check
        %p7495 = pneg %p7494
      $region130: #{_lambda_.1} parent=5 // pred_check_branch
        %7497 = sbr.rel (%p7495) target = $region132
      $region131: #{_lambda_.1} parent=5 // pred_region
        %s7498 = ssub.s32 %s28, 2
        // Predicated region
        $region133: #{_lambda_.1} parent=131 // pred_check
          %p7499 = pneg %p419
        $region134: #{_lambda_.1} parent=131 // pred_check_branch
          %7501 = sbr.rel (%p7499) target = $region136
        $region135: #{_lambda_.1} parent=131 // pred_region
          %p7502 = scmp.lt.s32.totalorder %s34, 1
          %s7503 = scalar_select %p7502, %s34, 1
          %s7504 = smul.addr %s7503, 2
          %s7505 = smul.addr %s7504, 8
          %s7506 = scalar_lea.vmem %s17, %s7505
        $region136: #{_lambda_.1} parent=131 // pred_fallthru
          _
      $region132: #{_lambda_.1} parent=5 // pred_fallthru
        _
    $region6: #{_lambda_.1} parent=1 // loop_footer
      %s32 = sadd.s32 1, %s28
    $region7: #{_lambda_.1} parent=1 // loop_footer_branch
      %27 = sbr.rel target = $region3
    $region8: #{_lambda_.1} parent=1 // loop_exit
      _
    %7507 = vsyncpa [#allocation3], 1
    %s7508 = scalar_lea.sflag [#allocation3], 1
    %7509 = vsyncpa %s7508, 1
    %7510 = vsyncpa [#allocation5], 1
    %7511 = vsyncpa [#allocation8], 1
    %7512 = vsyncpa [#allocation11], 1
    %7513 = vsyncpa [#allocation14], 1

</llo_original>
